<compile_context>
chip_gen: v7x
topology: tpu7x:2x2x1
jax: 0.10.0
libtpu: 0.0.40
codegen_flags: <defaults>
</compile_context>

<pallas_src>
import jax
import jax.numpy as jnp
from jax.experimental import pallas as pl
from jax.experimental.pallas import tpu as pltpu


def fused_basic_block_kernel(x_ref, w1_ref, s1_ref, b1_ref,
                             w2_ref, s2_ref, b2_ref,
                             out_ref, mid_ref):
    """One (batch n, row-tile h) step of the fused block.

    x_ref   : (H+4, WPx, Cp)       bf16  whole padded image for batch n (revolving block)
    w1_ref  : (3, 3*Cp, Cp)        bf16  conv1 weights, kw folded into the K axis
    s1/b1   : (1, Cp)              f32   folded BN1 scale/bias (ReLU applied after)
    w2_ref  : (3, 3*Cp, Cp)        bf16  conv2 weights, kw folded into the K axis
    s2/b2   : (1, Cp)              f32   folded BN2 scale/bias (no activation)
    out_ref : (TILE_H, W, Cp)      bf16  output row tile
    mid_ref : (TILE_H+2, WPm, Cp)  bf16  scratch: conv1 output tile, W-padded, 1-row overlap
    """
    TH, W, Cp = out_ref.shape
    TH2 = TH + 2
    h_idx = pl.program_id(1)
    last_h = pl.num_programs(1) - 1
    r0 = pl.multiple_of(h_idx * TH, TH)              # first output row of this tile

    # Column halo of the intermediate is conv2's zero W-padding.  The scratch is per-core
    # private and persistent, but under megacore sharding a core may never execute grid
    # step (0,0), so zero the two halo columns every step (2 x TH2 x Cp bf16 -> tiny).
    zcol = jnp.zeros((TH2, 1, Cp), mid_ref.dtype)
    mid_ref[:, pl.ds(0, 1), :] = zcol
    mid_ref[:, pl.ds(W + 1, 1), :] = zcol

    # ---- conv1: 3 kw-folded K=3*Cp matmuls, f32 MXU accumulation ------------------------
    # conv1 is computed for output rows [r0-1, r0+TH+1) so conv2 needs no cross-tile halo.
    acc1 = None
    for kh in range(3):
        patch = jnp.concatenate(
            [x_ref[pl.ds(r0 + kh, TH2), pl.ds(kw, W), :] for kw in range(3)], axis=-1)
        part = jnp.dot(patch.reshape(TH2 * W, 3 * Cp), w1_ref[kh],
                       preferred_element_type=jnp.float32)
        acc1 = part if acc1 is None else acc1 + part

    # folded BN1 + ReLU in f32 on the VPU, then bf16 intermediate
    h1 = jnp.maximum(acc1 * s1_ref[...] + b1_ref[...], 0.0).reshape(TH2, W, Cp)
    mid_ref[:, pl.ds(1, W), :] = h1.astype(mid_ref.dtype)

    # Rows r0-1 == -1 (first tile) and r0+TH == H (last tile) are conv2's zero padding:
    # overwrite just those rows instead of a full-tile iota+where mask every step.
    @pl.when(h_idx == 0)
    def _():
        mid_ref[pl.ds(0, 1), pl.ds(1, W), :] = jnp.zeros((1, W, Cp), mid_ref.dtype)

    @pl.when(h_idx == last_h)
    def _():
        mid_ref[pl.ds(TH + 1, 1), pl.ds(1, W), :] = jnp.zeros((1, W, Cp), mid_ref.dtype)

    # ---- conv2: 3 kw-folded K=3*Cp matmuls on the padded intermediate -------------------
    acc2 = None
    for kh in range(3):
        patch = jnp.concatenate(
            [mid_ref[pl.ds(kh, TH), pl.ds(kw, W), :] for kw in range(3)], axis=-1)
        part = jnp.dot(patch.reshape(TH * W, 3 * Cp), w2_ref[kh],
                       preferred_element_type=jnp.float32)
        acc2 = part if acc2 is None else acc2 + part

    # folded BN2 (no activation), residual from the x tile interior, final ReLU, bf16 out
    out2 = (acc2 * s2_ref[...] + b2_ref[...]).reshape(TH, W, Cp)
    ident = x_ref[pl.ds(r0 + 2, TH), pl.ds(1, W), :].astype(jnp.float32)
    out_ref[...] = jnp.maximum(out2 + ident, 0.0).astype(out_ref.dtype)


def _round_up(x, m):
    return (x + m - 1) // m * m


def _pick_tile_h(H, W, Cp, wpx, wpm, budget_bytes):
    """Largest divisor of H whose per-tile VMEM footprint fits the budget."""
    fixed = (2 * (H + 4) * wpx * Cp * 2           # x block, double-buffered, bf16
             + 2 * 3 * (3 * Cp) * Cp * 2          # w1 + w2, single-buffered, bf16
             + 4 * Cp * 4)                        # BN scale/bias
    for t in sorted((d for d in range(1, H + 1) if H % d == 0), reverse=True):
        th2 = t + 2
        per_tile = (2 * t * W * Cp * 2            # out block, double-buffered, bf16
                    + th2 * wpm * Cp * 2          # mid scratch, bf16
                    + th2 * W * 3 * Cp * 2        # kw-concat patch, bf16
                    + 2 * th2 * W * Cp * 4)       # f32 accumulator + epilogue temporaries
        if fixed + per_tile <= budget_bytes:
            return t
    return 1


def fused_basic_block(x_nchw, w1_oihw, bn1, w2_oihw, bn2, eps=1e-5):
    """NCHW f32 in / NCHW f32 out. bn1/bn2 = (gamma, beta, running_mean, running_var)."""
    N, C, H, W = x_nchw.shape
    Cout = w1_oihw.shape[0]
    assert Cout == C, "stride=1 BasicBlock with no downsample requires inplanes == planes"

    Cp = max(128, _round_up(C, 128))                 # lane-dense channel padding
    WPx = _round_up(W + 2, 8)                        # 8-aligned row pitch for padded x
    WPm = _round_up(W + 2, 8)                        # 8-aligned row pitch for intermediate

    # VMEM budget per generation (v5e/v6e: 128 MiB, v7x: 64 MiB per TensorCore).
    try:
        vmem_cap = pltpu.get_tpu_info().vmem_capacity_bytes
    except Exception:
        vmem_cap = 64 * 1024 * 1024                  # v7x-safe fallback
    vmem_limit = int(min(vmem_cap * 3 // 4, 96 * 1024 * 1024))

    TILE_H = _pick_tile_h(H, W, Cp, WPx, WPm, budget_bytes=int(vmem_limit * 0.7))
    assert H % TILE_H == 0, "conv2 boundary-row handling requires H % TILE_H == 0"

    # Single fused XLA prep op: NCHW->NHWC, cast to bf16, pad channels to Cp,
    # pad H by 2 (conv1 halo + 1-row conv1 overlap for conv2) and W to the aligned pitch.
    x_nhwc = jnp.transpose(x_nchw, (0, 2, 3, 1)).astype(jnp.bfloat16)
    xpad = jnp.pad(x_nhwc, ((0, 0), (2, 2), (1, WPx - (W + 1)), (0, Cp - C)))

    def prep_w(w_oihw):
        # OIHW -> HWIO, bf16, pad to (3,3,Cp,Cp), then fold kw into K: (3, 3*Cp, Cp).
        # reshape gives K index = kw*Cp + ci, matching the kernel's kw-concatenated patch.
        w = jnp.transpose(w_oihw, (2, 3, 1, 0)).astype(jnp.bfloat16)
        w = jnp.pad(w, ((0, 0), (0, 0), (0, Cp - C), (0, Cp - Cout)))
        return w.reshape(3, 3 * Cp, Cp)

    w1 = prep_w(w1_oihw)
    w2 = prep_w(w2_oihw)

    def fold(gamma, beta, mean, var):                # BN -> per-channel scale/bias (f32)
        s = (gamma / jnp.sqrt(var + eps)).astype(jnp.float32)
        b = (beta - mean * s).astype(jnp.float32)
        s = jnp.pad(s, (0, Cp - Cout)).reshape(1, Cp)
        b = jnp.pad(b, (0, Cp - Cout)).reshape(1, Cp)
        return s, b

    s1, b1 = fold(*bn1)
    s2, b2 = fold(*bn2)

    # Grid-invariant operands: single-buffer them (double-buffering constant blocks just
    # wastes VMEM — ~19 MB of dead weight buffers at Cp=512).
    def resident_spec(shape):
        idx = lambda n, h: (0,) * len(shape)
        if hasattr(pl, "Buffered"):
            try:
                return pl.BlockSpec(shape, idx, pipeline_mode=pl.Buffered(1))
            except TypeError:                        # older jax without pipeline_mode
                pass
        return pl.BlockSpec(shape, idx)

    grid = (N, H // TILE_H)
    # Megacore (v7x): shard the batch axis across cores when possible; the x index_map
    # ignores h, so splitting h across cores would duplicate the whole-image x DMA.
    dim_sem = ("parallel", "arbitrary") if N >= 2 else ("parallel", "parallel")

    out_nhwc = pl.pallas_call(
        fused_basic_block_kernel,
        out_shape=jax.ShapeDtypeStruct((N, H, W, Cp), jnp.bfloat16),
        grid=grid,
        in_specs=[
            # whole padded image per batch n; re-fetched only when n changes
            pl.BlockSpec((None, H + 4, WPx, Cp), lambda n, h: (n, 0, 0, 0)),
            resident_spec((3, 3 * Cp, Cp)),
            resident_spec((1, Cp)),
            resident_spec((1, Cp)),
            resident_spec((3, 3 * Cp, Cp)),
            resident_spec((1, Cp)),
            resident_spec((1, Cp)),
        ],
        out_specs=pl.BlockSpec((None, TILE_H, W, Cp), lambda n, h: (n, h, 0, 0)),
        scratch_shapes=[pltpu.VMEM((TILE_H + 2, WPm, Cp), jnp.bfloat16)],
        compiler_params=pltpu.CompilerParams(
            dimension_semantics=dim_sem,
            vmem_limit_bytes=vmem_limit,
        ),
    )(xpad, w1, s1, b1, w2, s2, b2)

    # NHWC bf16 -> NCHW f32 (PyTorch-module interface); drop the channel pad.
    return jnp.transpose(out_nhwc[..., :C], (0, 3, 1, 2)).astype(jnp.float32)


def reference_nchw(x, w1, bn1, w2, bn2, eps=1e-5):
    """Pure-JAX reference mirroring the kernel's precision pipeline (bf16 in, f32 acc)."""
    def bn(y, g, b, m, v):
        g, b, m, v = (t[None, :, None, None] for t in (g, b, m, v))
        return g * (y - m) / jnp.sqrt(v + eps) + b

    dn = ('NCHW', 'OIHW', 'NCHW')
    xb = x.astype(jnp.bfloat16)
    y = jax.lax.conv_general_dilated(xb, w1.astype(jnp.bfloat16), (1, 1), ((1, 1), (1, 1)),
                                     dimension_numbers=dn,
                                     preferred_element_type=jnp.float32)
    y = jax.nn.relu(bn(y, *bn1)).astype(jnp.bfloat16)
    y = jax.lax.conv_general_dilated(y, w2.astype(jnp.bfloat16), (1, 1), ((1, 1), (1, 1)),
                                     dimension_numbers=dn,
                                     preferred_element_type=jnp.float32)
    y = bn(y, *bn2)
    return jax.nn.relu(y + xb.astype(jnp.float32))


if __name__ == "__main__":
    key = jax.random.PRNGKey(0)
    ks = jax.random.split(key, 12)

    # inplanes = planes = 4, stride = 1, downsample = None
    N, C, H, W = 2, 4, 16, 16
    x = jax.random.normal(ks[0], (N, C, H, W), jnp.float32)

    # conv weights in PyTorch OIHW layout (Cout, Cin, 3, 3), deterministic init
    w1 = 0.2 * jax.random.normal(ks[1], (C, C, 3, 3), jnp.float32)
    w2 = 0.2 * jax.random.normal(ks[2], (C, C, 3, 3), jnp.float32)

    # FusedBnReLU params (gamma, beta, running_mean, running_var)
    bn1 = (1.0 + 0.1 * jax.random.normal(ks[3], (C,), jnp.float32),
           0.1 * jax.random.normal(ks[4], (C,), jnp.float32),
           0.1 * jax.random.normal(ks[5], (C,), jnp.float32),
           jax.random.uniform(ks[6], (C,), jnp.float32, 0.5, 1.5))
    bn2 = (1.0 + 0.1 * jax.random.normal(ks[7], (C,), jnp.float32),
           0.1 * jax.random.normal(ks[8], (C,), jnp.float32),
           0.1 * jax.random.normal(ks[9], (C,), jnp.float32),
           jax.random.uniform(ks[10], (C,), jnp.float32, 0.5, 1.5))

    out = fused_basic_block(x, w1, bn1, w2, bn2)
    out = jax.block_until_ready(out)

    ref = reference_nchw(x, w1, bn1, w2, bn2)
    assert out.shape == (N, C, H, W)
    max_diff = jnp.max(jnp.abs(out - ref))
    assert jnp.allclose(out, ref, atol=2e-2, rtol=2e-2), f"max abs diff {max_diff}"

    print("KERNEL_OK")
</pallas_src>

<mosaic_0001>
module attributes {stable_mosaic.version = 11 : i64} {
  func.func @fused_basic_block_kernel(%arg0: i32, %arg1: i32, %arg2: memref<1x20x24x128xbf16, #tpu.memory_space<vmem>>, %arg3: memref<3x384x128xbf16, #tpu.memory_space<vmem>>, %arg4: memref<1x128xf32, #tpu.memory_space<vmem>>, %arg5: memref<1x128xf32, #tpu.memory_space<vmem>>, %arg6: memref<3x384x128xbf16, #tpu.memory_space<vmem>>, %arg7: memref<1x128xf32, #tpu.memory_space<vmem>>, %arg8: memref<1x128xf32, #tpu.memory_space<vmem>>, %arg9: memref<1x16x16x128xbf16, #tpu.memory_space<vmem>>, %arg10: memref<18x24x128xbf16, #tpu.memory_space<vmem>>) attributes {dimension_semantics = [#tpu.dimension_semantics<parallel>, #tpu.dimension_semantics<arbitrary>], iteration_bounds = array<i64: 2, 1>, scalar_prefetch = 0 : i64, scratch_operands = 1 : i64, tpu.core_type = #tpu.core_type<tc>, window_params = [{transform_indices = @transform_0, window_bounds = array<i64: 1, 20, 24, 128>}, {pipeline_mode = #tpu.pipeline_mode<synchronous>, transform_indices = @transform_1, window_bounds = array<i64: 3, 384, 128>}, {pipeline_mode = #tpu.pipeline_mode<synchronous>, transform_indices = @transform_2, window_bounds = array<i64: 1, 128>}, {pipeline_mode = #tpu.pipeline_mode<synchronous>, transform_indices = @transform_3, window_bounds = array<i64: 1, 128>}, {pipeline_mode = #tpu.pipeline_mode<synchronous>, transform_indices = @transform_4, window_bounds = array<i64: 3, 384, 128>}, {pipeline_mode = #tpu.pipeline_mode<synchronous>, transform_indices = @transform_5, window_bounds = array<i64: 1, 128>}, {pipeline_mode = #tpu.pipeline_mode<synchronous>, transform_indices = @transform_6, window_bounds = array<i64: 1, 128>}, {transform_indices = @transform_7, window_bounds = array<i64: 1, 16, 16, 128>}]} {
    %c16_i32 = arith.constant 16 : i32
    %0 = arith.muli %arg1, %c16_i32 : i32
    %1 = tpu.assume_multiple %0, 16 : i32
    %cst = arith.constant 0.000000e+00 : bf16
    %2 = vector.broadcast %cst : bf16 to vector<18x1x128xbf16>
    %c0 = arith.constant 0 : index
    %c0_0 = arith.constant 0 : index
    %c0_1 = arith.constant 0 : index
    %3 = vector.load %arg10[%c0, %c0_0, %c0_1] : memref<18x24x128xbf16, #tpu.memory_space<vmem>>, vector<18x1x128xbf16>
    tpu.vector_store %arg10[%c0, %c0_0, %c0_1], %2 {strides = array<i32>} : memref<18x24x128xbf16, #tpu.memory_space<vmem>>, vector<18x1x128xbf16>,
    %c0_2 = arith.constant 0 : index
    %c17 = arith.constant 17 : index
    %c0_3 = arith.constant 0 : index
    %4 = vector.load %arg10[%c0_2, %c17, %c0_3] : memref<18x24x128xbf16, #tpu.memory_space<vmem>>, vector<18x1x128xbf16>
    tpu.vector_store %arg10[%c0_2, %c17, %c0_3], %2 {strides = array<i32>} : memref<18x24x128xbf16, #tpu.memory_space<vmem>>, vector<18x1x128xbf16>,
    %c0_i32 = arith.constant 0 : i32
    %5 = arith.addi %1, %c0_i32 : i32
    %c0_4 = arith.constant 0 : index
    %6 = arith.index_cast %5 : i32 to index
    %c0_5 = arith.constant 0 : index
    %c0_6 = arith.constant 0 : index
    %7 = vector.load %arg2[%c0_4, %6, %c0_5, %c0_6] : memref<1x20x24x128xbf16, #tpu.memory_space<vmem>>, vector<1x18x16x128xbf16>
    %8 = vector.shape_cast %7 : vector<1x18x16x128xbf16> to vector<18x16x128xbf16>
    %c0_i32_7 = arith.constant 0 : i32
    %9 = arith.addi %1, %c0_i32_7 : i32
    %c0_8 = arith.constant 0 : index
    %10 = arith.index_cast %9 : i32 to index
    %c1 = arith.constant 1 : index
    %c0_9 = arith.constant 0 : index
    %11 = vector.load %arg2[%c0_8, %10, %c1, %c0_9] : memref<1x20x24x128xbf16, #tpu.memory_space<vmem>>, vector<1x18x16x128xbf16>
    %12 = vector.shape_cast %11 : vector<1x18x16x128xbf16> to vector<18x16x128xbf16>
    %c0_i32_10 = arith.constant 0 : i32
    %13 = arith.addi %1, %c0_i32_10 : i32
    %c0_11 = arith.constant 0 : index
    %14 = arith.index_cast %13 : i32 to index
    %c2 = arith.constant 2 : index
    %c0_12 = arith.constant 0 : index
    %15 = vector.load %arg2[%c0_11, %14, %c2, %c0_12] : memref<1x20x24x128xbf16, #tpu.memory_space<vmem>>, vector<1x18x16x128xbf16>
    %16 = vector.shape_cast %15 : vector<1x18x16x128xbf16> to vector<18x16x128xbf16>
    %17 = tpu.concatenate %8, %12, %16 in 2 : vector<18x16x128xbf16>, vector<18x16x128xbf16>, vector<18x16x128xbf16> -> vector<18x16x384xbf16>
    %18 = vector.shape_cast %17 : vector<18x16x384xbf16> to vector<288x384xbf16>
    %c0_13 = arith.constant 0 : index
    %c0_14 = arith.constant 0 : index
    %c0_15 = arith.constant 0 : index
    %19 = vector.load %arg3[%c0_13, %c0_14, %c0_15] : memref<3x384x128xbf16, #tpu.memory_space<vmem>>, vector<1x384x128xbf16>
    %20 = vector.shape_cast %19 : vector<1x384x128xbf16> to vector<384x128xbf16>
    %cst_16 = arith.constant dense<0.000000e+00> : vector<288x128xf32>
    %21 = tpu.matmul %18, %20, %cst_16 {dimension_numbers = #tpu.dot_dimension_numbers<[1], [0], [0], [1], [0, 0, 1, 1], [], []>} : vector<288x384xbf16>, vector<384x128xbf16>, vector<288x128xf32> -> vector<288x128xf32>
    %c1_i32 = arith.constant 1 : i32
    %22 = arith.addi %1, %c1_i32 : i32
    %c0_17 = arith.constant 0 : index
    %23 = arith.index_cast %22 : i32 to index
    %c0_18 = arith.constant 0 : index
    %c0_19 = arith.constant 0 : index
    %24 = vector.load %arg2[%c0_17, %23, %c0_18, %c0_19] : memref<1x20x24x128xbf16, #tpu.memory_space<vmem>>, vector<1x18x16x128xbf16>
    %25 = vector.shape_cast %24 : vector<1x18x16x128xbf16> to vector<18x16x128xbf16>
    %c1_i32_20 = arith.constant 1 : i32
    %26 = arith.addi %1, %c1_i32_20 : i32
    %c0_21 = arith.constant 0 : index
    %27 = arith.index_cast %26 : i32 to index
    %c1_22 = arith.constant 1 : index
    %c0_23 = arith.constant 0 : index
    %28 = vector.load %arg2[%c0_21, %27, %c1_22, %c0_23] : memref<1x20x24x128xbf16, #tpu.memory_space<vmem>>, vector<1x18x16x128xbf16>
    %29 = vector.shape_cast %28 : vector<1x18x16x128xbf16> to vector<18x16x128xbf16>
    %c1_i32_24 = arith.constant 1 : i32
    %30 = arith.addi %1, %c1_i32_24 : i32
    %c0_25 = arith.constant 0 : index
    %31 = arith.index_cast %30 : i32 to index
    %c2_26 = arith.constant 2 : index
    %c0_27 = arith.constant 0 : index
    %32 = vector.load %arg2[%c0_25, %31, %c2_26, %c0_27] : memref<1x20x24x128xbf16, #tpu.memory_space<vmem>>, vector<1x18x16x128xbf16>
    %33 = vector.shape_cast %32 : vector<1x18x16x128xbf16> to vector<18x16x128xbf16>
    %34 = tpu.concatenate %25, %29, %33 in 2 : vector<18x16x128xbf16>, vector<18x16x128xbf16>, vector<18x16x128xbf16> -> vector<18x16x384xbf16>
    %35 = vector.shape_cast %34 : vector<18x16x384xbf16> to vector<288x384xbf16>
    %c1_28 = arith.constant 1 : index
    %c0_29 = arith.constant 0 : index
    %c0_30 = arith.constant 0 : index
    %36 = vector.load %arg3[%c1_28, %c0_29, %c0_30] : memref<3x384x128xbf16, #tpu.memory_space<vmem>>, vector<1x384x128xbf16>
    %37 = vector.shape_cast %36 : vector<1x384x128xbf16> to vector<384x128xbf16>
    %cst_31 = arith.constant dense<0.000000e+00> : vector<288x128xf32>
    %38 = tpu.matmul %35, %37, %cst_31 {dimension_numbers = #tpu.dot_dimension_numbers<[1], [0], [0], [1], [0, 0, 1, 1], [], []>} : vector<288x384xbf16>, vector<384x128xbf16>, vector<288x128xf32> -> vector<288x128xf32>
    %39 = arith.addf %21, %38 : vector<288x128xf32>
    %c2_i32 = arith.constant 2 : i32
    %40 = arith.addi %1, %c2_i32 : i32
    %c0_32 = arith.constant 0 : index
    %41 = arith.index_cast %40 : i32 to index
    %c0_33 = arith.constant 0 : index
    %c0_34 = arith.constant 0 : index
    %42 = vector.load %arg2[%c0_32, %41, %c0_33, %c0_34] : memref<1x20x24x128xbf16, #tpu.memory_space<vmem>>, vector<1x18x16x128xbf16>
    %43 = vector.shape_cast %42 : vector<1x18x16x128xbf16> to vector<18x16x128xbf16>
    %c2_i32_35 = arith.constant 2 : i32
    %44 = arith.addi %1, %c2_i32_35 : i32
    %c0_36 = arith.constant 0 : index
    %45 = arith.index_cast %44 : i32 to index
    %c1_37 = arith.constant 1 : index
    %c0_38 = arith.constant 0 : index
    %46 = vector.load %arg2[%c0_36, %45, %c1_37, %c0_38] : memref<1x20x24x128xbf16, #tpu.memory_space<vmem>>, vector<1x18x16x128xbf16>
    %47 = vector.shape_cast %46 : vector<1x18x16x128xbf16> to vector<18x16x128xbf16>
    %c2_i32_39 = arith.constant 2 : i32
    %48 = arith.addi %1, %c2_i32_39 : i32
    %c0_40 = arith.constant 0 : index
    %49 = arith.index_cast %48 : i32 to index
    %c2_41 = arith.constant 2 : index
    %c0_42 = arith.constant 0 : index
    %50 = vector.load %arg2[%c0_40, %49, %c2_41, %c0_42] : memref<1x20x24x128xbf16, #tpu.memory_space<vmem>>, vector<1x18x16x128xbf16>
    %51 = vector.shape_cast %50 : vector<1x18x16x128xbf16> to vector<18x16x128xbf16>
    %52 = tpu.concatenate %43, %47, %51 in 2 : vector<18x16x128xbf16>, vector<18x16x128xbf16>, vector<18x16x128xbf16> -> vector<18x16x384xbf16>
    %53 = vector.shape_cast %52 : vector<18x16x384xbf16> to vector<288x384xbf16>
    %c2_43 = arith.constant 2 : index
    %c0_44 = arith.constant 0 : index
    %c0_45 = arith.constant 0 : index
    %54 = vector.load %arg3[%c2_43, %c0_44, %c0_45] : memref<3x384x128xbf16, #tpu.memory_space<vmem>>, vector<1x384x128xbf16>
    %55 = vector.shape_cast %54 : vector<1x384x128xbf16> to vector<384x128xbf16>
    %cst_46 = arith.constant dense<0.000000e+00> : vector<288x128xf32>
    %56 = tpu.matmul %53, %55, %cst_46 {dimension_numbers = #tpu.dot_dimension_numbers<[1], [0], [0], [1], [0, 0, 1, 1], [], []>} : vector<288x384xbf16>, vector<384x128xbf16>, vector<288x128xf32> -> vector<288x128xf32>
    %57 = arith.addf %39, %56 : vector<288x128xf32>
    %c0_47 = arith.constant 0 : index
    %c0_48 = arith.constant 0 : index
    %58 = vector.load %arg4[%c0_47, %c0_48] : memref<1x128xf32, #tpu.memory_space<vmem>>, vector<1x128xf32>
    %59 = vector.broadcast %58 : vector<1x128xf32> to vector<288x128xf32>
    %60 = arith.mulf %57, %59 : vector<288x128xf32>
    %c0_49 = arith.constant 0 : index
    %c0_50 = arith.constant 0 : index
    %61 = vector.load %arg5[%c0_49, %c0_50] : memref<1x128xf32, #tpu.memory_space<vmem>>, vector<1x128xf32>
    %62 = vector.broadcast %61 : vector<1x128xf32> to vector<288x128xf32>
    %63 = arith.addf %60, %62 : vector<288x128xf32>
    %cst_51 = arith.constant 0.000000e+00 : f32
    %64 = vector.broadcast %cst_51 : f32 to vector<288x128xf32>
    %65 = arith.maximumf %63, %64 : vector<288x128xf32>
    %66 = vector.shape_cast %65 : vector<288x128xf32> to vector<18x16x128xf32>
    %67 = arith.truncf %66 : vector<18x16x128xf32> to vector<18x16x128xbf16>
    %c0_52 = arith.constant 0 : index
    %c1_53 = arith.constant 1 : index
    %c0_54 = arith.constant 0 : index
    %68 = vector.load %arg10[%c0_52, %c1_53, %c0_54] : memref<18x24x128xbf16, #tpu.memory_space<vmem>>, vector<18x16x128xbf16>
    tpu.vector_store %arg10[%c0_52, %c1_53, %c0_54], %67 {strides = array<i32>} : memref<18x24x128xbf16, #tpu.memory_space<vmem>>, vector<18x16x128xbf16>,
    %c0_i32_55 = arith.constant 0 : i32
    %69 = arith.cmpi eq, %arg1, %c0_i32_55 : i32
    %70 = arith.extui %69 : i1 to i32
    %c0_i32_56 = arith.constant 0 : i32
    %71 = arith.cmpi ne, %70, %c0_i32_56 : i32
    scf.if %71 {
      %cst_111 = arith.constant 0.000000e+00 : bf16
      %120 = vector.broadcast %cst_111 : bf16 to vector<1x16x128xbf16>
      %c0_112 = arith.constant 0 : index
      %c1_113 = arith.constant 1 : index
      %c0_114 = arith.constant 0 : index
      %121 = vector.load %arg10[%c0_112, %c1_113, %c0_114] : memref<18x24x128xbf16, #tpu.memory_space<vmem>>, vector<1x16x128xbf16>
      tpu.vector_store %arg10[%c0_112, %c1_113, %c0_114], %120 {strides = array<i32>} : memref<18x24x128xbf16, #tpu.memory_space<vmem>>, vector<1x16x128xbf16>,
    } else {
    }
    %c0_i32_57 = arith.constant 0 : i32
    %72 = arith.cmpi eq, %arg1, %c0_i32_57 : i32
    %73 = arith.extui %72 : i1 to i32
    %c0_i32_58 = arith.constant 0 : i32
    %74 = arith.cmpi ne, %73, %c0_i32_58 : i32
    scf.if %74 {
      %cst_111 = arith.constant 0.000000e+00 : bf16
      %120 = vector.broadcast %cst_111 : bf16 to vector<1x16x128xbf16>
      %c17_112 = arith.constant 17 : index
      %c1_113 = arith.constant 1 : index
      %c0_114 = arith.constant 0 : index
      %121 = vector.load %arg10[%c17_112, %c1_113, %c0_114] : memref<18x24x128xbf16, #tpu.memory_space<vmem>>, vector<1x16x128xbf16>
      tpu.vector_store %arg10[%c17_112, %c1_113, %c0_114], %120 {strides = array<i32>} : memref<18x24x128xbf16, #tpu.memory_space<vmem>>, vector<1x16x128xbf16>,
    } else {
    }
    %c0_59 = arith.constant 0 : index
    %c0_60 = arith.constant 0 : index
    %c0_61 = arith.constant 0 : index
    %75 = vector.load %arg10[%c0_59, %c0_60, %c0_61] : memref<18x24x128xbf16, #tpu.memory_space<vmem>>, vector<16x16x128xbf16>
    %c0_62 = arith.constant 0 : index
    %c1_63 = arith.constant 1 : index
    %c0_64 = arith.constant 0 : index
    %76 = vector.load %arg10[%c0_62, %c1_63, %c0_64] : memref<18x24x128xbf16, #tpu.memory_space<vmem>>, vector<16x16x128xbf16>
    %c0_65 = arith.constant 0 : index
    %c2_66 = arith.constant 2 : index
    %c0_67 = arith.constant 0 : index
    %77 = vector.load %arg10[%c0_65, %c2_66, %c0_67] : memref<18x24x128xbf16, #tpu.memory_space<vmem>>, vector<16x16x128xbf16>
    %78 = tpu.concatenate %75, %76, %77 in 2 : vector<16x16x128xbf16>, vector<16x16x128xbf16>, vector<16x16x128xbf16> -> vector<16x16x384xbf16>
    %79 = vector.shape_cast %78 : vector<16x16x384xbf16> to vector<256x384xbf16>
    %c0_68 = arith.constant 0 : index
    %c0_69 = arith.constant 0 : index
    %c0_70 = arith.constant 0 : index
    %80 = vector.load %arg6[%c0_68, %c0_69, %c0_70] : memref<3x384x128xbf16, #tpu.memory_space<vmem>>, vector<1x384x128xbf16>
    %81 = vector.shape_cast %80 : vector<1x384x128xbf16> to vector<384x128xbf16>
    %cst_71 = arith.constant dense<0.000000e+00> : vector<256x128xf32>
    %82 = tpu.matmul %79, %81, %cst_71 {dimension_numbers = #tpu.dot_dimension_numbers<[1], [0], [0], [1], [0, 0, 1, 1], [], []>} : vector<256x384xbf16>, vector<384x128xbf16>, vector<256x128xf32> -> vector<256x128xf32>
    %c1_72 = arith.constant 1 : index
    %c0_73 = arith.constant 0 : index
    %c0_74 = arith.constant 0 : index
    %83 = vector.load %arg10[%c1_72, %c0_73, %c0_74] : memref<18x24x128xbf16, #tpu.memory_space<vmem>>, vector<16x16x128xbf16>
    %c1_75 = arith.constant 1 : index
    %c1_76 = arith.constant 1 : index
    %c0_77 = arith.constant 0 : index
    %84 = vector.load %arg10[%c1_75, %c1_76, %c0_77] : memref<18x24x128xbf16, #tpu.memory_space<vmem>>, vector<16x16x128xbf16>
    %c1_78 = arith.constant 1 : index
    %c2_79 = arith.constant 2 : index
    %c0_80 = arith.constant 0 : index
    %85 = vector.load %arg10[%c1_78, %c2_79, %c0_80] : memref<18x24x128xbf16, #tpu.memory_space<vmem>>, vector<16x16x128xbf16>
    %86 = tpu.concatenate %83, %84, %85 in 2 : vector<16x16x128xbf16>, vector<16x16x128xbf16>, vector<16x16x128xbf16> -> vector<16x16x384xbf16>
    %87 = vector.shape_cast %86 : vector<16x16x384xbf16> to vector<256x384xbf16>
    %c1_81 = arith.constant 1 : index
    %c0_82 = arith.constant 0 : index
    %c0_83 = arith.constant 0 : index
    %88 = vector.load %arg6[%c1_81, %c0_82, %c0_83] : memref<3x384x128xbf16, #tpu.memory_space<vmem>>, vector<1x384x128xbf16>
    %89 = vector.shape_cast %88 : vector<1x384x128xbf16> to vector<384x128xbf16>
    %cst_84 = arith.constant dense<0.000000e+00> : vector<256x128xf32>
    %90 = tpu.matmul %87, %89, %cst_84 {dimension_numbers = #tpu.dot_dimension_numbers<[1], [0], [0], [1], [0, 0, 1, 1], [], []>} : vector<256x384xbf16>, vector<384x128xbf16>, vector<256x128xf32> -> vector<256x128xf32>
    %91 = arith.addf %82, %90 : vector<256x128xf32>
    %c2_85 = arith.constant 2 : index
    %c0_86 = arith.constant 0 : index
    %c0_87 = arith.constant 0 : index
    %92 = vector.load %arg10[%c2_85, %c0_86, %c0_87] : memref<18x24x128xbf16, #tpu.memory_space<vmem>>, vector<16x16x128xbf16>
    %c2_88 = arith.constant 2 : index
    %c1_89 = arith.constant 1 : index
    %c0_90 = arith.constant 0 : index
    %93 = vector.load %arg10[%c2_88, %c1_89, %c0_90] : memref<18x24x128xbf16, #tpu.memory_space<vmem>>, vector<16x16x128xbf16>
    %c2_91 = arith.constant 2 : index
    %c2_92 = arith.constant 2 : index
    %c0_93 = arith.constant 0 : index
    %94 = vector.load %arg10[%c2_91, %c2_92, %c0_93] : memref<18x24x128xbf16, #tpu.memory_space<vmem>>, vector<16x16x128xbf16>
    %95 = tpu.concatenate %92, %93, %94 in 2 : vector<16x16x128xbf16>, vector<16x16x128xbf16>, vector<16x16x128xbf16> -> vector<16x16x384xbf16>
    %96 = vector.shape_cast %95 : vector<16x16x384xbf16> to vector<256x384xbf16>
    %c2_94 = arith.constant 2 : index
    %c0_95 = arith.constant 0 : index
    %c0_96 = arith.constant 0 : index
    %97 = vector.load %arg6[%c2_94, %c0_95, %c0_96] : memref<3x384x128xbf16, #tpu.memory_space<vmem>>, vector<1x384x128xbf16>
    %98 = vector.shape_cast %97 : vector<1x384x128xbf16> to vector<384x128xbf16>
    %cst_97 = arith.constant dense<0.000000e+00> : vector<256x128xf32>
    %99 = tpu.matmul %96, %98, %cst_97 {dimension_numbers = #tpu.dot_dimension_numbers<[1], [0], [0], [1], [0, 0, 1, 1], [], []>} : vector<256x384xbf16>, vector<384x128xbf16>, vector<256x128xf32> -> vector<256x128xf32>
    %100 = arith.addf %91, %99 : vector<256x128xf32>
    %c0_98 = arith.constant 0 : index
    %c0_99 = arith.constant 0 : index
    %101 = vector.load %arg7[%c0_98, %c0_99] : memref<1x128xf32, #tpu.memory_space<vmem>>, vector<1x128xf32>
    %102 = vector.broadcast %101 : vector<1x128xf32> to vector<256x128xf32>
    %103 = arith.mulf %100, %102 : vector<256x128xf32>
    %c0_100 = arith.constant 0 : index
    %c0_101 = arith.constant 0 : index
    %104 = vector.load %arg8[%c0_100, %c0_101] : memref<1x128xf32, #tpu.memory_space<vmem>>, vector<1x128xf32>
    %105 = vector.broadcast %104 : vector<1x128xf32> to vector<256x128xf32>
    %106 = arith.addf %103, %105 : vector<256x128xf32>
    %107 = vector.shape_cast %106 : vector<256x128xf32> to vector<16x16x128xf32>
    %c2_i32_102 = arith.constant 2 : i32
    %108 = arith.addi %1, %c2_i32_102 : i32
    %c0_103 = arith.constant 0 : index
    %109 = arith.index_cast %108 : i32 to index
    %c1_104 = arith.constant 1 : index
    %c0_105 = arith.constant 0 : index
    %110 = vector.load %arg2[%c0_103, %109, %c1_104, %c0_105] : memref<1x20x24x128xbf16, #tpu.memory_space<vmem>>, vector<1x16x16x128xbf16>
    %111 = vector.shape_cast %110 : vector<1x16x16x128xbf16> to vector<16x16x128xbf16>
    %112 = arith.extf %111 : vector<16x16x128xbf16> to vector<16x16x128xf32>
    %113 = arith.addf %107, %112 : vector<16x16x128xf32>
    %cst_106 = arith.constant 0.000000e+00 : f32
    %114 = vector.broadcast %cst_106 : f32 to vector<16x16x128xf32>
    %115 = arith.maximumf %113, %114 : vector<16x16x128xf32>
    %116 = arith.truncf %115 : vector<16x16x128xf32> to vector<16x16x128xbf16>
    %c0_107 = arith.constant 0 : index
    %c0_108 = arith.constant 0 : index
    %c0_109 = arith.constant 0 : index
    %c0_110 = arith.constant 0 : index
    %117 = vector.load %arg9[%c0_107, %c0_108, %c0_109, %c0_110] : memref<1x16x16x128xbf16, #tpu.memory_space<vmem>>, vector<1x16x16x128xbf16>
    %118 = vector.shape_cast %117 : vector<1x16x16x128xbf16> to vector<16x16x128xbf16>
    %119 = vector.shape_cast %116 : vector<16x16x128xbf16> to vector<1x16x16x128xbf16>
    tpu.vector_store %arg9[%c0_107, %c0_108, %c0_109, %c0_110], %119 {strides = array<i32>} : memref<1x16x16x128xbf16, #tpu.memory_space<vmem>>, vector<1x16x16x128xbf16>,
    return
  }
  func.func @transform_0(%arg0: i32, %arg1: i32) -> (i32, i32, i32, i32) {
    %c0_i32 = arith.constant 0 : i32
    %c0_i32_0 = arith.constant 0 : i32
    %c0_i32_1 = arith.constant 0 : i32
    %c0_i32_2 = arith.constant 0 : i32
    return %arg0, %c0_i32, %c0_i32_0, %c0_i32_1 : i32, i32, i32, i32
  }
  func.func @transform_1(%arg0: i32, %arg1: i32) -> (i32, i32, i32) {
    %c0_i32 = arith.constant 0 : i32
    %c0_i32_0 = arith.constant 0 : i32
    %c0_i32_1 = arith.constant 0 : i32
    %c0_i32_2 = arith.constant 0 : i32
    return %c0_i32, %c0_i32_0, %c0_i32_1 : i32, i32, i32
  }
  func.func @transform_2(%arg0: i32, %arg1: i32) -> (i32, i32) {
    %c0_i32 = arith.constant 0 : i32
    %c0_i32_0 = arith.constant 0 : i32
    %c0_i32_1 = arith.constant 0 : i32
    return %c0_i32, %c0_i32_0 : i32, i32
  }
  func.func @transform_3(%arg0: i32, %arg1: i32) -> (i32, i32) {
    %c0_i32 = arith.constant 0 : i32
    %c0_i32_0 = arith.constant 0 : i32
    %c0_i32_1 = arith.constant 0 : i32
    return %c0_i32, %c0_i32_0 : i32, i32
  }
  func.func @transform_4(%arg0: i32, %arg1: i32) -> (i32, i32, i32) {
    %c0_i32 = arith.constant 0 : i32
    %c0_i32_0 = arith.constant 0 : i32
    %c0_i32_1 = arith.constant 0 : i32
    %c0_i32_2 = arith.constant 0 : i32
    return %c0_i32, %c0_i32_0, %c0_i32_1 : i32, i32, i32
  }
  func.func @transform_5(%arg0: i32, %arg1: i32) -> (i32, i32) {
    %c0_i32 = arith.constant 0 : i32
    %c0_i32_0 = arith.constant 0 : i32
    %c0_i32_1 = arith.constant 0 : i32
    return %c0_i32, %c0_i32_0 : i32, i32
  }
  func.func @transform_6(%arg0: i32, %arg1: i32) -> (i32, i32) {
    %c0_i32 = arith.constant 0 : i32
    %c0_i32_0 = arith.constant 0 : i32
    %c0_i32_1 = arith.constant 0 : i32
    return %c0_i32, %c0_i32_0 : i32, i32
  }
  func.func @transform_7(%arg0: i32, %arg1: i32) -> (i32, i32, i32, i32) {
    %c0_i32 = arith.constant 0 : i32
    %c0_i32_0 = arith.constant 0 : i32
    %c0_i32_1 = arith.constant 0 : i32
    return %arg0, %arg1, %c0_i32, %c0_i32_0 : i32, i32, i32, i32
  }
}

</mosaic_0001>

<llo_original>
// kernel: tpu_custom_call.1
$region0: #{tpu_custom_call.1}
  #allocation0 [shape = 'u32[]', space=smem, size = 0x4, offset = 0x4, fixed_abs, tag = 'smem constant byte address 0x4 - core index']
  #allocation1 [shape = 'u32[144,128]{1,0:T(1,128)}', space=vmem, size = 0x12000, scoped, tag = 'internal scratch']
  #allocation2 [shape = 'bf16[18,24,128]{2,1,0:T(8,128)(2,1)}', space=vmem, size = 0x1b000, scoped, tag = 'scratch operand']
  %s0 = inlined_call_operand.hbm [shape: bf16[2,20,24,128], index: 0, kind: input, shape index: {}]
  %s1 = inlined_call_operand.hbm [shape: bf16[3,384,128], index: 1, kind: input, shape index: {}]
  %s2 = inlined_call_operand.vmem [shape: f32[1,128], index: 2, kind: input, shape index: {}]
  %s3 = inlined_call_operand.vmem [shape: f32[1,128], index: 3, kind: input, shape index: {}]
  %s4 = inlined_call_operand.hbm [shape: bf16[3,384,128], index: 4, kind: input, shape index: {}]
  %s5 = inlined_call_operand.vmem [shape: f32[1,128], index: 5, kind: input, shape index: {}]
  %s6 = inlined_call_operand.vmem [shape: f32[1,128], index: 6, kind: input, shape index: {}]
  %s7 = inlined_call_operand.hbm [shape: bf16[2,16,16,128], index: 7, kind: output, shape index: {}]
  %s8 = sld [smem:[#allocation0]]
  $region77: #{tpu_custom_call.1} parent=0
    _
  %s10 = ssub.s32 1, %s8
  %s11 = scalar_select 0, %s10, %s8
  $region1: #{tpu_custom_call.1} parent=0
    #allocation3 [shape = 'u8[245760]{0}', space=vmem, size = 0x3c000, scoped, tag = 'input window, operand 0']
    #allocation4 [shape = 's32[2]{0}', space=sflag, size = 0x8, scoped, tag = 'scoped memory for tpu_custom_call.1']
    #allocation5 [shape = 's32[2]{0}', space=sflag, size = 0x8, scoped, tag = 'scoped memory for tpu_custom_call.1']
    #allocation6 [shape = 'u8[294912]{0}', space=vmem, size = 0x48000, scoped, tag = 'input window, operand 1, single buffered']
    #allocation7 [shape = 's32[1]{0}', space=sflag, size = 0x4, scoped, tag = 'scoped memory for tpu_custom_call.1']
    #allocation8 [shape = 'u8[294912]{0}', space=vmem, size = 0x48000, scoped, tag = 'input window, operand 4, single buffered']
    #allocation9 [shape = 'u8[131072]{0}', space=vmem, size = 0x20000, scoped, tag = 'output window, operand 0']
    %12 = vsyncpa [#allocation4], 0
    %s13 = scalar_lea.sflag [#allocation4], 1
    %14 = vsyncpa %s13, 0
    %15 = vsyncpa [#allocation7], 0
    %16 = vsyncpa [#allocation5], 0
    %s17 = scalar_lea.sflag [#allocation5], 1
    %18 = vsyncpa %s17, 0
    loop: start=0, step=1, limit=4
    $region2: #{tpu_custom_call.1} parent=1 // loop_pre_header
      _
    $region3: #{tpu_custom_call.1} parent=1 // loop_header
      %s20 = sphi 0, %s24
      %p21 = scmp.ge.s32.totalorder %s20, 4
      %s27 = sphi 0, %s39
      %s28 = sphi 0, %s35
      %s29 = sphi 0, %s27
      %s30 = sphi 0, %s28
      %s31 = sphi 0, %s29
      %s32 = sphi 0, %s30
      %s42 = sphi 0, %s44
      %s45 = sphi 0, %s42
      %s46 = sphi 0, %s45
      %s62 = sphi 0, %s46
      %s66 = sphi 0, %s66
      %s68 = sphi 0, %s66
      %s69 = sphi 0, %s68
      %s83 = sphi 0, %s69
      %s87 = sphi 0, %s87
      %s89 = sphi 0, %s87
      %s90 = sphi 0, %s89
      %s104 = sphi 0, %s90
      %s108 = sphi 0, %s108
      %s110 = sphi 0, %s108
      %s111 = sphi 0, %s110
      %s125 = sphi 0, %s111
      %s129 = sphi 0, %s129
      %s131 = sphi 0, %s129
      %s132 = sphi 0, %s131
      %s146 = sphi 0, %s132
      %s150 = sphi 0, %s150
      %s152 = sphi 0, %s150
      %s153 = sphi 0, %s152
      %s167 = sphi 0, %s153
      %s171 = sphi 0, %s171
      %s173 = sphi 0, %s171
      %s174 = sphi 0, %s173
      %s188 = sphi 0, %s174
      %s196 = sphi 0, %s198
      %s199 = sphi 0, %s196
      %s200 = sphi 0, %s199
      %s216 = sphi 0, %s200
    $region4: #{tpu_custom_call.1} parent=1 // loop_header_branch
      %23 = sbr.rel (%p21) target = $region8
    $region5: #{tpu_custom_call.1} parent=1 // loop_body
      %s25 = ssub.s32 %s20, 1
      %s26 = ssub.s32 %s20, 2
      %s33 = sadd.s32 1, %s28
      %p34 = scmp.ge.s32.totalorder %s33, 1
      %s35 = scalar_select %p34, 0, %s33
      %s36 = sadd.s32 1, %s27
      %s37 = scalar_select %p34, %s36, %s27
      %p38 = scmp.ge.s32.totalorder %s37, 2
      %s39 = scalar_select %p38, 0, %s37
      %s40 = ssub.s32 %s27, %s39
      %p41 = scmp.eq.s32.totalorder %s40, 0
      %s43 = sadd.s32 %s42, 1
      %s44 = scalar_select %p41, %s42, %s43
      %p47 = pneg %p41
      %p48 = scmp.eq.s32.totalorder %s20, 1
      %p49 = por %p47, %p48
      %p50 = scmp.ne.s32.totalorder %s42, %s45
      %p51 = scmp.eq.s32.totalorder %s20, 0
      %p52 = por %p50, %p51
      %p53 = scmp.ne.s32.totalorder %s42, %s45
      %p54 = scmp.eq.s32.totalorder %s25, 1
      %p55 = por %p53, %p54
      %p56 = scmp.ne.s32.totalorder %s45, %s46
      %p57 = scmp.eq.s32.totalorder %s25, 0
      %p58 = por %p56, %p57
      %p59 = scmp.ne.s32.totalorder %s45, %s46
      %p60 = scmp.eq.s32.totalorder %s26, 1
      %p61 = por %p59, %p60
      %p63 = scmp.ne.s32.totalorder %s46, %s62
      %p64 = scmp.eq.s32.totalorder %s26, 0
      %p65 = por %p63, %p64
      %s67 = sadd.s32 %s66, 1
      %p70 = scmp.eq.s32.totalorder %s20, 1
      %p71 = scmp.ne.s32.totalorder %s66, %s68
      %p72 = scmp.eq.s32.totalorder %s20, 0
      %p73 = por %p71, %p72
      %p74 = scmp.ne.s32.totalorder %s66, %s68
      %p75 = scmp.eq.s32.totalorder %s25, 1
      %p76 = por %p74, %p75
      %p77 = scmp.ne.s32.totalorder %s68, %s69
      %p78 = scmp.eq.s32.totalorder %s25, 0
      %p79 = por %p77, %p78
      %p80 = scmp.ne.s32.totalorder %s68, %s69
      %p81 = scmp.eq.s32.totalorder %s26, 1
      %p82 = por %p80, %p81
      %p84 = scmp.ne.s32.totalorder %s69, %s83
      %p85 = scmp.eq.s32.totalorder %s26, 0
      %p86 = por %p84, %p85
      %s88 = sadd.s32 %s87, 1
      %p91 = scmp.eq.s32.totalorder %s20, 1
      %p92 = scmp.ne.s32.totalorder %s87, %s89
      %p93 = scmp.eq.s32.totalorder %s20, 0
      %p94 = por %p92, %p93
      %p95 = scmp.ne.s32.totalorder %s87, %s89
      %p96 = scmp.eq.s32.totalorder %s25, 1
      %p97 = por %p95, %p96
      %p98 = scmp.ne.s32.totalorder %s89, %s90
      %p99 = scmp.eq.s32.totalorder %s25, 0
      %p100 = por %p98, %p99
      %p101 = scmp.ne.s32.totalorder %s89, %s90
      %p102 = scmp.eq.s32.totalorder %s26, 1
      %p103 = por %p101, %p102
      %p105 = scmp.ne.s32.totalorder %s90, %s104
      %p106 = scmp.eq.s32.totalorder %s26, 0
      %p107 = por %p105, %p106
      %s109 = sadd.s32 %s108, 1
      %p112 = scmp.eq.s32.totalorder %s20, 1
      %p113 = scmp.ne.s32.totalorder %s108, %s110
      %p114 = scmp.eq.s32.totalorder %s20, 0
      %p115 = por %p113, %p114
      %p116 = scmp.ne.s32.totalorder %s108, %s110
      %p117 = scmp.eq.s32.totalorder %s25, 1
      %p118 = por %p116, %p117
      %p119 = scmp.ne.s32.totalorder %s110, %s111
      %p120 = scmp.eq.s32.totalorder %s25, 0
      %p121 = por %p119, %p120
      %p122 = scmp.ne.s32.totalorder %s110, %s111
      %p123 = scmp.eq.s32.totalorder %s26, 1
      %p124 = por %p122, %p123
      %p126 = scmp.ne.s32.totalorder %s111, %s125
      %p127 = scmp.eq.s32.totalorder %s26, 0
      %p128 = por %p126, %p127
      %s130 = sadd.s32 %s129, 1
      %p133 = scmp.eq.s32.totalorder %s20, 1
      %p134 = scmp.ne.s32.totalorder %s129, %s131
      %p135 = scmp.eq.s32.totalorder %s20, 0
      %p136 = por %p134, %p135
      %p137 = scmp.ne.s32.totalorder %s129, %s131
      %p138 = scmp.eq.s32.totalorder %s25, 1
      %p139 = por %p137, %p138
      %p140 = scmp.ne.s32.totalorder %s131, %s132
      %p141 = scmp.eq.s32.totalorder %s25, 0
      %p142 = por %p140, %p141
      %p143 = scmp.ne.s32.totalorder %s131, %s132
      %p144 = scmp.eq.s32.totalorder %s26, 1
      %p145 = por %p143, %p144
      %p147 = scmp.ne.s32.totalorder %s132, %s146
      %p148 = scmp.eq.s32.totalorder %s26, 0
      %p149 = por %p147, %p148
      %s151 = sadd.s32 %s150, 1
      %p154 = scmp.eq.s32.totalorder %s20, 1
      %p155 = scmp.ne.s32.totalorder %s150, %s152
      %p156 = scmp.eq.s32.totalorder %s20, 0
      %p157 = por %p155, %p156
      %p158 = scmp.ne.s32.totalorder %s150, %s152
      %p159 = scmp.eq.s32.totalorder %s25, 1
      %p160 = por %p158, %p159
      %p161 = scmp.ne.s32.totalorder %s152, %s153
      %p162 = scmp.eq.s32.totalorder %s25, 0
      %p163 = por %p161, %p162
      %p164 = scmp.ne.s32.totalorder %s152, %s153
      %p165 = scmp.eq.s32.totalorder %s26, 1
      %p166 = por %p164, %p165
      %p168 = scmp.ne.s32.totalorder %s153, %s167
      %p169 = scmp.eq.s32.totalorder %s26, 0
      %p170 = por %p168, %p169
      %s172 = sadd.s32 %s171, 1
      %p175 = scmp.eq.s32.totalorder %s20, 1
      %p176 = scmp.ne.s32.totalorder %s171, %s173
      %p177 = scmp.eq.s32.totalorder %s20, 0
      %p178 = por %p176, %p177
      %p179 = scmp.ne.s32.totalorder %s171, %s173
      %p180 = scmp.eq.s32.totalorder %s25, 1
      %p181 = por %p179, %p180
      %p182 = scmp.ne.s32.totalorder %s173, %s174
      %p183 = scmp.eq.s32.totalorder %s25, 0
      %p184 = por %p182, %p183
      %p185 = scmp.ne.s32.totalorder %s173, %s174
      %p186 = scmp.eq.s32.totalorder %s26, 1
      %p187 = por %p185, %p186
      %p189 = scmp.ne.s32.totalorder %s174, %s188
      %p190 = scmp.eq.s32.totalorder %s26, 0
      %p191 = por %p189, %p190
      %s192 = ssub.s32 %s27, %s39
      %s193 = ssub.s32 %s28, %s35
      %s194 = sor.u32 %s192, %s193
      %p195 = scmp.eq.s32.totalorder %s194, 0
      %s197 = sadd.s32 %s196, 1
      %s198 = scalar_select %p195, %s196, %s197
      %p201 = pneg %p195
      %p202 = scmp.eq.s32.totalorder %s20, 1
      %p203 = por %p201, %p202
      %p204 = scmp.ne.s32.totalorder %s196, %s199
      %p205 = scmp.eq.s32.totalorder %s20, 0
      %p206 = por %p204, %p205
      %p207 = scmp.ne.s32.totalorder %s196, %s199
      %p208 = scmp.eq.s32.totalorder %s25, 1
      %p209 = por %p207, %p208
      %p210 = scmp.ne.s32.totalorder %s199, %s200
      %p211 = scmp.eq.s32.totalorder %s25, 0
      %p212 = por %p210, %p211
      %p213 = scmp.ne.s32.totalorder %s199, %s200
      %p214 = scmp.eq.s32.totalorder %s26, 1
      %p215 = por %p213, %p214
      %p217 = scmp.ne.s32.totalorder %s200, %s216
      %p218 = scmp.eq.s32.totalorder %s26, 0
      %p219 = por %p217, %p218
      %p220 = scmp.le.s32.totalorder 1, %s20
      %p221 = scmp.lt.s32.totalorder %s20, 3
      %p222 = pnand %p220, %p221
      %p223 = pneg %p222
      // Predicated region
      $region9: #{tpu_custom_call.1} parent=5 // pred_check
        _
      $region10: #{tpu_custom_call.1} parent=5 // pred_check_branch
        %225 = sbr.rel (%p222) target = $region12
      $region11: #{tpu_custom_call.1} parent=5 // pred_region
        %s226 = ssub.s32 %s20, 1
        // Predicated region
        $region13: #{tpu_custom_call.1} parent=11 // pred_check
          %p227 = pneg %p79
        $region14: #{tpu_custom_call.1} parent=11 // pred_check_branch
          %229 = sbr.rel (%p227) target = $region16
        $region15: #{tpu_custom_call.1} parent=11 // pred_region
          %s231 = ssub.s32 9216, 9216
          %232 = vsyncadd [#allocation7], %s231
          %s233 = sshll.u32 [#allocation6], 4
          %s234 = int_to_ptr.vmem [resolvable:$true] %s233
          %239 = dma.hbm_to_vmem [thread:$0]  %s1, 9216, %s234, [#allocation7], 64, 64, 4
        $region16: #{tpu_custom_call.1} parent=11 // pred_fallthru
          _
        // Predicated region
        $region17: #{tpu_custom_call.1} parent=11 // pred_check
          %p240 = pneg %p100
        $region18: #{tpu_custom_call.1} parent=11 // pred_check_branch
          %242 = sbr.rel (%p240) target = $region20
        $region19: #{tpu_custom_call.1} parent=11 // pred_region
          _
        $region20: #{tpu_custom_call.1} parent=11 // pred_fallthru
          _
        // Predicated region
        $region21: #{tpu_custom_call.1} parent=11 // pred_check
          %p243 = pneg %p121
        $region22: #{tpu_custom_call.1} parent=11 // pred_check_branch
          %245 = sbr.rel (%p243) target = $region24
        $region23: #{tpu_custom_call.1} parent=11 // pred_region
          _
        $region24: #{tpu_custom_call.1} parent=11 // pred_fallthru
          _
        // Predicated region
        $region25: #{tpu_custom_call.1} parent=11 // pred_check
          %p246 = pneg %p142
        $region26: #{tpu_custom_call.1} parent=11 // pred_check_branch
          %248 = sbr.rel (%p246) target = $region28
        $region27: #{tpu_custom_call.1} parent=11 // pred_region
          %s250 = ssub.s32 9216, 9216
          %251 = vsyncadd [#allocation7], %s250
          %s252 = sshll.u32 [#allocation8], 4
          %s253 = int_to_ptr.vmem [resolvable:$true] %s252
          %258 = dma.hbm_to_vmem [thread:$0]  %s4, 9216, %s253, [#allocation7], 64, 64, 4
        $region28: #{tpu_custom_call.1} parent=11 // pred_fallthru
          _
        // Predicated region
        $region29: #{tpu_custom_call.1} parent=11 // pred_check
          %p259 = pneg %p163
        $region30: #{tpu_custom_call.1} parent=11 // pred_check_branch
          %261 = sbr.rel (%p259) target = $region32
        $region31: #{tpu_custom_call.1} parent=11 // pred_region
          _
        $region32: #{tpu_custom_call.1} parent=11 // pred_fallthru
          _
        // Predicated region
        $region33: #{tpu_custom_call.1} parent=11 // pred_check
          %p262 = pneg %p184
        $region34: #{tpu_custom_call.1} parent=11 // pred_check_branch
          %264 = sbr.rel (%p262) target = $region36
        $region35: #{tpu_custom_call.1} parent=11 // pred_region
          _
        $region36: #{tpu_custom_call.1} parent=11 // pred_fallthru
          _
      $region12: #{tpu_custom_call.1} parent=5 // pred_fallthru
        _
      %p265 = scmp.lt.s32.totalorder %s20, 2
      // Predicated region
      $region37: #{tpu_custom_call.1} parent=5 // pred_check
        %p266 = pneg %p265
      $region38: #{tpu_custom_call.1} parent=5 // pred_check_branch
        %268 = sbr.rel (%p266) target = $region40
      $region39: #{tpu_custom_call.1} parent=5 // pred_region
        // Predicated region
        $region41: #{tpu_custom_call.1} parent=39 // pred_check
          %p269 = pneg %p52
        $region42: #{tpu_custom_call.1} parent=39 // pred_check_branch
          %271 = sbr.rel (%p269) target = $region44
        $region43: #{tpu_custom_call.1} parent=39 // pred_region
          %s272 = sand.u32 %s42, 1
          %s273 = scalar_lea.sflag [#allocation4], %s272
          %s274 = sand.u32 %s42, 1
          %s275 = smul.addr %s274, 240
          %s276 = scalar_lea.vmem [#allocation3], %s275
          %s278 = ssub.s32 3840, 3840
          %279 = vsyncadd %s273, %s278
          %s280 = smul.addr %s27, 60
          %s281 = smul.addr %s280, 64
          %s282 = scalar_lea.hbm %s0, %s281
          %s283 = sshll.u32 %s276, 4
          %s284 = int_to_ptr.vmem [resolvable:$true] %s283
          %289 = dma.hbm_to_vmem [thread:$0]  %s282, 3840, %s284, %s273, 64, 64, 4
        $region44: #{tpu_custom_call.1} parent=39 // pred_fallthru
          _
      $region40: #{tpu_custom_call.1} parent=5 // pred_fallthru
        _
      %p290 = scmp.le.s32.totalorder 1, %s20
      %p291 = scmp.lt.s32.totalorder %s20, 3
      %p292 = pnand %p290, %p291
      %p293 = pneg %p292
      // Predicated region
      $region45: #{tpu_custom_call.1} parent=5 // pred_check
        _
      $region46: #{tpu_custom_call.1} parent=5 // pred_check_branch
        %295 = sbr.rel (%p292) target = $region48
      $region47: #{tpu_custom_call.1} parent=5 // pred_region
        %s296 = ssub.s32 %s20, 1
        %s297 = sand.u32 %s45, 1
        %s298 = scalar_lea.sflag [#allocation4], %s297
        %s299 = sand.u32 %s45, 1
        %s300 = smul.addr %s299, 240
        %s301 = scalar_lea.vmem [#allocation3], %s300
        // Predicated region
        $region49: #{tpu_custom_call.1} parent=47 // pred_check
          %p302 = pneg %p58
        $region50: #{tpu_custom_call.1} parent=47 // pred_check_branch
          %304 = sbr.rel (%p302) target = $region52
        $region51: #{tpu_custom_call.1} parent=47 // pred_region
          %305 = dma.done %s298, 3840
        $region52: #{tpu_custom_call.1} parent=47 // pred_fallthru
          _
        // Predicated region
        $region53: #{tpu_custom_call.1} parent=47 // pred_check
          %p306 = pneg %p79
        $region54: #{tpu_custom_call.1} parent=47 // pred_check_branch
          %308 = sbr.rel (%p306) target = $region56
        $region55: #{tpu_custom_call.1} parent=47 // pred_region
          %309 = dma.done [#allocation7], 9216
        $region56: #{tpu_custom_call.1} parent=47 // pred_fallthru
          _
        // Predicated region
        $region57: #{tpu_custom_call.1} parent=47 // pred_check
          %p310 = pneg %p142
        $region58: #{tpu_custom_call.1} parent=47 // pred_check_branch
          %312 = sbr.rel (%p310) target = $region60
        $region59: #{tpu_custom_call.1} parent=47 // pred_region
          %313 = dma.done [#allocation7], 9216
        $region60: #{tpu_custom_call.1} parent=47 // pred_fallthru
          _
        %s314 = sand.u32 %s45, 1
        %s315 = scalar_lea.sflag [#allocation4], %s314
        %s316 = sand.u32 %s45, 1
        %s317 = smul.addr %s316, 240
        %s318 = scalar_lea.vmem [#allocation3], %s317
        %p319 = pneg %p58
        %p320 = pneg %p55
        %p321 = pneg %p79
        %p322 = pneg %p76
        %p323 = pneg %p100
        %p324 = pneg %p97
        %p325 = pneg %p121
        %p326 = pneg %p118
        %p327 = pneg %p142
        %p328 = pneg %p139
        %p329 = pneg %p163
        %p330 = pneg %p160
        %p331 = pneg %p184
        %p332 = pneg %p181
        %p333 = pneg %p212
        %p334 = pneg %p209
        %s335 = sand.u32 %s199, 1
        %s336 = scalar_lea.sflag [#allocation5], %s335
        %s337 = sand.u32 %s199, 1
        %s338 = smul.addr %s337, 128
        %s339 = scalar_lea.vmem [#allocation9], %s338
        %s340 = smul.u32 16, %s30
        %s342 = smul.u32 %s30, 16
        %vm343 = vcmask 1040384
        %vm344 = vsmask.f32 256
        %vm345 = vmand %vm343, %vm344
        %v346 = vld [vmem:[#allocation2] sm:$0x1]
        %v347 = vsel %vm345, 0, %v346
        %348 = vst [vmem:[#allocation2] sm:$0x1] %v347
        %v349 = vld [vmem:[#allocation2 + $0xc] sm:$0x1]
        %v350 = vsel %vm345, 0, %v349
        %351 = vst [vmem:[#allocation2 + $0xc] sm:$0x1] %v350
        %v352 = vld [vmem:[#allocation2 + $0x18] sm:$0x1]
        %v353 = vsel %vm345, 0, %v352
        %354 = vst [vmem:[#allocation2 + $0x18] sm:$0x1] %v353
        %v355 = vld [vmem:[#allocation2 + $0x24] sm:$0x1]
        %v356 = vsel %vm345, 0, %v355
        %357 = vst [vmem:[#allocation2 + $0x24] sm:$0x1] %v356
        %v358 = vld [vmem:[#allocation2 + $0x30] sm:$0x1]
        %v359 = vsel %vm345, 0, %v358
        %360 = vst [vmem:[#allocation2 + $0x30] sm:$0x1] %v359
        %v361 = vld [vmem:[#allocation2 + $0x3c] sm:$0x1]
        %v362 = vsel %vm345, 0, %v361
        %363 = vst [vmem:[#allocation2 + $0x3c] sm:$0x1] %v362
        %v364 = vld [vmem:[#allocation2 + $0x48] sm:$0x1]
        %v365 = vsel %vm345, 0, %v364
        %366 = vst [vmem:[#allocation2 + $0x48] sm:$0x1] %v365
        %v367 = vld [vmem:[#allocation2 + $0x54] sm:$0x1]
        %v368 = vsel %vm345, 0, %v367
        %369 = vst [vmem:[#allocation2 + $0x54] sm:$0x1] %v368
        %v370 = vld [vmem:[#allocation2 + $0x60] sm:$0x1]
        %v371 = vsel %vm345, 0, %v370
        %372 = vst [vmem:[#allocation2 + $0x60] sm:$0x1] %v371
        %v373 = vld [vmem:[#allocation2 + $0x6c] sm:$0x1]
        %v374 = vsel %vm345, 0, %v373
        %375 = vst [vmem:[#allocation2 + $0x6c] sm:$0x1] %v374
        %v376 = vld [vmem:[#allocation2 + $0x78] sm:$0x1]
        %v377 = vsel %vm345, 0, %v376
        %378 = vst [vmem:[#allocation2 + $0x78] sm:$0x1] %v377
        %v379 = vld [vmem:[#allocation2 + $0x84] sm:$0x1]
        %v380 = vsel %vm345, 0, %v379
        %381 = vst [vmem:[#allocation2 + $0x84] sm:$0x1] %v380
        %v382 = vld [vmem:[#allocation2 + $0x90] sm:$0x1]
        %v383 = vsel %vm345, 0, %v382
        %384 = vst [vmem:[#allocation2 + $0x90] sm:$0x1] %v383
        %v385 = vld [vmem:[#allocation2 + $0x9c] sm:$0x1]
        %v386 = vsel %vm345, 0, %v385
        %387 = vst [vmem:[#allocation2 + $0x9c] sm:$0x1] %v386
        %v388 = vld [vmem:[#allocation2 + $0xa8] sm:$0x1]
        %v389 = vsel %vm345, 0, %v388
        %390 = vst [vmem:[#allocation2 + $0xa8] sm:$0x1] %v389
        %v391 = vld [vmem:[#allocation2 + $0xb4] sm:$0x1]
        %v392 = vsel %vm345, 0, %v391
        %393 = vst [vmem:[#allocation2 + $0xb4] sm:$0x1] %v392
        %v394 = vld [vmem:[#allocation2 + $0xc0] sm:$0x1]
        %v395 = vsel %vm345, 0, %v394
        %396 = vst [vmem:[#allocation2 + $0xc0] sm:$0x1] %v395
        %v397 = vld [vmem:[#allocation2 + $0xcc] sm:$0x1]
        %v398 = vsel %vm345, 0, %v397
        %399 = vst [vmem:[#allocation2 + $0xcc] sm:$0x1] %v398
        %vm400 = vsmask.f32 7938
        %vm401 = vmand %vm343, %vm400
        %v402 = vld [vmem:[#allocation2 + $0x8] sm:$0x1]
        %v403 = vsel %vm401, 0, %v402
        %404 = vst [vmem:[#allocation2 + $0x8] sm:$0x1] %v403
        %v405 = vld [vmem:[#allocation2 + $0x14] sm:$0x1]
        %v406 = vsel %vm401, 0, %v405
        %407 = vst [vmem:[#allocation2 + $0x14] sm:$0x1] %v406
        %v408 = vld [vmem:[#allocation2 + $0x20] sm:$0x1]
        %v409 = vsel %vm401, 0, %v408
        %410 = vst [vmem:[#allocation2 + $0x20] sm:$0x1] %v409
        %v411 = vld [vmem:[#allocation2 + $0x2c] sm:$0x1]
        %v412 = vsel %vm401, 0, %v411
        %413 = vst [vmem:[#allocation2 + $0x2c] sm:$0x1] %v412
        %v414 = vld [vmem:[#allocation2 + $0x38] sm:$0x1]
        %v415 = vsel %vm401, 0, %v414
        %416 = vst [vmem:[#allocation2 + $0x38] sm:$0x1] %v415
        %v417 = vld [vmem:[#allocation2 + $0x44] sm:$0x1]
        %v418 = vsel %vm401, 0, %v417
        %419 = vst [vmem:[#allocation2 + $0x44] sm:$0x1] %v418
        %v420 = vld [vmem:[#allocation2 + $0x50] sm:$0x1]
        %v421 = vsel %vm401, 0, %v420
        %422 = vst [vmem:[#allocation2 + $0x50] sm:$0x1] %v421
        %v423 = vld [vmem:[#allocation2 + $0x5c] sm:$0x1]
        %v424 = vsel %vm401, 0, %v423
        %425 = vst [vmem:[#allocation2 + $0x5c] sm:$0x1] %v424
        %v426 = vld [vmem:[#allocation2 + $0x68] sm:$0x1]
        %v427 = vsel %vm401, 0, %v426
        %428 = vst [vmem:[#allocation2 + $0x68] sm:$0x1] %v427
        %v429 = vld [vmem:[#allocation2 + $0x74] sm:$0x1]
        %v430 = vsel %vm401, 0, %v429
        %431 = vst [vmem:[#allocation2 + $0x74] sm:$0x1] %v430
        %v432 = vld [vmem:[#allocation2 + $0x80] sm:$0x1]
        %v433 = vsel %vm401, 0, %v432
        %434 = vst [vmem:[#allocation2 + $0x80] sm:$0x1] %v433
        %v435 = vld [vmem:[#allocation2 + $0x8c] sm:$0x1]
        %v436 = vsel %vm401, 0, %v435
        %437 = vst [vmem:[#allocation2 + $0x8c] sm:$0x1] %v436
        %v438 = vld [vmem:[#allocation2 + $0x98] sm:$0x1]
        %v439 = vsel %vm401, 0, %v438
        %440 = vst [vmem:[#allocation2 + $0x98] sm:$0x1] %v439
        %v441 = vld [vmem:[#allocation2 + $0xa4] sm:$0x1]
        %v442 = vsel %vm401, 0, %v441
        %443 = vst [vmem:[#allocation2 + $0xa4] sm:$0x1] %v442
        %v444 = vld [vmem:[#allocation2 + $0xb0] sm:$0x1]
        %v445 = vsel %vm401, 0, %v444
        %446 = vst [vmem:[#allocation2 + $0xb0] sm:$0x1] %v445
        %v447 = vld [vmem:[#allocation2 + $0xbc] sm:$0x1]
        %v448 = vsel %vm401, 0, %v447
        %449 = vst [vmem:[#allocation2 + $0xbc] sm:$0x1] %v448
        %v450 = vld [vmem:[#allocation2 + $0xc8] sm:$0x1]
        %v451 = vsel %vm401, 0, %v450
        %452 = vst [vmem:[#allocation2 + $0xc8] sm:$0x1] %v451
        %v453 = vld [vmem:[#allocation2 + $0xd4] sm:$0x1]
        %v454 = vsel %vm401, 0, %v453
        %455 = vst [vmem:[#allocation2 + $0xd4] sm:$0x1] %v454
        %s456 = smul.u32 %s342, 3
        %s457 = smul.addr %s456, 4
        %s458 = scalar_lea.vmem %s301, %s457 [#allocation3]
        %v459 = vld [vmem:[%s458] sm:$0xf]
        %v460 = vld [vmem:[%s458 + $0x4] sm:$0xf]
        %v461 = vld [vmem:[%s458 + $0xc] sm:$0xf]
        %v462 = vld [vmem:[%s458 + $0x10] sm:$0xf]
        %v463 = vld [vmem:[%s458 + $0x18] sm:$0xf]
        %v464 = vld [vmem:[%s458 + $0x1c] sm:$0xf]
        %v465 = vld [vmem:[%s458 + $0x24] sm:$0xf]
        %v466 = vld [vmem:[%s458 + $0x28] sm:$0xf]
        %v467 = vld [vmem:[%s458 + $0x30] sm:$0xf]
        %v468 = vld [vmem:[%s458 + $0x34] sm:$0xf]
        %v469 = vld [vmem:[%s458 + $0x3c] sm:$0xf]
        %v470 = vld [vmem:[%s458 + $0x40] sm:$0xf]
        %v471 = vld [vmem:[%s458 + $0x48] sm:$0xf]
        %v472 = vld [vmem:[%s458 + $0x4c] sm:$0xf]
        %v473 = vld [vmem:[%s458 + $0x54] sm:$0xf]
        %v474 = vld [vmem:[%s458 + $0x58] sm:$0xf]
        %v475 = vld [vmem:[%s458 + $0x60] sm:$0xf]
        %v476 = vld [vmem:[%s458 + $0x64] sm:$0xf]
        %v477 = vld [vmem:[%s458 + $0x6c] sm:$0xf]
        %v478 = vld [vmem:[%s458 + $0x70] sm:$0xf]
        %v479 = vld [vmem:[%s458 + $0x78] sm:$0xf]
        %v480 = vld [vmem:[%s458 + $0x7c] sm:$0xf]
        %v481 = vld [vmem:[%s458 + $0x84] sm:$0xf]
        %v482 = vld [vmem:[%s458 + $0x88] sm:$0xf]
        %v483 = vld [vmem:[%s458 + $0x90] sm:$0xf]
        %v484 = vld [vmem:[%s458 + $0x94] sm:$0xf]
        %v485 = vld [vmem:[%s458 + $0x9c] sm:$0xf]
        %v486 = vld [vmem:[%s458 + $0xa0] sm:$0xf]
        %v487 = vld [vmem:[%s458 + $0xa8] sm:$0xf]
        %v488 = vld [vmem:[%s458 + $0xac] sm:$0xf]
        %v489 = vld [vmem:[%s458 + $0xb4] sm:$0xf]
        %v490 = vld [vmem:[%s458 + $0xb8] sm:$0xf]
        %v491 = vld [vmem:[%s458 + $0xc0] sm:$0xf]
        %v492 = vld [vmem:[%s458 + $0xc4] sm:$0xf]
        %v493 = vld [vmem:[%s458 + $0xcc] sm:$0xf]
        %v494 = vld [vmem:[%s458 + $0xd0] sm:$0xf]
        %v495 = vld [vmem:[%s458 + $0x8] sm:$0x1]
        %v496 = vld [vmem:[%s458 + $0x14] sm:$0x1]
        %v497 = vld [vmem:[%s458 + $0x20] sm:$0x1]
        %v498 = vld [vmem:[%s458 + $0x2c] sm:$0x1]
        %v499 = vld [vmem:[%s458 + $0x38] sm:$0x1]
        %v500 = vld [vmem:[%s458 + $0x44] sm:$0x1]
        %v501 = vld [vmem:[%s458 + $0x50] sm:$0x1]
        %v502 = vld [vmem:[%s458 + $0x5c] sm:$0x1]
        %v503 = vld [vmem:[%s458 + $0x68] sm:$0x1]
        %v504 = vld [vmem:[%s458 + $0x74] sm:$0x1]
        %v505 = vld [vmem:[%s458 + $0x80] sm:$0x1]
        %v506 = vld [vmem:[%s458 + $0x8c] sm:$0x1]
        %v507 = vld [vmem:[%s458 + $0x98] sm:$0x1]
        %v508 = vld [vmem:[%s458 + $0xa4] sm:$0x1]
        %v509 = vld [vmem:[%s458 + $0xb0] sm:$0x1]
        %v510 = vld [vmem:[%s458 + $0xbc] sm:$0x1]
        %v511 = vld [vmem:[%s458 + $0xc8] sm:$0x1]
        %v512 = vld [vmem:[%s458 + $0xd4] sm:$0x1]
        %v513 = vld [vmem:[%s458] sm:$0xe]
        %v514 = vld [vmem:[%s458 + $0xc] sm:$0xe]
        %v515 = vld [vmem:[%s458 + $0x18] sm:$0xe]
        %v516 = vld [vmem:[%s458 + $0x24] sm:$0xe]
        %v517 = vld [vmem:[%s458 + $0x30] sm:$0xe]
        %v518 = vld [vmem:[%s458 + $0x3c] sm:$0xe]
        %v519 = vld [vmem:[%s458 + $0x48] sm:$0xe]
        %v520 = vld [vmem:[%s458 + $0x54] sm:$0xe]
        %v521 = vld [vmem:[%s458 + $0x60] sm:$0xe]
        %v522 = vld [vmem:[%s458 + $0x6c] sm:$0xe]
        %v523 = vld [vmem:[%s458 + $0x78] sm:$0xe]
        %v524 = vld [vmem:[%s458 + $0x84] sm:$0xe]
        %v525 = vld [vmem:[%s458 + $0x90] sm:$0xe]
        %v526 = vld [vmem:[%s458 + $0x9c] sm:$0xe]
        %v527 = vld [vmem:[%s458 + $0xa8] sm:$0xe]
        %v528 = vld [vmem:[%s458 + $0xb4] sm:$0xe]
        %v529 = vld [vmem:[%s458 + $0xc0] sm:$0xe]
        %v530 = vld [vmem:[%s458 + $0xcc] sm:$0xe]
        %v567 = vunpack.c.l.b16 %v459
        %v568 = vunpack.c.l.b16 %v460
        %v569 = vunpack.c.l.b16 %v461
        %v570 = vunpack.c.l.b16 %v462
        %v571 = vunpack.c.l.b16 %v463
        %v572 = vunpack.c.l.b16 %v464
        %v573 = vunpack.c.l.b16 %v465
        %v574 = vunpack.c.l.b16 %v466
        %v575 = vunpack.c.l.b16 %v467
        %v576 = vunpack.c.l.b16 %v468
        %v577 = vunpack.c.l.b16 %v469
        %v578 = vunpack.c.l.b16 %v470
        %v579 = vunpack.c.l.b16 %v471
        %v580 = vunpack.c.l.b16 %v472
        %v581 = vunpack.c.l.b16 %v473
        %v582 = vunpack.c.l.b16 %v474
        %v583 = vunpack.c.l.b16 %v475
        %v584 = vunpack.c.l.b16 %v476
        %v585 = vunpack.c.l.b16 %v477
        %v586 = vunpack.c.l.b16 %v478
        %v587 = vunpack.c.l.b16 %v479
        %v588 = vunpack.c.l.b16 %v480
        %v589 = vunpack.c.l.b16 %v481
        %v590 = vunpack.c.l.b16 %v482
        %v591 = vunpack.c.l.b16 %v483
        %v592 = vunpack.c.l.b16 %v484
        %v593 = vunpack.c.l.b16 %v485
        %v594 = vunpack.c.l.b16 %v486
        %v595 = vunpack.c.l.b16 %v487
        %v596 = vunpack.c.l.b16 %v488
        %v597 = vunpack.c.l.b16 %v489
        %v598 = vunpack.c.l.b16 %v490
        %v599 = vunpack.c.l.b16 %v491
        %v600 = vunpack.c.l.b16 %v492
        %v601 = vunpack.c.l.b16 %v493
        %v602 = vunpack.c.l.b16 %v494
        %v603 = vpack.c.b16 %v568, %v567
        %v604 = vpack.c.b16 %v570, %v569
        %v605 = vpack.c.b16 %v572, %v571
        %v606 = vpack.c.b16 %v574, %v573
        %v607 = vpack.c.b16 %v576, %v575
        %v608 = vpack.c.b16 %v578, %v577
        %v609 = vpack.c.b16 %v580, %v579
        %v610 = vpack.c.b16 %v582, %v581
        %v611 = vpack.c.b16 %v584, %v583
        %v612 = vpack.c.b16 %v586, %v585
        %v613 = vpack.c.b16 %v588, %v587
        %v614 = vpack.c.b16 %v590, %v589
        %v615 = vpack.c.b16 %v592, %v591
        %v616 = vpack.c.b16 %v594, %v593
        %v617 = vpack.c.b16 %v596, %v595
        %v618 = vpack.c.b16 %v598, %v597
        %v619 = vpack.c.b16 %v600, %v599
        %v620 = vpack.c.b16 %v602, %v601
        %v657 = vunpack.c.l.b16 %v495
        %v658 = vunpack.c.l.b16 %v496
        %v659 = vunpack.c.l.b16 %v497
        %v660 = vunpack.c.l.b16 %v498
        %v661 = vunpack.c.l.b16 %v499
        %v662 = vunpack.c.l.b16 %v500
        %v663 = vunpack.c.l.b16 %v501
        %v664 = vunpack.c.l.b16 %v502
        %v665 = vunpack.c.l.b16 %v503
        %v666 = vunpack.c.l.b16 %v504
        %v667 = vunpack.c.l.b16 %v505
        %v668 = vunpack.c.l.b16 %v506
        %v669 = vunpack.c.l.b16 %v507
        %v670 = vunpack.c.l.b16 %v508
        %v671 = vunpack.c.l.b16 %v509
        %v672 = vunpack.c.l.b16 %v510
        %v673 = vunpack.c.l.b16 %v511
        %v674 = vunpack.c.l.b16 %v512
        %v675 = vpack.c.b16 %v657, %v657
        %v676 = vpack.c.b16 %v658, %v658
        %v677 = vpack.c.b16 %v659, %v659
        %v678 = vpack.c.b16 %v660, %v660
        %v679 = vpack.c.b16 %v661, %v661
        %v680 = vpack.c.b16 %v662, %v662
        %v681 = vpack.c.b16 %v663, %v663
        %v682 = vpack.c.b16 %v664, %v664
        %v683 = vpack.c.b16 %v665, %v665
        %v684 = vpack.c.b16 %v666, %v666
        %v685 = vpack.c.b16 %v667, %v667
        %v686 = vpack.c.b16 %v668, %v668
        %v687 = vpack.c.b16 %v669, %v669
        %v688 = vpack.c.b16 %v670, %v670
        %v689 = vpack.c.b16 %v671, %v671
        %v690 = vpack.c.b16 %v672, %v672
        %v691 = vpack.c.b16 %v673, %v673
        %v692 = vpack.c.b16 %v674, %v674
        %vm693 = vsmask.f32 7424
        %v695 = vshrl.u32 %v603, 16
        %v697 = vshll.u32 %v603, 16
        %v699 = vrot.slane %v697, 1
        %v700 = vor.u32 %v695, %v699
        %v702 = vshll.u32 %v675, 16
        %v704 = vrot.slane %v702, 1
        %v705 = vsel %vm693, %v700, %v704
        %v707 = vshrl.u32 %v604, 16
        %v709 = vshll.u32 %v604, 16
        %v711 = vrot.slane %v709, 1
        %v712 = vor.u32 %v707, %v711
        %v714 = vshll.u32 %v676, 16
        %v716 = vrot.slane %v714, 1
        %v717 = vsel %vm693, %v712, %v716
        %v719 = vshrl.u32 %v605, 16
        %v721 = vshll.u32 %v605, 16
        %v723 = vrot.slane %v721, 1
        %v724 = vor.u32 %v719, %v723
        %v726 = vshll.u32 %v677, 16
        %v728 = vrot.slane %v726, 1
        %v729 = vsel %vm693, %v724, %v728
        %v731 = vshrl.u32 %v606, 16
        %v733 = vshll.u32 %v606, 16
        %v735 = vrot.slane %v733, 1
        %v736 = vor.u32 %v731, %v735
        %v738 = vshll.u32 %v678, 16
        %v740 = vrot.slane %v738, 1
        %v741 = vsel %vm693, %v736, %v740
        %v743 = vshrl.u32 %v607, 16
        %v745 = vshll.u32 %v607, 16
        %v747 = vrot.slane %v745, 1
        %v748 = vor.u32 %v743, %v747
        %v750 = vshll.u32 %v679, 16
        %v752 = vrot.slane %v750, 1
        %v753 = vsel %vm693, %v748, %v752
        %v755 = vshrl.u32 %v608, 16
        %v757 = vshll.u32 %v608, 16
        %v759 = vrot.slane %v757, 1
        %v760 = vor.u32 %v755, %v759
        %v762 = vshll.u32 %v680, 16
        %v764 = vrot.slane %v762, 1
        %v765 = vsel %vm693, %v760, %v764
        %v767 = vshrl.u32 %v609, 16
        %v769 = vshll.u32 %v609, 16
        %v771 = vrot.slane %v769, 1
        %v772 = vor.u32 %v767, %v771
        %v774 = vshll.u32 %v681, 16
        %v776 = vrot.slane %v774, 1
        %v777 = vsel %vm693, %v772, %v776
        %v779 = vshrl.u32 %v610, 16
        %v781 = vshll.u32 %v610, 16
        %v783 = vrot.slane %v781, 1
        %v784 = vor.u32 %v779, %v783
        %v786 = vshll.u32 %v682, 16
        %v788 = vrot.slane %v786, 1
        %v789 = vsel %vm693, %v784, %v788
        %v791 = vshrl.u32 %v611, 16
        %v793 = vshll.u32 %v611, 16
        %v795 = vrot.slane %v793, 1
        %v796 = vor.u32 %v791, %v795
        %v798 = vshll.u32 %v683, 16
        %v800 = vrot.slane %v798, 1
        %v801 = vsel %vm693, %v796, %v800
        %v803 = vshrl.u32 %v612, 16
        %v805 = vshll.u32 %v612, 16
        %v807 = vrot.slane %v805, 1
        %v808 = vor.u32 %v803, %v807
        %v810 = vshll.u32 %v684, 16
        %v812 = vrot.slane %v810, 1
        %v813 = vsel %vm693, %v808, %v812
        %v815 = vshrl.u32 %v613, 16
        %v817 = vshll.u32 %v613, 16
        %v819 = vrot.slane %v817, 1
        %v820 = vor.u32 %v815, %v819
        %v822 = vshll.u32 %v685, 16
        %v824 = vrot.slane %v822, 1
        %v825 = vsel %vm693, %v820, %v824
        %v827 = vshrl.u32 %v614, 16
        %v829 = vshll.u32 %v614, 16
        %v831 = vrot.slane %v829, 1
        %v832 = vor.u32 %v827, %v831
        %v834 = vshll.u32 %v686, 16
        %v836 = vrot.slane %v834, 1
        %v837 = vsel %vm693, %v832, %v836
        %v839 = vshrl.u32 %v615, 16
        %v841 = vshll.u32 %v615, 16
        %v843 = vrot.slane %v841, 1
        %v844 = vor.u32 %v839, %v843
        %v846 = vshll.u32 %v687, 16
        %v848 = vrot.slane %v846, 1
        %v849 = vsel %vm693, %v844, %v848
        %v851 = vshrl.u32 %v616, 16
        %v853 = vshll.u32 %v616, 16
        %v855 = vrot.slane %v853, 1
        %v856 = vor.u32 %v851, %v855
        %v858 = vshll.u32 %v688, 16
        %v860 = vrot.slane %v858, 1
        %v861 = vsel %vm693, %v856, %v860
        %v863 = vshrl.u32 %v617, 16
        %v865 = vshll.u32 %v617, 16
        %v867 = vrot.slane %v865, 1
        %v868 = vor.u32 %v863, %v867
        %v870 = vshll.u32 %v689, 16
        %v872 = vrot.slane %v870, 1
        %v873 = vsel %vm693, %v868, %v872
        %v875 = vshrl.u32 %v618, 16
        %v877 = vshll.u32 %v618, 16
        %v879 = vrot.slane %v877, 1
        %v880 = vor.u32 %v875, %v879
        %v882 = vshll.u32 %v690, 16
        %v884 = vrot.slane %v882, 1
        %v885 = vsel %vm693, %v880, %v884
        %v887 = vshrl.u32 %v619, 16
        %v889 = vshll.u32 %v619, 16
        %v891 = vrot.slane %v889, 1
        %v892 = vor.u32 %v887, %v891
        %v894 = vshll.u32 %v691, 16
        %v896 = vrot.slane %v894, 1
        %v897 = vsel %vm693, %v892, %v896
        %v899 = vshrl.u32 %v620, 16
        %v901 = vshll.u32 %v620, 16
        %v903 = vrot.slane %v901, 1
        %v904 = vor.u32 %v899, %v903
        %v906 = vshll.u32 %v692, 16
        %v908 = vrot.slane %v906, 1
        %v909 = vsel %vm693, %v904, %v908
        %v946 = vunpack.c.l.b16 %v513
        %v947 = vunpack.c.l.b16 %v514
        %v948 = vunpack.c.l.b16 %v515
        %v949 = vunpack.c.l.b16 %v516
        %v950 = vunpack.c.l.b16 %v517
        %v951 = vunpack.c.l.b16 %v518
        %v952 = vunpack.c.l.b16 %v519
        %v953 = vunpack.c.l.b16 %v520
        %v954 = vunpack.c.l.b16 %v521
        %v955 = vunpack.c.l.b16 %v522
        %v956 = vunpack.c.l.b16 %v523
        %v957 = vunpack.c.l.b16 %v524
        %v958 = vunpack.c.l.b16 %v525
        %v959 = vunpack.c.l.b16 %v526
        %v960 = vunpack.c.l.b16 %v527
        %v961 = vunpack.c.l.b16 %v528
        %v962 = vunpack.c.l.b16 %v529
        %v963 = vunpack.c.l.b16 %v530
        %v964 = vpack.c.b16 %v568, %v946
        %v965 = vpack.c.b16 %v570, %v947
        %v966 = vpack.c.b16 %v572, %v948
        %v967 = vpack.c.b16 %v574, %v949
        %v968 = vpack.c.b16 %v576, %v950
        %v969 = vpack.c.b16 %v578, %v951
        %v970 = vpack.c.b16 %v580, %v952
        %v971 = vpack.c.b16 %v582, %v953
        %v972 = vpack.c.b16 %v584, %v954
        %v973 = vpack.c.b16 %v586, %v955
        %v974 = vpack.c.b16 %v588, %v956
        %v975 = vpack.c.b16 %v590, %v957
        %v976 = vpack.c.b16 %v592, %v958
        %v977 = vpack.c.b16 %v594, %v959
        %v978 = vpack.c.b16 %v596, %v960
        %v979 = vpack.c.b16 %v598, %v961
        %v980 = vpack.c.b16 %v600, %v962
        %v981 = vpack.c.b16 %v602, %v963
        %vm982 = vcmask 1046528
        %v983 = vrot.slane %v964, 1
        %v984 = vrot.slane %v675, 1
        %v985 = vsel %vm982, %v983, %v984
        %v986 = vrot.slane %v965, 1
        %v987 = vrot.slane %v676, 1
        %v988 = vsel %vm982, %v986, %v987
        %v989 = vrot.slane %v966, 1
        %v990 = vrot.slane %v677, 1
        %v991 = vsel %vm982, %v989, %v990
        %v992 = vrot.slane %v967, 1
        %v993 = vrot.slane %v678, 1
        %v994 = vsel %vm982, %v992, %v993
        %v995 = vrot.slane %v968, 1
        %v996 = vrot.slane %v679, 1
        %v997 = vsel %vm982, %v995, %v996
        %v998 = vrot.slane %v969, 1
        %v999 = vrot.slane %v680, 1
        %v1000 = vsel %vm982, %v998, %v999
        %v1001 = vrot.slane %v970, 1
        %v1002 = vrot.slane %v681, 1
        %v1003 = vsel %vm982, %v1001, %v1002
        %v1004 = vrot.slane %v971, 1
        %v1005 = vrot.slane %v682, 1
        %v1006 = vsel %vm982, %v1004, %v1005
        %v1007 = vrot.slane %v972, 1
        %v1008 = vrot.slane %v683, 1
        %v1009 = vsel %vm982, %v1007, %v1008
        %v1010 = vrot.slane %v973, 1
        %v1011 = vrot.slane %v684, 1
        %v1012 = vsel %vm982, %v1010, %v1011
        %v1013 = vrot.slane %v974, 1
        %v1014 = vrot.slane %v685, 1
        %v1015 = vsel %vm982, %v1013, %v1014
        %v1016 = vrot.slane %v975, 1
        %v1017 = vrot.slane %v686, 1
        %v1018 = vsel %vm982, %v1016, %v1017
        %v1019 = vrot.slane %v976, 1
        %v1020 = vrot.slane %v687, 1
        %v1021 = vsel %vm982, %v1019, %v1020
        %v1022 = vrot.slane %v977, 1
        %v1023 = vrot.slane %v688, 1
        %v1024 = vsel %vm982, %v1022, %v1023
        %v1025 = vrot.slane %v978, 1
        %v1026 = vrot.slane %v689, 1
        %v1027 = vsel %vm982, %v1025, %v1026
        %v1028 = vrot.slane %v979, 1
        %v1029 = vrot.slane %v690, 1
        %v1030 = vsel %vm982, %v1028, %v1029
        %v1031 = vrot.slane %v980, 1
        %v1032 = vrot.slane %v691, 1
        %v1033 = vsel %vm982, %v1031, %v1032
        %v1034 = vrot.slane %v981, 1
        %v1035 = vrot.slane %v692, 1
        %v1036 = vsel %vm982, %v1034, %v1035
        %v1055 = vld [vmem:[#allocation6] sm:$0xf]
        %v1056 = vld [vmem:[#allocation6 + $0x4] sm:$0xf]
        %v1057 = vld [vmem:[#allocation6 + $0x8] sm:$0xf]
        %v1058 = vld [vmem:[#allocation6 + $0xc] sm:$0xf]
        %v1059 = vld [vmem:[#allocation6 + $0x10] sm:$0xf]
        %v1060 = vld [vmem:[#allocation6 + $0x14] sm:$0xf]
        %v1061 = vld [vmem:[#allocation6 + $0x18] sm:$0xf]
        %v1062 = vld [vmem:[#allocation6 + $0x1c] sm:$0xf]
        %v1063 = vld [vmem:[#allocation6 + $0x20] sm:$0xf]
        %v1064 = vld [vmem:[#allocation6 + $0x24] sm:$0xf]
        %v1065 = vld [vmem:[#allocation6 + $0x28] sm:$0xf]
        %v1066 = vld [vmem:[#allocation6 + $0x2c] sm:$0xf]
        %v1067 = vld [vmem:[#allocation6 + $0x30] sm:$0xf]
        %v1068 = vld [vmem:[#allocation6 + $0x34] sm:$0xf]
        %v1069 = vld [vmem:[#allocation6 + $0x38] sm:$0xf]
        %v1070 = vld [vmem:[#allocation6 + $0x3c] sm:$0xf]
        %v1071 = vld [vmem:[#allocation6 + $0x40] sm:$0xf]
        %v1072 = vld [vmem:[#allocation6 + $0x44] sm:$0xf]
        %v1073 = vld [vmem:[#allocation6 + $0x48] sm:$0xf]
        %v1074 = vld [vmem:[#allocation6 + $0x4c] sm:$0xf]
        %v1075 = vld [vmem:[#allocation6 + $0x50] sm:$0xf]
        %v1076 = vld [vmem:[#allocation6 + $0x54] sm:$0xf]
        %v1077 = vld [vmem:[#allocation6 + $0x58] sm:$0xf]
        %v1078 = vld [vmem:[#allocation6 + $0x5c] sm:$0xf]
        %v1079 = vld [vmem:[#allocation6 + $0x60] sm:$0xf]
        %v1080 = vld [vmem:[#allocation6 + $0x64] sm:$0xf]
        %v1081 = vld [vmem:[#allocation6 + $0x68] sm:$0xf]
        %v1082 = vld [vmem:[#allocation6 + $0x6c] sm:$0xf]
        %v1083 = vld [vmem:[#allocation6 + $0x70] sm:$0xf]
        %v1084 = vld [vmem:[#allocation6 + $0x74] sm:$0xf]
        %v1085 = vld [vmem:[#allocation6 + $0x78] sm:$0xf]
        %v1086 = vld [vmem:[#allocation6 + $0x7c] sm:$0xf]
        %v1087 = vld [vmem:[#allocation6 + $0x80] sm:$0xf]
        %v1088 = vld [vmem:[#allocation6 + $0x84] sm:$0xf]
        %v1089 = vld [vmem:[#allocation6 + $0x88] sm:$0xf]
        %v1090 = vld [vmem:[#allocation6 + $0x8c] sm:$0xf]
        %v1091 = vld [vmem:[#allocation6 + $0x90] sm:$0xf]
        %v1092 = vld [vmem:[#allocation6 + $0x94] sm:$0xf]
        %v1093 = vld [vmem:[#allocation6 + $0x98] sm:$0xf]
        %v1094 = vld [vmem:[#allocation6 + $0x9c] sm:$0xf]
        %v1095 = vld [vmem:[#allocation6 + $0xa0] sm:$0xf]
        %v1096 = vld [vmem:[#allocation6 + $0xa4] sm:$0xf]
        %v1097 = vld [vmem:[#allocation6 + $0xa8] sm:$0xf]
        %v1098 = vld [vmem:[#allocation6 + $0xac] sm:$0xf]
        %v1099 = vld [vmem:[#allocation6 + $0xb0] sm:$0xf]
        %v1100 = vld [vmem:[#allocation6 + $0xb4] sm:$0xf]
        %v1101 = vld [vmem:[#allocation6 + $0xb8] sm:$0xf]
        %v1102 = vld [vmem:[#allocation6 + $0xbc] sm:$0xf]
        %s1103 = sadd.s32 %s342, 1
        %s1104 = smul.u32 %s1103, 3
        %s1105 = smul.addr %s1104, 4
        %s1106 = scalar_lea.vmem %s301, %s1105 [#allocation3]
        %v1107 = vld [vmem:[%s1106] sm:$0xf]
        %v1108 = vld [vmem:[%s1106 + $0x4] sm:$0xf]
        %v1109 = vld [vmem:[%s1106 + $0xc] sm:$0xf]
        %v1110 = vld [vmem:[%s1106 + $0x10] sm:$0xf]
        %v1111 = vld [vmem:[%s1106 + $0x18] sm:$0xf]
        %v1112 = vld [vmem:[%s1106 + $0x1c] sm:$0xf]
        %v1113 = vld [vmem:[%s1106 + $0x24] sm:$0xf]
        %v1114 = vld [vmem:[%s1106 + $0x28] sm:$0xf]
        %v1115 = vld [vmem:[%s1106 + $0x30] sm:$0xf]
        %v1116 = vld [vmem:[%s1106 + $0x34] sm:$0xf]
        %v1117 = vld [vmem:[%s1106 + $0x3c] sm:$0xf]
        %v1118 = vld [vmem:[%s1106 + $0x40] sm:$0xf]
        %v1119 = vld [vmem:[%s1106 + $0x48] sm:$0xf]
        %v1120 = vld [vmem:[%s1106 + $0x4c] sm:$0xf]
        %v1121 = vld [vmem:[%s1106 + $0x54] sm:$0xf]
        %v1122 = vld [vmem:[%s1106 + $0x58] sm:$0xf]
        %v1123 = vld [vmem:[%s1106 + $0x60] sm:$0xf]
        %v1124 = vld [vmem:[%s1106 + $0x64] sm:$0xf]
        %v1125 = vld [vmem:[%s1106 + $0x6c] sm:$0xf]
        %v1126 = vld [vmem:[%s1106 + $0x70] sm:$0xf]
        %v1127 = vld [vmem:[%s1106 + $0x78] sm:$0xf]
        %v1128 = vld [vmem:[%s1106 + $0x7c] sm:$0xf]
        %v1129 = vld [vmem:[%s1106 + $0x84] sm:$0xf]
        %v1130 = vld [vmem:[%s1106 + $0x88] sm:$0xf]
        %v1131 = vld [vmem:[%s1106 + $0x90] sm:$0xf]
        %v1132 = vld [vmem:[%s1106 + $0x94] sm:$0xf]
        %v1133 = vld [vmem:[%s1106 + $0x9c] sm:$0xf]
        %v1134 = vld [vmem:[%s1106 + $0xa0] sm:$0xf]
        %v1135 = vld [vmem:[%s1106 + $0xa8] sm:$0xf]
        %v1136 = vld [vmem:[%s1106 + $0xac] sm:$0xf]
        %v1137 = vld [vmem:[%s1106 + $0xb4] sm:$0xf]
        %v1138 = vld [vmem:[%s1106 + $0xb8] sm:$0xf]
        %v1139 = vld [vmem:[%s1106 + $0xc0] sm:$0xf]
        %v1140 = vld [vmem:[%s1106 + $0xc4] sm:$0xf]
        %v1141 = vld [vmem:[%s1106 + $0xcc] sm:$0xf]
        %v1142 = vld [vmem:[%s1106 + $0xd0] sm:$0xf]
        %v1143 = vld [vmem:[%s1106 + $0x8] sm:$0x1]
        %v1144 = vld [vmem:[%s1106 + $0x14] sm:$0x1]
        %v1145 = vld [vmem:[%s1106 + $0x20] sm:$0x1]
        %v1146 = vld [vmem:[%s1106 + $0x2c] sm:$0x1]
        %v1147 = vld [vmem:[%s1106 + $0x38] sm:$0x1]
        %v1148 = vld [vmem:[%s1106 + $0x44] sm:$0x1]
        %v1149 = vld [vmem:[%s1106 + $0x50] sm:$0x1]
        %v1150 = vld [vmem:[%s1106 + $0x5c] sm:$0x1]
        %v1151 = vld [vmem:[%s1106 + $0x68] sm:$0x1]
        %v1152 = vld [vmem:[%s1106 + $0x74] sm:$0x1]
        %v1153 = vld [vmem:[%s1106 + $0x80] sm:$0x1]
        %v1154 = vld [vmem:[%s1106 + $0x8c] sm:$0x1]
        %v1155 = vld [vmem:[%s1106 + $0x98] sm:$0x1]
        %v1156 = vld [vmem:[%s1106 + $0xa4] sm:$0x1]
        %v1157 = vld [vmem:[%s1106 + $0xb0] sm:$0x1]
        %v1158 = vld [vmem:[%s1106 + $0xbc] sm:$0x1]
        %v1159 = vld [vmem:[%s1106 + $0xc8] sm:$0x1]
        %v1160 = vld [vmem:[%s1106 + $0xd4] sm:$0x1]
        %v1161 = vld [vmem:[%s1106] sm:$0xe]
        %v1162 = vld [vmem:[%s1106 + $0xc] sm:$0xe]
        %v1163 = vld [vmem:[%s1106 + $0x18] sm:$0xe]
        %v1164 = vld [vmem:[%s1106 + $0x24] sm:$0xe]
        %v1165 = vld [vmem:[%s1106 + $0x30] sm:$0xe]
        %v1166 = vld [vmem:[%s1106 + $0x3c] sm:$0xe]
        %v1167 = vld [vmem:[%s1106 + $0x48] sm:$0xe]
        %v1168 = vld [vmem:[%s1106 + $0x54] sm:$0xe]
        %v1169 = vld [vmem:[%s1106 + $0x60] sm:$0xe]
        %v1170 = vld [vmem:[%s1106 + $0x6c] sm:$0xe]
        %v1171 = vld [vmem:[%s1106 + $0x78] sm:$0xe]
        %v1172 = vld [vmem:[%s1106 + $0x84] sm:$0xe]
        %v1173 = vld [vmem:[%s1106 + $0x90] sm:$0xe]
        %v1174 = vld [vmem:[%s1106 + $0x9c] sm:$0xe]
        %v1175 = vld [vmem:[%s1106 + $0xa8] sm:$0xe]
        %v1176 = vld [vmem:[%s1106 + $0xb4] sm:$0xe]
        %v1177 = vld [vmem:[%s1106 + $0xc0] sm:$0xe]
        %v1178 = vld [vmem:[%s1106 + $0xcc] sm:$0xe]
        %v1215 = vunpack.c.l.b16 %v1107
        %v1216 = vunpack.c.l.b16 %v1108
        %v1217 = vunpack.c.l.b16 %v1109
        %v1218 = vunpack.c.l.b16 %v1110
        %v1219 = vunpack.c.l.b16 %v1111
        %v1220 = vunpack.c.l.b16 %v1112
        %v1221 = vunpack.c.l.b16 %v1113
        %v1222 = vunpack.c.l.b16 %v1114
        %v1223 = vunpack.c.l.b16 %v1115
        %v1224 = vunpack.c.l.b16 %v1116
        %v1225 = vunpack.c.l.b16 %v1117
        %v1226 = vunpack.c.l.b16 %v1118
        %v1227 = vunpack.c.l.b16 %v1119
        %v1228 = vunpack.c.l.b16 %v1120
        %v1229 = vunpack.c.l.b16 %v1121
        %v1230 = vunpack.c.l.b16 %v1122
        %v1231 = vunpack.c.l.b16 %v1123
        %v1232 = vunpack.c.l.b16 %v1124
        %v1233 = vunpack.c.l.b16 %v1125
        %v1234 = vunpack.c.l.b16 %v1126
        %v1235 = vunpack.c.l.b16 %v1127
        %v1236 = vunpack.c.l.b16 %v1128
        %v1237 = vunpack.c.l.b16 %v1129
        %v1238 = vunpack.c.l.b16 %v1130
        %v1239 = vunpack.c.l.b16 %v1131
        %v1240 = vunpack.c.l.b16 %v1132
        %v1241 = vunpack.c.l.b16 %v1133
        %v1242 = vunpack.c.l.b16 %v1134
        %v1243 = vunpack.c.l.b16 %v1135
        %v1244 = vunpack.c.l.b16 %v1136
        %v1245 = vunpack.c.l.b16 %v1137
        %v1246 = vunpack.c.l.b16 %v1138
        %v1247 = vunpack.c.l.b16 %v1139
        %v1248 = vunpack.c.l.b16 %v1140
        %v1249 = vunpack.c.l.b16 %v1141
        %v1250 = vunpack.c.l.b16 %v1142
        %v1251 = vpack.c.b16 %v1216, %v1215
        %v1252 = vpack.c.b16 %v1218, %v1217
        %v1253 = vpack.c.b16 %v1220, %v1219
        %v1254 = vpack.c.b16 %v1222, %v1221
        %v1255 = vpack.c.b16 %v1224, %v1223
        %v1256 = vpack.c.b16 %v1226, %v1225
        %v1257 = vpack.c.b16 %v1228, %v1227
        %v1258 = vpack.c.b16 %v1230, %v1229
        %v1259 = vpack.c.b16 %v1232, %v1231
        %v1260 = vpack.c.b16 %v1234, %v1233
        %v1261 = vpack.c.b16 %v1236, %v1235
        %v1262 = vpack.c.b16 %v1238, %v1237
        %v1263 = vpack.c.b16 %v1240, %v1239
        %v1264 = vpack.c.b16 %v1242, %v1241
        %v1265 = vpack.c.b16 %v1244, %v1243
        %v1266 = vpack.c.b16 %v1246, %v1245
        %v1267 = vpack.c.b16 %v1248, %v1247
        %v1268 = vpack.c.b16 %v1250, %v1249
        %v1305 = vunpack.c.l.b16 %v1143
        %v1306 = vunpack.c.l.b16 %v1144
        %v1307 = vunpack.c.l.b16 %v1145
        %v1308 = vunpack.c.l.b16 %v1146
        %v1309 = vunpack.c.l.b16 %v1147
        %v1310 = vunpack.c.l.b16 %v1148
        %v1311 = vunpack.c.l.b16 %v1149
        %v1312 = vunpack.c.l.b16 %v1150
        %v1313 = vunpack.c.l.b16 %v1151
        %v1314 = vunpack.c.l.b16 %v1152
        %v1315 = vunpack.c.l.b16 %v1153
        %v1316 = vunpack.c.l.b16 %v1154
        %v1317 = vunpack.c.l.b16 %v1155
        %v1318 = vunpack.c.l.b16 %v1156
        %v1319 = vunpack.c.l.b16 %v1157
        %v1320 = vunpack.c.l.b16 %v1158
        %v1321 = vunpack.c.l.b16 %v1159
        %v1322 = vunpack.c.l.b16 %v1160
        %v1323 = vpack.c.b16 %v1305, %v1305
        %v1324 = vpack.c.b16 %v1306, %v1306
        %v1325 = vpack.c.b16 %v1307, %v1307
        %v1326 = vpack.c.b16 %v1308, %v1308
        %v1327 = vpack.c.b16 %v1309, %v1309
        %v1328 = vpack.c.b16 %v1310, %v1310
        %v1329 = vpack.c.b16 %v1311, %v1311
        %v1330 = vpack.c.b16 %v1312, %v1312
        %v1331 = vpack.c.b16 %v1313, %v1313
        %v1332 = vpack.c.b16 %v1314, %v1314
        %v1333 = vpack.c.b16 %v1315, %v1315
        %v1334 = vpack.c.b16 %v1316, %v1316
        %v1335 = vpack.c.b16 %v1317, %v1317
        %v1336 = vpack.c.b16 %v1318, %v1318
        %v1337 = vpack.c.b16 %v1319, %v1319
        %v1338 = vpack.c.b16 %v1320, %v1320
        %v1339 = vpack.c.b16 %v1321, %v1321
        %v1340 = vpack.c.b16 %v1322, %v1322
        %v1342 = vshrl.u32 %v1251, 16
        %v1344 = vshll.u32 %v1251, 16
        %v1346 = vrot.slane %v1344, 1
        %v1347 = vor.u32 %v1342, %v1346
        %v1349 = vshll.u32 %v1323, 16
        %v1351 = vrot.slane %v1349, 1
        %v1352 = vsel %vm693, %v1347, %v1351
        %v1354 = vshrl.u32 %v1252, 16
        %v1356 = vshll.u32 %v1252, 16
        %v1358 = vrot.slane %v1356, 1
        %v1359 = vor.u32 %v1354, %v1358
        %v1361 = vshll.u32 %v1324, 16
        %v1363 = vrot.slane %v1361, 1
        %v1364 = vsel %vm693, %v1359, %v1363
        %v1366 = vshrl.u32 %v1253, 16
        %v1368 = vshll.u32 %v1253, 16
        %v1370 = vrot.slane %v1368, 1
        %v1371 = vor.u32 %v1366, %v1370
        %v1373 = vshll.u32 %v1325, 16
        %v1375 = vrot.slane %v1373, 1
        %v1376 = vsel %vm693, %v1371, %v1375
        %v1378 = vshrl.u32 %v1254, 16
        %v1380 = vshll.u32 %v1254, 16
        %v1382 = vrot.slane %v1380, 1
        %v1383 = vor.u32 %v1378, %v1382
        %v1385 = vshll.u32 %v1326, 16
        %v1387 = vrot.slane %v1385, 1
        %v1388 = vsel %vm693, %v1383, %v1387
        %v1390 = vshrl.u32 %v1255, 16
        %v1392 = vshll.u32 %v1255, 16
        %v1394 = vrot.slane %v1392, 1
        %v1395 = vor.u32 %v1390, %v1394
        %v1397 = vshll.u32 %v1327, 16
        %v1399 = vrot.slane %v1397, 1
        %v1400 = vsel %vm693, %v1395, %v1399
        %v1402 = vshrl.u32 %v1256, 16
        %v1404 = vshll.u32 %v1256, 16
        %v1406 = vrot.slane %v1404, 1
        %v1407 = vor.u32 %v1402, %v1406
        %v1409 = vshll.u32 %v1328, 16
        %v1411 = vrot.slane %v1409, 1
        %v1412 = vsel %vm693, %v1407, %v1411
        %v1414 = vshrl.u32 %v1257, 16
        %v1416 = vshll.u32 %v1257, 16
        %v1418 = vrot.slane %v1416, 1
        %v1419 = vor.u32 %v1414, %v1418
        %v1421 = vshll.u32 %v1329, 16
        %v1423 = vrot.slane %v1421, 1
        %v1424 = vsel %vm693, %v1419, %v1423
        %v1426 = vshrl.u32 %v1258, 16
        %v1428 = vshll.u32 %v1258, 16
        %v1430 = vrot.slane %v1428, 1
        %v1431 = vor.u32 %v1426, %v1430
        %v1433 = vshll.u32 %v1330, 16
        %v1435 = vrot.slane %v1433, 1
        %v1436 = vsel %vm693, %v1431, %v1435
        %v1438 = vshrl.u32 %v1259, 16
        %v1440 = vshll.u32 %v1259, 16
        %v1442 = vrot.slane %v1440, 1
        %v1443 = vor.u32 %v1438, %v1442
        %v1445 = vshll.u32 %v1331, 16
        %v1447 = vrot.slane %v1445, 1
        %v1448 = vsel %vm693, %v1443, %v1447
        %v1450 = vshrl.u32 %v1260, 16
        %v1452 = vshll.u32 %v1260, 16
        %v1454 = vrot.slane %v1452, 1
        %v1455 = vor.u32 %v1450, %v1454
        %v1457 = vshll.u32 %v1332, 16
        %v1459 = vrot.slane %v1457, 1
        %v1460 = vsel %vm693, %v1455, %v1459
        %v1462 = vshrl.u32 %v1261, 16
        %v1464 = vshll.u32 %v1261, 16
        %v1466 = vrot.slane %v1464, 1
        %v1467 = vor.u32 %v1462, %v1466
        %v1469 = vshll.u32 %v1333, 16
        %v1471 = vrot.slane %v1469, 1
        %v1472 = vsel %vm693, %v1467, %v1471
        %v1474 = vshrl.u32 %v1262, 16
        %v1476 = vshll.u32 %v1262, 16
        %v1478 = vrot.slane %v1476, 1
        %v1479 = vor.u32 %v1474, %v1478
        %v1481 = vshll.u32 %v1334, 16
        %v1483 = vrot.slane %v1481, 1
        %v1484 = vsel %vm693, %v1479, %v1483
        %v1486 = vshrl.u32 %v1263, 16
        %v1488 = vshll.u32 %v1263, 16
        %v1490 = vrot.slane %v1488, 1
        %v1491 = vor.u32 %v1486, %v1490
        %v1493 = vshll.u32 %v1335, 16
        %v1495 = vrot.slane %v1493, 1
        %v1496 = vsel %vm693, %v1491, %v1495
        %v1498 = vshrl.u32 %v1264, 16
        %v1500 = vshll.u32 %v1264, 16
        %v1502 = vrot.slane %v1500, 1
        %v1503 = vor.u32 %v1498, %v1502
        %v1505 = vshll.u32 %v1336, 16
        %v1507 = vrot.slane %v1505, 1
        %v1508 = vsel %vm693, %v1503, %v1507
        %v1510 = vshrl.u32 %v1265, 16
        %v1512 = vshll.u32 %v1265, 16
        %v1514 = vrot.slane %v1512, 1
        %v1515 = vor.u32 %v1510, %v1514
        %v1517 = vshll.u32 %v1337, 16
        %v1519 = vrot.slane %v1517, 1
        %v1520 = vsel %vm693, %v1515, %v1519
        %v1522 = vshrl.u32 %v1266, 16
        %v1524 = vshll.u32 %v1266, 16
        %v1526 = vrot.slane %v1524, 1
        %v1527 = vor.u32 %v1522, %v1526
        %v1529 = vshll.u32 %v1338, 16
        %v1531 = vrot.slane %v1529, 1
        %v1532 = vsel %vm693, %v1527, %v1531
        %v1534 = vshrl.u32 %v1267, 16
        %v1536 = vshll.u32 %v1267, 16
        %v1538 = vrot.slane %v1536, 1
        %v1539 = vor.u32 %v1534, %v1538
        %v1541 = vshll.u32 %v1339, 16
        %v1543 = vrot.slane %v1541, 1
        %v1544 = vsel %vm693, %v1539, %v1543
        %v1546 = vshrl.u32 %v1268, 16
        %v1548 = vshll.u32 %v1268, 16
        %v1550 = vrot.slane %v1548, 1
        %v1551 = vor.u32 %v1546, %v1550
        %v1553 = vshll.u32 %v1340, 16
        %v1555 = vrot.slane %v1553, 1
        %v1556 = vsel %vm693, %v1551, %v1555
        %v1593 = vunpack.c.l.b16 %v1161
        %v1594 = vunpack.c.l.b16 %v1162
        %v1595 = vunpack.c.l.b16 %v1163
        %v1596 = vunpack.c.l.b16 %v1164
        %v1597 = vunpack.c.l.b16 %v1165
        %v1598 = vunpack.c.l.b16 %v1166
        %v1599 = vunpack.c.l.b16 %v1167
        %v1600 = vunpack.c.l.b16 %v1168
        %v1601 = vunpack.c.l.b16 %v1169
        %v1602 = vunpack.c.l.b16 %v1170
        %v1603 = vunpack.c.l.b16 %v1171
        %v1604 = vunpack.c.l.b16 %v1172
        %v1605 = vunpack.c.l.b16 %v1173
        %v1606 = vunpack.c.l.b16 %v1174
        %v1607 = vunpack.c.l.b16 %v1175
        %v1608 = vunpack.c.l.b16 %v1176
        %v1609 = vunpack.c.l.b16 %v1177
        %v1610 = vunpack.c.l.b16 %v1178
        %v1611 = vpack.c.b16 %v1216, %v1593
        %v1612 = vpack.c.b16 %v1218, %v1594
        %v1613 = vpack.c.b16 %v1220, %v1595
        %v1614 = vpack.c.b16 %v1222, %v1596
        %v1615 = vpack.c.b16 %v1224, %v1597
        %v1616 = vpack.c.b16 %v1226, %v1598
        %v1617 = vpack.c.b16 %v1228, %v1599
        %v1618 = vpack.c.b16 %v1230, %v1600
        %v1619 = vpack.c.b16 %v1232, %v1601
        %v1620 = vpack.c.b16 %v1234, %v1602
        %v1621 = vpack.c.b16 %v1236, %v1603
        %v1622 = vpack.c.b16 %v1238, %v1604
        %v1623 = vpack.c.b16 %v1240, %v1605
        %v1624 = vpack.c.b16 %v1242, %v1606
        %v1625 = vpack.c.b16 %v1244, %v1607
        %v1626 = vpack.c.b16 %v1246, %v1608
        %v1627 = vpack.c.b16 %v1248, %v1609
        %v1628 = vpack.c.b16 %v1250, %v1610
        %v1629 = vrot.slane %v1611, 1
        %v1630 = vrot.slane %v1323, 1
        %v1631 = vsel %vm982, %v1629, %v1630
        %v1632 = vrot.slane %v1612, 1
        %v1633 = vrot.slane %v1324, 1
        %v1634 = vsel %vm982, %v1632, %v1633
        %v1635 = vrot.slane %v1613, 1
        %v1636 = vrot.slane %v1325, 1
        %v1637 = vsel %vm982, %v1635, %v1636
        %v1638 = vrot.slane %v1614, 1
        %v1639 = vrot.slane %v1326, 1
        %v1640 = vsel %vm982, %v1638, %v1639
        %v1641 = vrot.slane %v1615, 1
        %v1642 = vrot.slane %v1327, 1
        %v1643 = vsel %vm982, %v1641, %v1642
        %v1644 = vrot.slane %v1616, 1
        %v1645 = vrot.slane %v1328, 1
        %v1646 = vsel %vm982, %v1644, %v1645
        %v1647 = vrot.slane %v1617, 1
        %v1648 = vrot.slane %v1329, 1
        %v1649 = vsel %vm982, %v1647, %v1648
        %v1650 = vrot.slane %v1618, 1
        %v1651 = vrot.slane %v1330, 1
        %v1652 = vsel %vm982, %v1650, %v1651
        %v1653 = vrot.slane %v1619, 1
        %v1654 = vrot.slane %v1331, 1
        %v1655 = vsel %vm982, %v1653, %v1654
        %v1656 = vrot.slane %v1620, 1
        %v1657 = vrot.slane %v1332, 1
        %v1658 = vsel %vm982, %v1656, %v1657
        %v1659 = vrot.slane %v1621, 1
        %v1660 = vrot.slane %v1333, 1
        %v1661 = vsel %vm982, %v1659, %v1660
        %v1662 = vrot.slane %v1622, 1
        %v1663 = vrot.slane %v1334, 1
        %v1664 = vsel %vm982, %v1662, %v1663
        %v1665 = vrot.slane %v1623, 1
        %v1666 = vrot.slane %v1335, 1
        %v1667 = vsel %vm982, %v1665, %v1666
        %v1668 = vrot.slane %v1624, 1
        %v1669 = vrot.slane %v1336, 1
        %v1670 = vsel %vm982, %v1668, %v1669
        %v1671 = vrot.slane %v1625, 1
        %v1672 = vrot.slane %v1337, 1
        %v1673 = vsel %vm982, %v1671, %v1672
        %v1674 = vrot.slane %v1626, 1
        %v1675 = vrot.slane %v1338, 1
        %v1676 = vsel %vm982, %v1674, %v1675
        %v1677 = vrot.slane %v1627, 1
        %v1678 = vrot.slane %v1339, 1
        %v1679 = vsel %vm982, %v1677, %v1678
        %v1680 = vrot.slane %v1628, 1
        %v1681 = vrot.slane %v1340, 1
        %v1682 = vsel %vm982, %v1680, %v1681
        %s1701 = scalar_lea.vmem [#allocation6], 192
        %v1702 = vld [vmem:[%s1701] sm:$0xf]
        %v1703 = vld [vmem:[%s1701 + $0x4] sm:$0xf]
        %v1704 = vld [vmem:[%s1701 + $0x8] sm:$0xf]
        %v1705 = vld [vmem:[%s1701 + $0xc] sm:$0xf]
        %v1706 = vld [vmem:[%s1701 + $0x10] sm:$0xf]
        %v1707 = vld [vmem:[%s1701 + $0x14] sm:$0xf]
        %v1708 = vld [vmem:[%s1701 + $0x18] sm:$0xf]
        %v1709 = vld [vmem:[%s1701 + $0x1c] sm:$0xf]
        %v1710 = vld [vmem:[%s1701 + $0x20] sm:$0xf]
        %v1711 = vld [vmem:[%s1701 + $0x24] sm:$0xf]
        %v1712 = vld [vmem:[%s1701 + $0x28] sm:$0xf]
        %v1713 = vld [vmem:[%s1701 + $0x2c] sm:$0xf]
        %v1714 = vld [vmem:[%s1701 + $0x30] sm:$0xf]
        %v1715 = vld [vmem:[%s1701 + $0x34] sm:$0xf]
        %v1716 = vld [vmem:[%s1701 + $0x38] sm:$0xf]
        %v1717 = vld [vmem:[%s1701 + $0x3c] sm:$0xf]
        %v1718 = vld [vmem:[%s1701 + $0x40] sm:$0xf]
        %v1719 = vld [vmem:[%s1701 + $0x44] sm:$0xf]
        %v1720 = vld [vmem:[%s1701 + $0x48] sm:$0xf]
        %v1721 = vld [vmem:[%s1701 + $0x4c] sm:$0xf]
        %v1722 = vld [vmem:[%s1701 + $0x50] sm:$0xf]
        %v1723 = vld [vmem:[%s1701 + $0x54] sm:$0xf]
        %v1724 = vld [vmem:[%s1701 + $0x58] sm:$0xf]
        %v1725 = vld [vmem:[%s1701 + $0x5c] sm:$0xf]
        %v1726 = vld [vmem:[%s1701 + $0x60] sm:$0xf]
        %v1727 = vld [vmem:[%s1701 + $0x64] sm:$0xf]
        %v1728 = vld [vmem:[%s1701 + $0x68] sm:$0xf]
        %v1729 = vld [vmem:[%s1701 + $0x6c] sm:$0xf]
        %v1730 = vld [vmem:[%s1701 + $0x70] sm:$0xf]
        %v1731 = vld [vmem:[%s1701 + $0x74] sm:$0xf]
        %v1732 = vld [vmem:[%s1701 + $0x78] sm:$0xf]
        %v1733 = vld [vmem:[%s1701 + $0x7c] sm:$0xf]
        %v1734 = vld [vmem:[%s1701 + $0x80] sm:$0xf]
        %v1735 = vld [vmem:[%s1701 + $0x84] sm:$0xf]
        %v1736 = vld [vmem:[%s1701 + $0x88] sm:$0xf]
        %v1737 = vld [vmem:[%s1701 + $0x8c] sm:$0xf]
        %v1738 = vld [vmem:[%s1701 + $0x90] sm:$0xf]
        %v1739 = vld [vmem:[%s1701 + $0x94] sm:$0xf]
        %v1740 = vld [vmem:[%s1701 + $0x98] sm:$0xf]
        %v1741 = vld [vmem:[%s1701 + $0x9c] sm:$0xf]
        %v1742 = vld [vmem:[%s1701 + $0xa0] sm:$0xf]
        %v1743 = vld [vmem:[%s1701 + $0xa4] sm:$0xf]
        %v1744 = vld [vmem:[%s1701 + $0xa8] sm:$0xf]
        %v1745 = vld [vmem:[%s1701 + $0xac] sm:$0xf]
        %v1746 = vld [vmem:[%s1701 + $0xb0] sm:$0xf]
        %v1747 = vld [vmem:[%s1701 + $0xb4] sm:$0xf]
        %v1748 = vld [vmem:[%s1701 + $0xb8] sm:$0xf]
        %v1749 = vld [vmem:[%s1701 + $0xbc] sm:$0xf]
        %v1798 = vunpack.c.l.b16 %v1702
        %v1799 = vunpack.c.l.b16 %v1703
        %v1800 = vunpack.c.l.b16 %v1704
        %v1801 = vunpack.c.l.b16 %v1705
        %v1802 = vunpack.c.l.b16 %v1706
        %v1803 = vunpack.c.l.b16 %v1707
        %v1804 = vunpack.c.l.b16 %v1708
        %v1805 = vunpack.c.l.b16 %v1709
        %v1806 = vunpack.c.l.b16 %v1710
        %v1807 = vunpack.c.l.b16 %v1711
        %v1808 = vunpack.c.l.b16 %v1712
        %v1809 = vunpack.c.l.b16 %v1713
        %v1810 = vunpack.c.l.b16 %v1714
        %v1811 = vunpack.c.l.b16 %v1715
        %v1812 = vunpack.c.l.b16 %v1716
        %v1813 = vunpack.c.l.b16 %v1717
        %v1814 = vunpack.c.l.b16 %v1718
        %v1815 = vunpack.c.l.b16 %v1719
        %v1816 = vunpack.c.l.b16 %v1720
        %v1817 = vunpack.c.l.b16 %v1721
        %v1818 = vunpack.c.l.b16 %v1722
        %v1819 = vunpack.c.l.b16 %v1723
        %v1820 = vunpack.c.l.b16 %v1724
        %v1821 = vunpack.c.l.b16 %v1725
        %v1822 = vunpack.c.l.b16 %v1726
        %v1823 = vunpack.c.l.b16 %v1727
        %v1824 = vunpack.c.l.b16 %v1728
        %v1825 = vunpack.c.l.b16 %v1729
        %v1826 = vunpack.c.l.b16 %v1730
        %v1827 = vunpack.c.l.b16 %v1731
        %v1828 = vunpack.c.l.b16 %v1732
        %v1829 = vunpack.c.l.b16 %v1733
        %v1830 = vunpack.c.l.b16 %v1734
        %v1831 = vunpack.c.l.b16 %v1735
        %v1832 = vunpack.c.l.b16 %v1736
        %v1833 = vunpack.c.l.b16 %v1737
        %v1834 = vunpack.c.l.b16 %v1738
        %v1835 = vunpack.c.l.b16 %v1739
        %v1836 = vunpack.c.l.b16 %v1740
        %v1837 = vunpack.c.l.b16 %v1741
        %v1838 = vunpack.c.l.b16 %v1742
        %v1839 = vunpack.c.l.b16 %v1743
        %v1840 = vunpack.c.l.b16 %v1744
        %v1841 = vunpack.c.l.b16 %v1745
        %v1842 = vunpack.c.l.b16 %v1746
        %v1843 = vunpack.c.l.b16 %v1747
        %v1844 = vunpack.c.l.b16 %v1748
        %v1845 = vunpack.c.l.b16 %v1749
        %v1846 = vpack.c.b16 %v1799, %v1798
        %v1847 = vpack.c.b16 %v1801, %v1800
        %v1848 = vpack.c.b16 %v1803, %v1802
        %v1849 = vpack.c.b16 %v1805, %v1804
        %v1850 = vpack.c.b16 %v1807, %v1806
        %v1851 = vpack.c.b16 %v1809, %v1808
        %v1852 = vpack.c.b16 %v1811, %v1810
        %v1853 = vpack.c.b16 %v1813, %v1812
        %v1854 = vpack.c.b16 %v1815, %v1814
        %v1855 = vpack.c.b16 %v1817, %v1816
        %v1856 = vpack.c.b16 %v1819, %v1818
        %v1857 = vpack.c.b16 %v1821, %v1820
        %v1858 = vpack.c.b16 %v1823, %v1822
        %v1859 = vpack.c.b16 %v1825, %v1824
        %v1860 = vpack.c.b16 %v1827, %v1826
        %v1861 = vpack.c.b16 %v1829, %v1828
        %v1862 = vpack.c.b16 %v1831, %v1830
        %v1863 = vpack.c.b16 %v1833, %v1832
        %v1864 = vpack.c.b16 %v1835, %v1834
        %v1865 = vpack.c.b16 %v1837, %v1836
        %v1866 = vpack.c.b16 %v1839, %v1838
        %v1867 = vpack.c.b16 %v1841, %v1840
        %v1868 = vpack.c.b16 %v1843, %v1842
        %v1869 = vpack.c.b16 %v1845, %v1844
        %1894 = vmatprep.subr.bf16.mxu0 0
        %1895 = vmatpush1.bf16.msra.mxu0 %v1846
        %1896 = vmatprep.subr.bf16.mxu0 0
        %1897 = vmatpush1.bf16.msra.mxu0 %v1847
        %1898 = vmatprep.subr.bf16.mxu0 0
        %1899 = vmatpush1.bf16.msra.mxu0 %v1848
        %1900 = vmatprep.subr.bf16.mxu0 0
        %1901 = vmatpush1.bf16.msra.mxu0 %v1849
        %1902 = vmatprep.subr.bf16.mxu0 0
        %1903 = vmatpush1.bf16.msra.mxu0 %v1850
        %1904 = vmatprep.subr.bf16.mxu0 0
        %1905 = vmatpush1.bf16.msra.mxu0 %v1851
        %1906 = vmatprep.subr.bf16.mxu0 0
        %1907 = vmatpush1.bf16.msra.mxu0 %v1852
        %1908 = vmatprep.subr.bf16.mxu0 0
        %1909 = vmatpush1.bf16.msra.mxu0 %v1853
        %1910 = vmatprep.subr.bf16.mxu0 0
        %1911 = vmatpush1.bf16.msra.mxu0 %v1854
        %1912 = vmatprep.subr.bf16.mxu0 0
        %1913 = vmatpush1.bf16.msra.mxu0 %v1855
        %1914 = vmatprep.subr.bf16.mxu0 0
        %1915 = vmatpush1.bf16.msra.mxu0 %v1856
        %1916 = vmatprep.subr.bf16.mxu0 0
        %1917 = vmatpush1.bf16.msra.mxu0 %v1857
        %1918 = vmatprep.subr.bf16.mxu0 0
        %1919 = vmatpush1.bf16.msra.mxu0 %v1858
        %1920 = vmatprep.subr.bf16.mxu0 0
        %1921 = vmatpush1.bf16.msra.mxu0 %v1859
        %1922 = vmatprep.subr.bf16.mxu0 0
        %1923 = vmatpush1.bf16.msra.mxu0 %v1860
        %1924 = vmatprep.subr.bf16.mxu0 0
        %1925 = vmatpush1.bf16.msra.mxu0 %v1861
        %1926 = vmatprep.mubr.bf16.mxu0 %v1352
        %1927 = vmatmul.mubr.bf16.gmra.mrb[0].mxu0 %v1251
        %v1928 = vpop.f32.mrb[0].mxu0
        %v1929 = vadd.f32 0.0, %v1928
        %v1930 = vpop.f32.mrb[0].mxu0
        %v1931 = vpop.f32.mrb[0].mxu0
        %v1932 = vadd.f32 0.0, %v1931
        %v1933 = vpop.f32.mrb[0].mxu0
        %1934 = vmatprep.mubr.bf16.mxu0 %v1364
        %1935 = vmatmul.mubr.bf16.gmra.mrb[0].mxu0 %v1252
        %v1936 = vpop.f32.mrb[0].mxu0
        %v1937 = vadd.f32 0.0, %v1936
        %v1938 = vpop.f32.mrb[0].mxu0
        %v1939 = vpop.f32.mrb[0].mxu0
        %v1940 = vadd.f32 0.0, %v1939
        %v1941 = vpop.f32.mrb[0].mxu0
        %1942 = vmatprep.mubr.bf16.mxu0 %v1376
        %1943 = vmatmul.mubr.bf16.gmra.mrb[0].mxu0 %v1253
        %v1944 = vpop.f32.mrb[0].mxu0
        %v1945 = vadd.f32 0.0, %v1944
        %v1946 = vpop.f32.mrb[0].mxu0
        %v1947 = vpop.f32.mrb[0].mxu0
        %v1948 = vadd.f32 0.0, %v1947
        %v1949 = vpop.f32.mrb[0].mxu0
        %1950 = vmatprep.mubr.bf16.mxu0 %v1388
        %1951 = vmatmul.mubr.bf16.gmra.mrb[0].mxu0 %v1254
        %v1952 = vpop.f32.mrb[0].mxu0
        %v1953 = vadd.f32 0.0, %v1952
        %v1954 = vpop.f32.mrb[0].mxu0
        %v1955 = vpop.f32.mrb[0].mxu0
        %v1956 = vadd.f32 0.0, %v1955
        %v1957 = vpop.f32.mrb[0].mxu0
        %1958 = vmatprep.mubr.bf16.mxu0 %v1400
        %1959 = vmatmul.mubr.bf16.gmra.mrb[0].mxu0 %v1255
        %v1960 = vpop.f32.mrb[0].mxu0
        %v1961 = vadd.f32 0.0, %v1960
        %v1962 = vpop.f32.mrb[0].mxu0
        %v1963 = vpop.f32.mrb[0].mxu0
        %v1964 = vadd.f32 0.0, %v1963
        %v1965 = vpop.f32.mrb[0].mxu0
        %1966 = vmatprep.mubr.bf16.mxu0 %v1412
        %1967 = vmatmul.mubr.bf16.gmra.mrb[0].mxu0 %v1256
        %v1968 = vpop.f32.mrb[0].mxu0
        %v1969 = vadd.f32 0.0, %v1968
        %v1970 = vpop.f32.mrb[0].mxu0
        %v1971 = vpop.f32.mrb[0].mxu0
        %v1972 = vadd.f32 0.0, %v1971
        %v1973 = vpop.f32.mrb[0].mxu0
        %1974 = vmatprep.mubr.bf16.mxu0 %v1424
        %1975 = vmatmul.mubr.bf16.gmra.mrb[0].mxu0 %v1257
        %v1976 = vpop.f32.mrb[0].mxu0
        %v1977 = vadd.f32 0.0, %v1976
        %v1978 = vpop.f32.mrb[0].mxu0
        %v1979 = vpop.f32.mrb[0].mxu0
        %v1980 = vadd.f32 0.0, %v1979
        %v1981 = vpop.f32.mrb[0].mxu0
        %1982 = vmatprep.mubr.bf16.mxu0 %v1436
        %1983 = vmatmul.mubr.bf16.gmra.mrb[0].mxu0 %v1258
        %v1984 = vpop.f32.mrb[0].mxu0
        %v1985 = vadd.f32 0.0, %v1984
        %v1986 = vpop.f32.mrb[0].mxu0
        %v1987 = vpop.f32.mrb[0].mxu0
        %v1988 = vadd.f32 0.0, %v1987
        %v1989 = vpop.f32.mrb[0].mxu0
        %1990 = vmatprep.mubr.bf16.mxu0 %v1448
        %1991 = vmatmul.mubr.bf16.gmra.mrb[0].mxu0 %v1259
        %v1992 = vpop.f32.mrb[0].mxu0
        %v1993 = vadd.f32 0.0, %v1992
        %v1994 = vpop.f32.mrb[0].mxu0
        %v1995 = vpop.f32.mrb[0].mxu0
        %v1996 = vadd.f32 0.0, %v1995
        %v1997 = vpop.f32.mrb[0].mxu0
        %1998 = vmatprep.mubr.bf16.mxu0 %v1460
        %1999 = vmatmul.mubr.bf16.gmra.mrb[0].mxu0 %v1260
        %v2000 = vpop.f32.mrb[0].mxu0
        %v2001 = vadd.f32 0.0, %v2000
        %v2002 = vpop.f32.mrb[0].mxu0
        %v2003 = vpop.f32.mrb[0].mxu0
        %v2004 = vadd.f32 0.0, %v2003
        %v2005 = vpop.f32.mrb[0].mxu0
        %2006 = vmatprep.mubr.bf16.mxu0 %v1472
        %2007 = vmatmul.mubr.bf16.gmra.mrb[0].mxu0 %v1261
        %v2008 = vpop.f32.mrb[0].mxu0
        %v2009 = vadd.f32 0.0, %v2008
        %v2010 = vpop.f32.mrb[0].mxu0
        %v2011 = vpop.f32.mrb[0].mxu0
        %v2012 = vadd.f32 0.0, %v2011
        %v2013 = vpop.f32.mrb[0].mxu0
        %2014 = vmatprep.mubr.bf16.mxu0 %v1484
        %2015 = vmatmul.mubr.bf16.gmra.mrb[0].mxu0 %v1262
        %v2016 = vpop.f32.mrb[0].mxu0
        %v2017 = vadd.f32 0.0, %v2016
        %v2018 = vpop.f32.mrb[0].mxu0
        %v2019 = vpop.f32.mrb[0].mxu0
        %v2020 = vadd.f32 0.0, %v2019
        %v2021 = vpop.f32.mrb[0].mxu0
        %2022 = vmatprep.mubr.bf16.mxu0 %v1496
        %2023 = vmatmul.mubr.bf16.gmra.mrb[0].mxu0 %v1263
        %v2024 = vpop.f32.mrb[0].mxu0
        %v2025 = vadd.f32 0.0, %v2024
        %v2026 = vpop.f32.mrb[0].mxu0
        %v2027 = vpop.f32.mrb[0].mxu0
        %v2028 = vadd.f32 0.0, %v2027
        %v2029 = vpop.f32.mrb[0].mxu0
        %2030 = vmatprep.mubr.bf16.mxu0 %v1508
        %2031 = vmatmul.mubr.bf16.gmra.mrb[0].mxu0 %v1264
        %v2032 = vpop.f32.mrb[0].mxu0
        %v2033 = vadd.f32 0.0, %v2032
        %v2034 = vpop.f32.mrb[0].mxu0
        %v2035 = vpop.f32.mrb[0].mxu0
        %v2036 = vadd.f32 0.0, %v2035
        %v2037 = vpop.f32.mrb[0].mxu0
        %2038 = vmatprep.mubr.bf16.mxu0 %v1520
        %2039 = vmatmul.mubr.bf16.gmra.mrb[0].mxu0 %v1265
        %v2040 = vpop.f32.mrb[0].mxu0
        %v2041 = vadd.f32 0.0, %v2040
        %v2042 = vpop.f32.mrb[0].mxu0
        %v2043 = vpop.f32.mrb[0].mxu0
        %v2044 = vadd.f32 0.0, %v2043
        %v2045 = vpop.f32.mrb[0].mxu0
        %2046 = vmatprep.mubr.bf16.mxu0 %v1532
        %2047 = vmatmul.mubr.bf16.gmra.mrb[0].mxu0 %v1266
        %v2048 = vpop.f32.mrb[0].mxu0
        %v2049 = vadd.f32 0.0, %v2048
        %v2050 = vpop.f32.mrb[0].mxu0
        %v2051 = vpop.f32.mrb[0].mxu0
        %v2052 = vadd.f32 0.0, %v2051
        %v2053 = vpop.f32.mrb[0].mxu0
        %2054 = vmatprep.mubr.bf16.mxu0 %v1544
        %2055 = vmatmul.mubr.bf16.gmra.mrb[0].mxu0 %v1267
        %v2056 = vpop.f32.mrb[0].mxu0
        %v2057 = vadd.f32 0.0, %v2056
        %v2058 = vpop.f32.mrb[0].mxu0
        %v2059 = vpop.f32.mrb[0].mxu0
        %v2060 = vadd.f32 0.0, %v2059
        %v2061 = vpop.f32.mrb[0].mxu0
        %2062 = vmatprep.mubr.bf16.mxu0 %v1556
        %2063 = vmatmul.mubr.bf16.gmra.mrb[0].mxu0 %v1268
        %v2064 = vpop.f32.mrb[0].mxu0
        %v2065 = vadd.f32 0.0, %v2064
        %v2066 = vpop.f32.mrb[0].mxu0
        %v2067 = vpop.f32.mrb[0].mxu0
        %v2068 = vadd.f32 0.0, %v2067
        %v2069 = vpop.f32.mrb[0].mxu0
        %2070 = vdwg.mxu0
        %2071 = vmatprep.subr.bf16.mxu0 0
        %2072 = vmatpush1.bf16.msra.mxu0 %v1862
        %2073 = vmatprep.subr.bf16.mxu0 0
        %2074 = vmatpush1.bf16.msra.mxu0 %v1863
        %2075 = vmatprep.subr.bf16.mxu0 0
        %2076 = vmatpush1.bf16.msra.mxu0 %v1864
        %2077 = vmatprep.subr.bf16.mxu0 0
        %2078 = vmatpush1.bf16.msra.mxu0 %v1865
        %2079 = vmatprep.subr.bf16.mxu0 0
        %2080 = vmatpush1.bf16.msra.mxu0 %v1866
        %2081 = vmatprep.subr.bf16.mxu0 0
        %2082 = vmatpush1.bf16.msra.mxu0 %v1867
        %2083 = vmatprep.subr.bf16.mxu0 0
        %2084 = vmatpush1.bf16.msra.mxu0 %v1868
        %2085 = vmatprep.subr.bf16.mxu0 0
        %2086 = vmatpush1.bf16.msra.mxu0 %v1869
        %2087 = vmatprep.subr.bf16.mxu0 0
        %2088 = vmatpush1.bf16.msra.mxu0 0
        %2089 = vmatprep.subr.bf16.mxu0 0
        %2090 = vmatpush1.bf16.msra.mxu0 0
        %2091 = vmatprep.subr.bf16.mxu0 0
        %2092 = vmatpush1.bf16.msra.mxu0 0
        %2093 = vmatprep.subr.bf16.mxu0 0
        %2094 = vmatpush1.bf16.msra.mxu0 0
        %2095 = vmatprep.subr.bf16.mxu0 0
        %2096 = vmatpush1.bf16.msra.mxu0 0
        %2097 = vmatprep.subr.bf16.mxu0 0
        %2098 = vmatpush1.bf16.msra.mxu0 0
        %2099 = vmatprep.subr.bf16.mxu0 0
        %2100 = vmatpush1.bf16.msra.mxu0 0
        %2101 = vmatprep.subr.bf16.mxu0 0
        %2102 = vmatpush1.bf16.msra.mxu0 0
        %2103 = vmatprep.mubr.bf16.mxu0 0
        %2104 = vmatmul.mubr.bf16.gmra.mrb[0].mxu0 %v1631
        %v2105 = vpop.f32.mrb[0].mxu0
        %v2106 = vadd.f32 %v1929, %v2105
        %v2107 = vpop.f32.mrb[0].mxu0
        %v2108 = vpop.f32.mrb[0].mxu0
        %v2109 = vadd.f32 %v1932, %v2108
        %v2110 = vpop.f32.mrb[0].mxu0
        %2111 = vmatprep.mubr.bf16.mxu0 0
        %2112 = vmatmul.mubr.bf16.gmra.mrb[0].mxu0 %v1634
        %v2113 = vpop.f32.mrb[0].mxu0
        %v2114 = vadd.f32 %v1937, %v2113
        %v2115 = vpop.f32.mrb[0].mxu0
        %v2116 = vpop.f32.mrb[0].mxu0
        %v2117 = vadd.f32 %v1940, %v2116
        %v2118 = vpop.f32.mrb[0].mxu0
        %2119 = vmatprep.mubr.bf16.mxu0 0
        %2120 = vmatmul.mubr.bf16.gmra.mrb[0].mxu0 %v1637
        %v2121 = vpop.f32.mrb[0].mxu0
        %v2122 = vadd.f32 %v1945, %v2121
        %v2123 = vpop.f32.mrb[0].mxu0
        %v2124 = vpop.f32.mrb[0].mxu0
        %v2125 = vadd.f32 %v1948, %v2124
        %v2126 = vpop.f32.mrb[0].mxu0
        %2127 = vmatprep.mubr.bf16.mxu0 0
        %2128 = vmatmul.mubr.bf16.gmra.mrb[0].mxu0 %v1640
        %v2129 = vpop.f32.mrb[0].mxu0
        %v2130 = vadd.f32 %v1953, %v2129
        %v2131 = vpop.f32.mrb[0].mxu0
        %v2132 = vpop.f32.mrb[0].mxu0
        %v2133 = vadd.f32 %v1956, %v2132
        %v2134 = vpop.f32.mrb[0].mxu0
        %2135 = vmatprep.mubr.bf16.mxu0 0
        %2136 = vmatmul.mubr.bf16.gmra.mrb[0].mxu0 %v1643
        %v2137 = vpop.f32.mrb[0].mxu0
        %v2138 = vadd.f32 %v1961, %v2137
        %v2139 = vpop.f32.mrb[0].mxu0
        %v2140 = vpop.f32.mrb[0].mxu0
        %v2141 = vadd.f32 %v1964, %v2140
        %v2142 = vpop.f32.mrb[0].mxu0
        %2143 = vmatprep.mubr.bf16.mxu0 0
        %2144 = vmatmul.mubr.bf16.gmra.mrb[0].mxu0 %v1646
        %v2145 = vpop.f32.mrb[0].mxu0
        %v2146 = vadd.f32 %v1969, %v2145
        %v2147 = vpop.f32.mrb[0].mxu0
        %v2148 = vpop.f32.mrb[0].mxu0
        %v2149 = vadd.f32 %v1972, %v2148
        %v2150 = vpop.f32.mrb[0].mxu0
        %2151 = vmatprep.mubr.bf16.mxu0 0
        %2152 = vmatmul.mubr.bf16.gmra.mrb[0].mxu0 %v1649
        %v2153 = vpop.f32.mrb[0].mxu0
        %v2154 = vadd.f32 %v1977, %v2153
        %v2155 = vpop.f32.mrb[0].mxu0
        %v2156 = vpop.f32.mrb[0].mxu0
        %v2157 = vadd.f32 %v1980, %v2156
        %v2158 = vpop.f32.mrb[0].mxu0
        %2159 = vmatprep.mubr.bf16.mxu0 0
        %2160 = vmatmul.mubr.bf16.gmra.mrb[0].mxu0 %v1652
        %v2161 = vpop.f32.mrb[0].mxu0
        %v2162 = vadd.f32 %v1985, %v2161
        %v2163 = vpop.f32.mrb[0].mxu0
        %v2164 = vpop.f32.mrb[0].mxu0
        %v2165 = vadd.f32 %v1988, %v2164
        %v2166 = vpop.f32.mrb[0].mxu0
        %2167 = vmatprep.mubr.bf16.mxu0 0
        %2168 = vmatmul.mubr.bf16.gmra.mrb[0].mxu0 %v1655
        %v2169 = vpop.f32.mrb[0].mxu0
        %v2170 = vadd.f32 %v1993, %v2169
        %v2171 = vpop.f32.mrb[0].mxu0
        %v2172 = vpop.f32.mrb[0].mxu0
        %v2173 = vadd.f32 %v1996, %v2172
        %v2174 = vpop.f32.mrb[0].mxu0
        %2175 = vmatprep.mubr.bf16.mxu0 0
        %2176 = vmatmul.mubr.bf16.gmra.mrb[0].mxu0 %v1658
        %v2177 = vpop.f32.mrb[0].mxu0
        %v2178 = vadd.f32 %v2001, %v2177
        %v2179 = vpop.f32.mrb[0].mxu0
        %v2180 = vpop.f32.mrb[0].mxu0
        %v2181 = vadd.f32 %v2004, %v2180
        %v2182 = vpop.f32.mrb[0].mxu0
        %2183 = vmatprep.mubr.bf16.mxu0 0
        %2184 = vmatmul.mubr.bf16.gmra.mrb[0].mxu0 %v1661
        %v2185 = vpop.f32.mrb[0].mxu0
        %v2186 = vadd.f32 %v2009, %v2185
        %v2187 = vpop.f32.mrb[0].mxu0
        %v2188 = vpop.f32.mrb[0].mxu0
        %v2189 = vadd.f32 %v2012, %v2188
        %v2190 = vpop.f32.mrb[0].mxu0
        %2191 = vmatprep.mubr.bf16.mxu0 0
        %2192 = vmatmul.mubr.bf16.gmra.mrb[0].mxu0 %v1664
        %v2193 = vpop.f32.mrb[0].mxu0
        %v2194 = vadd.f32 %v2017, %v2193
        %v2195 = vpop.f32.mrb[0].mxu0
        %v2196 = vpop.f32.mrb[0].mxu0
        %v2197 = vadd.f32 %v2020, %v2196
        %v2198 = vpop.f32.mrb[0].mxu0
        %2199 = vmatprep.mubr.bf16.mxu0 0
        %2200 = vmatmul.mubr.bf16.gmra.mrb[0].mxu0 %v1667
        %v2201 = vpop.f32.mrb[0].mxu0
        %v2202 = vadd.f32 %v2025, %v2201
        %v2203 = vpop.f32.mrb[0].mxu0
        %v2204 = vpop.f32.mrb[0].mxu0
        %v2205 = vadd.f32 %v2028, %v2204
        %v2206 = vpop.f32.mrb[0].mxu0
        %2207 = vmatprep.mubr.bf16.mxu0 0
        %2208 = vmatmul.mubr.bf16.gmra.mrb[0].mxu0 %v1670
        %v2209 = vpop.f32.mrb[0].mxu0
        %v2210 = vadd.f32 %v2033, %v2209
        %v2211 = vpop.f32.mrb[0].mxu0
        %v2212 = vpop.f32.mrb[0].mxu0
        %v2213 = vadd.f32 %v2036, %v2212
        %v2214 = vpop.f32.mrb[0].mxu0
        %2215 = vmatprep.mubr.bf16.mxu0 0
        %2216 = vmatmul.mubr.bf16.gmra.mrb[0].mxu0 %v1673
        %v2217 = vpop.f32.mrb[0].mxu0
        %v2218 = vadd.f32 %v2041, %v2217
        %v2219 = vpop.f32.mrb[0].mxu0
        %v2220 = vpop.f32.mrb[0].mxu0
        %v2221 = vadd.f32 %v2044, %v2220
        %v2222 = vpop.f32.mrb[0].mxu0
        %2223 = vmatprep.mubr.bf16.mxu0 0
        %2224 = vmatmul.mubr.bf16.gmra.mrb[0].mxu0 %v1676
        %v2225 = vpop.f32.mrb[0].mxu0
        %v2226 = vadd.f32 %v2049, %v2225
        %v2227 = vpop.f32.mrb[0].mxu0
        %v2228 = vpop.f32.mrb[0].mxu0
        %v2229 = vadd.f32 %v2052, %v2228
        %v2230 = vpop.f32.mrb[0].mxu0
        %2231 = vmatprep.mubr.bf16.mxu0 0
        %2232 = vmatmul.mubr.bf16.gmra.mrb[0].mxu0 %v1679
        %v2233 = vpop.f32.mrb[0].mxu0
        %v2234 = vadd.f32 %v2057, %v2233
        %v2235 = vpop.f32.mrb[0].mxu0
        %v2236 = vpop.f32.mrb[0].mxu0
        %v2237 = vadd.f32 %v2060, %v2236
        %v2238 = vpop.f32.mrb[0].mxu0
        %2239 = vmatprep.mubr.bf16.mxu0 0
        %2240 = vmatmul.mubr.bf16.gmra.mrb[0].mxu0 %v1682
        %v2241 = vpop.f32.mrb[0].mxu0
        %v2242 = vadd.f32 %v2065, %v2241
        %v2243 = vpop.f32.mrb[0].mxu0
        %v2244 = vpop.f32.mrb[0].mxu0
        %v2245 = vadd.f32 %v2068, %v2244
        %v2246 = vpop.f32.mrb[0].mxu0
        %2247 = vdwg.mxu0
        %v2296 = vunpack.c.l.b16 %v1055
        %v2297 = vunpack.c.l.b16 %v1056
        %v2298 = vunpack.c.l.b16 %v1057
        %v2299 = vunpack.c.l.b16 %v1058
        %v2300 = vunpack.c.l.b16 %v1059
        %v2301 = vunpack.c.l.b16 %v1060
        %v2302 = vunpack.c.l.b16 %v1061
        %v2303 = vunpack.c.l.b16 %v1062
        %v2304 = vunpack.c.l.b16 %v1063
        %v2305 = vunpack.c.l.b16 %v1064
        %v2306 = vunpack.c.l.b16 %v1065
        %v2307 = vunpack.c.l.b16 %v1066
        %v2308 = vunpack.c.l.b16 %v1067
        %v2309 = vunpack.c.l.b16 %v1068
        %v2310 = vunpack.c.l.b16 %v1069
        %v2311 = vunpack.c.l.b16 %v1070
        %v2312 = vunpack.c.l.b16 %v1071
        %v2313 = vunpack.c.l.b16 %v1072
        %v2314 = vunpack.c.l.b16 %v1073
        %v2315 = vunpack.c.l.b16 %v1074
        %v2316 = vunpack.c.l.b16 %v1075
        %v2317 = vunpack.c.l.b16 %v1076
        %v2318 = vunpack.c.l.b16 %v1077
        %v2319 = vunpack.c.l.b16 %v1078
        %v2320 = vunpack.c.l.b16 %v1079
        %v2321 = vunpack.c.l.b16 %v1080
        %v2322 = vunpack.c.l.b16 %v1081
        %v2323 = vunpack.c.l.b16 %v1082
        %v2324 = vunpack.c.l.b16 %v1083
        %v2325 = vunpack.c.l.b16 %v1084
        %v2326 = vunpack.c.l.b16 %v1085
        %v2327 = vunpack.c.l.b16 %v1086
        %v2328 = vunpack.c.l.b16 %v1087
        %v2329 = vunpack.c.l.b16 %v1088
        %v2330 = vunpack.c.l.b16 %v1089
        %v2331 = vunpack.c.l.b16 %v1090
        %v2332 = vunpack.c.l.b16 %v1091
        %v2333 = vunpack.c.l.b16 %v1092
        %v2334 = vunpack.c.l.b16 %v1093
        %v2335 = vunpack.c.l.b16 %v1094
        %v2336 = vunpack.c.l.b16 %v1095
        %v2337 = vunpack.c.l.b16 %v1096
        %v2338 = vunpack.c.l.b16 %v1097
        %v2339 = vunpack.c.l.b16 %v1098
        %v2340 = vunpack.c.l.b16 %v1099
        %v2341 = vunpack.c.l.b16 %v1100
        %v2342 = vunpack.c.l.b16 %v1101
        %v2343 = vunpack.c.l.b16 %v1102
        %v2344 = vpack.c.b16 %v2297, %v2296
        %v2345 = vpack.c.b16 %v2299, %v2298
        %v2346 = vpack.c.b16 %v2301, %v2300
        %v2347 = vpack.c.b16 %v2303, %v2302
        %v2348 = vpack.c.b16 %v2305, %v2304
        %v2349 = vpack.c.b16 %v2307, %v2306
        %v2350 = vpack.c.b16 %v2309, %v2308
        %v2351 = vpack.c.b16 %v2311, %v2310
        %v2352 = vpack.c.b16 %v2313, %v2312
        %v2353 = vpack.c.b16 %v2315, %v2314
        %v2354 = vpack.c.b16 %v2317, %v2316
        %v2355 = vpack.c.b16 %v2319, %v2318
        %v2356 = vpack.c.b16 %v2321, %v2320
        %v2357 = vpack.c.b16 %v2323, %v2322
        %v2358 = vpack.c.b16 %v2325, %v2324
        %v2359 = vpack.c.b16 %v2327, %v2326
        %v2360 = vpack.c.b16 %v2329, %v2328
        %v2361 = vpack.c.b16 %v2331, %v2330
        %v2362 = vpack.c.b16 %v2333, %v2332
        %v2363 = vpack.c.b16 %v2335, %v2334
        %v2364 = vpack.c.b16 %v2337, %v2336
        %v2365 = vpack.c.b16 %v2339, %v2338
        %v2366 = vpack.c.b16 %v2341, %v2340
        %v2367 = vpack.c.b16 %v2343, %v2342
        %2392 = vmatprep.subr.bf16.mxu0 0
        %2393 = vmatpush1.bf16.msra.mxu0 %v2344
        %2394 = vmatprep.subr.bf16.mxu0 0
        %2395 = vmatpush1.bf16.msra.mxu0 %v2345
        %2396 = vmatprep.subr.bf16.mxu0 0
        %2397 = vmatpush1.bf16.msra.mxu0 %v2346
        %2398 = vmatprep.subr.bf16.mxu0 0
        %2399 = vmatpush1.bf16.msra.mxu0 %v2347
        %2400 = vmatprep.subr.bf16.mxu0 0
        %2401 = vmatpush1.bf16.msra.mxu0 %v2348
        %2402 = vmatprep.subr.bf16.mxu0 0
        %2403 = vmatpush1.bf16.msra.mxu0 %v2349
        %2404 = vmatprep.subr.bf16.mxu0 0
        %2405 = vmatpush1.bf16.msra.mxu0 %v2350
        %2406 = vmatprep.subr.bf16.mxu0 0
        %2407 = vmatpush1.bf16.msra.mxu0 %v2351
        %2408 = vmatprep.subr.bf16.mxu0 0
        %2409 = vmatpush1.bf16.msra.mxu0 %v2352
        %2410 = vmatprep.subr.bf16.mxu0 0
        %2411 = vmatpush1.bf16.msra.mxu0 %v2353
        %2412 = vmatprep.subr.bf16.mxu0 0
        %2413 = vmatpush1.bf16.msra.mxu0 %v2354
        %2414 = vmatprep.subr.bf16.mxu0 0
        %2415 = vmatpush1.bf16.msra.mxu0 %v2355
        %2416 = vmatprep.subr.bf16.mxu0 0
        %2417 = vmatpush1.bf16.msra.mxu0 %v2356
        %2418 = vmatprep.subr.bf16.mxu0 0
        %2419 = vmatpush1.bf16.msra.mxu0 %v2357
        %2420 = vmatprep.subr.bf16.mxu0 0
        %2421 = vmatpush1.bf16.msra.mxu0 %v2358
        %2422 = vmatprep.subr.bf16.mxu0 0
        %2423 = vmatpush1.bf16.msra.mxu0 %v2359
        %2424 = vmatprep.mubr.bf16.mxu0 %v705
        %2425 = vmatmul.mubr.bf16.gmra.mrb[0].mxu0 %v603
        %v2426 = vpop.f32.mrb[0].mxu0
        %v2427 = vadd.f32 %v2106, %v2426
        %v2428 = vpop.f32.mrb[0].mxu0
        %v2429 = vpop.f32.mrb[0].mxu0
        %v2430 = vadd.f32 %v2109, %v2429
        %v2431 = vpop.f32.mrb[0].mxu0
        %2432 = vmatprep.mubr.bf16.mxu0 %v717
        %2433 = vmatmul.mubr.bf16.gmra.mrb[0].mxu0 %v604
        %v2434 = vpop.f32.mrb[0].mxu0
        %v2435 = vadd.f32 %v2114, %v2434
        %v2436 = vpop.f32.mrb[0].mxu0
        %v2437 = vpop.f32.mrb[0].mxu0
        %v2438 = vadd.f32 %v2117, %v2437
        %v2439 = vpop.f32.mrb[0].mxu0
        %2440 = vmatprep.mubr.bf16.mxu0 %v729
        %2441 = vmatmul.mubr.bf16.gmra.mrb[0].mxu0 %v605
        %v2442 = vpop.f32.mrb[0].mxu0
        %v2443 = vadd.f32 %v2122, %v2442
        %v2444 = vpop.f32.mrb[0].mxu0
        %v2445 = vpop.f32.mrb[0].mxu0
        %v2446 = vadd.f32 %v2125, %v2445
        %v2447 = vpop.f32.mrb[0].mxu0
        %2448 = vmatprep.mubr.bf16.mxu0 %v741
        %2449 = vmatmul.mubr.bf16.gmra.mrb[0].mxu0 %v606
        %v2450 = vpop.f32.mrb[0].mxu0
        %v2451 = vadd.f32 %v2130, %v2450
        %v2452 = vpop.f32.mrb[0].mxu0
        %v2453 = vpop.f32.mrb[0].mxu0
        %v2454 = vadd.f32 %v2133, %v2453
        %v2455 = vpop.f32.mrb[0].mxu0
        %2456 = vmatprep.mubr.bf16.mxu0 %v753
        %2457 = vmatmul.mubr.bf16.gmra.mrb[0].mxu0 %v607
        %v2458 = vpop.f32.mrb[0].mxu0
        %v2459 = vadd.f32 %v2138, %v2458
        %v2460 = vpop.f32.mrb[0].mxu0
        %v2461 = vpop.f32.mrb[0].mxu0
        %v2462 = vadd.f32 %v2141, %v2461
        %v2463 = vpop.f32.mrb[0].mxu0
        %2464 = vmatprep.mubr.bf16.mxu0 %v765
        %2465 = vmatmul.mubr.bf16.gmra.mrb[0].mxu0 %v608
        %v2466 = vpop.f32.mrb[0].mxu0
        %v2467 = vadd.f32 %v2146, %v2466
        %v2468 = vpop.f32.mrb[0].mxu0
        %v2469 = vpop.f32.mrb[0].mxu0
        %v2470 = vadd.f32 %v2149, %v2469
        %v2471 = vpop.f32.mrb[0].mxu0
        %2472 = vmatprep.mubr.bf16.mxu0 %v777
        %2473 = vmatmul.mubr.bf16.gmra.mrb[0].mxu0 %v609
        %v2474 = vpop.f32.mrb[0].mxu0
        %v2475 = vadd.f32 %v2154, %v2474
        %v2476 = vpop.f32.mrb[0].mxu0
        %v2477 = vpop.f32.mrb[0].mxu0
        %v2478 = vadd.f32 %v2157, %v2477
        %v2479 = vpop.f32.mrb[0].mxu0
        %2480 = vmatprep.mubr.bf16.mxu0 %v789
        %2481 = vmatmul.mubr.bf16.gmra.mrb[0].mxu0 %v610
        %v2482 = vpop.f32.mrb[0].mxu0
        %v2483 = vadd.f32 %v2162, %v2482
        %v2484 = vpop.f32.mrb[0].mxu0
        %v2485 = vpop.f32.mrb[0].mxu0
        %v2486 = vadd.f32 %v2165, %v2485
        %v2487 = vpop.f32.mrb[0].mxu0
        %2488 = vmatprep.mubr.bf16.mxu0 %v801
        %2489 = vmatmul.mubr.bf16.gmra.mrb[0].mxu0 %v611
        %v2490 = vpop.f32.mrb[0].mxu0
        %v2491 = vadd.f32 %v2170, %v2490
        %v2492 = vpop.f32.mrb[0].mxu0
        %v2493 = vpop.f32.mrb[0].mxu0
        %v2494 = vadd.f32 %v2173, %v2493
        %v2495 = vpop.f32.mrb[0].mxu0
        %2496 = vmatprep.mubr.bf16.mxu0 %v813
        %2497 = vmatmul.mubr.bf16.gmra.mrb[0].mxu0 %v612
        %v2498 = vpop.f32.mrb[0].mxu0
        %v2499 = vadd.f32 %v2178, %v2498
        %v2500 = vpop.f32.mrb[0].mxu0
        %v2501 = vpop.f32.mrb[0].mxu0
        %v2502 = vadd.f32 %v2181, %v2501
        %v2503 = vpop.f32.mrb[0].mxu0
        %2504 = vmatprep.mubr.bf16.mxu0 %v825
        %2505 = vmatmul.mubr.bf16.gmra.mrb[0].mxu0 %v613
        %v2506 = vpop.f32.mrb[0].mxu0
        %v2507 = vadd.f32 %v2186, %v2506
        %v2508 = vpop.f32.mrb[0].mxu0
        %v2509 = vpop.f32.mrb[0].mxu0
        %v2510 = vadd.f32 %v2189, %v2509
        %v2511 = vpop.f32.mrb[0].mxu0
        %2512 = vmatprep.mubr.bf16.mxu0 %v837
        %2513 = vmatmul.mubr.bf16.gmra.mrb[0].mxu0 %v614
        %v2514 = vpop.f32.mrb[0].mxu0
        %v2515 = vadd.f32 %v2194, %v2514
        %v2516 = vpop.f32.mrb[0].mxu0
        %v2517 = vpop.f32.mrb[0].mxu0
        %v2518 = vadd.f32 %v2197, %v2517
        %v2519 = vpop.f32.mrb[0].mxu0
        %2520 = vmatprep.mubr.bf16.mxu0 %v849
        %2521 = vmatmul.mubr.bf16.gmra.mrb[0].mxu0 %v615
        %v2522 = vpop.f32.mrb[0].mxu0
        %v2523 = vadd.f32 %v2202, %v2522
        %v2524 = vpop.f32.mrb[0].mxu0
        %v2525 = vpop.f32.mrb[0].mxu0
        %v2526 = vadd.f32 %v2205, %v2525
        %v2527 = vpop.f32.mrb[0].mxu0
        %2528 = vmatprep.mubr.bf16.mxu0 %v861
        %2529 = vmatmul.mubr.bf16.gmra.mrb[0].mxu0 %v616
        %v2530 = vpop.f32.mrb[0].mxu0
        %v2531 = vadd.f32 %v2210, %v2530
        %v2532 = vpop.f32.mrb[0].mxu0
        %v2533 = vpop.f32.mrb[0].mxu0
        %v2534 = vadd.f32 %v2213, %v2533
        %v2535 = vpop.f32.mrb[0].mxu0
        %2536 = vmatprep.mubr.bf16.mxu0 %v873
        %2537 = vmatmul.mubr.bf16.gmra.mrb[0].mxu0 %v617
        %v2538 = vpop.f32.mrb[0].mxu0
        %v2539 = vadd.f32 %v2218, %v2538
        %v2540 = vpop.f32.mrb[0].mxu0
        %v2541 = vpop.f32.mrb[0].mxu0
        %v2542 = vadd.f32 %v2221, %v2541
        %v2543 = vpop.f32.mrb[0].mxu0
        %2544 = vmatprep.mubr.bf16.mxu0 %v885
        %2545 = vmatmul.mubr.bf16.gmra.mrb[0].mxu0 %v618
        %v2546 = vpop.f32.mrb[0].mxu0
        %v2547 = vadd.f32 %v2226, %v2546
        %v2548 = vpop.f32.mrb[0].mxu0
        %v2549 = vpop.f32.mrb[0].mxu0
        %v2550 = vadd.f32 %v2229, %v2549
        %v2551 = vpop.f32.mrb[0].mxu0
        %2552 = vmatprep.mubr.bf16.mxu0 %v897
        %2553 = vmatmul.mubr.bf16.gmra.mrb[0].mxu0 %v619
        %v2554 = vpop.f32.mrb[0].mxu0
        %v2555 = vadd.f32 %v2234, %v2554
        %v2556 = vpop.f32.mrb[0].mxu0
        %v2557 = vpop.f32.mrb[0].mxu0
        %v2558 = vadd.f32 %v2237, %v2557
        %v2559 = vpop.f32.mrb[0].mxu0
        %2560 = vmatprep.mubr.bf16.mxu0 %v909
        %2561 = vmatmul.mubr.bf16.gmra.mrb[0].mxu0 %v620
        %v2562 = vpop.f32.mrb[0].mxu0
        %v2563 = vadd.f32 %v2242, %v2562
        %v2564 = vpop.f32.mrb[0].mxu0
        %v2565 = vpop.f32.mrb[0].mxu0
        %v2566 = vadd.f32 %v2245, %v2565
        %v2567 = vpop.f32.mrb[0].mxu0
        %2568 = vdwg.mxu0
        %2569 = vmatprep.subr.bf16.mxu0 0
        %2570 = vmatpush1.bf16.msra.mxu0 %v2360
        %2571 = vmatprep.subr.bf16.mxu0 0
        %2572 = vmatpush1.bf16.msra.mxu0 %v2361
        %2573 = vmatprep.subr.bf16.mxu0 0
        %2574 = vmatpush1.bf16.msra.mxu0 %v2362
        %2575 = vmatprep.subr.bf16.mxu0 0
        %2576 = vmatpush1.bf16.msra.mxu0 %v2363
        %2577 = vmatprep.subr.bf16.mxu0 0
        %2578 = vmatpush1.bf16.msra.mxu0 %v2364
        %2579 = vmatprep.subr.bf16.mxu0 0
        %2580 = vmatpush1.bf16.msra.mxu0 %v2365
        %2581 = vmatprep.subr.bf16.mxu0 0
        %2582 = vmatpush1.bf16.msra.mxu0 %v2366
        %2583 = vmatprep.subr.bf16.mxu0 0
        %2584 = vmatpush1.bf16.msra.mxu0 %v2367
        %2585 = vmatprep.subr.bf16.mxu0 0
        %2586 = vmatpush1.bf16.msra.mxu0 0
        %2587 = vmatprep.subr.bf16.mxu0 0
        %2588 = vmatpush1.bf16.msra.mxu0 0
        %2589 = vmatprep.subr.bf16.mxu0 0
        %2590 = vmatpush1.bf16.msra.mxu0 0
        %2591 = vmatprep.subr.bf16.mxu0 0
        %2592 = vmatpush1.bf16.msra.mxu0 0
        %2593 = vmatprep.subr.bf16.mxu0 0
        %2594 = vmatpush1.bf16.msra.mxu0 0
        %2595 = vmatprep.subr.bf16.mxu0 0
        %2596 = vmatpush1.bf16.msra.mxu0 0
        %2597 = vmatprep.subr.bf16.mxu0 0
        %2598 = vmatpush1.bf16.msra.mxu0 0
        %2599 = vmatprep.subr.bf16.mxu0 0
        %2600 = vmatpush1.bf16.msra.mxu0 0
        %2601 = vmatprep.mubr.bf16.mxu0 0
        %2602 = vmatmul.mubr.bf16.gmra.mrb[0].mxu0 %v985
        %v2603 = vpop.f32.mrb[0].mxu0
        %v2604 = vadd.f32 %v2427, %v2603
        %v2605 = vpop.f32.mrb[0].mxu0
        %v2606 = vpop.f32.mrb[0].mxu0
        %v2607 = vadd.f32 %v2430, %v2606
        %v2608 = vpop.f32.mrb[0].mxu0
        %2609 = vmatprep.mubr.bf16.mxu0 0
        %2610 = vmatmul.mubr.bf16.gmra.mrb[0].mxu0 %v988
        %v2611 = vpop.f32.mrb[0].mxu0
        %v2612 = vadd.f32 %v2435, %v2611
        %v2613 = vpop.f32.mrb[0].mxu0
        %v2614 = vpop.f32.mrb[0].mxu0
        %v2615 = vadd.f32 %v2438, %v2614
        %v2616 = vpop.f32.mrb[0].mxu0
        %2617 = vmatprep.mubr.bf16.mxu0 0
        %2618 = vmatmul.mubr.bf16.gmra.mrb[0].mxu0 %v991
        %v2619 = vpop.f32.mrb[0].mxu0
        %v2620 = vadd.f32 %v2443, %v2619
        %v2621 = vpop.f32.mrb[0].mxu0
        %v2622 = vpop.f32.mrb[0].mxu0
        %v2623 = vadd.f32 %v2446, %v2622
        %v2624 = vpop.f32.mrb[0].mxu0
        %2625 = vmatprep.mubr.bf16.mxu0 0
        %2626 = vmatmul.mubr.bf16.gmra.mrb[0].mxu0 %v994
        %v2627 = vpop.f32.mrb[0].mxu0
        %v2628 = vadd.f32 %v2451, %v2627
        %v2629 = vpop.f32.mrb[0].mxu0
        %v2630 = vpop.f32.mrb[0].mxu0
        %v2631 = vadd.f32 %v2454, %v2630
        %v2632 = vpop.f32.mrb[0].mxu0
        %2633 = vmatprep.mubr.bf16.mxu0 0
        %2634 = vmatmul.mubr.bf16.gmra.mrb[0].mxu0 %v997
        %v2635 = vpop.f32.mrb[0].mxu0
        %v2636 = vadd.f32 %v2459, %v2635
        %v2637 = vpop.f32.mrb[0].mxu0
        %v2638 = vpop.f32.mrb[0].mxu0
        %v2639 = vadd.f32 %v2462, %v2638
        %v2640 = vpop.f32.mrb[0].mxu0
        %2641 = vmatprep.mubr.bf16.mxu0 0
        %2642 = vmatmul.mubr.bf16.gmra.mrb[0].mxu0 %v1000
        %v2643 = vpop.f32.mrb[0].mxu0
        %v2644 = vadd.f32 %v2467, %v2643
        %v2645 = vpop.f32.mrb[0].mxu0
        %v2646 = vpop.f32.mrb[0].mxu0
        %v2647 = vadd.f32 %v2470, %v2646
        %v2648 = vpop.f32.mrb[0].mxu0
        %2649 = vmatprep.mubr.bf16.mxu0 0
        %2650 = vmatmul.mubr.bf16.gmra.mrb[0].mxu0 %v1003
        %v2651 = vpop.f32.mrb[0].mxu0
        %v2652 = vadd.f32 %v2475, %v2651
        %v2653 = vpop.f32.mrb[0].mxu0
        %v2654 = vpop.f32.mrb[0].mxu0
        %v2655 = vadd.f32 %v2478, %v2654
        %v2656 = vpop.f32.mrb[0].mxu0
        %2657 = vmatprep.mubr.bf16.mxu0 0
        %2658 = vmatmul.mubr.bf16.gmra.mrb[0].mxu0 %v1006
        %v2659 = vpop.f32.mrb[0].mxu0
        %v2660 = vadd.f32 %v2483, %v2659
        %v2661 = vpop.f32.mrb[0].mxu0
        %v2662 = vpop.f32.mrb[0].mxu0
        %v2663 = vadd.f32 %v2486, %v2662
        %v2664 = vpop.f32.mrb[0].mxu0
        %2665 = vmatprep.mubr.bf16.mxu0 0
        %2666 = vmatmul.mubr.bf16.gmra.mrb[0].mxu0 %v1009
        %v2667 = vpop.f32.mrb[0].mxu0
        %v2668 = vadd.f32 %v2491, %v2667
        %v2669 = vpop.f32.mrb[0].mxu0
        %v2670 = vpop.f32.mrb[0].mxu0
        %v2671 = vadd.f32 %v2494, %v2670
        %v2672 = vpop.f32.mrb[0].mxu0
        %2673 = vmatprep.mubr.bf16.mxu0 0
        %2674 = vmatmul.mubr.bf16.gmra.mrb[0].mxu0 %v1012
        %v2675 = vpop.f32.mrb[0].mxu0
        %v2676 = vadd.f32 %v2499, %v2675
        %v2677 = vpop.f32.mrb[0].mxu0
        %v2678 = vpop.f32.mrb[0].mxu0
        %v2679 = vadd.f32 %v2502, %v2678
        %v2680 = vpop.f32.mrb[0].mxu0
        %2681 = vmatprep.mubr.bf16.mxu0 0
        %2682 = vmatmul.mubr.bf16.gmra.mrb[0].mxu0 %v1015
        %v2683 = vpop.f32.mrb[0].mxu0
        %v2684 = vadd.f32 %v2507, %v2683
        %v2685 = vpop.f32.mrb[0].mxu0
        %v2686 = vpop.f32.mrb[0].mxu0
        %v2687 = vadd.f32 %v2510, %v2686
        %v2688 = vpop.f32.mrb[0].mxu0
        %2689 = vmatprep.mubr.bf16.mxu0 0
        %2690 = vmatmul.mubr.bf16.gmra.mrb[0].mxu0 %v1018
        %v2691 = vpop.f32.mrb[0].mxu0
        %v2692 = vadd.f32 %v2515, %v2691
        %v2693 = vpop.f32.mrb[0].mxu0
        %v2694 = vpop.f32.mrb[0].mxu0
        %v2695 = vadd.f32 %v2518, %v2694
        %v2696 = vpop.f32.mrb[0].mxu0
        %2697 = vmatprep.mubr.bf16.mxu0 0
        %2698 = vmatmul.mubr.bf16.gmra.mrb[0].mxu0 %v1021
        %v2699 = vpop.f32.mrb[0].mxu0
        %v2700 = vadd.f32 %v2523, %v2699
        %v2701 = vpop.f32.mrb[0].mxu0
        %v2702 = vpop.f32.mrb[0].mxu0
        %v2703 = vadd.f32 %v2526, %v2702
        %v2704 = vpop.f32.mrb[0].mxu0
        %2705 = vmatprep.mubr.bf16.mxu0 0
        %2706 = vmatmul.mubr.bf16.gmra.mrb[0].mxu0 %v1024
        %v2707 = vpop.f32.mrb[0].mxu0
        %v2708 = vadd.f32 %v2531, %v2707
        %v2709 = vpop.f32.mrb[0].mxu0
        %v2710 = vpop.f32.mrb[0].mxu0
        %v2711 = vadd.f32 %v2534, %v2710
        %v2712 = vpop.f32.mrb[0].mxu0
        %2713 = vmatprep.mubr.bf16.mxu0 0
        %2714 = vmatmul.mubr.bf16.gmra.mrb[0].mxu0 %v1027
        %v2715 = vpop.f32.mrb[0].mxu0
        %v2716 = vadd.f32 %v2539, %v2715
        %v2717 = vpop.f32.mrb[0].mxu0
        %v2718 = vpop.f32.mrb[0].mxu0
        %v2719 = vadd.f32 %v2542, %v2718
        %v2720 = vpop.f32.mrb[0].mxu0
        %2721 = vmatprep.mubr.bf16.mxu0 0
        %2722 = vmatmul.mubr.bf16.gmra.mrb[0].mxu0 %v1030
        %v2723 = vpop.f32.mrb[0].mxu0
        %v2724 = vadd.f32 %v2547, %v2723
        %v2725 = vpop.f32.mrb[0].mxu0
        %v2726 = vpop.f32.mrb[0].mxu0
        %v2727 = vadd.f32 %v2550, %v2726
        %v2728 = vpop.f32.mrb[0].mxu0
        %2729 = vmatprep.mubr.bf16.mxu0 0
        %2730 = vmatmul.mubr.bf16.gmra.mrb[0].mxu0 %v1033
        %v2731 = vpop.f32.mrb[0].mxu0
        %v2732 = vadd.f32 %v2555, %v2731
        %v2733 = vpop.f32.mrb[0].mxu0
        %v2734 = vpop.f32.mrb[0].mxu0
        %v2735 = vadd.f32 %v2558, %v2734
        %v2736 = vpop.f32.mrb[0].mxu0
        %2737 = vmatprep.mubr.bf16.mxu0 0
        %2738 = vmatmul.mubr.bf16.gmra.mrb[0].mxu0 %v1036
        %v2739 = vpop.f32.mrb[0].mxu0
        %v2740 = vadd.f32 %v2563, %v2739
        %v2741 = vpop.f32.mrb[0].mxu0
        %v2742 = vpop.f32.mrb[0].mxu0
        %v2743 = vadd.f32 %v2566, %v2742
        %v2744 = vpop.f32.mrb[0].mxu0
        %2745 = vdwg.mxu0
        %s2746 = sadd.s32 %s342, 2
        %s2747 = smul.u32 %s2746, 3
        %s2748 = smul.addr %s2747, 4
        %s2749 = scalar_lea.vmem %s301, %s2748 [#allocation3]
        %v2750 = vld [vmem:[%s2749] sm:$0xf]
        %v2751 = vld [vmem:[%s2749 + $0x4] sm:$0xf]
        %v2752 = vld [vmem:[%s2749 + $0xc] sm:$0xf]
        %v2753 = vld [vmem:[%s2749 + $0x10] sm:$0xf]
        %v2754 = vld [vmem:[%s2749 + $0x18] sm:$0xf]
        %v2755 = vld [vmem:[%s2749 + $0x1c] sm:$0xf]
        %v2756 = vld [vmem:[%s2749 + $0x24] sm:$0xf]
        %v2757 = vld [vmem:[%s2749 + $0x28] sm:$0xf]
        %v2758 = vld [vmem:[%s2749 + $0x30] sm:$0xf]
        %v2759 = vld [vmem:[%s2749 + $0x34] sm:$0xf]
        %v2760 = vld [vmem:[%s2749 + $0x3c] sm:$0xf]
        %v2761 = vld [vmem:[%s2749 + $0x40] sm:$0xf]
        %v2762 = vld [vmem:[%s2749 + $0x48] sm:$0xf]
        %v2763 = vld [vmem:[%s2749 + $0x4c] sm:$0xf]
        %v2764 = vld [vmem:[%s2749 + $0x54] sm:$0xf]
        %v2765 = vld [vmem:[%s2749 + $0x58] sm:$0xf]
        %v2766 = vld [vmem:[%s2749 + $0x60] sm:$0xf]
        %v2767 = vld [vmem:[%s2749 + $0x64] sm:$0xf]
        %v2768 = vld [vmem:[%s2749 + $0x6c] sm:$0xf]
        %v2769 = vld [vmem:[%s2749 + $0x70] sm:$0xf]
        %v2770 = vld [vmem:[%s2749 + $0x78] sm:$0xf]
        %v2771 = vld [vmem:[%s2749 + $0x7c] sm:$0xf]
        %v2772 = vld [vmem:[%s2749 + $0x84] sm:$0xf]
        %v2773 = vld [vmem:[%s2749 + $0x88] sm:$0xf]
        %v2774 = vld [vmem:[%s2749 + $0x90] sm:$0xf]
        %v2775 = vld [vmem:[%s2749 + $0x94] sm:$0xf]
        %v2776 = vld [vmem:[%s2749 + $0x9c] sm:$0xf]
        %v2777 = vld [vmem:[%s2749 + $0xa0] sm:$0xf]
        %v2778 = vld [vmem:[%s2749 + $0xa8] sm:$0xf]
        %v2779 = vld [vmem:[%s2749 + $0xac] sm:$0xf]
        %v2780 = vld [vmem:[%s2749 + $0xb4] sm:$0xf]
        %v2781 = vld [vmem:[%s2749 + $0xb8] sm:$0xf]
        %v2782 = vld [vmem:[%s2749 + $0xc0] sm:$0xf]
        %v2783 = vld [vmem:[%s2749 + $0xc4] sm:$0xf]
        %v2784 = vld [vmem:[%s2749 + $0xcc] sm:$0xf]
        %v2785 = vld [vmem:[%s2749 + $0xd0] sm:$0xf]
        %v2786 = vld [vmem:[%s2749 + $0x8] sm:$0x1]
        %v2787 = vld [vmem:[%s2749 + $0x14] sm:$0x1]
        %v2788 = vld [vmem:[%s2749 + $0x20] sm:$0x1]
        %v2789 = vld [vmem:[%s2749 + $0x2c] sm:$0x1]
        %v2790 = vld [vmem:[%s2749 + $0x38] sm:$0x1]
        %v2791 = vld [vmem:[%s2749 + $0x44] sm:$0x1]
        %v2792 = vld [vmem:[%s2749 + $0x50] sm:$0x1]
        %v2793 = vld [vmem:[%s2749 + $0x5c] sm:$0x1]
        %v2794 = vld [vmem:[%s2749 + $0x68] sm:$0x1]
        %v2795 = vld [vmem:[%s2749 + $0x74] sm:$0x1]
        %v2796 = vld [vmem:[%s2749 + $0x80] sm:$0x1]
        %v2797 = vld [vmem:[%s2749 + $0x8c] sm:$0x1]
        %v2798 = vld [vmem:[%s2749 + $0x98] sm:$0x1]
        %v2799 = vld [vmem:[%s2749 + $0xa4] sm:$0x1]
        %v2800 = vld [vmem:[%s2749 + $0xb0] sm:$0x1]
        %v2801 = vld [vmem:[%s2749 + $0xbc] sm:$0x1]
        %v2802 = vld [vmem:[%s2749 + $0xc8] sm:$0x1]
        %v2803 = vld [vmem:[%s2749 + $0xd4] sm:$0x1]
        %v2804 = vld [vmem:[%s2749] sm:$0xe]
        %v2805 = vld [vmem:[%s2749 + $0xc] sm:$0xe]
        %v2806 = vld [vmem:[%s2749 + $0x18] sm:$0xe]
        %v2807 = vld [vmem:[%s2749 + $0x24] sm:$0xe]
        %v2808 = vld [vmem:[%s2749 + $0x30] sm:$0xe]
        %v2809 = vld [vmem:[%s2749 + $0x3c] sm:$0xe]
        %v2810 = vld [vmem:[%s2749 + $0x48] sm:$0xe]
        %v2811 = vld [vmem:[%s2749 + $0x54] sm:$0xe]
        %v2812 = vld [vmem:[%s2749 + $0x60] sm:$0xe]
        %v2813 = vld [vmem:[%s2749 + $0x6c] sm:$0xe]
        %v2814 = vld [vmem:[%s2749 + $0x78] sm:$0xe]
        %v2815 = vld [vmem:[%s2749 + $0x84] sm:$0xe]
        %v2816 = vld [vmem:[%s2749 + $0x90] sm:$0xe]
        %v2817 = vld [vmem:[%s2749 + $0x9c] sm:$0xe]
        %v2818 = vld [vmem:[%s2749 + $0xa8] sm:$0xe]
        %v2819 = vld [vmem:[%s2749 + $0xb4] sm:$0xe]
        %v2820 = vld [vmem:[%s2749 + $0xc0] sm:$0xe]
        %v2821 = vld [vmem:[%s2749 + $0xcc] sm:$0xe]
        %v2858 = vunpack.c.l.b16 %v2750
        %v2859 = vunpack.c.l.b16 %v2751
        %v2860 = vunpack.c.l.b16 %v2752
        %v2861 = vunpack.c.l.b16 %v2753
        %v2862 = vunpack.c.l.b16 %v2754
        %v2863 = vunpack.c.l.b16 %v2755
        %v2864 = vunpack.c.l.b16 %v2756
        %v2865 = vunpack.c.l.b16 %v2757
        %v2866 = vunpack.c.l.b16 %v2758
        %v2867 = vunpack.c.l.b16 %v2759
        %v2868 = vunpack.c.l.b16 %v2760
        %v2869 = vunpack.c.l.b16 %v2761
        %v2870 = vunpack.c.l.b16 %v2762
        %v2871 = vunpack.c.l.b16 %v2763
        %v2872 = vunpack.c.l.b16 %v2764
        %v2873 = vunpack.c.l.b16 %v2765
        %v2874 = vunpack.c.l.b16 %v2766
        %v2875 = vunpack.c.l.b16 %v2767
        %v2876 = vunpack.c.l.b16 %v2768
        %v2877 = vunpack.c.l.b16 %v2769
        %v2878 = vunpack.c.l.b16 %v2770
        %v2879 = vunpack.c.l.b16 %v2771
        %v2880 = vunpack.c.l.b16 %v2772
        %v2881 = vunpack.c.l.b16 %v2773
        %v2882 = vunpack.c.l.b16 %v2774
        %v2883 = vunpack.c.l.b16 %v2775
        %v2884 = vunpack.c.l.b16 %v2776
        %v2885 = vunpack.c.l.b16 %v2777
        %v2886 = vunpack.c.l.b16 %v2778
        %v2887 = vunpack.c.l.b16 %v2779
        %v2888 = vunpack.c.l.b16 %v2780
        %v2889 = vunpack.c.l.b16 %v2781
        %v2890 = vunpack.c.l.b16 %v2782
        %v2891 = vunpack.c.l.b16 %v2783
        %v2892 = vunpack.c.l.b16 %v2784
        %v2893 = vunpack.c.l.b16 %v2785
        %v2894 = vpack.c.b16 %v2859, %v2858
        %v2895 = vpack.c.b16 %v2861, %v2860
        %v2896 = vpack.c.b16 %v2863, %v2862
        %v2897 = vpack.c.b16 %v2865, %v2864
        %v2898 = vpack.c.b16 %v2867, %v2866
        %v2899 = vpack.c.b16 %v2869, %v2868
        %v2900 = vpack.c.b16 %v2871, %v2870
        %v2901 = vpack.c.b16 %v2873, %v2872
        %v2902 = vpack.c.b16 %v2875, %v2874
        %v2903 = vpack.c.b16 %v2877, %v2876
        %v2904 = vpack.c.b16 %v2879, %v2878
        %v2905 = vpack.c.b16 %v2881, %v2880
        %v2906 = vpack.c.b16 %v2883, %v2882
        %v2907 = vpack.c.b16 %v2885, %v2884
        %v2908 = vpack.c.b16 %v2887, %v2886
        %v2909 = vpack.c.b16 %v2889, %v2888
        %v2910 = vpack.c.b16 %v2891, %v2890
        %v2911 = vpack.c.b16 %v2893, %v2892
        %v2948 = vunpack.c.l.b16 %v2786
        %v2949 = vunpack.c.l.b16 %v2787
        %v2950 = vunpack.c.l.b16 %v2788
        %v2951 = vunpack.c.l.b16 %v2789
        %v2952 = vunpack.c.l.b16 %v2790
        %v2953 = vunpack.c.l.b16 %v2791
        %v2954 = vunpack.c.l.b16 %v2792
        %v2955 = vunpack.c.l.b16 %v2793
        %v2956 = vunpack.c.l.b16 %v2794
        %v2957 = vunpack.c.l.b16 %v2795
        %v2958 = vunpack.c.l.b16 %v2796
        %v2959 = vunpack.c.l.b16 %v2797
        %v2960 = vunpack.c.l.b16 %v2798
        %v2961 = vunpack.c.l.b16 %v2799
        %v2962 = vunpack.c.l.b16 %v2800
        %v2963 = vunpack.c.l.b16 %v2801
        %v2964 = vunpack.c.l.b16 %v2802
        %v2965 = vunpack.c.l.b16 %v2803
        %v2966 = vpack.c.b16 %v2948, %v2948
        %v2967 = vpack.c.b16 %v2949, %v2949
        %v2968 = vpack.c.b16 %v2950, %v2950
        %v2969 = vpack.c.b16 %v2951, %v2951
        %v2970 = vpack.c.b16 %v2952, %v2952
        %v2971 = vpack.c.b16 %v2953, %v2953
        %v2972 = vpack.c.b16 %v2954, %v2954
        %v2973 = vpack.c.b16 %v2955, %v2955
        %v2974 = vpack.c.b16 %v2956, %v2956
        %v2975 = vpack.c.b16 %v2957, %v2957
        %v2976 = vpack.c.b16 %v2958, %v2958
        %v2977 = vpack.c.b16 %v2959, %v2959
        %v2978 = vpack.c.b16 %v2960, %v2960
        %v2979 = vpack.c.b16 %v2961, %v2961
        %v2980 = vpack.c.b16 %v2962, %v2962
        %v2981 = vpack.c.b16 %v2963, %v2963
        %v2982 = vpack.c.b16 %v2964, %v2964
        %v2983 = vpack.c.b16 %v2965, %v2965
        %v2985 = vshrl.u32 %v2894, 16
        %v2987 = vshll.u32 %v2894, 16
        %v2989 = vrot.slane %v2987, 1
        %v2990 = vor.u32 %v2985, %v2989
        %v2992 = vshll.u32 %v2966, 16
        %v2994 = vrot.slane %v2992, 1
        %v2995 = vsel %vm693, %v2990, %v2994
        %v2997 = vshrl.u32 %v2895, 16
        %v2999 = vshll.u32 %v2895, 16
        %v3001 = vrot.slane %v2999, 1
        %v3002 = vor.u32 %v2997, %v3001
        %v3004 = vshll.u32 %v2967, 16
        %v3006 = vrot.slane %v3004, 1
        %v3007 = vsel %vm693, %v3002, %v3006
        %v3009 = vshrl.u32 %v2896, 16
        %v3011 = vshll.u32 %v2896, 16
        %v3013 = vrot.slane %v3011, 1
        %v3014 = vor.u32 %v3009, %v3013
        %v3016 = vshll.u32 %v2968, 16
        %v3018 = vrot.slane %v3016, 1
        %v3019 = vsel %vm693, %v3014, %v3018
        %v3021 = vshrl.u32 %v2897, 16
        %v3023 = vshll.u32 %v2897, 16
        %v3025 = vrot.slane %v3023, 1
        %v3026 = vor.u32 %v3021, %v3025
        %v3028 = vshll.u32 %v2969, 16
        %v3030 = vrot.slane %v3028, 1
        %v3031 = vsel %vm693, %v3026, %v3030
        %v3033 = vshrl.u32 %v2898, 16
        %v3035 = vshll.u32 %v2898, 16
        %v3037 = vrot.slane %v3035, 1
        %v3038 = vor.u32 %v3033, %v3037
        %v3040 = vshll.u32 %v2970, 16
        %v3042 = vrot.slane %v3040, 1
        %v3043 = vsel %vm693, %v3038, %v3042
        %v3045 = vshrl.u32 %v2899, 16
        %v3047 = vshll.u32 %v2899, 16
        %v3049 = vrot.slane %v3047, 1
        %v3050 = vor.u32 %v3045, %v3049
        %v3052 = vshll.u32 %v2971, 16
        %v3054 = vrot.slane %v3052, 1
        %v3055 = vsel %vm693, %v3050, %v3054
        %v3057 = vshrl.u32 %v2900, 16
        %v3059 = vshll.u32 %v2900, 16
        %v3061 = vrot.slane %v3059, 1
        %v3062 = vor.u32 %v3057, %v3061
        %v3064 = vshll.u32 %v2972, 16
        %v3066 = vrot.slane %v3064, 1
        %v3067 = vsel %vm693, %v3062, %v3066
        %v3069 = vshrl.u32 %v2901, 16
        %v3071 = vshll.u32 %v2901, 16
        %v3073 = vrot.slane %v3071, 1
        %v3074 = vor.u32 %v3069, %v3073
        %v3076 = vshll.u32 %v2973, 16
        %v3078 = vrot.slane %v3076, 1
        %v3079 = vsel %vm693, %v3074, %v3078
        %v3081 = vshrl.u32 %v2902, 16
        %v3083 = vshll.u32 %v2902, 16
        %v3085 = vrot.slane %v3083, 1
        %v3086 = vor.u32 %v3081, %v3085
        %v3088 = vshll.u32 %v2974, 16
        %v3090 = vrot.slane %v3088, 1
        %v3091 = vsel %vm693, %v3086, %v3090
        %v3093 = vshrl.u32 %v2903, 16
        %v3095 = vshll.u32 %v2903, 16
        %v3097 = vrot.slane %v3095, 1
        %v3098 = vor.u32 %v3093, %v3097
        %v3100 = vshll.u32 %v2975, 16
        %v3102 = vrot.slane %v3100, 1
        %v3103 = vsel %vm693, %v3098, %v3102
        %v3105 = vshrl.u32 %v2904, 16
        %v3107 = vshll.u32 %v2904, 16
        %v3109 = vrot.slane %v3107, 1
        %v3110 = vor.u32 %v3105, %v3109
        %v3112 = vshll.u32 %v2976, 16
        %v3114 = vrot.slane %v3112, 1
        %v3115 = vsel %vm693, %v3110, %v3114
        %v3117 = vshrl.u32 %v2905, 16
        %v3119 = vshll.u32 %v2905, 16
        %v3121 = vrot.slane %v3119, 1
        %v3122 = vor.u32 %v3117, %v3121
        %v3124 = vshll.u32 %v2977, 16
        %v3126 = vrot.slane %v3124, 1
        %v3127 = vsel %vm693, %v3122, %v3126
        %v3129 = vshrl.u32 %v2906, 16
        %v3131 = vshll.u32 %v2906, 16
        %v3133 = vrot.slane %v3131, 1
        %v3134 = vor.u32 %v3129, %v3133
        %v3136 = vshll.u32 %v2978, 16
        %v3138 = vrot.slane %v3136, 1
        %v3139 = vsel %vm693, %v3134, %v3138
        %v3141 = vshrl.u32 %v2907, 16
        %v3143 = vshll.u32 %v2907, 16
        %v3145 = vrot.slane %v3143, 1
        %v3146 = vor.u32 %v3141, %v3145
        %v3148 = vshll.u32 %v2979, 16
        %v3150 = vrot.slane %v3148, 1
        %v3151 = vsel %vm693, %v3146, %v3150
        %v3153 = vshrl.u32 %v2908, 16
        %v3155 = vshll.u32 %v2908, 16
        %v3157 = vrot.slane %v3155, 1
        %v3158 = vor.u32 %v3153, %v3157
        %v3160 = vshll.u32 %v2980, 16
        %v3162 = vrot.slane %v3160, 1
        %v3163 = vsel %vm693, %v3158, %v3162
        %v3165 = vshrl.u32 %v2909, 16
        %v3167 = vshll.u32 %v2909, 16
        %v3169 = vrot.slane %v3167, 1
        %v3170 = vor.u32 %v3165, %v3169
        %v3172 = vshll.u32 %v2981, 16
        %v3174 = vrot.slane %v3172, 1
        %v3175 = vsel %vm693, %v3170, %v3174
        %v3177 = vshrl.u32 %v2910, 16
        %v3179 = vshll.u32 %v2910, 16
        %v3181 = vrot.slane %v3179, 1
        %v3182 = vor.u32 %v3177, %v3181
        %v3184 = vshll.u32 %v2982, 16
        %v3186 = vrot.slane %v3184, 1
        %v3187 = vsel %vm693, %v3182, %v3186
        %v3189 = vshrl.u32 %v2911, 16
        %v3191 = vshll.u32 %v2911, 16
        %v3193 = vrot.slane %v3191, 1
        %v3194 = vor.u32 %v3189, %v3193
        %v3196 = vshll.u32 %v2983, 16
        %v3198 = vrot.slane %v3196, 1
        %v3199 = vsel %vm693, %v3194, %v3198
        %v3236 = vunpack.c.l.b16 %v2804
        %v3237 = vunpack.c.l.b16 %v2805
        %v3238 = vunpack.c.l.b16 %v2806
        %v3239 = vunpack.c.l.b16 %v2807
        %v3240 = vunpack.c.l.b16 %v2808
        %v3241 = vunpack.c.l.b16 %v2809
        %v3242 = vunpack.c.l.b16 %v2810
        %v3243 = vunpack.c.l.b16 %v2811
        %v3244 = vunpack.c.l.b16 %v2812
        %v3245 = vunpack.c.l.b16 %v2813
        %v3246 = vunpack.c.l.b16 %v2814
        %v3247 = vunpack.c.l.b16 %v2815
        %v3248 = vunpack.c.l.b16 %v2816
        %v3249 = vunpack.c.l.b16 %v2817
        %v3250 = vunpack.c.l.b16 %v2818
        %v3251 = vunpack.c.l.b16 %v2819
        %v3252 = vunpack.c.l.b16 %v2820
        %v3253 = vunpack.c.l.b16 %v2821
        %v3254 = vpack.c.b16 %v2859, %v3236
        %v3255 = vpack.c.b16 %v2861, %v3237
        %v3256 = vpack.c.b16 %v2863, %v3238
        %v3257 = vpack.c.b16 %v2865, %v3239
        %v3258 = vpack.c.b16 %v2867, %v3240
        %v3259 = vpack.c.b16 %v2869, %v3241
        %v3260 = vpack.c.b16 %v2871, %v3242
        %v3261 = vpack.c.b16 %v2873, %v3243
        %v3262 = vpack.c.b16 %v2875, %v3244
        %v3263 = vpack.c.b16 %v2877, %v3245
        %v3264 = vpack.c.b16 %v2879, %v3246
        %v3265 = vpack.c.b16 %v2881, %v3247
        %v3266 = vpack.c.b16 %v2883, %v3248
        %v3267 = vpack.c.b16 %v2885, %v3249
        %v3268 = vpack.c.b16 %v2887, %v3250
        %v3269 = vpack.c.b16 %v2889, %v3251
        %v3270 = vpack.c.b16 %v2891, %v3252
        %v3271 = vpack.c.b16 %v2893, %v3253
        %v3272 = vrot.slane %v3254, 1
        %v3273 = vrot.slane %v2966, 1
        %v3274 = vsel %vm982, %v3272, %v3273
        %v3275 = vrot.slane %v3255, 1
        %v3276 = vrot.slane %v2967, 1
        %v3277 = vsel %vm982, %v3275, %v3276
        %v3278 = vrot.slane %v3256, 1
        %v3279 = vrot.slane %v2968, 1
        %v3280 = vsel %vm982, %v3278, %v3279
        %v3281 = vrot.slane %v3257, 1
        %v3282 = vrot.slane %v2969, 1
        %v3283 = vsel %vm982, %v3281, %v3282
        %v3284 = vrot.slane %v3258, 1
        %v3285 = vrot.slane %v2970, 1
        %v3286 = vsel %vm982, %v3284, %v3285
        %v3287 = vrot.slane %v3259, 1
        %v3288 = vrot.slane %v2971, 1
        %v3289 = vsel %vm982, %v3287, %v3288
        %v3290 = vrot.slane %v3260, 1
        %v3291 = vrot.slane %v2972, 1
        %v3292 = vsel %vm982, %v3290, %v3291
        %v3293 = vrot.slane %v3261, 1
        %v3294 = vrot.slane %v2973, 1
        %v3295 = vsel %vm982, %v3293, %v3294
        %v3296 = vrot.slane %v3262, 1
        %v3297 = vrot.slane %v2974, 1
        %v3298 = vsel %vm982, %v3296, %v3297
        %v3299 = vrot.slane %v3263, 1
        %v3300 = vrot.slane %v2975, 1
        %v3301 = vsel %vm982, %v3299, %v3300
        %v3302 = vrot.slane %v3264, 1
        %v3303 = vrot.slane %v2976, 1
        %v3304 = vsel %vm982, %v3302, %v3303
        %v3305 = vrot.slane %v3265, 1
        %v3306 = vrot.slane %v2977, 1
        %v3307 = vsel %vm982, %v3305, %v3306
        %v3308 = vrot.slane %v3266, 1
        %v3309 = vrot.slane %v2978, 1
        %v3310 = vsel %vm982, %v3308, %v3309
        %v3311 = vrot.slane %v3267, 1
        %v3312 = vrot.slane %v2979, 1
        %v3313 = vsel %vm982, %v3311, %v3312
        %v3314 = vrot.slane %v3268, 1
        %v3315 = vrot.slane %v2980, 1
        %v3316 = vsel %vm982, %v3314, %v3315
        %v3317 = vrot.slane %v3269, 1
        %v3318 = vrot.slane %v2981, 1
        %v3319 = vsel %vm982, %v3317, %v3318
        %v3320 = vrot.slane %v3270, 1
        %v3321 = vrot.slane %v2982, 1
        %v3322 = vsel %vm982, %v3320, %v3321
        %v3323 = vrot.slane %v3271, 1
        %v3324 = vrot.slane %v2983, 1
        %v3325 = vsel %vm982, %v3323, %v3324
        %s3344 = scalar_lea.vmem [#allocation6], 384
        %v3345 = vld [vmem:[%s3344] sm:$0xf]
        %v3346 = vld [vmem:[%s3344 + $0x4] sm:$0xf]
        %v3347 = vld [vmem:[%s3344 + $0x8] sm:$0xf]
        %v3348 = vld [vmem:[%s3344 + $0xc] sm:$0xf]
        %v3349 = vld [vmem:[%s3344 + $0x10] sm:$0xf]
        %v3350 = vld [vmem:[%s3344 + $0x14] sm:$0xf]
        %v3351 = vld [vmem:[%s3344 + $0x18] sm:$0xf]
        %v3352 = vld [vmem:[%s3344 + $0x1c] sm:$0xf]
        %v3353 = vld [vmem:[%s3344 + $0x20] sm:$0xf]
        %v3354 = vld [vmem:[%s3344 + $0x24] sm:$0xf]
        %v3355 = vld [vmem:[%s3344 + $0x28] sm:$0xf]
        %v3356 = vld [vmem:[%s3344 + $0x2c] sm:$0xf]
        %v3357 = vld [vmem:[%s3344 + $0x30] sm:$0xf]
        %v3358 = vld [vmem:[%s3344 + $0x34] sm:$0xf]
        %v3359 = vld [vmem:[%s3344 + $0x38] sm:$0xf]
        %v3360 = vld [vmem:[%s3344 + $0x3c] sm:$0xf]
        %v3361 = vld [vmem:[%s3344 + $0x40] sm:$0xf]
        %v3362 = vld [vmem:[%s3344 + $0x44] sm:$0xf]
        %v3363 = vld [vmem:[%s3344 + $0x48] sm:$0xf]
        %v3364 = vld [vmem:[%s3344 + $0x4c] sm:$0xf]
        %v3365 = vld [vmem:[%s3344 + $0x50] sm:$0xf]
        %v3366 = vld [vmem:[%s3344 + $0x54] sm:$0xf]
        %v3367 = vld [vmem:[%s3344 + $0x58] sm:$0xf]
        %v3368 = vld [vmem:[%s3344 + $0x5c] sm:$0xf]
        %v3369 = vld [vmem:[%s3344 + $0x60] sm:$0xf]
        %v3370 = vld [vmem:[%s3344 + $0x64] sm:$0xf]
        %v3371 = vld [vmem:[%s3344 + $0x68] sm:$0xf]
        %v3372 = vld [vmem:[%s3344 + $0x6c] sm:$0xf]
        %v3373 = vld [vmem:[%s3344 + $0x70] sm:$0xf]
        %v3374 = vld [vmem:[%s3344 + $0x74] sm:$0xf]
        %v3375 = vld [vmem:[%s3344 + $0x78] sm:$0xf]
        %v3376 = vld [vmem:[%s3344 + $0x7c] sm:$0xf]
        %v3377 = vld [vmem:[%s3344 + $0x80] sm:$0xf]
        %v3378 = vld [vmem:[%s3344 + $0x84] sm:$0xf]
        %v3379 = vld [vmem:[%s3344 + $0x88] sm:$0xf]
        %v3380 = vld [vmem:[%s3344 + $0x8c] sm:$0xf]
        %v3381 = vld [vmem:[%s3344 + $0x90] sm:$0xf]
        %v3382 = vld [vmem:[%s3344 + $0x94] sm:$0xf]
        %v3383 = vld [vmem:[%s3344 + $0x98] sm:$0xf]
        %v3384 = vld [vmem:[%s3344 + $0x9c] sm:$0xf]
        %v3385 = vld [vmem:[%s3344 + $0xa0] sm:$0xf]
        %v3386 = vld [vmem:[%s3344 + $0xa4] sm:$0xf]
        %v3387 = vld [vmem:[%s3344 + $0xa8] sm:$0xf]
        %v3388 = vld [vmem:[%s3344 + $0xac] sm:$0xf]
        %v3389 = vld [vmem:[%s3344 + $0xb0] sm:$0xf]
        %v3390 = vld [vmem:[%s3344 + $0xb4] sm:$0xf]
        %v3391 = vld [vmem:[%s3344 + $0xb8] sm:$0xf]
        %v3392 = vld [vmem:[%s3344 + $0xbc] sm:$0xf]
        %v3441 = vunpack.c.l.b16 %v3345
        %v3442 = vunpack.c.l.b16 %v3346
        %v3443 = vunpack.c.l.b16 %v3347
        %v3444 = vunpack.c.l.b16 %v3348
        %v3445 = vunpack.c.l.b16 %v3349
        %v3446 = vunpack.c.l.b16 %v3350
        %v3447 = vunpack.c.l.b16 %v3351
        %v3448 = vunpack.c.l.b16 %v3352
        %v3449 = vunpack.c.l.b16 %v3353
        %v3450 = vunpack.c.l.b16 %v3354
        %v3451 = vunpack.c.l.b16 %v3355
        %v3452 = vunpack.c.l.b16 %v3356
        %v3453 = vunpack.c.l.b16 %v3357
        %v3454 = vunpack.c.l.b16 %v3358
        %v3455 = vunpack.c.l.b16 %v3359
        %v3456 = vunpack.c.l.b16 %v3360
        %v3457 = vunpack.c.l.b16 %v3361
        %v3458 = vunpack.c.l.b16 %v3362
        %v3459 = vunpack.c.l.b16 %v3363
        %v3460 = vunpack.c.l.b16 %v3364
        %v3461 = vunpack.c.l.b16 %v3365
        %v3462 = vunpack.c.l.b16 %v3366
        %v3463 = vunpack.c.l.b16 %v3367
        %v3464 = vunpack.c.l.b16 %v3368
        %v3465 = vunpack.c.l.b16 %v3369
        %v3466 = vunpack.c.l.b16 %v3370
        %v3467 = vunpack.c.l.b16 %v3371
        %v3468 = vunpack.c.l.b16 %v3372
        %v3469 = vunpack.c.l.b16 %v3373
        %v3470 = vunpack.c.l.b16 %v3374
        %v3471 = vunpack.c.l.b16 %v3375
        %v3472 = vunpack.c.l.b16 %v3376
        %v3473 = vunpack.c.l.b16 %v3377
        %v3474 = vunpack.c.l.b16 %v3378
        %v3475 = vunpack.c.l.b16 %v3379
        %v3476 = vunpack.c.l.b16 %v3380
        %v3477 = vunpack.c.l.b16 %v3381
        %v3478 = vunpack.c.l.b16 %v3382
        %v3479 = vunpack.c.l.b16 %v3383
        %v3480 = vunpack.c.l.b16 %v3384
        %v3481 = vunpack.c.l.b16 %v3385
        %v3482 = vunpack.c.l.b16 %v3386
        %v3483 = vunpack.c.l.b16 %v3387
        %v3484 = vunpack.c.l.b16 %v3388
        %v3485 = vunpack.c.l.b16 %v3389
        %v3486 = vunpack.c.l.b16 %v3390
        %v3487 = vunpack.c.l.b16 %v3391
        %v3488 = vunpack.c.l.b16 %v3392
        %v3489 = vpack.c.b16 %v3442, %v3441
        %v3490 = vpack.c.b16 %v3444, %v3443
        %v3491 = vpack.c.b16 %v3446, %v3445
        %v3492 = vpack.c.b16 %v3448, %v3447
        %v3493 = vpack.c.b16 %v3450, %v3449
        %v3494 = vpack.c.b16 %v3452, %v3451
        %v3495 = vpack.c.b16 %v3454, %v3453
        %v3496 = vpack.c.b16 %v3456, %v3455
        %v3497 = vpack.c.b16 %v3458, %v3457
        %v3498 = vpack.c.b16 %v3460, %v3459
        %v3499 = vpack.c.b16 %v3462, %v3461
        %v3500 = vpack.c.b16 %v3464, %v3463
        %v3501 = vpack.c.b16 %v3466, %v3465
        %v3502 = vpack.c.b16 %v3468, %v3467
        %v3503 = vpack.c.b16 %v3470, %v3469
        %v3504 = vpack.c.b16 %v3472, %v3471
        %v3505 = vpack.c.b16 %v3474, %v3473
        %v3506 = vpack.c.b16 %v3476, %v3475
        %v3507 = vpack.c.b16 %v3478, %v3477
        %v3508 = vpack.c.b16 %v3480, %v3479
        %v3509 = vpack.c.b16 %v3482, %v3481
        %v3510 = vpack.c.b16 %v3484, %v3483
        %v3511 = vpack.c.b16 %v3486, %v3485
        %v3512 = vpack.c.b16 %v3488, %v3487
        %3537 = vmatprep.subr.bf16.mxu0 0
        %3538 = vmatpush1.bf16.msra.mxu0 %v3489
        %3539 = vmatprep.subr.bf16.mxu0 0
        %3540 = vmatpush1.bf16.msra.mxu0 %v3490
        %3541 = vmatprep.subr.bf16.mxu0 0
        %3542 = vmatpush1.bf16.msra.mxu0 %v3491
        %3543 = vmatprep.subr.bf16.mxu0 0
        %3544 = vmatpush1.bf16.msra.mxu0 %v3492
        %3545 = vmatprep.subr.bf16.mxu0 0
        %3546 = vmatpush1.bf16.msra.mxu0 %v3493
        %3547 = vmatprep.subr.bf16.mxu0 0
        %3548 = vmatpush1.bf16.msra.mxu0 %v3494
        %3549 = vmatprep.subr.bf16.mxu0 0
        %3550 = vmatpush1.bf16.msra.mxu0 %v3495
        %3551 = vmatprep.subr.bf16.mxu0 0
        %3552 = vmatpush1.bf16.msra.mxu0 %v3496
        %3553 = vmatprep.subr.bf16.mxu0 0
        %3554 = vmatpush1.bf16.msra.mxu0 %v3497
        %3555 = vmatprep.subr.bf16.mxu0 0
        %3556 = vmatpush1.bf16.msra.mxu0 %v3498
        %3557 = vmatprep.subr.bf16.mxu0 0
        %3558 = vmatpush1.bf16.msra.mxu0 %v3499
        %3559 = vmatprep.subr.bf16.mxu0 0
        %3560 = vmatpush1.bf16.msra.mxu0 %v3500
        %3561 = vmatprep.subr.bf16.mxu0 0
        %3562 = vmatpush1.bf16.msra.mxu0 %v3501
        %3563 = vmatprep.subr.bf16.mxu0 0
        %3564 = vmatpush1.bf16.msra.mxu0 %v3502
        %3565 = vmatprep.subr.bf16.mxu0 0
        %3566 = vmatpush1.bf16.msra.mxu0 %v3503
        %3567 = vmatprep.subr.bf16.mxu0 0
        %3568 = vmatpush1.bf16.msra.mxu0 %v3504
        %3569 = vmatprep.mubr.bf16.mxu0 %v2995
        %3570 = vmatmul.mubr.bf16.gmra.mrb[0].mxu0 %v2894
        %v3571 = vpop.f32.mrb[0].mxu0
        %v3572 = vadd.f32 0.0, %v3571
        %v3573 = vpop.f32.mrb[0].mxu0
        %v3574 = vpop.f32.mrb[0].mxu0
        %v3575 = vadd.f32 0.0, %v3574
        %v3576 = vpop.f32.mrb[0].mxu0
        %3577 = vmatprep.mubr.bf16.mxu0 %v3007
        %3578 = vmatmul.mubr.bf16.gmra.mrb[0].mxu0 %v2895
        %v3579 = vpop.f32.mrb[0].mxu0
        %v3580 = vadd.f32 0.0, %v3579
        %v3581 = vpop.f32.mrb[0].mxu0
        %v3582 = vpop.f32.mrb[0].mxu0
        %v3583 = vadd.f32 0.0, %v3582
        %v3584 = vpop.f32.mrb[0].mxu0
        %3585 = vmatprep.mubr.bf16.mxu0 %v3019
        %3586 = vmatmul.mubr.bf16.gmra.mrb[0].mxu0 %v2896
        %v3587 = vpop.f32.mrb[0].mxu0
        %v3588 = vadd.f32 0.0, %v3587
        %v3589 = vpop.f32.mrb[0].mxu0
        %v3590 = vpop.f32.mrb[0].mxu0
        %v3591 = vadd.f32 0.0, %v3590
        %v3592 = vpop.f32.mrb[0].mxu0
        %3593 = vmatprep.mubr.bf16.mxu0 %v3031
        %3594 = vmatmul.mubr.bf16.gmra.mrb[0].mxu0 %v2897
        %v3595 = vpop.f32.mrb[0].mxu0
        %v3596 = vadd.f32 0.0, %v3595
        %v3597 = vpop.f32.mrb[0].mxu0
        %v3598 = vpop.f32.mrb[0].mxu0
        %v3599 = vadd.f32 0.0, %v3598
        %v3600 = vpop.f32.mrb[0].mxu0
        %3601 = vmatprep.mubr.bf16.mxu0 %v3043
        %3602 = vmatmul.mubr.bf16.gmra.mrb[0].mxu0 %v2898
        %v3603 = vpop.f32.mrb[0].mxu0
        %v3604 = vadd.f32 0.0, %v3603
        %v3605 = vpop.f32.mrb[0].mxu0
        %v3606 = vpop.f32.mrb[0].mxu0
        %v3607 = vadd.f32 0.0, %v3606
        %v3608 = vpop.f32.mrb[0].mxu0
        %3609 = vmatprep.mubr.bf16.mxu0 %v3055
        %3610 = vmatmul.mubr.bf16.gmra.mrb[0].mxu0 %v2899
        %v3611 = vpop.f32.mrb[0].mxu0
        %v3612 = vadd.f32 0.0, %v3611
        %v3613 = vpop.f32.mrb[0].mxu0
        %v3614 = vpop.f32.mrb[0].mxu0
        %v3615 = vadd.f32 0.0, %v3614
        %v3616 = vpop.f32.mrb[0].mxu0
        %3617 = vmatprep.mubr.bf16.mxu0 %v3067
        %3618 = vmatmul.mubr.bf16.gmra.mrb[0].mxu0 %v2900
        %v3619 = vpop.f32.mrb[0].mxu0
        %v3620 = vadd.f32 0.0, %v3619
        %v3621 = vpop.f32.mrb[0].mxu0
        %v3622 = vpop.f32.mrb[0].mxu0
        %v3623 = vadd.f32 0.0, %v3622
        %v3624 = vpop.f32.mrb[0].mxu0
        %3625 = vmatprep.mubr.bf16.mxu0 %v3079
        %3626 = vmatmul.mubr.bf16.gmra.mrb[0].mxu0 %v2901
        %v3627 = vpop.f32.mrb[0].mxu0
        %v3628 = vadd.f32 0.0, %v3627
        %v3629 = vpop.f32.mrb[0].mxu0
        %v3630 = vpop.f32.mrb[0].mxu0
        %v3631 = vadd.f32 0.0, %v3630
        %v3632 = vpop.f32.mrb[0].mxu0
        %3633 = vmatprep.mubr.bf16.mxu0 %v3091
        %3634 = vmatmul.mubr.bf16.gmra.mrb[0].mxu0 %v2902
        %v3635 = vpop.f32.mrb[0].mxu0
        %v3636 = vadd.f32 0.0, %v3635
        %v3637 = vpop.f32.mrb[0].mxu0
        %v3638 = vpop.f32.mrb[0].mxu0
        %v3639 = vadd.f32 0.0, %v3638
        %v3640 = vpop.f32.mrb[0].mxu0
        %3641 = vmatprep.mubr.bf16.mxu0 %v3103
        %3642 = vmatmul.mubr.bf16.gmra.mrb[0].mxu0 %v2903
        %v3643 = vpop.f32.mrb[0].mxu0
        %v3644 = vadd.f32 0.0, %v3643
        %v3645 = vpop.f32.mrb[0].mxu0
        %v3646 = vpop.f32.mrb[0].mxu0
        %v3647 = vadd.f32 0.0, %v3646
        %v3648 = vpop.f32.mrb[0].mxu0
        %3649 = vmatprep.mubr.bf16.mxu0 %v3115
        %3650 = vmatmul.mubr.bf16.gmra.mrb[0].mxu0 %v2904
        %v3651 = vpop.f32.mrb[0].mxu0
        %v3652 = vadd.f32 0.0, %v3651
        %v3653 = vpop.f32.mrb[0].mxu0
        %v3654 = vpop.f32.mrb[0].mxu0
        %v3655 = vadd.f32 0.0, %v3654
        %v3656 = vpop.f32.mrb[0].mxu0
        %3657 = vmatprep.mubr.bf16.mxu0 %v3127
        %3658 = vmatmul.mubr.bf16.gmra.mrb[0].mxu0 %v2905
        %v3659 = vpop.f32.mrb[0].mxu0
        %v3660 = vadd.f32 0.0, %v3659
        %v3661 = vpop.f32.mrb[0].mxu0
        %v3662 = vpop.f32.mrb[0].mxu0
        %v3663 = vadd.f32 0.0, %v3662
        %v3664 = vpop.f32.mrb[0].mxu0
        %3665 = vmatprep.mubr.bf16.mxu0 %v3139
        %3666 = vmatmul.mubr.bf16.gmra.mrb[0].mxu0 %v2906
        %v3667 = vpop.f32.mrb[0].mxu0
        %v3668 = vadd.f32 0.0, %v3667
        %v3669 = vpop.f32.mrb[0].mxu0
        %v3670 = vpop.f32.mrb[0].mxu0
        %v3671 = vadd.f32 0.0, %v3670
        %v3672 = vpop.f32.mrb[0].mxu0
        %3673 = vmatprep.mubr.bf16.mxu0 %v3151
        %3674 = vmatmul.mubr.bf16.gmra.mrb[0].mxu0 %v2907
        %v3675 = vpop.f32.mrb[0].mxu0
        %v3676 = vadd.f32 0.0, %v3675
        %v3677 = vpop.f32.mrb[0].mxu0
        %v3678 = vpop.f32.mrb[0].mxu0
        %v3679 = vadd.f32 0.0, %v3678
        %v3680 = vpop.f32.mrb[0].mxu0
        %3681 = vmatprep.mubr.bf16.mxu0 %v3163
        %3682 = vmatmul.mubr.bf16.gmra.mrb[0].mxu0 %v2908
        %v3683 = vpop.f32.mrb[0].mxu0
        %v3684 = vadd.f32 0.0, %v3683
        %v3685 = vpop.f32.mrb[0].mxu0
        %v3686 = vpop.f32.mrb[0].mxu0
        %v3687 = vadd.f32 0.0, %v3686
        %v3688 = vpop.f32.mrb[0].mxu0
        %3689 = vmatprep.mubr.bf16.mxu0 %v3175
        %3690 = vmatmul.mubr.bf16.gmra.mrb[0].mxu0 %v2909
        %v3691 = vpop.f32.mrb[0].mxu0
        %v3692 = vadd.f32 0.0, %v3691
        %v3693 = vpop.f32.mrb[0].mxu0
        %v3694 = vpop.f32.mrb[0].mxu0
        %v3695 = vadd.f32 0.0, %v3694
        %v3696 = vpop.f32.mrb[0].mxu0
        %3697 = vmatprep.mubr.bf16.mxu0 %v3187
        %3698 = vmatmul.mubr.bf16.gmra.mrb[0].mxu0 %v2910
        %v3699 = vpop.f32.mrb[0].mxu0
        %v3700 = vadd.f32 0.0, %v3699
        %v3701 = vpop.f32.mrb[0].mxu0
        %v3702 = vpop.f32.mrb[0].mxu0
        %v3703 = vadd.f32 0.0, %v3702
        %v3704 = vpop.f32.mrb[0].mxu0
        %3705 = vmatprep.mubr.bf16.mxu0 %v3199
        %3706 = vmatmul.mubr.bf16.gmra.mrb[0].mxu0 %v2911
        %v3707 = vpop.f32.mrb[0].mxu0
        %v3708 = vadd.f32 0.0, %v3707
        %v3709 = vpop.f32.mrb[0].mxu0
        %v3710 = vpop.f32.mrb[0].mxu0
        %v3711 = vadd.f32 0.0, %v3710
        %v3712 = vpop.f32.mrb[0].mxu0
        %3713 = vdwg.mxu0
        %3714 = vmatprep.subr.bf16.mxu0 0
        %3715 = vmatpush1.bf16.msra.mxu0 %v3505
        %3716 = vmatprep.subr.bf16.mxu0 0
        %3717 = vmatpush1.bf16.msra.mxu0 %v3506
        %3718 = vmatprep.subr.bf16.mxu0 0
        %3719 = vmatpush1.bf16.msra.mxu0 %v3507
        %3720 = vmatprep.subr.bf16.mxu0 0
        %3721 = vmatpush1.bf16.msra.mxu0 %v3508
        %3722 = vmatprep.subr.bf16.mxu0 0
        %3723 = vmatpush1.bf16.msra.mxu0 %v3509
        %3724 = vmatprep.subr.bf16.mxu0 0
        %3725 = vmatpush1.bf16.msra.mxu0 %v3510
        %3726 = vmatprep.subr.bf16.mxu0 0
        %3727 = vmatpush1.bf16.msra.mxu0 %v3511
        %3728 = vmatprep.subr.bf16.mxu0 0
        %3729 = vmatpush1.bf16.msra.mxu0 %v3512
        %3730 = vmatprep.subr.bf16.mxu0 0
        %3731 = vmatpush1.bf16.msra.mxu0 0
        %3732 = vmatprep.subr.bf16.mxu0 0
        %3733 = vmatpush1.bf16.msra.mxu0 0
        %3734 = vmatprep.subr.bf16.mxu0 0
        %3735 = vmatpush1.bf16.msra.mxu0 0
        %3736 = vmatprep.subr.bf16.mxu0 0
        %3737 = vmatpush1.bf16.msra.mxu0 0
        %3738 = vmatprep.subr.bf16.mxu0 0
        %3739 = vmatpush1.bf16.msra.mxu0 0
        %3740 = vmatprep.subr.bf16.mxu0 0
        %3741 = vmatpush1.bf16.msra.mxu0 0
        %3742 = vmatprep.subr.bf16.mxu0 0
        %3743 = vmatpush1.bf16.msra.mxu0 0
        %3744 = vmatprep.subr.bf16.mxu0 0
        %3745 = vmatpush1.bf16.msra.mxu0 0
        %3746 = vmatprep.mubr.bf16.mxu0 0
        %3747 = vmatmul.mubr.bf16.gmra.mrb[0].mxu0 %v3274
        %v3748 = vpop.f32.mrb[0].mxu0
        %v3749 = vadd.f32 %v3572, %v3748
        %v3750 = vpop.f32.mrb[0].mxu0
        %v3751 = vpop.f32.mrb[0].mxu0
        %v3752 = vadd.f32 %v3575, %v3751
        %v3753 = vpop.f32.mrb[0].mxu0
        %3754 = vmatprep.mubr.bf16.mxu0 0
        %3755 = vmatmul.mubr.bf16.gmra.mrb[0].mxu0 %v3277
        %v3756 = vpop.f32.mrb[0].mxu0
        %v3757 = vadd.f32 %v3580, %v3756
        %v3758 = vpop.f32.mrb[0].mxu0
        %v3759 = vpop.f32.mrb[0].mxu0
        %v3760 = vadd.f32 %v3583, %v3759
        %v3761 = vpop.f32.mrb[0].mxu0
        %3762 = vmatprep.mubr.bf16.mxu0 0
        %3763 = vmatmul.mubr.bf16.gmra.mrb[0].mxu0 %v3280
        %v3764 = vpop.f32.mrb[0].mxu0
        %v3765 = vadd.f32 %v3588, %v3764
        %v3766 = vpop.f32.mrb[0].mxu0
        %v3767 = vpop.f32.mrb[0].mxu0
        %v3768 = vadd.f32 %v3591, %v3767
        %v3769 = vpop.f32.mrb[0].mxu0
        %3770 = vmatprep.mubr.bf16.mxu0 0
        %3771 = vmatmul.mubr.bf16.gmra.mrb[0].mxu0 %v3283
        %v3772 = vpop.f32.mrb[0].mxu0
        %v3773 = vadd.f32 %v3596, %v3772
        %v3774 = vpop.f32.mrb[0].mxu0
        %v3775 = vpop.f32.mrb[0].mxu0
        %v3776 = vadd.f32 %v3599, %v3775
        %v3777 = vpop.f32.mrb[0].mxu0
        %3778 = vmatprep.mubr.bf16.mxu0 0
        %3779 = vmatmul.mubr.bf16.gmra.mrb[0].mxu0 %v3286
        %v3780 = vpop.f32.mrb[0].mxu0
        %v3781 = vadd.f32 %v3604, %v3780
        %v3782 = vpop.f32.mrb[0].mxu0
        %v3783 = vpop.f32.mrb[0].mxu0
        %v3784 = vadd.f32 %v3607, %v3783
        %v3785 = vpop.f32.mrb[0].mxu0
        %3786 = vmatprep.mubr.bf16.mxu0 0
        %3787 = vmatmul.mubr.bf16.gmra.mrb[0].mxu0 %v3289
        %v3788 = vpop.f32.mrb[0].mxu0
        %v3789 = vadd.f32 %v3612, %v3788
        %v3790 = vpop.f32.mrb[0].mxu0
        %v3791 = vpop.f32.mrb[0].mxu0
        %v3792 = vadd.f32 %v3615, %v3791
        %v3793 = vpop.f32.mrb[0].mxu0
        %3794 = vmatprep.mubr.bf16.mxu0 0
        %3795 = vmatmul.mubr.bf16.gmra.mrb[0].mxu0 %v3292
        %v3796 = vpop.f32.mrb[0].mxu0
        %v3797 = vadd.f32 %v3620, %v3796
        %v3798 = vpop.f32.mrb[0].mxu0
        %v3799 = vpop.f32.mrb[0].mxu0
        %v3800 = vadd.f32 %v3623, %v3799
        %v3801 = vpop.f32.mrb[0].mxu0
        %3802 = vmatprep.mubr.bf16.mxu0 0
        %3803 = vmatmul.mubr.bf16.gmra.mrb[0].mxu0 %v3295
        %v3804 = vpop.f32.mrb[0].mxu0
        %v3805 = vadd.f32 %v3628, %v3804
        %v3806 = vpop.f32.mrb[0].mxu0
        %v3807 = vpop.f32.mrb[0].mxu0
        %v3808 = vadd.f32 %v3631, %v3807
        %v3809 = vpop.f32.mrb[0].mxu0
        %3810 = vmatprep.mubr.bf16.mxu0 0
        %3811 = vmatmul.mubr.bf16.gmra.mrb[0].mxu0 %v3298
        %v3812 = vpop.f32.mrb[0].mxu0
        %v3813 = vadd.f32 %v3636, %v3812
        %v3814 = vpop.f32.mrb[0].mxu0
        %v3815 = vpop.f32.mrb[0].mxu0
        %v3816 = vadd.f32 %v3639, %v3815
        %v3817 = vpop.f32.mrb[0].mxu0
        %3818 = vmatprep.mubr.bf16.mxu0 0
        %3819 = vmatmul.mubr.bf16.gmra.mrb[0].mxu0 %v3301
        %v3820 = vpop.f32.mrb[0].mxu0
        %v3821 = vadd.f32 %v3644, %v3820
        %v3822 = vpop.f32.mrb[0].mxu0
        %v3823 = vpop.f32.mrb[0].mxu0
        %v3824 = vadd.f32 %v3647, %v3823
        %v3825 = vpop.f32.mrb[0].mxu0
        %3826 = vmatprep.mubr.bf16.mxu0 0
        %3827 = vmatmul.mubr.bf16.gmra.mrb[0].mxu0 %v3304
        %v3828 = vpop.f32.mrb[0].mxu0
        %v3829 = vadd.f32 %v3652, %v3828
        %v3830 = vpop.f32.mrb[0].mxu0
        %v3831 = vpop.f32.mrb[0].mxu0
        %v3832 = vadd.f32 %v3655, %v3831
        %v3833 = vpop.f32.mrb[0].mxu0
        %3834 = vmatprep.mubr.bf16.mxu0 0
        %3835 = vmatmul.mubr.bf16.gmra.mrb[0].mxu0 %v3307
        %v3836 = vpop.f32.mrb[0].mxu0
        %v3837 = vadd.f32 %v3660, %v3836
        %v3838 = vpop.f32.mrb[0].mxu0
        %v3839 = vpop.f32.mrb[0].mxu0
        %v3840 = vadd.f32 %v3663, %v3839
        %v3841 = vpop.f32.mrb[0].mxu0
        %3842 = vmatprep.mubr.bf16.mxu0 0
        %3843 = vmatmul.mubr.bf16.gmra.mrb[0].mxu0 %v3310
        %v3844 = vpop.f32.mrb[0].mxu0
        %v3845 = vadd.f32 %v3668, %v3844
        %v3846 = vpop.f32.mrb[0].mxu0
        %v3847 = vpop.f32.mrb[0].mxu0
        %v3848 = vadd.f32 %v3671, %v3847
        %v3849 = vpop.f32.mrb[0].mxu0
        %3850 = vmatprep.mubr.bf16.mxu0 0
        %3851 = vmatmul.mubr.bf16.gmra.mrb[0].mxu0 %v3313
        %v3852 = vpop.f32.mrb[0].mxu0
        %v3853 = vadd.f32 %v3676, %v3852
        %v3854 = vpop.f32.mrb[0].mxu0
        %v3855 = vpop.f32.mrb[0].mxu0
        %v3856 = vadd.f32 %v3679, %v3855
        %v3857 = vpop.f32.mrb[0].mxu0
        %3858 = vmatprep.mubr.bf16.mxu0 0
        %3859 = vmatmul.mubr.bf16.gmra.mrb[0].mxu0 %v3316
        %v3860 = vpop.f32.mrb[0].mxu0
        %v3861 = vadd.f32 %v3684, %v3860
        %v3862 = vpop.f32.mrb[0].mxu0
        %v3863 = vpop.f32.mrb[0].mxu0
        %v3864 = vadd.f32 %v3687, %v3863
        %v3865 = vpop.f32.mrb[0].mxu0
        %3866 = vmatprep.mubr.bf16.mxu0 0
        %3867 = vmatmul.mubr.bf16.gmra.mrb[0].mxu0 %v3319
        %v3868 = vpop.f32.mrb[0].mxu0
        %v3869 = vadd.f32 %v3692, %v3868
        %v3870 = vpop.f32.mrb[0].mxu0
        %v3871 = vpop.f32.mrb[0].mxu0
        %v3872 = vadd.f32 %v3695, %v3871
        %v3873 = vpop.f32.mrb[0].mxu0
        %3874 = vmatprep.mubr.bf16.mxu0 0
        %3875 = vmatmul.mubr.bf16.gmra.mrb[0].mxu0 %v3322
        %v3876 = vpop.f32.mrb[0].mxu0
        %v3877 = vadd.f32 %v3700, %v3876
        %v3878 = vpop.f32.mrb[0].mxu0
        %v3879 = vpop.f32.mrb[0].mxu0
        %v3880 = vadd.f32 %v3703, %v3879
        %v3881 = vpop.f32.mrb[0].mxu0
        %3882 = vmatprep.mubr.bf16.mxu0 0
        %3883 = vmatmul.mubr.bf16.gmra.mrb[0].mxu0 %v3325
        %v3884 = vpop.f32.mrb[0].mxu0
        %v3885 = vadd.f32 %v3708, %v3884
        %v3886 = vpop.f32.mrb[0].mxu0
        %v3887 = vpop.f32.mrb[0].mxu0
        %v3888 = vadd.f32 %v3711, %v3887
        %v3889 = vpop.f32.mrb[0].mxu0
        %3890 = vdwg.mxu0
        %v3891 = vadd.f32 %v2604, %v3749
        %v3892 = vadd.f32 %v2607, %v3752
        %v3893 = vadd.f32 %v2612, %v3757
        %v3894 = vadd.f32 %v2615, %v3760
        %v3895 = vadd.f32 %v2620, %v3765
        %v3896 = vadd.f32 %v2623, %v3768
        %v3897 = vadd.f32 %v2628, %v3773
        %v3898 = vadd.f32 %v2631, %v3776
        %v3899 = vadd.f32 %v2636, %v3781
        %v3900 = vadd.f32 %v2639, %v3784
        %v3901 = vadd.f32 %v2644, %v3789
        %v3902 = vadd.f32 %v2647, %v3792
        %v3903 = vadd.f32 %v2652, %v3797
        %v3904 = vadd.f32 %v2655, %v3800
        %v3905 = vadd.f32 %v2660, %v3805
        %v3906 = vadd.f32 %v2663, %v3808
        %v3907 = vadd.f32 %v2668, %v3813
        %v3908 = vadd.f32 %v2671, %v3816
        %v3909 = vadd.f32 %v2676, %v3821
        %v3910 = vadd.f32 %v2679, %v3824
        %v3911 = vadd.f32 %v2684, %v3829
        %v3912 = vadd.f32 %v2687, %v3832
        %v3913 = vadd.f32 %v2692, %v3837
        %v3914 = vadd.f32 %v2695, %v3840
        %v3915 = vadd.f32 %v2700, %v3845
        %v3916 = vadd.f32 %v2703, %v3848
        %v3917 = vadd.f32 %v2708, %v3853
        %v3918 = vadd.f32 %v2711, %v3856
        %v3919 = vadd.f32 %v2716, %v3861
        %v3920 = vadd.f32 %v2719, %v3864
        %v3921 = vadd.f32 %v2724, %v3869
        %v3922 = vadd.f32 %v2727, %v3872
        %v3923 = vadd.f32 %v2732, %v3877
        %v3924 = vadd.f32 %v2735, %v3880
        %v3925 = vadd.f32 %v2740, %v3885
        %v3926 = vadd.f32 %v2743, %v3888
        %v3927 = vld [vmem:[%s2] sm:$0x1]
        %v3929 = vlaneseq
        %v3930 = vshrl.u32 %v3929, 7
        %v3931 = vsub.s32 0, %v3930
        %v3932 = vrot.slane %v3927, %v3931
        %v3934 = vmul.f32 %v3891, %v3932
        %v3935 = vmul.f32 %v3892, %v3932
        %v3936 = vmul.f32 %v3893, %v3932
        %v3937 = vmul.f32 %v3894, %v3932
        %v3938 = vmul.f32 %v3895, %v3932
        %v3939 = vmul.f32 %v3896, %v3932
        %v3940 = vmul.f32 %v3897, %v3932
        %v3941 = vmul.f32 %v3898, %v3932
        %v3942 = vmul.f32 %v3899, %v3932
        %v3943 = vmul.f32 %v3900, %v3932
        %v3944 = vmul.f32 %v3901, %v3932
        %v3945 = vmul.f32 %v3902, %v3932
        %v3946 = vmul.f32 %v3903, %v3932
        %v3947 = vmul.f32 %v3904, %v3932
        %v3948 = vmul.f32 %v3905, %v3932
        %v3949 = vmul.f32 %v3906, %v3932
        %v3950 = vmul.f32 %v3907, %v3932
        %v3951 = vmul.f32 %v3908, %v3932
        %v3952 = vmul.f32 %v3909, %v3932
        %v3953 = vmul.f32 %v3910, %v3932
        %v3954 = vmul.f32 %v3911, %v3932
        %v3955 = vmul.f32 %v3912, %v3932
        %v3956 = vmul.f32 %v3913, %v3932
        %v3957 = vmul.f32 %v3914, %v3932
        %v3958 = vmul.f32 %v3915, %v3932
        %v3959 = vmul.f32 %v3916, %v3932
        %v3960 = vmul.f32 %v3917, %v3932
        %v3961 = vmul.f32 %v3918, %v3932
        %v3962 = vmul.f32 %v3919, %v3932
        %v3963 = vmul.f32 %v3920, %v3932
        %v3964 = vmul.f32 %v3921, %v3932
        %v3965 = vmul.f32 %v3922, %v3932
        %v3966 = vmul.f32 %v3923, %v3932
        %v3967 = vmul.f32 %v3924, %v3932
        %v3968 = vmul.f32 %v3925, %v3932
        %v3969 = vmul.f32 %v3926, %v3932
        %v3970 = vld [vmem:[%s3] sm:$0x1]
        %v3972 = vlaneseq
        %v3973 = vshrl.u32 %v3972, 7
        %v3974 = vsub.s32 0, %v3973
        %v3975 = vrot.slane %v3970, %v3974
        %v3977 = vadd.f32 %v3934, %v3975
        %v3978 = vadd.f32 %v3935, %v3975
        %v3979 = vadd.f32 %v3936, %v3975
        %v3980 = vadd.f32 %v3937, %v3975
        %v3981 = vadd.f32 %v3938, %v3975
        %v3982 = vadd.f32 %v3939, %v3975
        %v3983 = vadd.f32 %v3940, %v3975
        %v3984 = vadd.f32 %v3941, %v3975
        %v3985 = vadd.f32 %v3942, %v3975
        %v3986 = vadd.f32 %v3943, %v3975
        %v3987 = vadd.f32 %v3944, %v3975
        %v3988 = vadd.f32 %v3945, %v3975
        %v3989 = vadd.f32 %v3946, %v3975
        %v3990 = vadd.f32 %v3947, %v3975
        %v3991 = vadd.f32 %v3948, %v3975
        %v3992 = vadd.f32 %v3949, %v3975
        %v3993 = vadd.f32 %v3950, %v3975
        %v3994 = vadd.f32 %v3951, %v3975
        %v3995 = vadd.f32 %v3952, %v3975
        %v3996 = vadd.f32 %v3953, %v3975
        %v3997 = vadd.f32 %v3954, %v3975
        %v3998 = vadd.f32 %v3955, %v3975
        %v3999 = vadd.f32 %v3956, %v3975
        %v4000 = vadd.f32 %v3957, %v3975
        %v4001 = vadd.f32 %v3958, %v3975
        %v4002 = vadd.f32 %v3959, %v3975
        %v4003 = vadd.f32 %v3960, %v3975
        %v4004 = vadd.f32 %v3961, %v3975
        %v4005 = vadd.f32 %v3962, %v3975
        %v4006 = vadd.f32 %v3963, %v3975
        %v4007 = vadd.f32 %v3964, %v3975
        %v4008 = vadd.f32 %v3965, %v3975
        %v4009 = vadd.f32 %v3966, %v3975
        %v4010 = vadd.f32 %v3967, %v3975
        %v4011 = vadd.f32 %v3968, %v3975
        %v4012 = vadd.f32 %v3969, %v3975
        %v4013 = vmax.f32 %v3977, 0.0
        %v4014 = vmax.f32 %v3978, 0.0
        %v4015 = vmax.f32 %v3979, 0.0
        %v4016 = vmax.f32 %v3980, 0.0
        %v4017 = vmax.f32 %v3981, 0.0
        %v4018 = vmax.f32 %v3982, 0.0
        %v4019 = vmax.f32 %v3983, 0.0
        %v4020 = vmax.f32 %v3984, 0.0
        %v4021 = vmax.f32 %v3985, 0.0
        %v4022 = vmax.f32 %v3986, 0.0
        %v4023 = vmax.f32 %v3987, 0.0
        %v4024 = vmax.f32 %v3988, 0.0
        %v4025 = vmax.f32 %v3989, 0.0
        %v4026 = vmax.f32 %v3990, 0.0
        %v4027 = vmax.f32 %v3991, 0.0
        %v4028 = vmax.f32 %v3992, 0.0
        %v4029 = vmax.f32 %v3993, 0.0
        %v4030 = vmax.f32 %v3994, 0.0
        %v4031 = vmax.f32 %v3995, 0.0
        %v4032 = vmax.f32 %v3996, 0.0
        %v4033 = vmax.f32 %v3997, 0.0
        %v4034 = vmax.f32 %v3998, 0.0
        %v4035 = vmax.f32 %v3999, 0.0
        %v4036 = vmax.f32 %v4000, 0.0
        %v4037 = vmax.f32 %v4001, 0.0
        %v4038 = vmax.f32 %v4002, 0.0
        %v4039 = vmax.f32 %v4003, 0.0
        %v4040 = vmax.f32 %v4004, 0.0
        %v4041 = vmax.f32 %v4005, 0.0
        %v4042 = vmax.f32 %v4006, 0.0
        %v4043 = vmax.f32 %v4007, 0.0
        %v4044 = vmax.f32 %v4008, 0.0
        %v4045 = vmax.f32 %v4009, 0.0
        %v4046 = vmax.f32 %v4010, 0.0
        %v4047 = vmax.f32 %v4011, 0.0
        %v4048 = vmax.f32 %v4012, 0.0
        %v4049 = vpack.c.bf16 %v4014, %v4013
        %v4050 = vpack.c.bf16 %v4016, %v4015
        %v4051 = vpack.c.bf16 %v4018, %v4017
        %v4052 = vpack.c.bf16 %v4020, %v4019
        %v4053 = vpack.c.bf16 %v4022, %v4021
        %v4054 = vpack.c.bf16 %v4024, %v4023
        %v4055 = vpack.c.bf16 %v4026, %v4025
        %v4056 = vpack.c.bf16 %v4028, %v4027
        %v4057 = vpack.c.bf16 %v4030, %v4029
        %v4058 = vpack.c.bf16 %v4032, %v4031
        %v4059 = vpack.c.bf16 %v4034, %v4033
        %v4060 = vpack.c.bf16 %v4036, %v4035
        %v4061 = vpack.c.bf16 %v4038, %v4037
        %v4062 = vpack.c.bf16 %v4040, %v4039
        %v4063 = vpack.c.bf16 %v4042, %v4041
        %v4064 = vpack.c.bf16 %v4044, %v4043
        %v4065 = vpack.c.bf16 %v4046, %v4045
        %v4066 = vpack.c.bf16 %v4048, %v4047
        %v4085 = vunpack.c.l.b16 %v4049
        %v4086 = vunpack.c.h.b16 %v4049
        %v4087 = vunpack.c.l.b16 %v4050
        %v4088 = vunpack.c.h.b16 %v4050
        %v4089 = vunpack.c.l.b16 %v4051
        %v4090 = vunpack.c.h.b16 %v4051
        %v4091 = vunpack.c.l.b16 %v4052
        %v4092 = vunpack.c.h.b16 %v4052
        %v4093 = vunpack.c.l.b16 %v4053
        %v4094 = vunpack.c.h.b16 %v4053
        %v4095 = vunpack.c.l.b16 %v4054
        %v4096 = vunpack.c.h.b16 %v4054
        %v4097 = vunpack.c.l.b16 %v4055
        %v4098 = vunpack.c.h.b16 %v4055
        %v4099 = vunpack.c.l.b16 %v4056
        %v4100 = vunpack.c.h.b16 %v4056
        %v4101 = vunpack.c.l.b16 %v4057
        %v4102 = vunpack.c.h.b16 %v4057
        %v4103 = vunpack.c.l.b16 %v4058
        %v4104 = vunpack.c.h.b16 %v4058
        %v4105 = vunpack.c.l.b16 %v4059
        %v4106 = vunpack.c.h.b16 %v4059
        %v4107 = vunpack.c.l.b16 %v4060
        %v4108 = vunpack.c.h.b16 %v4060
        %v4109 = vunpack.c.l.b16 %v4061
        %v4110 = vunpack.c.h.b16 %v4061
        %v4111 = vunpack.c.l.b16 %v4062
        %v4112 = vunpack.c.h.b16 %v4062
        %v4113 = vunpack.c.l.b16 %v4063
        %v4114 = vunpack.c.h.b16 %v4063
        %v4115 = vunpack.c.l.b16 %v4064
        %v4116 = vunpack.c.h.b16 %v4064
        %v4117 = vunpack.c.l.b16 %v4065
        %v4118 = vunpack.c.h.b16 %v4065
        %v4119 = vunpack.c.l.b16 %v4066
        %v4120 = vunpack.c.h.b16 %v4066
        %v4121 = vpack.c.b16 %v4085, %v4085
        %v4122 = vpack.c.b16 %v4086, %v4086
        %v4123 = vpack.c.b16 %v4087, %v4087
        %v4124 = vpack.c.b16 %v4088, %v4088
        %v4125 = vpack.c.b16 %v4089, %v4089
        %v4126 = vpack.c.b16 %v4090, %v4090
        %v4127 = vpack.c.b16 %v4091, %v4091
        %v4128 = vpack.c.b16 %v4092, %v4092
        %v4129 = vpack.c.b16 %v4093, %v4093
        %v4130 = vpack.c.b16 %v4094, %v4094
        %v4131 = vpack.c.b16 %v4095, %v4095
        %v4132 = vpack.c.b16 %v4096, %v4096
        %v4133 = vpack.c.b16 %v4097, %v4097
        %v4134 = vpack.c.b16 %v4098, %v4098
        %v4135 = vpack.c.b16 %v4099, %v4099
        %v4136 = vpack.c.b16 %v4100, %v4100
        %v4137 = vpack.c.b16 %v4101, %v4101
        %v4138 = vpack.c.b16 %v4102, %v4102
        %v4139 = vpack.c.b16 %v4103, %v4103
        %v4140 = vpack.c.b16 %v4104, %v4104
        %v4141 = vpack.c.b16 %v4105, %v4105
        %v4142 = vpack.c.b16 %v4106, %v4106
        %v4143 = vpack.c.b16 %v4107, %v4107
        %v4144 = vpack.c.b16 %v4108, %v4108
        %v4145 = vpack.c.b16 %v4109, %v4109
        %v4146 = vpack.c.b16 %v4110, %v4110
        %v4147 = vpack.c.b16 %v4111, %v4111
        %v4148 = vpack.c.b16 %v4112, %v4112
        %v4149 = vpack.c.b16 %v4113, %v4113
        %v4150 = vpack.c.b16 %v4114, %v4114
        %v4151 = vpack.c.b16 %v4115, %v4115
        %v4152 = vpack.c.b16 %v4116, %v4116
        %v4153 = vpack.c.b16 %v4117, %v4117
        %v4154 = vpack.c.b16 %v4118, %v4118
        %v4155 = vpack.c.b16 %v4119, %v4119
        %v4156 = vpack.c.b16 %v4120, %v4120
        %vm4157 = vsmask.f32 4368
        %vm4158 = vmor %vm344, %vm4157
        %v4160 = vshrl.u32 %v4121, 16
        %v4162 = vrot.slane %v4160, 7
        %v4163 = vshll.u32 %v4121, 16
        %v4165 = vor.u32 %v4162, %v4163
        %v4166 = vrot.slane %v4162, 4
        %v4168 = vshrl.u32 %v4122, 16
        %v4170 = vrot.slane %v4168, 7
        %v4171 = vshll.u32 %v4122, 16
        %v4173 = vor.u32 %v4170, %v4171
        %v4174 = vsel %vm4158, %v4166, %v4173
        %v4175 = vrot.slane %v4170, 4
        %v4177 = vshrl.u32 %v4123, 16
        %v4179 = vrot.slane %v4177, 7
        %v4180 = vshll.u32 %v4123, 16
        %v4182 = vor.u32 %v4179, %v4180
        %v4183 = vrot.slane %v4179, 4
        %v4185 = vshrl.u32 %v4124, 16
        %v4187 = vrot.slane %v4185, 7
        %v4188 = vshll.u32 %v4124, 16
        %v4190 = vor.u32 %v4187, %v4188
        %v4191 = vsel %vm4158, %v4183, %v4190
        %v4192 = vrot.slane %v4187, 4
        %v4194 = vshrl.u32 %v4125, 16
        %v4196 = vrot.slane %v4194, 7
        %v4197 = vshll.u32 %v4125, 16
        %v4199 = vor.u32 %v4196, %v4197
        %v4200 = vrot.slane %v4196, 4
        %v4202 = vshrl.u32 %v4126, 16
        %v4204 = vrot.slane %v4202, 7
        %v4205 = vshll.u32 %v4126, 16
        %v4207 = vor.u32 %v4204, %v4205
        %v4208 = vsel %vm4158, %v4200, %v4207
        %v4209 = vrot.slane %v4204, 4
        %v4211 = vshrl.u32 %v4127, 16
        %v4213 = vrot.slane %v4211, 7
        %v4214 = vshll.u32 %v4127, 16
        %v4216 = vor.u32 %v4213, %v4214
        %v4217 = vrot.slane %v4213, 4
        %v4219 = vshrl.u32 %v4128, 16
        %v4221 = vrot.slane %v4219, 7
        %v4222 = vshll.u32 %v4128, 16
        %v4224 = vor.u32 %v4221, %v4222
        %v4225 = vsel %vm4158, %v4217, %v4224
        %v4226 = vrot.slane %v4221, 4
        %v4228 = vshrl.u32 %v4129, 16
        %v4230 = vrot.slane %v4228, 7
        %v4231 = vshll.u32 %v4129, 16
        %v4233 = vor.u32 %v4230, %v4231
        %v4234 = vrot.slane %v4230, 4
        %v4236 = vshrl.u32 %v4130, 16
        %v4238 = vrot.slane %v4236, 7
        %v4239 = vshll.u32 %v4130, 16
        %v4241 = vor.u32 %v4238, %v4239
        %v4242 = vsel %vm4158, %v4234, %v4241
        %v4243 = vrot.slane %v4238, 4
        %v4245 = vshrl.u32 %v4131, 16
        %v4247 = vrot.slane %v4245, 7
        %v4248 = vshll.u32 %v4131, 16
        %v4250 = vor.u32 %v4247, %v4248
        %v4251 = vrot.slane %v4247, 4
        %v4253 = vshrl.u32 %v4132, 16
        %v4255 = vrot.slane %v4253, 7
        %v4256 = vshll.u32 %v4132, 16
        %v4258 = vor.u32 %v4255, %v4256
        %v4259 = vsel %vm4158, %v4251, %v4258
        %v4260 = vrot.slane %v4255, 4
        %v4262 = vshrl.u32 %v4133, 16
        %v4264 = vrot.slane %v4262, 7
        %v4265 = vshll.u32 %v4133, 16
        %v4267 = vor.u32 %v4264, %v4265
        %v4268 = vrot.slane %v4264, 4
        %v4270 = vshrl.u32 %v4134, 16
        %v4272 = vrot.slane %v4270, 7
        %v4273 = vshll.u32 %v4134, 16
        %v4275 = vor.u32 %v4272, %v4273
        %v4276 = vsel %vm4158, %v4268, %v4275
        %v4277 = vrot.slane %v4272, 4
        %v4279 = vshrl.u32 %v4135, 16
        %v4281 = vrot.slane %v4279, 7
        %v4282 = vshll.u32 %v4135, 16
        %v4284 = vor.u32 %v4281, %v4282
        %v4285 = vrot.slane %v4281, 4
        %v4287 = vshrl.u32 %v4136, 16
        %v4289 = vrot.slane %v4287, 7
        %v4290 = vshll.u32 %v4136, 16
        %v4292 = vor.u32 %v4289, %v4290
        %v4293 = vsel %vm4158, %v4285, %v4292
        %v4294 = vrot.slane %v4289, 4
        %v4296 = vshrl.u32 %v4137, 16
        %v4298 = vrot.slane %v4296, 7
        %v4299 = vshll.u32 %v4137, 16
        %v4301 = vor.u32 %v4298, %v4299
        %v4302 = vrot.slane %v4298, 4
        %v4304 = vshrl.u32 %v4138, 16
        %v4306 = vrot.slane %v4304, 7
        %v4307 = vshll.u32 %v4138, 16
        %v4309 = vor.u32 %v4306, %v4307
        %v4310 = vsel %vm4158, %v4302, %v4309
        %v4311 = vrot.slane %v4306, 4
        %v4313 = vshrl.u32 %v4139, 16
        %v4315 = vrot.slane %v4313, 7
        %v4316 = vshll.u32 %v4139, 16
        %v4318 = vor.u32 %v4315, %v4316
        %v4319 = vrot.slane %v4315, 4
        %v4321 = vshrl.u32 %v4140, 16
        %v4323 = vrot.slane %v4321, 7
        %v4324 = vshll.u32 %v4140, 16
        %v4326 = vor.u32 %v4323, %v4324
        %v4327 = vsel %vm4158, %v4319, %v4326
        %v4328 = vrot.slane %v4323, 4
        %v4330 = vshrl.u32 %v4141, 16
        %v4332 = vrot.slane %v4330, 7
        %v4333 = vshll.u32 %v4141, 16
        %v4335 = vor.u32 %v4332, %v4333
        %v4336 = vrot.slane %v4332, 4
        %v4338 = vshrl.u32 %v4142, 16
        %v4340 = vrot.slane %v4338, 7
        %v4341 = vshll.u32 %v4142, 16
        %v4343 = vor.u32 %v4340, %v4341
        %v4344 = vsel %vm4158, %v4336, %v4343
        %v4345 = vrot.slane %v4340, 4
        %v4347 = vshrl.u32 %v4143, 16
        %v4349 = vrot.slane %v4347, 7
        %v4350 = vshll.u32 %v4143, 16
        %v4352 = vor.u32 %v4349, %v4350
        %v4353 = vrot.slane %v4349, 4
        %v4355 = vshrl.u32 %v4144, 16
        %v4357 = vrot.slane %v4355, 7
        %v4358 = vshll.u32 %v4144, 16
        %v4360 = vor.u32 %v4357, %v4358
        %v4361 = vsel %vm4158, %v4353, %v4360
        %v4362 = vrot.slane %v4357, 4
        %v4364 = vshrl.u32 %v4145, 16
        %v4366 = vrot.slane %v4364, 7
        %v4367 = vshll.u32 %v4145, 16
        %v4369 = vor.u32 %v4366, %v4367
        %v4370 = vrot.slane %v4366, 4
        %v4372 = vshrl.u32 %v4146, 16
        %v4374 = vrot.slane %v4372, 7
        %v4375 = vshll.u32 %v4146, 16
        %v4377 = vor.u32 %v4374, %v4375
        %v4378 = vsel %vm4158, %v4370, %v4377
        %v4379 = vrot.slane %v4374, 4
        %v4381 = vshrl.u32 %v4147, 16
        %v4383 = vrot.slane %v4381, 7
        %v4384 = vshll.u32 %v4147, 16
        %v4386 = vor.u32 %v4383, %v4384
        %v4387 = vrot.slane %v4383, 4
        %v4389 = vshrl.u32 %v4148, 16
        %v4391 = vrot.slane %v4389, 7
        %v4392 = vshll.u32 %v4148, 16
        %v4394 = vor.u32 %v4391, %v4392
        %v4395 = vsel %vm4158, %v4387, %v4394
        %v4396 = vrot.slane %v4391, 4
        %v4398 = vshrl.u32 %v4149, 16
        %v4400 = vrot.slane %v4398, 7
        %v4401 = vshll.u32 %v4149, 16
        %v4403 = vor.u32 %v4400, %v4401
        %v4404 = vrot.slane %v4400, 4
        %v4406 = vshrl.u32 %v4150, 16
        %v4408 = vrot.slane %v4406, 7
        %v4409 = vshll.u32 %v4150, 16
        %v4411 = vor.u32 %v4408, %v4409
        %v4412 = vsel %vm4158, %v4404, %v4411
        %v4413 = vrot.slane %v4408, 4
        %v4415 = vshrl.u32 %v4151, 16
        %v4417 = vrot.slane %v4415, 7
        %v4418 = vshll.u32 %v4151, 16
        %v4420 = vor.u32 %v4417, %v4418
        %v4421 = vrot.slane %v4417, 4
        %v4423 = vshrl.u32 %v4152, 16
        %v4425 = vrot.slane %v4423, 7
        %v4426 = vshll.u32 %v4152, 16
        %v4428 = vor.u32 %v4425, %v4426
        %v4429 = vsel %vm4158, %v4421, %v4428
        %v4430 = vrot.slane %v4425, 4
        %v4432 = vshrl.u32 %v4153, 16
        %v4434 = vrot.slane %v4432, 7
        %v4435 = vshll.u32 %v4153, 16
        %v4437 = vor.u32 %v4434, %v4435
        %v4438 = vrot.slane %v4434, 4
        %v4440 = vshrl.u32 %v4154, 16
        %v4442 = vrot.slane %v4440, 7
        %v4443 = vshll.u32 %v4154, 16
        %v4445 = vor.u32 %v4442, %v4443
        %v4446 = vsel %vm4158, %v4438, %v4445
        %v4447 = vrot.slane %v4442, 4
        %v4449 = vshrl.u32 %v4155, 16
        %v4451 = vrot.slane %v4449, 7
        %v4452 = vshll.u32 %v4155, 16
        %v4454 = vor.u32 %v4451, %v4452
        %v4455 = vrot.slane %v4451, 4
        %v4457 = vshrl.u32 %v4156, 16
        %v4459 = vrot.slane %v4457, 7
        %v4460 = vshll.u32 %v4156, 16
        %v4462 = vor.u32 %v4459, %v4460
        %v4463 = vsel %vm4158, %v4455, %v4462
        %v4464 = vrot.slane %v4459, 4
        %vm4519 = vcmask 1043456
        %vm4520 = vmand %vm4519, %vm400
        %v4521 = vld [vmem:[#allocation2] sm:$0xf]
        %v4522 = vsel %vm4520, %v4165, %v4521
        %4523 = vst [vmem:[#allocation2] sm:$0xf] %v4522
        %4524 = vst [vmem:[#allocation2 + $0x4] sm:$0xf] %v4174
        %v4525 = vld [vmem:[#allocation2 + $0x8] sm:$0x1]
        %v4526 = vsel %vm345, %v4175, %v4525
        %4527 = vst [vmem:[#allocation2 + $0x8] sm:$0x1] %v4526
        %v4528 = vld [vmem:[#allocation2 + $0xc] sm:$0xf]
        %v4529 = vsel %vm4520, %v4182, %v4528
        %4530 = vst [vmem:[#allocation2 + $0xc] sm:$0xf] %v4529
        %4531 = vst [vmem:[#allocation2 + $0x10] sm:$0xf] %v4191
        %v4532 = vld [vmem:[#allocation2 + $0x14] sm:$0x1]
        %v4533 = vsel %vm345, %v4192, %v4532
        %4534 = vst [vmem:[#allocation2 + $0x14] sm:$0x1] %v4533
        %v4535 = vld [vmem:[#allocation2 + $0x18] sm:$0xf]
        %v4536 = vsel %vm4520, %v4199, %v4535
        %4537 = vst [vmem:[#allocation2 + $0x18] sm:$0xf] %v4536
        %4538 = vst [vmem:[#allocation2 + $0x1c] sm:$0xf] %v4208
        %v4539 = vld [vmem:[#allocation2 + $0x20] sm:$0x1]
        %v4540 = vsel %vm345, %v4209, %v4539
        %4541 = vst [vmem:[#allocation2 + $0x20] sm:$0x1] %v4540
        %v4542 = vld [vmem:[#allocation2 + $0x24] sm:$0xf]
        %v4543 = vsel %vm4520, %v4216, %v4542
        %4544 = vst [vmem:[#allocation2 + $0x24] sm:$0xf] %v4543
        %4545 = vst [vmem:[#allocation2 + $0x28] sm:$0xf] %v4225
        %v4546 = vld [vmem:[#allocation2 + $0x2c] sm:$0x1]
        %v4547 = vsel %vm345, %v4226, %v4546
        %4548 = vst [vmem:[#allocation2 + $0x2c] sm:$0x1] %v4547
        %v4549 = vld [vmem:[#allocation2 + $0x30] sm:$0xf]
        %v4550 = vsel %vm4520, %v4233, %v4549
        %4551 = vst [vmem:[#allocation2 + $0x30] sm:$0xf] %v4550
        %4552 = vst [vmem:[#allocation2 + $0x34] sm:$0xf] %v4242
        %v4553 = vld [vmem:[#allocation2 + $0x38] sm:$0x1]
        %v4554 = vsel %vm345, %v4243, %v4553
        %4555 = vst [vmem:[#allocation2 + $0x38] sm:$0x1] %v4554
        %v4556 = vld [vmem:[#allocation2 + $0x3c] sm:$0xf]
        %v4557 = vsel %vm4520, %v4250, %v4556
        %4558 = vst [vmem:[#allocation2 + $0x3c] sm:$0xf] %v4557
        %4559 = vst [vmem:[#allocation2 + $0x40] sm:$0xf] %v4259
        %v4560 = vld [vmem:[#allocation2 + $0x44] sm:$0x1]
        %v4561 = vsel %vm345, %v4260, %v4560
        %4562 = vst [vmem:[#allocation2 + $0x44] sm:$0x1] %v4561
        %v4563 = vld [vmem:[#allocation2 + $0x48] sm:$0xf]
        %v4564 = vsel %vm4520, %v4267, %v4563
        %4565 = vst [vmem:[#allocation2 + $0x48] sm:$0xf] %v4564
        %4566 = vst [vmem:[#allocation2 + $0x4c] sm:$0xf] %v4276
        %v4567 = vld [vmem:[#allocation2 + $0x50] sm:$0x1]
        %v4568 = vsel %vm345, %v4277, %v4567
        %4569 = vst [vmem:[#allocation2 + $0x50] sm:$0x1] %v4568
        %v4570 = vld [vmem:[#allocation2 + $0x54] sm:$0xf]
        %v4571 = vsel %vm4520, %v4284, %v4570
        %4572 = vst [vmem:[#allocation2 + $0x54] sm:$0xf] %v4571
        %4573 = vst [vmem:[#allocation2 + $0x58] sm:$0xf] %v4293
        %v4574 = vld [vmem:[#allocation2 + $0x5c] sm:$0x1]
        %v4575 = vsel %vm345, %v4294, %v4574
        %4576 = vst [vmem:[#allocation2 + $0x5c] sm:$0x1] %v4575
        %v4577 = vld [vmem:[#allocation2 + $0x60] sm:$0xf]
        %v4578 = vsel %vm4520, %v4301, %v4577
        %4579 = vst [vmem:[#allocation2 + $0x60] sm:$0xf] %v4578
        %4580 = vst [vmem:[#allocation2 + $0x64] sm:$0xf] %v4310
        %v4581 = vld [vmem:[#allocation2 + $0x68] sm:$0x1]
        %v4582 = vsel %vm345, %v4311, %v4581
        %4583 = vst [vmem:[#allocation2 + $0x68] sm:$0x1] %v4582
        %v4584 = vld [vmem:[#allocation2 + $0x6c] sm:$0xf]
        %v4585 = vsel %vm4520, %v4318, %v4584
        %4586 = vst [vmem:[#allocation2 + $0x6c] sm:$0xf] %v4585
        %4587 = vst [vmem:[#allocation2 + $0x70] sm:$0xf] %v4327
        %v4588 = vld [vmem:[#allocation2 + $0x74] sm:$0x1]
        %v4589 = vsel %vm345, %v4328, %v4588
        %4590 = vst [vmem:[#allocation2 + $0x74] sm:$0x1] %v4589
        %v4591 = vld [vmem:[#allocation2 + $0x78] sm:$0xf]
        %v4592 = vsel %vm4520, %v4335, %v4591
        %4593 = vst [vmem:[#allocation2 + $0x78] sm:$0xf] %v4592
        %4594 = vst [vmem:[#allocation2 + $0x7c] sm:$0xf] %v4344
        %v4595 = vld [vmem:[#allocation2 + $0x80] sm:$0x1]
        %v4596 = vsel %vm345, %v4345, %v4595
        %4597 = vst [vmem:[#allocation2 + $0x80] sm:$0x1] %v4596
        %v4598 = vld [vmem:[#allocation2 + $0x84] sm:$0xf]
        %v4599 = vsel %vm4520, %v4352, %v4598
        %4600 = vst [vmem:[#allocation2 + $0x84] sm:$0xf] %v4599
        %4601 = vst [vmem:[#allocation2 + $0x88] sm:$0xf] %v4361
        %v4602 = vld [vmem:[#allocation2 + $0x8c] sm:$0x1]
        %v4603 = vsel %vm345, %v4362, %v4602
        %4604 = vst [vmem:[#allocation2 + $0x8c] sm:$0x1] %v4603
        %v4605 = vld [vmem:[#allocation2 + $0x90] sm:$0xf]
        %v4606 = vsel %vm4520, %v4369, %v4605
        %4607 = vst [vmem:[#allocation2 + $0x90] sm:$0xf] %v4606
        %4608 = vst [vmem:[#allocation2 + $0x94] sm:$0xf] %v4378
        %v4609 = vld [vmem:[#allocation2 + $0x98] sm:$0x1]
        %v4610 = vsel %vm345, %v4379, %v4609
        %4611 = vst [vmem:[#allocation2 + $0x98] sm:$0x1] %v4610
        %v4612 = vld [vmem:[#allocation2 + $0x9c] sm:$0xf]
        %v4613 = vsel %vm4520, %v4386, %v4612
        %4614 = vst [vmem:[#allocation2 + $0x9c] sm:$0xf] %v4613
        %4615 = vst [vmem:[#allocation2 + $0xa0] sm:$0xf] %v4395
        %v4616 = vld [vmem:[#allocation2 + $0xa4] sm:$0x1]
        %v4617 = vsel %vm345, %v4396, %v4616
        %4618 = vst [vmem:[#allocation2 + $0xa4] sm:$0x1] %v4617
        %v4619 = vld [vmem:[#allocation2 + $0xa8] sm:$0xf]
        %v4620 = vsel %vm4520, %v4403, %v4619
        %4621 = vst [vmem:[#allocation2 + $0xa8] sm:$0xf] %v4620
        %4622 = vst [vmem:[#allocation2 + $0xac] sm:$0xf] %v4412
        %v4623 = vld [vmem:[#allocation2 + $0xb0] sm:$0x1]
        %v4624 = vsel %vm345, %v4413, %v4623
        %4625 = vst [vmem:[#allocation2 + $0xb0] sm:$0x1] %v4624
        %v4626 = vld [vmem:[#allocation2 + $0xb4] sm:$0xf]
        %v4627 = vsel %vm4520, %v4420, %v4626
        %4628 = vst [vmem:[#allocation2 + $0xb4] sm:$0xf] %v4627
        %4629 = vst [vmem:[#allocation2 + $0xb8] sm:$0xf] %v4429
        %v4630 = vld [vmem:[#allocation2 + $0xbc] sm:$0x1]
        %v4631 = vsel %vm345, %v4430, %v4630
        %4632 = vst [vmem:[#allocation2 + $0xbc] sm:$0x1] %v4631
        %v4633 = vld [vmem:[#allocation2 + $0xc0] sm:$0xf]
        %v4634 = vsel %vm4520, %v4437, %v4633
        %4635 = vst [vmem:[#allocation2 + $0xc0] sm:$0xf] %v4634
        %4636 = vst [vmem:[#allocation2 + $0xc4] sm:$0xf] %v4446
        %v4637 = vld [vmem:[#allocation2 + $0xc8] sm:$0x1]
        %v4638 = vsel %vm345, %v4447, %v4637
        %4639 = vst [vmem:[#allocation2 + $0xc8] sm:$0x1] %v4638
        %v4640 = vld [vmem:[#allocation2 + $0xcc] sm:$0xf]
        %v4641 = vsel %vm4520, %v4454, %v4640
        %4642 = vst [vmem:[#allocation2 + $0xcc] sm:$0xf] %v4641
        %4643 = vst [vmem:[#allocation2 + $0xd0] sm:$0xf] %v4463
        %v4644 = vld [vmem:[#allocation2 + $0xd4] sm:$0x1]
        %v4645 = vsel %vm345, %v4464, %v4644
        %4646 = vst [vmem:[#allocation2 + $0xd4] sm:$0x1] %v4645
        %p4647 = scmp.eq.s32.totalorder %s30, 0
        // Predicated region
        $region61: #{tpu_custom_call.1} parent=47 // pred_check
          %p4648 = pneg %p4647
        $region62: #{tpu_custom_call.1} parent=47 // pred_check_branch
          %4650 = sbr.rel (%p4648) target = $region64
        $region63: #{tpu_custom_call.1} parent=47 // pred_region
          %v4651 = vld [vmem:[#allocation2] sm:$0xf]
          %v4652 = vsel %vm4520, 0, %v4651
          %4653 = vst [vmem:[#allocation2] sm:$0xf] %v4652
          %4654 = vst [vmem:[#allocation2 + $0x4] sm:$0xf] 0
          %v4655 = vld [vmem:[#allocation2 + $0x8] sm:$0x1]
          %v4656 = vsel %vm345, 0, %v4655
          %4657 = vst [vmem:[#allocation2 + $0x8] sm:$0x1] %v4656
          %s4658 = scalar_lea.vmem [#allocation2], 204
          %v4659 = vld [vmem:[%s4658] sm:$0xf]
          %v4660 = vsel %vm4520, 0, %v4659
          %4661 = vst [vmem:[%s4658] sm:$0xf] %v4660
          %4662 = vst [vmem:[%s4658 + $0x4] sm:$0xf] 0
          %v4663 = vld [vmem:[%s4658 + $0x8] sm:$0x1]
          %v4664 = vsel %vm345, 0, %v4663
          %4665 = vst [vmem:[%s4658 + $0x8] sm:$0x1] %v4664
        $region64: #{tpu_custom_call.1} parent=47 // pred_fallthru
          _
        %v4666 = vld [vmem:[#allocation2] sm:$0xf]
        %v4667 = vld [vmem:[#allocation2 + $0x4] sm:$0xf]
        %v4668 = vld [vmem:[#allocation2 + $0xc] sm:$0xf]
        %v4669 = vld [vmem:[#allocation2 + $0x10] sm:$0xf]
        %v4670 = vld [vmem:[#allocation2 + $0x18] sm:$0xf]
        %v4671 = vld [vmem:[#allocation2 + $0x1c] sm:$0xf]
        %v4672 = vld [vmem:[#allocation2 + $0x24] sm:$0xf]
        %v4673 = vld [vmem:[#allocation2 + $0x28] sm:$0xf]
        %v4674 = vld [vmem:[#allocation2 + $0x30] sm:$0xf]
        %v4675 = vld [vmem:[#allocation2 + $0x34] sm:$0xf]
        %v4676 = vld [vmem:[#allocation2 + $0x3c] sm:$0xf]
        %v4677 = vld [vmem:[#allocation2 + $0x40] sm:$0xf]
        %v4678 = vld [vmem:[#allocation2 + $0x48] sm:$0xf]
        %v4679 = vld [vmem:[#allocation2 + $0x4c] sm:$0xf]
        %v4680 = vld [vmem:[#allocation2 + $0x54] sm:$0xf]
        %v4681 = vld [vmem:[#allocation2 + $0x58] sm:$0xf]
        %v4682 = vld [vmem:[#allocation2 + $0x60] sm:$0xf]
        %v4683 = vld [vmem:[#allocation2 + $0x64] sm:$0xf]
        %v4684 = vld [vmem:[#allocation2 + $0x6c] sm:$0xf]
        %v4685 = vld [vmem:[#allocation2 + $0x70] sm:$0xf]
        %v4686 = vld [vmem:[#allocation2 + $0x78] sm:$0xf]
        %v4687 = vld [vmem:[#allocation2 + $0x7c] sm:$0xf]
        %v4688 = vld [vmem:[#allocation2 + $0x84] sm:$0xf]
        %v4689 = vld [vmem:[#allocation2 + $0x88] sm:$0xf]
        %v4690 = vld [vmem:[#allocation2 + $0x90] sm:$0xf]
        %v4691 = vld [vmem:[#allocation2 + $0x94] sm:$0xf]
        %v4692 = vld [vmem:[#allocation2 + $0x9c] sm:$0xf]
        %v4693 = vld [vmem:[#allocation2 + $0xa0] sm:$0xf]
        %v4694 = vld [vmem:[#allocation2 + $0xa8] sm:$0xf]
        %v4695 = vld [vmem:[#allocation2 + $0xac] sm:$0xf]
        %v4696 = vld [vmem:[#allocation2 + $0xb4] sm:$0xf]
        %v4697 = vld [vmem:[#allocation2 + $0xb8] sm:$0xf]
        %v4698 = vld [vmem:[#allocation2 + $0x8] sm:$0x1]
        %v4699 = vld [vmem:[#allocation2 + $0x14] sm:$0x1]
        %v4700 = vld [vmem:[#allocation2 + $0x20] sm:$0x1]
        %v4701 = vld [vmem:[#allocation2 + $0x2c] sm:$0x1]
        %v4702 = vld [vmem:[#allocation2 + $0x38] sm:$0x1]
        %v4703 = vld [vmem:[#allocation2 + $0x44] sm:$0x1]
        %v4704 = vld [vmem:[#allocation2 + $0x50] sm:$0x1]
        %v4705 = vld [vmem:[#allocation2 + $0x5c] sm:$0x1]
        %v4706 = vld [vmem:[#allocation2 + $0x68] sm:$0x1]
        %v4707 = vld [vmem:[#allocation2 + $0x74] sm:$0x1]
        %v4708 = vld [vmem:[#allocation2 + $0x80] sm:$0x1]
        %v4709 = vld [vmem:[#allocation2 + $0x8c] sm:$0x1]
        %v4710 = vld [vmem:[#allocation2 + $0x98] sm:$0x1]
        %v4711 = vld [vmem:[#allocation2 + $0xa4] sm:$0x1]
        %v4712 = vld [vmem:[#allocation2 + $0xb0] sm:$0x1]
        %v4713 = vld [vmem:[#allocation2 + $0xbc] sm:$0x1]
        %v4714 = vld [vmem:[#allocation2] sm:$0xe]
        %v4715 = vld [vmem:[#allocation2 + $0xc] sm:$0xe]
        %v4716 = vld [vmem:[#allocation2 + $0x18] sm:$0xe]
        %v4717 = vld [vmem:[#allocation2 + $0x24] sm:$0xe]
        %v4718 = vld [vmem:[#allocation2 + $0x30] sm:$0xe]
        %v4719 = vld [vmem:[#allocation2 + $0x3c] sm:$0xe]
        %v4720 = vld [vmem:[#allocation2 + $0x48] sm:$0xe]
        %v4721 = vld [vmem:[#allocation2 + $0x54] sm:$0xe]
        %v4722 = vld [vmem:[#allocation2 + $0x60] sm:$0xe]
        %v4723 = vld [vmem:[#allocation2 + $0x6c] sm:$0xe]
        %v4724 = vld [vmem:[#allocation2 + $0x78] sm:$0xe]
        %v4725 = vld [vmem:[#allocation2 + $0x84] sm:$0xe]
        %v4726 = vld [vmem:[#allocation2 + $0x90] sm:$0xe]
        %v4727 = vld [vmem:[#allocation2 + $0x9c] sm:$0xe]
        %v4728 = vld [vmem:[#allocation2 + $0xa8] sm:$0xe]
        %v4729 = vld [vmem:[#allocation2 + $0xb4] sm:$0xe]
        %v4762 = vunpack.c.l.b16 %v4666
        %v4763 = vunpack.c.l.b16 %v4667
        %v4764 = vunpack.c.l.b16 %v4668
        %v4765 = vunpack.c.l.b16 %v4669
        %v4766 = vunpack.c.l.b16 %v4670
        %v4767 = vunpack.c.l.b16 %v4671
        %v4768 = vunpack.c.l.b16 %v4672
        %v4769 = vunpack.c.l.b16 %v4673
        %v4770 = vunpack.c.l.b16 %v4674
        %v4771 = vunpack.c.l.b16 %v4675
        %v4772 = vunpack.c.l.b16 %v4676
        %v4773 = vunpack.c.l.b16 %v4677
        %v4774 = vunpack.c.l.b16 %v4678
        %v4775 = vunpack.c.l.b16 %v4679
        %v4776 = vunpack.c.l.b16 %v4680
        %v4777 = vunpack.c.l.b16 %v4681
        %v4778 = vunpack.c.l.b16 %v4682
        %v4779 = vunpack.c.l.b16 %v4683
        %v4780 = vunpack.c.l.b16 %v4684
        %v4781 = vunpack.c.l.b16 %v4685
        %v4782 = vunpack.c.l.b16 %v4686
        %v4783 = vunpack.c.l.b16 %v4687
        %v4784 = vunpack.c.l.b16 %v4688
        %v4785 = vunpack.c.l.b16 %v4689
        %v4786 = vunpack.c.l.b16 %v4690
        %v4787 = vunpack.c.l.b16 %v4691
        %v4788 = vunpack.c.l.b16 %v4692
        %v4789 = vunpack.c.l.b16 %v4693
        %v4790 = vunpack.c.l.b16 %v4694
        %v4791 = vunpack.c.l.b16 %v4695
        %v4792 = vunpack.c.l.b16 %v4696
        %v4793 = vunpack.c.l.b16 %v4697
        %v4794 = vpack.c.b16 %v4763, %v4762
        %v4795 = vpack.c.b16 %v4765, %v4764
        %v4796 = vpack.c.b16 %v4767, %v4766
        %v4797 = vpack.c.b16 %v4769, %v4768
        %v4798 = vpack.c.b16 %v4771, %v4770
        %v4799 = vpack.c.b16 %v4773, %v4772
        %v4800 = vpack.c.b16 %v4775, %v4774
        %v4801 = vpack.c.b16 %v4777, %v4776
        %v4802 = vpack.c.b16 %v4779, %v4778
        %v4803 = vpack.c.b16 %v4781, %v4780
        %v4804 = vpack.c.b16 %v4783, %v4782
        %v4805 = vpack.c.b16 %v4785, %v4784
        %v4806 = vpack.c.b16 %v4787, %v4786
        %v4807 = vpack.c.b16 %v4789, %v4788
        %v4808 = vpack.c.b16 %v4791, %v4790
        %v4809 = vpack.c.b16 %v4793, %v4792
        %v4842 = vunpack.c.l.b16 %v4698
        %v4843 = vunpack.c.l.b16 %v4699
        %v4844 = vunpack.c.l.b16 %v4700
        %v4845 = vunpack.c.l.b16 %v4701
        %v4846 = vunpack.c.l.b16 %v4702
        %v4847 = vunpack.c.l.b16 %v4703
        %v4848 = vunpack.c.l.b16 %v4704
        %v4849 = vunpack.c.l.b16 %v4705
        %v4850 = vunpack.c.l.b16 %v4706
        %v4851 = vunpack.c.l.b16 %v4707
        %v4852 = vunpack.c.l.b16 %v4708
        %v4853 = vunpack.c.l.b16 %v4709
        %v4854 = vunpack.c.l.b16 %v4710
        %v4855 = vunpack.c.l.b16 %v4711
        %v4856 = vunpack.c.l.b16 %v4712
        %v4857 = vunpack.c.l.b16 %v4713
        %v4858 = vpack.c.b16 %v4842, %v4842
        %v4859 = vpack.c.b16 %v4843, %v4843
        %v4860 = vpack.c.b16 %v4844, %v4844
        %v4861 = vpack.c.b16 %v4845, %v4845
        %v4862 = vpack.c.b16 %v4846, %v4846
        %v4863 = vpack.c.b16 %v4847, %v4847
        %v4864 = vpack.c.b16 %v4848, %v4848
        %v4865 = vpack.c.b16 %v4849, %v4849
        %v4866 = vpack.c.b16 %v4850, %v4850
        %v4867 = vpack.c.b16 %v4851, %v4851
        %v4868 = vpack.c.b16 %v4852, %v4852
        %v4869 = vpack.c.b16 %v4853, %v4853
        %v4870 = vpack.c.b16 %v4854, %v4854
        %v4871 = vpack.c.b16 %v4855, %v4855
        %v4872 = vpack.c.b16 %v4856, %v4856
        %v4873 = vpack.c.b16 %v4857, %v4857
        %v4875 = vshrl.u32 %v4794, 16
        %v4877 = vshll.u32 %v4794, 16
        %v4879 = vrot.slane %v4877, 1
        %v4880 = vor.u32 %v4875, %v4879
        %v4882 = vshll.u32 %v4858, 16
        %v4884 = vrot.slane %v4882, 1
        %v4885 = vsel %vm693, %v4880, %v4884
        %v4887 = vshrl.u32 %v4795, 16
        %v4889 = vshll.u32 %v4795, 16
        %v4891 = vrot.slane %v4889, 1
        %v4892 = vor.u32 %v4887, %v4891
        %v4894 = vshll.u32 %v4859, 16
        %v4896 = vrot.slane %v4894, 1
        %v4897 = vsel %vm693, %v4892, %v4896
        %v4899 = vshrl.u32 %v4796, 16
        %v4901 = vshll.u32 %v4796, 16
        %v4903 = vrot.slane %v4901, 1
        %v4904 = vor.u32 %v4899, %v4903
        %v4906 = vshll.u32 %v4860, 16
        %v4908 = vrot.slane %v4906, 1
        %v4909 = vsel %vm693, %v4904, %v4908
        %v4911 = vshrl.u32 %v4797, 16
        %v4913 = vshll.u32 %v4797, 16
        %v4915 = vrot.slane %v4913, 1
        %v4916 = vor.u32 %v4911, %v4915
        %v4918 = vshll.u32 %v4861, 16
        %v4920 = vrot.slane %v4918, 1
        %v4921 = vsel %vm693, %v4916, %v4920
        %v4923 = vshrl.u32 %v4798, 16
        %v4925 = vshll.u32 %v4798, 16
        %v4927 = vrot.slane %v4925, 1
        %v4928 = vor.u32 %v4923, %v4927
        %v4930 = vshll.u32 %v4862, 16
        %v4932 = vrot.slane %v4930, 1
        %v4933 = vsel %vm693, %v4928, %v4932
        %v4935 = vshrl.u32 %v4799, 16
        %v4937 = vshll.u32 %v4799, 16
        %v4939 = vrot.slane %v4937, 1
        %v4940 = vor.u32 %v4935, %v4939
        %v4942 = vshll.u32 %v4863, 16
        %v4944 = vrot.slane %v4942, 1
        %v4945 = vsel %vm693, %v4940, %v4944
        %v4947 = vshrl.u32 %v4800, 16
        %v4949 = vshll.u32 %v4800, 16
        %v4951 = vrot.slane %v4949, 1
        %v4952 = vor.u32 %v4947, %v4951
        %v4954 = vshll.u32 %v4864, 16
        %v4956 = vrot.slane %v4954, 1
        %v4957 = vsel %vm693, %v4952, %v4956
        %v4959 = vshrl.u32 %v4801, 16
        %v4961 = vshll.u32 %v4801, 16
        %v4963 = vrot.slane %v4961, 1
        %v4964 = vor.u32 %v4959, %v4963
        %v4966 = vshll.u32 %v4865, 16
        %v4968 = vrot.slane %v4966, 1
        %v4969 = vsel %vm693, %v4964, %v4968
        %v4971 = vshrl.u32 %v4802, 16
        %v4973 = vshll.u32 %v4802, 16
        %v4975 = vrot.slane %v4973, 1
        %v4976 = vor.u32 %v4971, %v4975
        %v4978 = vshll.u32 %v4866, 16
        %v4980 = vrot.slane %v4978, 1
        %v4981 = vsel %vm693, %v4976, %v4980
        %v4983 = vshrl.u32 %v4803, 16
        %v4985 = vshll.u32 %v4803, 16
        %v4987 = vrot.slane %v4985, 1
        %v4988 = vor.u32 %v4983, %v4987
        %v4990 = vshll.u32 %v4867, 16
        %v4992 = vrot.slane %v4990, 1
        %v4993 = vsel %vm693, %v4988, %v4992
        %v4995 = vshrl.u32 %v4804, 16
        %v4997 = vshll.u32 %v4804, 16
        %v4999 = vrot.slane %v4997, 1
        %v5000 = vor.u32 %v4995, %v4999
        %v5002 = vshll.u32 %v4868, 16
        %v5004 = vrot.slane %v5002, 1
        %v5005 = vsel %vm693, %v5000, %v5004
        %v5007 = vshrl.u32 %v4805, 16
        %v5009 = vshll.u32 %v4805, 16
        %v5011 = vrot.slane %v5009, 1
        %v5012 = vor.u32 %v5007, %v5011
        %v5014 = vshll.u32 %v4869, 16
        %v5016 = vrot.slane %v5014, 1
        %v5017 = vsel %vm693, %v5012, %v5016
        %v5019 = vshrl.u32 %v4806, 16
        %v5021 = vshll.u32 %v4806, 16
        %v5023 = vrot.slane %v5021, 1
        %v5024 = vor.u32 %v5019, %v5023
        %v5026 = vshll.u32 %v4870, 16
        %v5028 = vrot.slane %v5026, 1
        %v5029 = vsel %vm693, %v5024, %v5028
        %v5031 = vshrl.u32 %v4807, 16
        %v5033 = vshll.u32 %v4807, 16
        %v5035 = vrot.slane %v5033, 1
        %v5036 = vor.u32 %v5031, %v5035
        %v5038 = vshll.u32 %v4871, 16
        %v5040 = vrot.slane %v5038, 1
        %v5041 = vsel %vm693, %v5036, %v5040
        %v5043 = vshrl.u32 %v4808, 16
        %v5045 = vshll.u32 %v4808, 16
        %v5047 = vrot.slane %v5045, 1
        %v5048 = vor.u32 %v5043, %v5047
        %v5050 = vshll.u32 %v4872, 16
        %v5052 = vrot.slane %v5050, 1
        %v5053 = vsel %vm693, %v5048, %v5052
        %v5055 = vshrl.u32 %v4809, 16
        %v5057 = vshll.u32 %v4809, 16
        %v5059 = vrot.slane %v5057, 1
        %v5060 = vor.u32 %v5055, %v5059
        %v5062 = vshll.u32 %v4873, 16
        %v5064 = vrot.slane %v5062, 1
        %v5065 = vsel %vm693, %v5060, %v5064
        %v5098 = vunpack.c.l.b16 %v4714
        %v5099 = vunpack.c.l.b16 %v4715
        %v5100 = vunpack.c.l.b16 %v4716
        %v5101 = vunpack.c.l.b16 %v4717
        %v5102 = vunpack.c.l.b16 %v4718
        %v5103 = vunpack.c.l.b16 %v4719
        %v5104 = vunpack.c.l.b16 %v4720
        %v5105 = vunpack.c.l.b16 %v4721
        %v5106 = vunpack.c.l.b16 %v4722
        %v5107 = vunpack.c.l.b16 %v4723
        %v5108 = vunpack.c.l.b16 %v4724
        %v5109 = vunpack.c.l.b16 %v4725
        %v5110 = vunpack.c.l.b16 %v4726
        %v5111 = vunpack.c.l.b16 %v4727
        %v5112 = vunpack.c.l.b16 %v4728
        %v5113 = vunpack.c.l.b16 %v4729
        %v5114 = vpack.c.b16 %v4763, %v5098
        %v5115 = vpack.c.b16 %v4765, %v5099
        %v5116 = vpack.c.b16 %v4767, %v5100
        %v5117 = vpack.c.b16 %v4769, %v5101
        %v5118 = vpack.c.b16 %v4771, %v5102
        %v5119 = vpack.c.b16 %v4773, %v5103
        %v5120 = vpack.c.b16 %v4775, %v5104
        %v5121 = vpack.c.b16 %v4777, %v5105
        %v5122 = vpack.c.b16 %v4779, %v5106
        %v5123 = vpack.c.b16 %v4781, %v5107
        %v5124 = vpack.c.b16 %v4783, %v5108
        %v5125 = vpack.c.b16 %v4785, %v5109
        %v5126 = vpack.c.b16 %v4787, %v5110
        %v5127 = vpack.c.b16 %v4789, %v5111
        %v5128 = vpack.c.b16 %v4791, %v5112
        %v5129 = vpack.c.b16 %v4793, %v5113
        %v5130 = vrot.slane %v5114, 1
        %v5131 = vrot.slane %v4858, 1
        %v5132 = vsel %vm982, %v5130, %v5131
        %v5133 = vrot.slane %v5115, 1
        %v5134 = vrot.slane %v4859, 1
        %v5135 = vsel %vm982, %v5133, %v5134
        %v5136 = vrot.slane %v5116, 1
        %v5137 = vrot.slane %v4860, 1
        %v5138 = vsel %vm982, %v5136, %v5137
        %v5139 = vrot.slane %v5117, 1
        %v5140 = vrot.slane %v4861, 1
        %v5141 = vsel %vm982, %v5139, %v5140
        %v5142 = vrot.slane %v5118, 1
        %v5143 = vrot.slane %v4862, 1
        %v5144 = vsel %vm982, %v5142, %v5143
        %v5145 = vrot.slane %v5119, 1
        %v5146 = vrot.slane %v4863, 1
        %v5147 = vsel %vm982, %v5145, %v5146
        %v5148 = vrot.slane %v5120, 1
        %v5149 = vrot.slane %v4864, 1
        %v5150 = vsel %vm982, %v5148, %v5149
        %v5151 = vrot.slane %v5121, 1
        %v5152 = vrot.slane %v4865, 1
        %v5153 = vsel %vm982, %v5151, %v5152
        %v5154 = vrot.slane %v5122, 1
        %v5155 = vrot.slane %v4866, 1
        %v5156 = vsel %vm982, %v5154, %v5155
        %v5157 = vrot.slane %v5123, 1
        %v5158 = vrot.slane %v4867, 1
        %v5159 = vsel %vm982, %v5157, %v5158
        %v5160 = vrot.slane %v5124, 1
        %v5161 = vrot.slane %v4868, 1
        %v5162 = vsel %vm982, %v5160, %v5161
        %v5163 = vrot.slane %v5125, 1
        %v5164 = vrot.slane %v4869, 1
        %v5165 = vsel %vm982, %v5163, %v5164
        %v5166 = vrot.slane %v5126, 1
        %v5167 = vrot.slane %v4870, 1
        %v5168 = vsel %vm982, %v5166, %v5167
        %v5169 = vrot.slane %v5127, 1
        %v5170 = vrot.slane %v4871, 1
        %v5171 = vsel %vm982, %v5169, %v5170
        %v5172 = vrot.slane %v5128, 1
        %v5173 = vrot.slane %v4872, 1
        %v5174 = vsel %vm982, %v5172, %v5173
        %v5175 = vrot.slane %v5129, 1
        %v5176 = vrot.slane %v4873, 1
        %v5177 = vsel %vm982, %v5175, %v5176
        %v5194 = vld [vmem:[#allocation8] sm:$0xf]
        %v5195 = vld [vmem:[#allocation8 + $0x4] sm:$0xf]
        %v5196 = vld [vmem:[#allocation8 + $0x8] sm:$0xf]
        %v5197 = vld [vmem:[#allocation8 + $0xc] sm:$0xf]
        %v5198 = vld [vmem:[#allocation8 + $0x10] sm:$0xf]
        %v5199 = vld [vmem:[#allocation8 + $0x14] sm:$0xf]
        %v5200 = vld [vmem:[#allocation8 + $0x18] sm:$0xf]
        %v5201 = vld [vmem:[#allocation8 + $0x1c] sm:$0xf]
        %v5202 = vld [vmem:[#allocation8 + $0x20] sm:$0xf]
        %v5203 = vld [vmem:[#allocation8 + $0x24] sm:$0xf]
        %v5204 = vld [vmem:[#allocation8 + $0x28] sm:$0xf]
        %v5205 = vld [vmem:[#allocation8 + $0x2c] sm:$0xf]
        %v5206 = vld [vmem:[#allocation8 + $0x30] sm:$0xf]
        %v5207 = vld [vmem:[#allocation8 + $0x34] sm:$0xf]
        %v5208 = vld [vmem:[#allocation8 + $0x38] sm:$0xf]
        %v5209 = vld [vmem:[#allocation8 + $0x3c] sm:$0xf]
        %v5210 = vld [vmem:[#allocation8 + $0x40] sm:$0xf]
        %v5211 = vld [vmem:[#allocation8 + $0x44] sm:$0xf]
        %v5212 = vld [vmem:[#allocation8 + $0x48] sm:$0xf]
        %v5213 = vld [vmem:[#allocation8 + $0x4c] sm:$0xf]
        %v5214 = vld [vmem:[#allocation8 + $0x50] sm:$0xf]
        %v5215 = vld [vmem:[#allocation8 + $0x54] sm:$0xf]
        %v5216 = vld [vmem:[#allocation8 + $0x58] sm:$0xf]
        %v5217 = vld [vmem:[#allocation8 + $0x5c] sm:$0xf]
        %v5218 = vld [vmem:[#allocation8 + $0x60] sm:$0xf]
        %v5219 = vld [vmem:[#allocation8 + $0x64] sm:$0xf]
        %v5220 = vld [vmem:[#allocation8 + $0x68] sm:$0xf]
        %v5221 = vld [vmem:[#allocation8 + $0x6c] sm:$0xf]
        %v5222 = vld [vmem:[#allocation8 + $0x70] sm:$0xf]
        %v5223 = vld [vmem:[#allocation8 + $0x74] sm:$0xf]
        %v5224 = vld [vmem:[#allocation8 + $0x78] sm:$0xf]
        %v5225 = vld [vmem:[#allocation8 + $0x7c] sm:$0xf]
        %v5226 = vld [vmem:[#allocation8 + $0x80] sm:$0xf]
        %v5227 = vld [vmem:[#allocation8 + $0x84] sm:$0xf]
        %v5228 = vld [vmem:[#allocation8 + $0x88] sm:$0xf]
        %v5229 = vld [vmem:[#allocation8 + $0x8c] sm:$0xf]
        %v5230 = vld [vmem:[#allocation8 + $0x90] sm:$0xf]
        %v5231 = vld [vmem:[#allocation8 + $0x94] sm:$0xf]
        %v5232 = vld [vmem:[#allocation8 + $0x98] sm:$0xf]
        %v5233 = vld [vmem:[#allocation8 + $0x9c] sm:$0xf]
        %v5234 = vld [vmem:[#allocation8 + $0xa0] sm:$0xf]
        %v5235 = vld [vmem:[#allocation8 + $0xa4] sm:$0xf]
        %v5236 = vld [vmem:[#allocation8 + $0xa8] sm:$0xf]
        %v5237 = vld [vmem:[#allocation8 + $0xac] sm:$0xf]
        %v5238 = vld [vmem:[#allocation8 + $0xb0] sm:$0xf]
        %v5239 = vld [vmem:[#allocation8 + $0xb4] sm:$0xf]
        %v5240 = vld [vmem:[#allocation8 + $0xb8] sm:$0xf]
        %v5241 = vld [vmem:[#allocation8 + $0xbc] sm:$0xf]
        %s5242 = scalar_lea.vmem [#allocation2], 12
        %v5243 = vld [vmem:[%s5242] sm:$0xf]
        %v5244 = vld [vmem:[%s5242 + $0x4] sm:$0xf]
        %v5245 = vld [vmem:[%s5242 + $0xc] sm:$0xf]
        %v5246 = vld [vmem:[%s5242 + $0x10] sm:$0xf]
        %v5247 = vld [vmem:[%s5242 + $0x18] sm:$0xf]
        %v5248 = vld [vmem:[%s5242 + $0x1c] sm:$0xf]
        %v5249 = vld [vmem:[%s5242 + $0x24] sm:$0xf]
        %v5250 = vld [vmem:[%s5242 + $0x28] sm:$0xf]
        %v5251 = vld [vmem:[%s5242 + $0x30] sm:$0xf]
        %v5252 = vld [vmem:[%s5242 + $0x34] sm:$0xf]
        %v5253 = vld [vmem:[%s5242 + $0x3c] sm:$0xf]
        %v5254 = vld [vmem:[%s5242 + $0x40] sm:$0xf]
        %v5255 = vld [vmem:[%s5242 + $0x48] sm:$0xf]
        %v5256 = vld [vmem:[%s5242 + $0x4c] sm:$0xf]
        %v5257 = vld [vmem:[%s5242 + $0x54] sm:$0xf]
        %v5258 = vld [vmem:[%s5242 + $0x58] sm:$0xf]
        %v5259 = vld [vmem:[%s5242 + $0x60] sm:$0xf]
        %v5260 = vld [vmem:[%s5242 + $0x64] sm:$0xf]
        %v5261 = vld [vmem:[%s5242 + $0x6c] sm:$0xf]
        %v5262 = vld [vmem:[%s5242 + $0x70] sm:$0xf]
        %v5263 = vld [vmem:[%s5242 + $0x78] sm:$0xf]
        %v5264 = vld [vmem:[%s5242 + $0x7c] sm:$0xf]
        %v5265 = vld [vmem:[%s5242 + $0x84] sm:$0xf]
        %v5266 = vld [vmem:[%s5242 + $0x88] sm:$0xf]
        %v5267 = vld [vmem:[%s5242 + $0x90] sm:$0xf]
        %v5268 = vld [vmem:[%s5242 + $0x94] sm:$0xf]
        %v5269 = vld [vmem:[%s5242 + $0x9c] sm:$0xf]
        %v5270 = vld [vmem:[%s5242 + $0xa0] sm:$0xf]
        %v5271 = vld [vmem:[%s5242 + $0xa8] sm:$0xf]
        %v5272 = vld [vmem:[%s5242 + $0xac] sm:$0xf]
        %v5273 = vld [vmem:[%s5242 + $0xb4] sm:$0xf]
        %v5274 = vld [vmem:[%s5242 + $0xb8] sm:$0xf]
        %v5275 = vld [vmem:[%s5242 + $0x8] sm:$0x1]
        %v5276 = vld [vmem:[%s5242 + $0x14] sm:$0x1]
        %v5277 = vld [vmem:[%s5242 + $0x20] sm:$0x1]
        %v5278 = vld [vmem:[%s5242 + $0x2c] sm:$0x1]
        %v5279 = vld [vmem:[%s5242 + $0x38] sm:$0x1]
        %v5280 = vld [vmem:[%s5242 + $0x44] sm:$0x1]
        %v5281 = vld [vmem:[%s5242 + $0x50] sm:$0x1]
        %v5282 = vld [vmem:[%s5242 + $0x5c] sm:$0x1]
        %v5283 = vld [vmem:[%s5242 + $0x68] sm:$0x1]
        %v5284 = vld [vmem:[%s5242 + $0x74] sm:$0x1]
        %v5285 = vld [vmem:[%s5242 + $0x80] sm:$0x1]
        %v5286 = vld [vmem:[%s5242 + $0x8c] sm:$0x1]
        %v5287 = vld [vmem:[%s5242 + $0x98] sm:$0x1]
        %v5288 = vld [vmem:[%s5242 + $0xa4] sm:$0x1]
        %v5289 = vld [vmem:[%s5242 + $0xb0] sm:$0x1]
        %v5290 = vld [vmem:[%s5242 + $0xbc] sm:$0x1]
        %v5291 = vld [vmem:[%s5242] sm:$0xe]
        %v5292 = vld [vmem:[%s5242 + $0xc] sm:$0xe]
        %v5293 = vld [vmem:[%s5242 + $0x18] sm:$0xe]
        %v5294 = vld [vmem:[%s5242 + $0x24] sm:$0xe]
        %v5295 = vld [vmem:[%s5242 + $0x30] sm:$0xe]
        %v5296 = vld [vmem:[%s5242 + $0x3c] sm:$0xe]
        %v5297 = vld [vmem:[%s5242 + $0x48] sm:$0xe]
        %v5298 = vld [vmem:[%s5242 + $0x54] sm:$0xe]
        %v5299 = vld [vmem:[%s5242 + $0x60] sm:$0xe]
        %v5300 = vld [vmem:[%s5242 + $0x6c] sm:$0xe]
        %v5301 = vld [vmem:[%s5242 + $0x78] sm:$0xe]
        %v5302 = vld [vmem:[%s5242 + $0x84] sm:$0xe]
        %v5303 = vld [vmem:[%s5242 + $0x90] sm:$0xe]
        %v5304 = vld [vmem:[%s5242 + $0x9c] sm:$0xe]
        %v5305 = vld [vmem:[%s5242 + $0xa8] sm:$0xe]
        %v5306 = vld [vmem:[%s5242 + $0xb4] sm:$0xe]
        %v5339 = vunpack.c.l.b16 %v5243
        %v5340 = vunpack.c.l.b16 %v5244
        %v5341 = vunpack.c.l.b16 %v5245
        %v5342 = vunpack.c.l.b16 %v5246
        %v5343 = vunpack.c.l.b16 %v5247
        %v5344 = vunpack.c.l.b16 %v5248
        %v5345 = vunpack.c.l.b16 %v5249
        %v5346 = vunpack.c.l.b16 %v5250
        %v5347 = vunpack.c.l.b16 %v5251
        %v5348 = vunpack.c.l.b16 %v5252
        %v5349 = vunpack.c.l.b16 %v5253
        %v5350 = vunpack.c.l.b16 %v5254
        %v5351 = vunpack.c.l.b16 %v5255
        %v5352 = vunpack.c.l.b16 %v5256
        %v5353 = vunpack.c.l.b16 %v5257
        %v5354 = vunpack.c.l.b16 %v5258
        %v5355 = vunpack.c.l.b16 %v5259
        %v5356 = vunpack.c.l.b16 %v5260
        %v5357 = vunpack.c.l.b16 %v5261
        %v5358 = vunpack.c.l.b16 %v5262
        %v5359 = vunpack.c.l.b16 %v5263
        %v5360 = vunpack.c.l.b16 %v5264
        %v5361 = vunpack.c.l.b16 %v5265
        %v5362 = vunpack.c.l.b16 %v5266
        %v5363 = vunpack.c.l.b16 %v5267
        %v5364 = vunpack.c.l.b16 %v5268
        %v5365 = vunpack.c.l.b16 %v5269
        %v5366 = vunpack.c.l.b16 %v5270
        %v5367 = vunpack.c.l.b16 %v5271
        %v5368 = vunpack.c.l.b16 %v5272
        %v5369 = vunpack.c.l.b16 %v5273
        %v5370 = vunpack.c.l.b16 %v5274
        %v5371 = vpack.c.b16 %v5340, %v5339
        %v5372 = vpack.c.b16 %v5342, %v5341
        %v5373 = vpack.c.b16 %v5344, %v5343
        %v5374 = vpack.c.b16 %v5346, %v5345
        %v5375 = vpack.c.b16 %v5348, %v5347
        %v5376 = vpack.c.b16 %v5350, %v5349
        %v5377 = vpack.c.b16 %v5352, %v5351
        %v5378 = vpack.c.b16 %v5354, %v5353
        %v5379 = vpack.c.b16 %v5356, %v5355
        %v5380 = vpack.c.b16 %v5358, %v5357
        %v5381 = vpack.c.b16 %v5360, %v5359
        %v5382 = vpack.c.b16 %v5362, %v5361
        %v5383 = vpack.c.b16 %v5364, %v5363
        %v5384 = vpack.c.b16 %v5366, %v5365
        %v5385 = vpack.c.b16 %v5368, %v5367
        %v5386 = vpack.c.b16 %v5370, %v5369
        %v5419 = vunpack.c.l.b16 %v5275
        %v5420 = vunpack.c.l.b16 %v5276
        %v5421 = vunpack.c.l.b16 %v5277
        %v5422 = vunpack.c.l.b16 %v5278
        %v5423 = vunpack.c.l.b16 %v5279
        %v5424 = vunpack.c.l.b16 %v5280
        %v5425 = vunpack.c.l.b16 %v5281
        %v5426 = vunpack.c.l.b16 %v5282
        %v5427 = vunpack.c.l.b16 %v5283
        %v5428 = vunpack.c.l.b16 %v5284
        %v5429 = vunpack.c.l.b16 %v5285
        %v5430 = vunpack.c.l.b16 %v5286
        %v5431 = vunpack.c.l.b16 %v5287
        %v5432 = vunpack.c.l.b16 %v5288
        %v5433 = vunpack.c.l.b16 %v5289
        %v5434 = vunpack.c.l.b16 %v5290
        %v5435 = vpack.c.b16 %v5419, %v5419
        %v5436 = vpack.c.b16 %v5420, %v5420
        %v5437 = vpack.c.b16 %v5421, %v5421
        %v5438 = vpack.c.b16 %v5422, %v5422
        %v5439 = vpack.c.b16 %v5423, %v5423
        %v5440 = vpack.c.b16 %v5424, %v5424
        %v5441 = vpack.c.b16 %v5425, %v5425
        %v5442 = vpack.c.b16 %v5426, %v5426
        %v5443 = vpack.c.b16 %v5427, %v5427
        %v5444 = vpack.c.b16 %v5428, %v5428
        %v5445 = vpack.c.b16 %v5429, %v5429
        %v5446 = vpack.c.b16 %v5430, %v5430
        %v5447 = vpack.c.b16 %v5431, %v5431
        %v5448 = vpack.c.b16 %v5432, %v5432
        %v5449 = vpack.c.b16 %v5433, %v5433
        %v5450 = vpack.c.b16 %v5434, %v5434
        %v5452 = vshrl.u32 %v5371, 16
        %v5454 = vshll.u32 %v5371, 16
        %v5456 = vrot.slane %v5454, 1
        %v5457 = vor.u32 %v5452, %v5456
        %v5459 = vshll.u32 %v5435, 16
        %v5461 = vrot.slane %v5459, 1
        %v5462 = vsel %vm693, %v5457, %v5461
        %v5464 = vshrl.u32 %v5372, 16
        %v5466 = vshll.u32 %v5372, 16
        %v5468 = vrot.slane %v5466, 1
        %v5469 = vor.u32 %v5464, %v5468
        %v5471 = vshll.u32 %v5436, 16
        %v5473 = vrot.slane %v5471, 1
        %v5474 = vsel %vm693, %v5469, %v5473
        %v5476 = vshrl.u32 %v5373, 16
        %v5478 = vshll.u32 %v5373, 16
        %v5480 = vrot.slane %v5478, 1
        %v5481 = vor.u32 %v5476, %v5480
        %v5483 = vshll.u32 %v5437, 16
        %v5485 = vrot.slane %v5483, 1
        %v5486 = vsel %vm693, %v5481, %v5485
        %v5488 = vshrl.u32 %v5374, 16
        %v5490 = vshll.u32 %v5374, 16
        %v5492 = vrot.slane %v5490, 1
        %v5493 = vor.u32 %v5488, %v5492
        %v5495 = vshll.u32 %v5438, 16
        %v5497 = vrot.slane %v5495, 1
        %v5498 = vsel %vm693, %v5493, %v5497
        %v5500 = vshrl.u32 %v5375, 16
        %v5502 = vshll.u32 %v5375, 16
        %v5504 = vrot.slane %v5502, 1
        %v5505 = vor.u32 %v5500, %v5504
        %v5507 = vshll.u32 %v5439, 16
        %v5509 = vrot.slane %v5507, 1
        %v5510 = vsel %vm693, %v5505, %v5509
        %v5512 = vshrl.u32 %v5376, 16
        %v5514 = vshll.u32 %v5376, 16
        %v5516 = vrot.slane %v5514, 1
        %v5517 = vor.u32 %v5512, %v5516
        %v5519 = vshll.u32 %v5440, 16
        %v5521 = vrot.slane %v5519, 1
        %v5522 = vsel %vm693, %v5517, %v5521
        %v5524 = vshrl.u32 %v5377, 16
        %v5526 = vshll.u32 %v5377, 16
        %v5528 = vrot.slane %v5526, 1
        %v5529 = vor.u32 %v5524, %v5528
        %v5531 = vshll.u32 %v5441, 16
        %v5533 = vrot.slane %v5531, 1
        %v5534 = vsel %vm693, %v5529, %v5533
        %v5536 = vshrl.u32 %v5378, 16
        %v5538 = vshll.u32 %v5378, 16
        %v5540 = vrot.slane %v5538, 1
        %v5541 = vor.u32 %v5536, %v5540
        %v5543 = vshll.u32 %v5442, 16
        %v5545 = vrot.slane %v5543, 1
        %v5546 = vsel %vm693, %v5541, %v5545
        %v5548 = vshrl.u32 %v5379, 16
        %v5550 = vshll.u32 %v5379, 16
        %v5552 = vrot.slane %v5550, 1
        %v5553 = vor.u32 %v5548, %v5552
        %v5555 = vshll.u32 %v5443, 16
        %v5557 = vrot.slane %v5555, 1
        %v5558 = vsel %vm693, %v5553, %v5557
        %v5560 = vshrl.u32 %v5380, 16
        %v5562 = vshll.u32 %v5380, 16
        %v5564 = vrot.slane %v5562, 1
        %v5565 = vor.u32 %v5560, %v5564
        %v5567 = vshll.u32 %v5444, 16
        %v5569 = vrot.slane %v5567, 1
        %v5570 = vsel %vm693, %v5565, %v5569
        %v5572 = vshrl.u32 %v5381, 16
        %v5574 = vshll.u32 %v5381, 16
        %v5576 = vrot.slane %v5574, 1
        %v5577 = vor.u32 %v5572, %v5576
        %v5579 = vshll.u32 %v5445, 16
        %v5581 = vrot.slane %v5579, 1
        %v5582 = vsel %vm693, %v5577, %v5581
        %v5584 = vshrl.u32 %v5382, 16
        %v5586 = vshll.u32 %v5382, 16
        %v5588 = vrot.slane %v5586, 1
        %v5589 = vor.u32 %v5584, %v5588
        %v5591 = vshll.u32 %v5446, 16
        %v5593 = vrot.slane %v5591, 1
        %v5594 = vsel %vm693, %v5589, %v5593
        %v5596 = vshrl.u32 %v5383, 16
        %v5598 = vshll.u32 %v5383, 16
        %v5600 = vrot.slane %v5598, 1
        %v5601 = vor.u32 %v5596, %v5600
        %v5603 = vshll.u32 %v5447, 16
        %v5605 = vrot.slane %v5603, 1
        %v5606 = vsel %vm693, %v5601, %v5605
        %v5608 = vshrl.u32 %v5384, 16
        %v5610 = vshll.u32 %v5384, 16
        %v5612 = vrot.slane %v5610, 1
        %v5613 = vor.u32 %v5608, %v5612
        %v5615 = vshll.u32 %v5448, 16
        %v5617 = vrot.slane %v5615, 1
        %v5618 = vsel %vm693, %v5613, %v5617
        %v5620 = vshrl.u32 %v5385, 16
        %v5622 = vshll.u32 %v5385, 16
        %v5624 = vrot.slane %v5622, 1
        %v5625 = vor.u32 %v5620, %v5624
        %v5627 = vshll.u32 %v5449, 16
        %v5629 = vrot.slane %v5627, 1
        %v5630 = vsel %vm693, %v5625, %v5629
        %v5632 = vshrl.u32 %v5386, 16
        %v5634 = vshll.u32 %v5386, 16
        %v5636 = vrot.slane %v5634, 1
        %v5637 = vor.u32 %v5632, %v5636
        %v5639 = vshll.u32 %v5450, 16
        %v5641 = vrot.slane %v5639, 1
        %v5642 = vsel %vm693, %v5637, %v5641
        %v5675 = vunpack.c.l.b16 %v5291
        %v5676 = vunpack.c.l.b16 %v5292
        %v5677 = vunpack.c.l.b16 %v5293
        %v5678 = vunpack.c.l.b16 %v5294
        %v5679 = vunpack.c.l.b16 %v5295
        %v5680 = vunpack.c.l.b16 %v5296
        %v5681 = vunpack.c.l.b16 %v5297
        %v5682 = vunpack.c.l.b16 %v5298
        %v5683 = vunpack.c.l.b16 %v5299
        %v5684 = vunpack.c.l.b16 %v5300
        %v5685 = vunpack.c.l.b16 %v5301
        %v5686 = vunpack.c.l.b16 %v5302
        %v5687 = vunpack.c.l.b16 %v5303
        %v5688 = vunpack.c.l.b16 %v5304
        %v5689 = vunpack.c.l.b16 %v5305
        %v5690 = vunpack.c.l.b16 %v5306
        %v5691 = vpack.c.b16 %v5340, %v5675
        %v5692 = vpack.c.b16 %v5342, %v5676
        %v5693 = vpack.c.b16 %v5344, %v5677
        %v5694 = vpack.c.b16 %v5346, %v5678
        %v5695 = vpack.c.b16 %v5348, %v5679
        %v5696 = vpack.c.b16 %v5350, %v5680
        %v5697 = vpack.c.b16 %v5352, %v5681
        %v5698 = vpack.c.b16 %v5354, %v5682
        %v5699 = vpack.c.b16 %v5356, %v5683
        %v5700 = vpack.c.b16 %v5358, %v5684
        %v5701 = vpack.c.b16 %v5360, %v5685
        %v5702 = vpack.c.b16 %v5362, %v5686
        %v5703 = vpack.c.b16 %v5364, %v5687
        %v5704 = vpack.c.b16 %v5366, %v5688
        %v5705 = vpack.c.b16 %v5368, %v5689
        %v5706 = vpack.c.b16 %v5370, %v5690
        %v5707 = vrot.slane %v5691, 1
        %v5708 = vrot.slane %v5435, 1
        %v5709 = vsel %vm982, %v5707, %v5708
        %v5710 = vrot.slane %v5692, 1
        %v5711 = vrot.slane %v5436, 1
        %v5712 = vsel %vm982, %v5710, %v5711
        %v5713 = vrot.slane %v5693, 1
        %v5714 = vrot.slane %v5437, 1
        %v5715 = vsel %vm982, %v5713, %v5714
        %v5716 = vrot.slane %v5694, 1
        %v5717 = vrot.slane %v5438, 1
        %v5718 = vsel %vm982, %v5716, %v5717
        %v5719 = vrot.slane %v5695, 1
        %v5720 = vrot.slane %v5439, 1
        %v5721 = vsel %vm982, %v5719, %v5720
        %v5722 = vrot.slane %v5696, 1
        %v5723 = vrot.slane %v5440, 1
        %v5724 = vsel %vm982, %v5722, %v5723
        %v5725 = vrot.slane %v5697, 1
        %v5726 = vrot.slane %v5441, 1
        %v5727 = vsel %vm982, %v5725, %v5726
        %v5728 = vrot.slane %v5698, 1
        %v5729 = vrot.slane %v5442, 1
        %v5730 = vsel %vm982, %v5728, %v5729
        %v5731 = vrot.slane %v5699, 1
        %v5732 = vrot.slane %v5443, 1
        %v5733 = vsel %vm982, %v5731, %v5732
        %v5734 = vrot.slane %v5700, 1
        %v5735 = vrot.slane %v5444, 1
        %v5736 = vsel %vm982, %v5734, %v5735
        %v5737 = vrot.slane %v5701, 1
        %v5738 = vrot.slane %v5445, 1
        %v5739 = vsel %vm982, %v5737, %v5738
        %v5740 = vrot.slane %v5702, 1
        %v5741 = vrot.slane %v5446, 1
        %v5742 = vsel %vm982, %v5740, %v5741
        %v5743 = vrot.slane %v5703, 1
        %v5744 = vrot.slane %v5447, 1
        %v5745 = vsel %vm982, %v5743, %v5744
        %v5746 = vrot.slane %v5704, 1
        %v5747 = vrot.slane %v5448, 1
        %v5748 = vsel %vm982, %v5746, %v5747
        %v5749 = vrot.slane %v5705, 1
        %v5750 = vrot.slane %v5449, 1
        %v5751 = vsel %vm982, %v5749, %v5750
        %v5752 = vrot.slane %v5706, 1
        %v5753 = vrot.slane %v5450, 1
        %v5754 = vsel %vm982, %v5752, %v5753
        %s5771 = scalar_lea.vmem [#allocation8], 192
        %v5772 = vld [vmem:[%s5771] sm:$0xf]
        %v5773 = vld [vmem:[%s5771 + $0x4] sm:$0xf]
        %v5774 = vld [vmem:[%s5771 + $0x8] sm:$0xf]
        %v5775 = vld [vmem:[%s5771 + $0xc] sm:$0xf]
        %v5776 = vld [vmem:[%s5771 + $0x10] sm:$0xf]
        %v5777 = vld [vmem:[%s5771 + $0x14] sm:$0xf]
        %v5778 = vld [vmem:[%s5771 + $0x18] sm:$0xf]
        %v5779 = vld [vmem:[%s5771 + $0x1c] sm:$0xf]
        %v5780 = vld [vmem:[%s5771 + $0x20] sm:$0xf]
        %v5781 = vld [vmem:[%s5771 + $0x24] sm:$0xf]
        %v5782 = vld [vmem:[%s5771 + $0x28] sm:$0xf]
        %v5783 = vld [vmem:[%s5771 + $0x2c] sm:$0xf]
        %v5784 = vld [vmem:[%s5771 + $0x30] sm:$0xf]
        %v5785 = vld [vmem:[%s5771 + $0x34] sm:$0xf]
        %v5786 = vld [vmem:[%s5771 + $0x38] sm:$0xf]
        %v5787 = vld [vmem:[%s5771 + $0x3c] sm:$0xf]
        %v5788 = vld [vmem:[%s5771 + $0x40] sm:$0xf]
        %v5789 = vld [vmem:[%s5771 + $0x44] sm:$0xf]
        %v5790 = vld [vmem:[%s5771 + $0x48] sm:$0xf]
        %v5791 = vld [vmem:[%s5771 + $0x4c] sm:$0xf]
        %v5792 = vld [vmem:[%s5771 + $0x50] sm:$0xf]
        %v5793 = vld [vmem:[%s5771 + $0x54] sm:$0xf]
        %v5794 = vld [vmem:[%s5771 + $0x58] sm:$0xf]
        %v5795 = vld [vmem:[%s5771 + $0x5c] sm:$0xf]
        %v5796 = vld [vmem:[%s5771 + $0x60] sm:$0xf]
        %v5797 = vld [vmem:[%s5771 + $0x64] sm:$0xf]
        %v5798 = vld [vmem:[%s5771 + $0x68] sm:$0xf]
        %v5799 = vld [vmem:[%s5771 + $0x6c] sm:$0xf]
        %v5800 = vld [vmem:[%s5771 + $0x70] sm:$0xf]
        %v5801 = vld [vmem:[%s5771 + $0x74] sm:$0xf]
        %v5802 = vld [vmem:[%s5771 + $0x78] sm:$0xf]
        %v5803 = vld [vmem:[%s5771 + $0x7c] sm:$0xf]
        %v5804 = vld [vmem:[%s5771 + $0x80] sm:$0xf]
        %v5805 = vld [vmem:[%s5771 + $0x84] sm:$0xf]
        %v5806 = vld [vmem:[%s5771 + $0x88] sm:$0xf]
        %v5807 = vld [vmem:[%s5771 + $0x8c] sm:$0xf]
        %v5808 = vld [vmem:[%s5771 + $0x90] sm:$0xf]
        %v5809 = vld [vmem:[%s5771 + $0x94] sm:$0xf]
        %v5810 = vld [vmem:[%s5771 + $0x98] sm:$0xf]
        %v5811 = vld [vmem:[%s5771 + $0x9c] sm:$0xf]
        %v5812 = vld [vmem:[%s5771 + $0xa0] sm:$0xf]
        %v5813 = vld [vmem:[%s5771 + $0xa4] sm:$0xf]
        %v5814 = vld [vmem:[%s5771 + $0xa8] sm:$0xf]
        %v5815 = vld [vmem:[%s5771 + $0xac] sm:$0xf]
        %v5816 = vld [vmem:[%s5771 + $0xb0] sm:$0xf]
        %v5817 = vld [vmem:[%s5771 + $0xb4] sm:$0xf]
        %v5818 = vld [vmem:[%s5771 + $0xb8] sm:$0xf]
        %v5819 = vld [vmem:[%s5771 + $0xbc] sm:$0xf]
        %v5868 = vunpack.c.l.b16 %v5772
        %v5869 = vunpack.c.l.b16 %v5773
        %v5870 = vunpack.c.l.b16 %v5774
        %v5871 = vunpack.c.l.b16 %v5775
        %v5872 = vunpack.c.l.b16 %v5776
        %v5873 = vunpack.c.l.b16 %v5777
        %v5874 = vunpack.c.l.b16 %v5778
        %v5875 = vunpack.c.l.b16 %v5779
        %v5876 = vunpack.c.l.b16 %v5780
        %v5877 = vunpack.c.l.b16 %v5781
        %v5878 = vunpack.c.l.b16 %v5782
        %v5879 = vunpack.c.l.b16 %v5783
        %v5880 = vunpack.c.l.b16 %v5784
        %v5881 = vunpack.c.l.b16 %v5785
        %v5882 = vunpack.c.l.b16 %v5786
        %v5883 = vunpack.c.l.b16 %v5787
        %v5884 = vunpack.c.l.b16 %v5788
        %v5885 = vunpack.c.l.b16 %v5789
        %v5886 = vunpack.c.l.b16 %v5790
        %v5887 = vunpack.c.l.b16 %v5791
        %v5888 = vunpack.c.l.b16 %v5792
        %v5889 = vunpack.c.l.b16 %v5793
        %v5890 = vunpack.c.l.b16 %v5794
        %v5891 = vunpack.c.l.b16 %v5795
        %v5892 = vunpack.c.l.b16 %v5796
        %v5893 = vunpack.c.l.b16 %v5797
        %v5894 = vunpack.c.l.b16 %v5798
        %v5895 = vunpack.c.l.b16 %v5799
        %v5896 = vunpack.c.l.b16 %v5800
        %v5897 = vunpack.c.l.b16 %v5801
        %v5898 = vunpack.c.l.b16 %v5802
        %v5899 = vunpack.c.l.b16 %v5803
        %v5900 = vunpack.c.l.b16 %v5804
        %v5901 = vunpack.c.l.b16 %v5805
        %v5902 = vunpack.c.l.b16 %v5806
        %v5903 = vunpack.c.l.b16 %v5807
        %v5904 = vunpack.c.l.b16 %v5808
        %v5905 = vunpack.c.l.b16 %v5809
        %v5906 = vunpack.c.l.b16 %v5810
        %v5907 = vunpack.c.l.b16 %v5811
        %v5908 = vunpack.c.l.b16 %v5812
        %v5909 = vunpack.c.l.b16 %v5813
        %v5910 = vunpack.c.l.b16 %v5814
        %v5911 = vunpack.c.l.b16 %v5815
        %v5912 = vunpack.c.l.b16 %v5816
        %v5913 = vunpack.c.l.b16 %v5817
        %v5914 = vunpack.c.l.b16 %v5818
        %v5915 = vunpack.c.l.b16 %v5819
        %v5916 = vpack.c.b16 %v5869, %v5868
        %v5917 = vpack.c.b16 %v5871, %v5870
        %v5918 = vpack.c.b16 %v5873, %v5872
        %v5919 = vpack.c.b16 %v5875, %v5874
        %v5920 = vpack.c.b16 %v5877, %v5876
        %v5921 = vpack.c.b16 %v5879, %v5878
        %v5922 = vpack.c.b16 %v5881, %v5880
        %v5923 = vpack.c.b16 %v5883, %v5882
        %v5924 = vpack.c.b16 %v5885, %v5884
        %v5925 = vpack.c.b16 %v5887, %v5886
        %v5926 = vpack.c.b16 %v5889, %v5888
        %v5927 = vpack.c.b16 %v5891, %v5890
        %v5928 = vpack.c.b16 %v5893, %v5892
        %v5929 = vpack.c.b16 %v5895, %v5894
        %v5930 = vpack.c.b16 %v5897, %v5896
        %v5931 = vpack.c.b16 %v5899, %v5898
        %v5932 = vpack.c.b16 %v5901, %v5900
        %v5933 = vpack.c.b16 %v5903, %v5902
        %v5934 = vpack.c.b16 %v5905, %v5904
        %v5935 = vpack.c.b16 %v5907, %v5906
        %v5936 = vpack.c.b16 %v5909, %v5908
        %v5937 = vpack.c.b16 %v5911, %v5910
        %v5938 = vpack.c.b16 %v5913, %v5912
        %v5939 = vpack.c.b16 %v5915, %v5914
        %5964 = vmatprep.subr.bf16.mxu0 0
        %5965 = vmatpush1.bf16.msra.mxu0 %v5916
        %5966 = vmatprep.subr.bf16.mxu0 0
        %5967 = vmatpush1.bf16.msra.mxu0 %v5917
        %5968 = vmatprep.subr.bf16.mxu0 0
        %5969 = vmatpush1.bf16.msra.mxu0 %v5918
        %5970 = vmatprep.subr.bf16.mxu0 0
        %5971 = vmatpush1.bf16.msra.mxu0 %v5919
        %5972 = vmatprep.subr.bf16.mxu0 0
        %5973 = vmatpush1.bf16.msra.mxu0 %v5920
        %5974 = vmatprep.subr.bf16.mxu0 0
        %5975 = vmatpush1.bf16.msra.mxu0 %v5921
        %5976 = vmatprep.subr.bf16.mxu0 0
        %5977 = vmatpush1.bf16.msra.mxu0 %v5922
        %5978 = vmatprep.subr.bf16.mxu0 0
        %5979 = vmatpush1.bf16.msra.mxu0 %v5923
        %5980 = vmatprep.subr.bf16.mxu0 0
        %5981 = vmatpush1.bf16.msra.mxu0 %v5924
        %5982 = vmatprep.subr.bf16.mxu0 0
        %5983 = vmatpush1.bf16.msra.mxu0 %v5925
        %5984 = vmatprep.subr.bf16.mxu0 0
        %5985 = vmatpush1.bf16.msra.mxu0 %v5926
        %5986 = vmatprep.subr.bf16.mxu0 0
        %5987 = vmatpush1.bf16.msra.mxu0 %v5927
        %5988 = vmatprep.subr.bf16.mxu0 0
        %5989 = vmatpush1.bf16.msra.mxu0 %v5928
        %5990 = vmatprep.subr.bf16.mxu0 0
        %5991 = vmatpush1.bf16.msra.mxu0 %v5929
        %5992 = vmatprep.subr.bf16.mxu0 0
        %5993 = vmatpush1.bf16.msra.mxu0 %v5930
        %5994 = vmatprep.subr.bf16.mxu0 0
        %5995 = vmatpush1.bf16.msra.mxu0 %v5931
        %5996 = vmatprep.mubr.bf16.mxu0 %v5462
        %5997 = vmatmul.mubr.bf16.gmra.mrb[0].mxu0 %v5371
        %v5998 = vpop.f32.mrb[0].mxu0
        %v5999 = vadd.f32 0.0, %v5998
        %v6000 = vpop.f32.mrb[0].mxu0
        %v6001 = vpop.f32.mrb[0].mxu0
        %v6002 = vadd.f32 0.0, %v6001
        %v6003 = vpop.f32.mrb[0].mxu0
        %6004 = vmatprep.mubr.bf16.mxu0 %v5474
        %6005 = vmatmul.mubr.bf16.gmra.mrb[0].mxu0 %v5372
        %v6006 = vpop.f32.mrb[0].mxu0
        %v6007 = vadd.f32 0.0, %v6006
        %v6008 = vpop.f32.mrb[0].mxu0
        %v6009 = vpop.f32.mrb[0].mxu0
        %v6010 = vadd.f32 0.0, %v6009
        %v6011 = vpop.f32.mrb[0].mxu0
        %6012 = vmatprep.mubr.bf16.mxu0 %v5486
        %6013 = vmatmul.mubr.bf16.gmra.mrb[0].mxu0 %v5373
        %v6014 = vpop.f32.mrb[0].mxu0
        %v6015 = vadd.f32 0.0, %v6014
        %v6016 = vpop.f32.mrb[0].mxu0
        %v6017 = vpop.f32.mrb[0].mxu0
        %v6018 = vadd.f32 0.0, %v6017
        %v6019 = vpop.f32.mrb[0].mxu0
        %6020 = vmatprep.mubr.bf16.mxu0 %v5498
        %6021 = vmatmul.mubr.bf16.gmra.mrb[0].mxu0 %v5374
        %v6022 = vpop.f32.mrb[0].mxu0
        %v6023 = vadd.f32 0.0, %v6022
        %v6024 = vpop.f32.mrb[0].mxu0
        %v6025 = vpop.f32.mrb[0].mxu0
        %v6026 = vadd.f32 0.0, %v6025
        %v6027 = vpop.f32.mrb[0].mxu0
        %6028 = vmatprep.mubr.bf16.mxu0 %v5510
        %6029 = vmatmul.mubr.bf16.gmra.mrb[0].mxu0 %v5375
        %v6030 = vpop.f32.mrb[0].mxu0
        %v6031 = vadd.f32 0.0, %v6030
        %v6032 = vpop.f32.mrb[0].mxu0
        %v6033 = vpop.f32.mrb[0].mxu0
        %v6034 = vadd.f32 0.0, %v6033
        %v6035 = vpop.f32.mrb[0].mxu0
        %6036 = vmatprep.mubr.bf16.mxu0 %v5522
        %6037 = vmatmul.mubr.bf16.gmra.mrb[0].mxu0 %v5376
        %v6038 = vpop.f32.mrb[0].mxu0
        %v6039 = vadd.f32 0.0, %v6038
        %v6040 = vpop.f32.mrb[0].mxu0
        %v6041 = vpop.f32.mrb[0].mxu0
        %v6042 = vadd.f32 0.0, %v6041
        %v6043 = vpop.f32.mrb[0].mxu0
        %6044 = vmatprep.mubr.bf16.mxu0 %v5534
        %6045 = vmatmul.mubr.bf16.gmra.mrb[0].mxu0 %v5377
        %v6046 = vpop.f32.mrb[0].mxu0
        %v6047 = vadd.f32 0.0, %v6046
        %v6048 = vpop.f32.mrb[0].mxu0
        %v6049 = vpop.f32.mrb[0].mxu0
        %v6050 = vadd.f32 0.0, %v6049
        %v6051 = vpop.f32.mrb[0].mxu0
        %6052 = vmatprep.mubr.bf16.mxu0 %v5546
        %6053 = vmatmul.mubr.bf16.gmra.mrb[0].mxu0 %v5378
        %v6054 = vpop.f32.mrb[0].mxu0
        %v6055 = vadd.f32 0.0, %v6054
        %v6056 = vpop.f32.mrb[0].mxu0
        %v6057 = vpop.f32.mrb[0].mxu0
        %v6058 = vadd.f32 0.0, %v6057
        %v6059 = vpop.f32.mrb[0].mxu0
        %6060 = vmatprep.mubr.bf16.mxu0 %v5558
        %6061 = vmatmul.mubr.bf16.gmra.mrb[0].mxu0 %v5379
        %v6062 = vpop.f32.mrb[0].mxu0
        %v6063 = vadd.f32 0.0, %v6062
        %v6064 = vpop.f32.mrb[0].mxu0
        %v6065 = vpop.f32.mrb[0].mxu0
        %v6066 = vadd.f32 0.0, %v6065
        %v6067 = vpop.f32.mrb[0].mxu0
        %6068 = vmatprep.mubr.bf16.mxu0 %v5570
        %6069 = vmatmul.mubr.bf16.gmra.mrb[0].mxu0 %v5380
        %v6070 = vpop.f32.mrb[0].mxu0
        %v6071 = vadd.f32 0.0, %v6070
        %v6072 = vpop.f32.mrb[0].mxu0
        %v6073 = vpop.f32.mrb[0].mxu0
        %v6074 = vadd.f32 0.0, %v6073
        %v6075 = vpop.f32.mrb[0].mxu0
        %6076 = vmatprep.mubr.bf16.mxu0 %v5582
        %6077 = vmatmul.mubr.bf16.gmra.mrb[0].mxu0 %v5381
        %v6078 = vpop.f32.mrb[0].mxu0
        %v6079 = vadd.f32 0.0, %v6078
        %v6080 = vpop.f32.mrb[0].mxu0
        %v6081 = vpop.f32.mrb[0].mxu0
        %v6082 = vadd.f32 0.0, %v6081
        %v6083 = vpop.f32.mrb[0].mxu0
        %6084 = vmatprep.mubr.bf16.mxu0 %v5594
        %6085 = vmatmul.mubr.bf16.gmra.mrb[0].mxu0 %v5382
        %v6086 = vpop.f32.mrb[0].mxu0
        %v6087 = vadd.f32 0.0, %v6086
        %v6088 = vpop.f32.mrb[0].mxu0
        %v6089 = vpop.f32.mrb[0].mxu0
        %v6090 = vadd.f32 0.0, %v6089
        %v6091 = vpop.f32.mrb[0].mxu0
        %6092 = vmatprep.mubr.bf16.mxu0 %v5606
        %6093 = vmatmul.mubr.bf16.gmra.mrb[0].mxu0 %v5383
        %v6094 = vpop.f32.mrb[0].mxu0
        %v6095 = vadd.f32 0.0, %v6094
        %v6096 = vpop.f32.mrb[0].mxu0
        %v6097 = vpop.f32.mrb[0].mxu0
        %v6098 = vadd.f32 0.0, %v6097
        %v6099 = vpop.f32.mrb[0].mxu0
        %6100 = vmatprep.mubr.bf16.mxu0 %v5618
        %6101 = vmatmul.mubr.bf16.gmra.mrb[0].mxu0 %v5384
        %v6102 = vpop.f32.mrb[0].mxu0
        %v6103 = vadd.f32 0.0, %v6102
        %v6104 = vpop.f32.mrb[0].mxu0
        %v6105 = vpop.f32.mrb[0].mxu0
        %v6106 = vadd.f32 0.0, %v6105
        %v6107 = vpop.f32.mrb[0].mxu0
        %6108 = vmatprep.mubr.bf16.mxu0 %v5630
        %6109 = vmatmul.mubr.bf16.gmra.mrb[0].mxu0 %v5385
        %v6110 = vpop.f32.mrb[0].mxu0
        %v6111 = vadd.f32 0.0, %v6110
        %v6112 = vpop.f32.mrb[0].mxu0
        %v6113 = vpop.f32.mrb[0].mxu0
        %v6114 = vadd.f32 0.0, %v6113
        %v6115 = vpop.f32.mrb[0].mxu0
        %6116 = vmatprep.mubr.bf16.mxu0 %v5642
        %6117 = vmatmul.mubr.bf16.gmra.mrb[0].mxu0 %v5386
        %v6118 = vpop.f32.mrb[0].mxu0
        %v6119 = vadd.f32 0.0, %v6118
        %v6120 = vpop.f32.mrb[0].mxu0
        %v6121 = vpop.f32.mrb[0].mxu0
        %v6122 = vadd.f32 0.0, %v6121
        %v6123 = vpop.f32.mrb[0].mxu0
        %6124 = vdwg.mxu0
        %6125 = vmatprep.subr.bf16.mxu0 0
        %6126 = vmatpush1.bf16.msra.mxu0 %v5932
        %6127 = vmatprep.subr.bf16.mxu0 0
        %6128 = vmatpush1.bf16.msra.mxu0 %v5933
        %6129 = vmatprep.subr.bf16.mxu0 0
        %6130 = vmatpush1.bf16.msra.mxu0 %v5934
        %6131 = vmatprep.subr.bf16.mxu0 0
        %6132 = vmatpush1.bf16.msra.mxu0 %v5935
        %6133 = vmatprep.subr.bf16.mxu0 0
        %6134 = vmatpush1.bf16.msra.mxu0 %v5936
        %6135 = vmatprep.subr.bf16.mxu0 0
        %6136 = vmatpush1.bf16.msra.mxu0 %v5937
        %6137 = vmatprep.subr.bf16.mxu0 0
        %6138 = vmatpush1.bf16.msra.mxu0 %v5938
        %6139 = vmatprep.subr.bf16.mxu0 0
        %6140 = vmatpush1.bf16.msra.mxu0 %v5939
        %6141 = vmatprep.subr.bf16.mxu0 0
        %6142 = vmatpush1.bf16.msra.mxu0 0
        %6143 = vmatprep.subr.bf16.mxu0 0
        %6144 = vmatpush1.bf16.msra.mxu0 0
        %6145 = vmatprep.subr.bf16.mxu0 0
        %6146 = vmatpush1.bf16.msra.mxu0 0
        %6147 = vmatprep.subr.bf16.mxu0 0
        %6148 = vmatpush1.bf16.msra.mxu0 0
        %6149 = vmatprep.subr.bf16.mxu0 0
        %6150 = vmatpush1.bf16.msra.mxu0 0
        %6151 = vmatprep.subr.bf16.mxu0 0
        %6152 = vmatpush1.bf16.msra.mxu0 0
        %6153 = vmatprep.subr.bf16.mxu0 0
        %6154 = vmatpush1.bf16.msra.mxu0 0
        %6155 = vmatprep.subr.bf16.mxu0 0
        %6156 = vmatpush1.bf16.msra.mxu0 0
        %6157 = vmatprep.mubr.bf16.mxu0 0
        %6158 = vmatmul.mubr.bf16.gmra.mrb[0].mxu0 %v5709
        %v6159 = vpop.f32.mrb[0].mxu0
        %v6160 = vadd.f32 %v5999, %v6159
        %v6161 = vpop.f32.mrb[0].mxu0
        %v6162 = vpop.f32.mrb[0].mxu0
        %v6163 = vadd.f32 %v6002, %v6162
        %v6164 = vpop.f32.mrb[0].mxu0
        %6165 = vmatprep.mubr.bf16.mxu0 0
        %6166 = vmatmul.mubr.bf16.gmra.mrb[0].mxu0 %v5712
        %v6167 = vpop.f32.mrb[0].mxu0
        %v6168 = vadd.f32 %v6007, %v6167
        %v6169 = vpop.f32.mrb[0].mxu0
        %v6170 = vpop.f32.mrb[0].mxu0
        %v6171 = vadd.f32 %v6010, %v6170
        %v6172 = vpop.f32.mrb[0].mxu0
        %6173 = vmatprep.mubr.bf16.mxu0 0
        %6174 = vmatmul.mubr.bf16.gmra.mrb[0].mxu0 %v5715
        %v6175 = vpop.f32.mrb[0].mxu0
        %v6176 = vadd.f32 %v6015, %v6175
        %v6177 = vpop.f32.mrb[0].mxu0
        %v6178 = vpop.f32.mrb[0].mxu0
        %v6179 = vadd.f32 %v6018, %v6178
        %v6180 = vpop.f32.mrb[0].mxu0
        %6181 = vmatprep.mubr.bf16.mxu0 0
        %6182 = vmatmul.mubr.bf16.gmra.mrb[0].mxu0 %v5718
        %v6183 = vpop.f32.mrb[0].mxu0
        %v6184 = vadd.f32 %v6023, %v6183
        %v6185 = vpop.f32.mrb[0].mxu0
        %v6186 = vpop.f32.mrb[0].mxu0
        %v6187 = vadd.f32 %v6026, %v6186
        %v6188 = vpop.f32.mrb[0].mxu0
        %6189 = vmatprep.mubr.bf16.mxu0 0
        %6190 = vmatmul.mubr.bf16.gmra.mrb[0].mxu0 %v5721
        %v6191 = vpop.f32.mrb[0].mxu0
        %v6192 = vadd.f32 %v6031, %v6191
        %v6193 = vpop.f32.mrb[0].mxu0
        %v6194 = vpop.f32.mrb[0].mxu0
        %v6195 = vadd.f32 %v6034, %v6194
        %v6196 = vpop.f32.mrb[0].mxu0
        %6197 = vmatprep.mubr.bf16.mxu0 0
        %6198 = vmatmul.mubr.bf16.gmra.mrb[0].mxu0 %v5724
        %v6199 = vpop.f32.mrb[0].mxu0
        %v6200 = vadd.f32 %v6039, %v6199
        %v6201 = vpop.f32.mrb[0].mxu0
        %v6202 = vpop.f32.mrb[0].mxu0
        %v6203 = vadd.f32 %v6042, %v6202
        %v6204 = vpop.f32.mrb[0].mxu0
        %6205 = vmatprep.mubr.bf16.mxu0 0
        %6206 = vmatmul.mubr.bf16.gmra.mrb[0].mxu0 %v5727
        %v6207 = vpop.f32.mrb[0].mxu0
        %v6208 = vadd.f32 %v6047, %v6207
        %v6209 = vpop.f32.mrb[0].mxu0
        %v6210 = vpop.f32.mrb[0].mxu0
        %v6211 = vadd.f32 %v6050, %v6210
        %v6212 = vpop.f32.mrb[0].mxu0
        %6213 = vmatprep.mubr.bf16.mxu0 0
        %6214 = vmatmul.mubr.bf16.gmra.mrb[0].mxu0 %v5730
        %v6215 = vpop.f32.mrb[0].mxu0
        %v6216 = vadd.f32 %v6055, %v6215
        %v6217 = vpop.f32.mrb[0].mxu0
        %v6218 = vpop.f32.mrb[0].mxu0
        %v6219 = vadd.f32 %v6058, %v6218
        %v6220 = vpop.f32.mrb[0].mxu0
        %6221 = vmatprep.mubr.bf16.mxu0 0
        %6222 = vmatmul.mubr.bf16.gmra.mrb[0].mxu0 %v5733
        %v6223 = vpop.f32.mrb[0].mxu0
        %v6224 = vadd.f32 %v6063, %v6223
        %v6225 = vpop.f32.mrb[0].mxu0
        %v6226 = vpop.f32.mrb[0].mxu0
        %v6227 = vadd.f32 %v6066, %v6226
        %v6228 = vpop.f32.mrb[0].mxu0
        %6229 = vmatprep.mubr.bf16.mxu0 0
        %6230 = vmatmul.mubr.bf16.gmra.mrb[0].mxu0 %v5736
        %v6231 = vpop.f32.mrb[0].mxu0
        %v6232 = vadd.f32 %v6071, %v6231
        %v6233 = vpop.f32.mrb[0].mxu0
        %v6234 = vpop.f32.mrb[0].mxu0
        %v6235 = vadd.f32 %v6074, %v6234
        %v6236 = vpop.f32.mrb[0].mxu0
        %6237 = vmatprep.mubr.bf16.mxu0 0
        %6238 = vmatmul.mubr.bf16.gmra.mrb[0].mxu0 %v5739
        %v6239 = vpop.f32.mrb[0].mxu0
        %v6240 = vadd.f32 %v6079, %v6239
        %v6241 = vpop.f32.mrb[0].mxu0
        %v6242 = vpop.f32.mrb[0].mxu0
        %v6243 = vadd.f32 %v6082, %v6242
        %v6244 = vpop.f32.mrb[0].mxu0
        %6245 = vmatprep.mubr.bf16.mxu0 0
        %6246 = vmatmul.mubr.bf16.gmra.mrb[0].mxu0 %v5742
        %v6247 = vpop.f32.mrb[0].mxu0
        %v6248 = vadd.f32 %v6087, %v6247
        %v6249 = vpop.f32.mrb[0].mxu0
        %v6250 = vpop.f32.mrb[0].mxu0
        %v6251 = vadd.f32 %v6090, %v6250
        %v6252 = vpop.f32.mrb[0].mxu0
        %6253 = vmatprep.mubr.bf16.mxu0 0
        %6254 = vmatmul.mubr.bf16.gmra.mrb[0].mxu0 %v5745
        %v6255 = vpop.f32.mrb[0].mxu0
        %v6256 = vadd.f32 %v6095, %v6255
        %v6257 = vpop.f32.mrb[0].mxu0
        %v6258 = vpop.f32.mrb[0].mxu0
        %v6259 = vadd.f32 %v6098, %v6258
        %v6260 = vpop.f32.mrb[0].mxu0
        %6261 = vmatprep.mubr.bf16.mxu0 0
        %6262 = vmatmul.mubr.bf16.gmra.mrb[0].mxu0 %v5748
        %v6263 = vpop.f32.mrb[0].mxu0
        %v6264 = vadd.f32 %v6103, %v6263
        %v6265 = vpop.f32.mrb[0].mxu0
        %v6266 = vpop.f32.mrb[0].mxu0
        %v6267 = vadd.f32 %v6106, %v6266
        %v6268 = vpop.f32.mrb[0].mxu0
        %6269 = vmatprep.mubr.bf16.mxu0 0
        %6270 = vmatmul.mubr.bf16.gmra.mrb[0].mxu0 %v5751
        %v6271 = vpop.f32.mrb[0].mxu0
        %v6272 = vadd.f32 %v6111, %v6271
        %v6273 = vpop.f32.mrb[0].mxu0
        %v6274 = vpop.f32.mrb[0].mxu0
        %v6275 = vadd.f32 %v6114, %v6274
        %v6276 = vpop.f32.mrb[0].mxu0
        %6277 = vmatprep.mubr.bf16.mxu0 0
        %6278 = vmatmul.mubr.bf16.gmra.mrb[0].mxu0 %v5754
        %v6279 = vpop.f32.mrb[0].mxu0
        %v6280 = vadd.f32 %v6119, %v6279
        %v6281 = vpop.f32.mrb[0].mxu0
        %v6282 = vpop.f32.mrb[0].mxu0
        %v6283 = vadd.f32 %v6122, %v6282
        %v6284 = vpop.f32.mrb[0].mxu0
        %6285 = vdwg.mxu0
        %v6334 = vunpack.c.l.b16 %v5194
        %v6335 = vunpack.c.l.b16 %v5195
        %v6336 = vunpack.c.l.b16 %v5196
        %v6337 = vunpack.c.l.b16 %v5197
        %v6338 = vunpack.c.l.b16 %v5198
        %v6339 = vunpack.c.l.b16 %v5199
        %v6340 = vunpack.c.l.b16 %v5200
        %v6341 = vunpack.c.l.b16 %v5201
        %v6342 = vunpack.c.l.b16 %v5202
        %v6343 = vunpack.c.l.b16 %v5203
        %v6344 = vunpack.c.l.b16 %v5204
        %v6345 = vunpack.c.l.b16 %v5205
        %v6346 = vunpack.c.l.b16 %v5206
        %v6347 = vunpack.c.l.b16 %v5207
        %v6348 = vunpack.c.l.b16 %v5208
        %v6349 = vunpack.c.l.b16 %v5209
        %v6350 = vunpack.c.l.b16 %v5210
        %v6351 = vunpack.c.l.b16 %v5211
        %v6352 = vunpack.c.l.b16 %v5212
        %v6353 = vunpack.c.l.b16 %v5213
        %v6354 = vunpack.c.l.b16 %v5214
        %v6355 = vunpack.c.l.b16 %v5215
        %v6356 = vunpack.c.l.b16 %v5216
        %v6357 = vunpack.c.l.b16 %v5217
        %v6358 = vunpack.c.l.b16 %v5218
        %v6359 = vunpack.c.l.b16 %v5219
        %v6360 = vunpack.c.l.b16 %v5220
        %v6361 = vunpack.c.l.b16 %v5221
        %v6362 = vunpack.c.l.b16 %v5222
        %v6363 = vunpack.c.l.b16 %v5223
        %v6364 = vunpack.c.l.b16 %v5224
        %v6365 = vunpack.c.l.b16 %v5225
        %v6366 = vunpack.c.l.b16 %v5226
        %v6367 = vunpack.c.l.b16 %v5227
        %v6368 = vunpack.c.l.b16 %v5228
        %v6369 = vunpack.c.l.b16 %v5229
        %v6370 = vunpack.c.l.b16 %v5230
        %v6371 = vunpack.c.l.b16 %v5231
        %v6372 = vunpack.c.l.b16 %v5232
        %v6373 = vunpack.c.l.b16 %v5233
        %v6374 = vunpack.c.l.b16 %v5234
        %v6375 = vunpack.c.l.b16 %v5235
        %v6376 = vunpack.c.l.b16 %v5236
        %v6377 = vunpack.c.l.b16 %v5237
        %v6378 = vunpack.c.l.b16 %v5238
        %v6379 = vunpack.c.l.b16 %v5239
        %v6380 = vunpack.c.l.b16 %v5240
        %v6381 = vunpack.c.l.b16 %v5241
        %v6382 = vpack.c.b16 %v6335, %v6334
        %v6383 = vpack.c.b16 %v6337, %v6336
        %v6384 = vpack.c.b16 %v6339, %v6338
        %v6385 = vpack.c.b16 %v6341, %v6340
        %v6386 = vpack.c.b16 %v6343, %v6342
        %v6387 = vpack.c.b16 %v6345, %v6344
        %v6388 = vpack.c.b16 %v6347, %v6346
        %v6389 = vpack.c.b16 %v6349, %v6348
        %v6390 = vpack.c.b16 %v6351, %v6350
        %v6391 = vpack.c.b16 %v6353, %v6352
        %v6392 = vpack.c.b16 %v6355, %v6354
        %v6393 = vpack.c.b16 %v6357, %v6356
        %v6394 = vpack.c.b16 %v6359, %v6358
        %v6395 = vpack.c.b16 %v6361, %v6360
        %v6396 = vpack.c.b16 %v6363, %v6362
        %v6397 = vpack.c.b16 %v6365, %v6364
        %v6398 = vpack.c.b16 %v6367, %v6366
        %v6399 = vpack.c.b16 %v6369, %v6368
        %v6400 = vpack.c.b16 %v6371, %v6370
        %v6401 = vpack.c.b16 %v6373, %v6372
        %v6402 = vpack.c.b16 %v6375, %v6374
        %v6403 = vpack.c.b16 %v6377, %v6376
        %v6404 = vpack.c.b16 %v6379, %v6378
        %v6405 = vpack.c.b16 %v6381, %v6380
        %6430 = vmatprep.subr.bf16.mxu0 0
        %6431 = vmatpush1.bf16.msra.mxu0 %v6382
        %6432 = vmatprep.subr.bf16.mxu0 0
        %6433 = vmatpush1.bf16.msra.mxu0 %v6383
        %6434 = vmatprep.subr.bf16.mxu0 0
        %6435 = vmatpush1.bf16.msra.mxu0 %v6384
        %6436 = vmatprep.subr.bf16.mxu0 0
        %6437 = vmatpush1.bf16.msra.mxu0 %v6385
        %6438 = vmatprep.subr.bf16.mxu0 0
        %6439 = vmatpush1.bf16.msra.mxu0 %v6386
        %6440 = vmatprep.subr.bf16.mxu0 0
        %6441 = vmatpush1.bf16.msra.mxu0 %v6387
        %6442 = vmatprep.subr.bf16.mxu0 0
        %6443 = vmatpush1.bf16.msra.mxu0 %v6388
        %6444 = vmatprep.subr.bf16.mxu0 0
        %6445 = vmatpush1.bf16.msra.mxu0 %v6389
        %6446 = vmatprep.subr.bf16.mxu0 0
        %6447 = vmatpush1.bf16.msra.mxu0 %v6390
        %6448 = vmatprep.subr.bf16.mxu0 0
        %6449 = vmatpush1.bf16.msra.mxu0 %v6391
        %6450 = vmatprep.subr.bf16.mxu0 0
        %6451 = vmatpush1.bf16.msra.mxu0 %v6392
        %6452 = vmatprep.subr.bf16.mxu0 0
        %6453 = vmatpush1.bf16.msra.mxu0 %v6393
        %6454 = vmatprep.subr.bf16.mxu0 0
        %6455 = vmatpush1.bf16.msra.mxu0 %v6394
        %6456 = vmatprep.subr.bf16.mxu0 0
        %6457 = vmatpush1.bf16.msra.mxu0 %v6395
        %6458 = vmatprep.subr.bf16.mxu0 0
        %6459 = vmatpush1.bf16.msra.mxu0 %v6396
        %6460 = vmatprep.subr.bf16.mxu0 0
        %6461 = vmatpush1.bf16.msra.mxu0 %v6397
        %6462 = vmatprep.mubr.bf16.mxu0 %v4885
        %6463 = vmatmul.mubr.bf16.gmra.mrb[0].mxu0 %v4794
        %v6464 = vpop.f32.mrb[0].mxu0
        %v6465 = vadd.f32 %v6160, %v6464
        %v6466 = vpop.f32.mrb[0].mxu0
        %v6467 = vpop.f32.mrb[0].mxu0
        %v6468 = vadd.f32 %v6163, %v6467
        %v6469 = vpop.f32.mrb[0].mxu0
        %6470 = vmatprep.mubr.bf16.mxu0 %v4897
        %6471 = vmatmul.mubr.bf16.gmra.mrb[0].mxu0 %v4795
        %v6472 = vpop.f32.mrb[0].mxu0
        %v6473 = vadd.f32 %v6168, %v6472
        %v6474 = vpop.f32.mrb[0].mxu0
        %v6475 = vpop.f32.mrb[0].mxu0
        %v6476 = vadd.f32 %v6171, %v6475
        %v6477 = vpop.f32.mrb[0].mxu0
        %6478 = vmatprep.mubr.bf16.mxu0 %v4909
        %6479 = vmatmul.mubr.bf16.gmra.mrb[0].mxu0 %v4796
        %v6480 = vpop.f32.mrb[0].mxu0
        %v6481 = vadd.f32 %v6176, %v6480
        %v6482 = vpop.f32.mrb[0].mxu0
        %v6483 = vpop.f32.mrb[0].mxu0
        %v6484 = vadd.f32 %v6179, %v6483
        %v6485 = vpop.f32.mrb[0].mxu0
        %6486 = vmatprep.mubr.bf16.mxu0 %v4921
        %6487 = vmatmul.mubr.bf16.gmra.mrb[0].mxu0 %v4797
        %v6488 = vpop.f32.mrb[0].mxu0
        %v6489 = vadd.f32 %v6184, %v6488
        %v6490 = vpop.f32.mrb[0].mxu0
        %v6491 = vpop.f32.mrb[0].mxu0
        %v6492 = vadd.f32 %v6187, %v6491
        %v6493 = vpop.f32.mrb[0].mxu0
        %6494 = vmatprep.mubr.bf16.mxu0 %v4933
        %6495 = vmatmul.mubr.bf16.gmra.mrb[0].mxu0 %v4798
        %v6496 = vpop.f32.mrb[0].mxu0
        %v6497 = vadd.f32 %v6192, %v6496
        %v6498 = vpop.f32.mrb[0].mxu0
        %v6499 = vpop.f32.mrb[0].mxu0
        %v6500 = vadd.f32 %v6195, %v6499
        %v6501 = vpop.f32.mrb[0].mxu0
        %6502 = vmatprep.mubr.bf16.mxu0 %v4945
        %6503 = vmatmul.mubr.bf16.gmra.mrb[0].mxu0 %v4799
        %v6504 = vpop.f32.mrb[0].mxu0
        %v6505 = vadd.f32 %v6200, %v6504
        %v6506 = vpop.f32.mrb[0].mxu0
        %v6507 = vpop.f32.mrb[0].mxu0
        %v6508 = vadd.f32 %v6203, %v6507
        %v6509 = vpop.f32.mrb[0].mxu0
        %6510 = vmatprep.mubr.bf16.mxu0 %v4957
        %6511 = vmatmul.mubr.bf16.gmra.mrb[0].mxu0 %v4800
        %v6512 = vpop.f32.mrb[0].mxu0
        %v6513 = vadd.f32 %v6208, %v6512
        %v6514 = vpop.f32.mrb[0].mxu0
        %v6515 = vpop.f32.mrb[0].mxu0
        %v6516 = vadd.f32 %v6211, %v6515
        %v6517 = vpop.f32.mrb[0].mxu0
        %6518 = vmatprep.mubr.bf16.mxu0 %v4969
        %6519 = vmatmul.mubr.bf16.gmra.mrb[0].mxu0 %v4801
        %v6520 = vpop.f32.mrb[0].mxu0
        %v6521 = vadd.f32 %v6216, %v6520
        %v6522 = vpop.f32.mrb[0].mxu0
        %v6523 = vpop.f32.mrb[0].mxu0
        %v6524 = vadd.f32 %v6219, %v6523
        %v6525 = vpop.f32.mrb[0].mxu0
        %6526 = vmatprep.mubr.bf16.mxu0 %v4981
        %6527 = vmatmul.mubr.bf16.gmra.mrb[0].mxu0 %v4802
        %v6528 = vpop.f32.mrb[0].mxu0
        %v6529 = vadd.f32 %v6224, %v6528
        %v6530 = vpop.f32.mrb[0].mxu0
        %v6531 = vpop.f32.mrb[0].mxu0
        %v6532 = vadd.f32 %v6227, %v6531
        %v6533 = vpop.f32.mrb[0].mxu0
        %6534 = vmatprep.mubr.bf16.mxu0 %v4993
        %6535 = vmatmul.mubr.bf16.gmra.mrb[0].mxu0 %v4803
        %v6536 = vpop.f32.mrb[0].mxu0
        %v6537 = vadd.f32 %v6232, %v6536
        %v6538 = vpop.f32.mrb[0].mxu0
        %v6539 = vpop.f32.mrb[0].mxu0
        %v6540 = vadd.f32 %v6235, %v6539
        %v6541 = vpop.f32.mrb[0].mxu0
        %6542 = vmatprep.mubr.bf16.mxu0 %v5005
        %6543 = vmatmul.mubr.bf16.gmra.mrb[0].mxu0 %v4804
        %v6544 = vpop.f32.mrb[0].mxu0
        %v6545 = vadd.f32 %v6240, %v6544
        %v6546 = vpop.f32.mrb[0].mxu0
        %v6547 = vpop.f32.mrb[0].mxu0
        %v6548 = vadd.f32 %v6243, %v6547
        %v6549 = vpop.f32.mrb[0].mxu0
        %6550 = vmatprep.mubr.bf16.mxu0 %v5017
        %6551 = vmatmul.mubr.bf16.gmra.mrb[0].mxu0 %v4805
        %v6552 = vpop.f32.mrb[0].mxu0
        %v6553 = vadd.f32 %v6248, %v6552
        %v6554 = vpop.f32.mrb[0].mxu0
        %v6555 = vpop.f32.mrb[0].mxu0
        %v6556 = vadd.f32 %v6251, %v6555
        %v6557 = vpop.f32.mrb[0].mxu0
        %6558 = vmatprep.mubr.bf16.mxu0 %v5029
        %6559 = vmatmul.mubr.bf16.gmra.mrb[0].mxu0 %v4806
        %v6560 = vpop.f32.mrb[0].mxu0
        %v6561 = vadd.f32 %v6256, %v6560
        %v6562 = vpop.f32.mrb[0].mxu0
        %v6563 = vpop.f32.mrb[0].mxu0
        %v6564 = vadd.f32 %v6259, %v6563
        %v6565 = vpop.f32.mrb[0].mxu0
        %6566 = vmatprep.mubr.bf16.mxu0 %v5041
        %6567 = vmatmul.mubr.bf16.gmra.mrb[0].mxu0 %v4807
        %v6568 = vpop.f32.mrb[0].mxu0
        %v6569 = vadd.f32 %v6264, %v6568
        %v6570 = vpop.f32.mrb[0].mxu0
        %v6571 = vpop.f32.mrb[0].mxu0
        %v6572 = vadd.f32 %v6267, %v6571
        %v6573 = vpop.f32.mrb[0].mxu0
        %6574 = vmatprep.mubr.bf16.mxu0 %v5053
        %6575 = vmatmul.mubr.bf16.gmra.mrb[0].mxu0 %v4808
        %v6576 = vpop.f32.mrb[0].mxu0
        %v6577 = vadd.f32 %v6272, %v6576
        %v6578 = vpop.f32.mrb[0].mxu0
        %v6579 = vpop.f32.mrb[0].mxu0
        %v6580 = vadd.f32 %v6275, %v6579
        %v6581 = vpop.f32.mrb[0].mxu0
        %6582 = vmatprep.mubr.bf16.mxu0 %v5065
        %6583 = vmatmul.mubr.bf16.gmra.mrb[0].mxu0 %v4809
        %v6584 = vpop.f32.mrb[0].mxu0
        %v6585 = vadd.f32 %v6280, %v6584
        %v6586 = vpop.f32.mrb[0].mxu0
        %v6587 = vpop.f32.mrb[0].mxu0
        %v6588 = vadd.f32 %v6283, %v6587
        %v6589 = vpop.f32.mrb[0].mxu0
        %6590 = vdwg.mxu0
        %6591 = vmatprep.subr.bf16.mxu0 0
        %6592 = vmatpush1.bf16.msra.mxu0 %v6398
        %6593 = vmatprep.subr.bf16.mxu0 0
        %6594 = vmatpush1.bf16.msra.mxu0 %v6399
        %6595 = vmatprep.subr.bf16.mxu0 0
        %6596 = vmatpush1.bf16.msra.mxu0 %v6400
        %6597 = vmatprep.subr.bf16.mxu0 0
        %6598 = vmatpush1.bf16.msra.mxu0 %v6401
        %6599 = vmatprep.subr.bf16.mxu0 0
        %6600 = vmatpush1.bf16.msra.mxu0 %v6402
        %6601 = vmatprep.subr.bf16.mxu0 0
        %6602 = vmatpush1.bf16.msra.mxu0 %v6403
        %6603 = vmatprep.subr.bf16.mxu0 0
        %6604 = vmatpush1.bf16.msra.mxu0 %v6404
        %6605 = vmatprep.subr.bf16.mxu0 0
        %6606 = vmatpush1.bf16.msra.mxu0 %v6405
        %6607 = vmatprep.subr.bf16.mxu0 0
        %6608 = vmatpush1.bf16.msra.mxu0 0
        %6609 = vmatprep.subr.bf16.mxu0 0
        %6610 = vmatpush1.bf16.msra.mxu0 0
        %6611 = vmatprep.subr.bf16.mxu0 0
        %6612 = vmatpush1.bf16.msra.mxu0 0
        %6613 = vmatprep.subr.bf16.mxu0 0
        %6614 = vmatpush1.bf16.msra.mxu0 0
        %6615 = vmatprep.subr.bf16.mxu0 0
        %6616 = vmatpush1.bf16.msra.mxu0 0
        %6617 = vmatprep.subr.bf16.mxu0 0
        %6618 = vmatpush1.bf16.msra.mxu0 0
        %6619 = vmatprep.subr.bf16.mxu0 0
        %6620 = vmatpush1.bf16.msra.mxu0 0
        %6621 = vmatprep.subr.bf16.mxu0 0
        %6622 = vmatpush1.bf16.msra.mxu0 0
        %6623 = vmatprep.mubr.bf16.mxu0 0
        %6624 = vmatmul.mubr.bf16.gmra.mrb[0].mxu0 %v5132
        %v6625 = vpop.f32.mrb[0].mxu0
        %v6626 = vadd.f32 %v6465, %v6625
        %v6627 = vpop.f32.mrb[0].mxu0
        %v6628 = vpop.f32.mrb[0].mxu0
        %v6629 = vadd.f32 %v6468, %v6628
        %v6630 = vpop.f32.mrb[0].mxu0
        %6631 = vmatprep.mubr.bf16.mxu0 0
        %6632 = vmatmul.mubr.bf16.gmra.mrb[0].mxu0 %v5135
        %v6633 = vpop.f32.mrb[0].mxu0
        %v6634 = vadd.f32 %v6473, %v6633
        %v6635 = vpop.f32.mrb[0].mxu0
        %v6636 = vpop.f32.mrb[0].mxu0
        %v6637 = vadd.f32 %v6476, %v6636
        %v6638 = vpop.f32.mrb[0].mxu0
        %6639 = vmatprep.mubr.bf16.mxu0 0
        %6640 = vmatmul.mubr.bf16.gmra.mrb[0].mxu0 %v5138
        %v6641 = vpop.f32.mrb[0].mxu0
        %v6642 = vadd.f32 %v6481, %v6641
        %v6643 = vpop.f32.mrb[0].mxu0
        %v6644 = vpop.f32.mrb[0].mxu0
        %v6645 = vadd.f32 %v6484, %v6644
        %v6646 = vpop.f32.mrb[0].mxu0
        %6647 = vmatprep.mubr.bf16.mxu0 0
        %6648 = vmatmul.mubr.bf16.gmra.mrb[0].mxu0 %v5141
        %v6649 = vpop.f32.mrb[0].mxu0
        %v6650 = vadd.f32 %v6489, %v6649
        %v6651 = vpop.f32.mrb[0].mxu0
        %v6652 = vpop.f32.mrb[0].mxu0
        %v6653 = vadd.f32 %v6492, %v6652
        %v6654 = vpop.f32.mrb[0].mxu0
        %6655 = vmatprep.mubr.bf16.mxu0 0
        %6656 = vmatmul.mubr.bf16.gmra.mrb[0].mxu0 %v5144
        %v6657 = vpop.f32.mrb[0].mxu0
        %v6658 = vadd.f32 %v6497, %v6657
        %v6659 = vpop.f32.mrb[0].mxu0
        %v6660 = vpop.f32.mrb[0].mxu0
        %v6661 = vadd.f32 %v6500, %v6660
        %v6662 = vpop.f32.mrb[0].mxu0
        %6663 = vmatprep.mubr.bf16.mxu0 0
        %6664 = vmatmul.mubr.bf16.gmra.mrb[0].mxu0 %v5147
        %v6665 = vpop.f32.mrb[0].mxu0
        %v6666 = vadd.f32 %v6505, %v6665
        %v6667 = vpop.f32.mrb[0].mxu0
        %v6668 = vpop.f32.mrb[0].mxu0
        %v6669 = vadd.f32 %v6508, %v6668
        %v6670 = vpop.f32.mrb[0].mxu0
        %6671 = vmatprep.mubr.bf16.mxu0 0
        %6672 = vmatmul.mubr.bf16.gmra.mrb[0].mxu0 %v5150
        %v6673 = vpop.f32.mrb[0].mxu0
        %v6674 = vadd.f32 %v6513, %v6673
        %v6675 = vpop.f32.mrb[0].mxu0
        %v6676 = vpop.f32.mrb[0].mxu0
        %v6677 = vadd.f32 %v6516, %v6676
        %v6678 = vpop.f32.mrb[0].mxu0
        %6679 = vmatprep.mubr.bf16.mxu0 0
        %6680 = vmatmul.mubr.bf16.gmra.mrb[0].mxu0 %v5153
        %v6681 = vpop.f32.mrb[0].mxu0
        %v6682 = vadd.f32 %v6521, %v6681
        %v6683 = vpop.f32.mrb[0].mxu0
        %v6684 = vpop.f32.mrb[0].mxu0
        %v6685 = vadd.f32 %v6524, %v6684
        %v6686 = vpop.f32.mrb[0].mxu0
        %6687 = vmatprep.mubr.bf16.mxu0 0
        %6688 = vmatmul.mubr.bf16.gmra.mrb[0].mxu0 %v5156
        %v6689 = vpop.f32.mrb[0].mxu0
        %v6690 = vadd.f32 %v6529, %v6689
        %v6691 = vpop.f32.mrb[0].mxu0
        %v6692 = vpop.f32.mrb[0].mxu0
        %v6693 = vadd.f32 %v6532, %v6692
        %v6694 = vpop.f32.mrb[0].mxu0
        %6695 = vmatprep.mubr.bf16.mxu0 0
        %6696 = vmatmul.mubr.bf16.gmra.mrb[0].mxu0 %v5159
        %v6697 = vpop.f32.mrb[0].mxu0
        %v6698 = vadd.f32 %v6537, %v6697
        %v6699 = vpop.f32.mrb[0].mxu0
        %v6700 = vpop.f32.mrb[0].mxu0
        %v6701 = vadd.f32 %v6540, %v6700
        %v6702 = vpop.f32.mrb[0].mxu0
        %6703 = vmatprep.mubr.bf16.mxu0 0
        %6704 = vmatmul.mubr.bf16.gmra.mrb[0].mxu0 %v5162
        %v6705 = vpop.f32.mrb[0].mxu0
        %v6706 = vadd.f32 %v6545, %v6705
        %v6707 = vpop.f32.mrb[0].mxu0
        %v6708 = vpop.f32.mrb[0].mxu0
        %v6709 = vadd.f32 %v6548, %v6708
        %v6710 = vpop.f32.mrb[0].mxu0
        %6711 = vmatprep.mubr.bf16.mxu0 0
        %6712 = vmatmul.mubr.bf16.gmra.mrb[0].mxu0 %v5165
        %v6713 = vpop.f32.mrb[0].mxu0
        %v6714 = vadd.f32 %v6553, %v6713
        %v6715 = vpop.f32.mrb[0].mxu0
        %v6716 = vpop.f32.mrb[0].mxu0
        %v6717 = vadd.f32 %v6556, %v6716
        %v6718 = vpop.f32.mrb[0].mxu0
        %6719 = vmatprep.mubr.bf16.mxu0 0
        %6720 = vmatmul.mubr.bf16.gmra.mrb[0].mxu0 %v5168
        %v6721 = vpop.f32.mrb[0].mxu0
        %v6722 = vadd.f32 %v6561, %v6721
        %v6723 = vpop.f32.mrb[0].mxu0
        %v6724 = vpop.f32.mrb[0].mxu0
        %v6725 = vadd.f32 %v6564, %v6724
        %v6726 = vpop.f32.mrb[0].mxu0
        %6727 = vmatprep.mubr.bf16.mxu0 0
        %6728 = vmatmul.mubr.bf16.gmra.mrb[0].mxu0 %v5171
        %v6729 = vpop.f32.mrb[0].mxu0
        %v6730 = vadd.f32 %v6569, %v6729
        %v6731 = vpop.f32.mrb[0].mxu0
        %v6732 = vpop.f32.mrb[0].mxu0
        %v6733 = vadd.f32 %v6572, %v6732
        %v6734 = vpop.f32.mrb[0].mxu0
        %6735 = vmatprep.mubr.bf16.mxu0 0
        %6736 = vmatmul.mubr.bf16.gmra.mrb[0].mxu0 %v5174
        %v6737 = vpop.f32.mrb[0].mxu0
        %v6738 = vadd.f32 %v6577, %v6737
        %v6739 = vpop.f32.mrb[0].mxu0
        %v6740 = vpop.f32.mrb[0].mxu0
        %v6741 = vadd.f32 %v6580, %v6740
        %v6742 = vpop.f32.mrb[0].mxu0
        %6743 = vmatprep.mubr.bf16.mxu0 0
        %6744 = vmatmul.mubr.bf16.gmra.mrb[0].mxu0 %v5177
        %v6745 = vpop.f32.mrb[0].mxu0
        %v6746 = vadd.f32 %v6585, %v6745
        %v6747 = vpop.f32.mrb[0].mxu0
        %v6748 = vpop.f32.mrb[0].mxu0
        %v6749 = vadd.f32 %v6588, %v6748
        %v6750 = vpop.f32.mrb[0].mxu0
        %6751 = vdwg.mxu0
        %s6752 = scalar_lea.vmem [#allocation2], 24
        %v6753 = vld [vmem:[%s6752] sm:$0xf]
        %v6754 = vld [vmem:[%s6752 + $0x4] sm:$0xf]
        %v6755 = vld [vmem:[%s6752 + $0xc] sm:$0xf]
        %v6756 = vld [vmem:[%s6752 + $0x10] sm:$0xf]
        %v6757 = vld [vmem:[%s6752 + $0x18] sm:$0xf]
        %v6758 = vld [vmem:[%s6752 + $0x1c] sm:$0xf]
        %v6759 = vld [vmem:[%s6752 + $0x24] sm:$0xf]
        %v6760 = vld [vmem:[%s6752 + $0x28] sm:$0xf]
        %v6761 = vld [vmem:[%s6752 + $0x30] sm:$0xf]
        %v6762 = vld [vmem:[%s6752 + $0x34] sm:$0xf]
        %v6763 = vld [vmem:[%s6752 + $0x3c] sm:$0xf]
        %v6764 = vld [vmem:[%s6752 + $0x40] sm:$0xf]
        %v6765 = vld [vmem:[%s6752 + $0x48] sm:$0xf]
        %v6766 = vld [vmem:[%s6752 + $0x4c] sm:$0xf]
        %v6767 = vld [vmem:[%s6752 + $0x54] sm:$0xf]
        %v6768 = vld [vmem:[%s6752 + $0x58] sm:$0xf]
        %v6769 = vld [vmem:[%s6752 + $0x60] sm:$0xf]
        %v6770 = vld [vmem:[%s6752 + $0x64] sm:$0xf]
        %v6771 = vld [vmem:[%s6752 + $0x6c] sm:$0xf]
        %v6772 = vld [vmem:[%s6752 + $0x70] sm:$0xf]
        %v6773 = vld [vmem:[%s6752 + $0x78] sm:$0xf]
        %v6774 = vld [vmem:[%s6752 + $0x7c] sm:$0xf]
        %v6775 = vld [vmem:[%s6752 + $0x84] sm:$0xf]
        %v6776 = vld [vmem:[%s6752 + $0x88] sm:$0xf]
        %v6777 = vld [vmem:[%s6752 + $0x90] sm:$0xf]
        %v6778 = vld [vmem:[%s6752 + $0x94] sm:$0xf]
        %v6779 = vld [vmem:[%s6752 + $0x9c] sm:$0xf]
        %v6780 = vld [vmem:[%s6752 + $0xa0] sm:$0xf]
        %v6781 = vld [vmem:[%s6752 + $0xa8] sm:$0xf]
        %v6782 = vld [vmem:[%s6752 + $0xac] sm:$0xf]
        %v6783 = vld [vmem:[%s6752 + $0xb4] sm:$0xf]
        %v6784 = vld [vmem:[%s6752 + $0xb8] sm:$0xf]
        %v6785 = vld [vmem:[%s6752 + $0x8] sm:$0x1]
        %v6786 = vld [vmem:[%s6752 + $0x14] sm:$0x1]
        %v6787 = vld [vmem:[%s6752 + $0x20] sm:$0x1]
        %v6788 = vld [vmem:[%s6752 + $0x2c] sm:$0x1]
        %v6789 = vld [vmem:[%s6752 + $0x38] sm:$0x1]
        %v6790 = vld [vmem:[%s6752 + $0x44] sm:$0x1]
        %v6791 = vld [vmem:[%s6752 + $0x50] sm:$0x1]
        %v6792 = vld [vmem:[%s6752 + $0x5c] sm:$0x1]
        %v6793 = vld [vmem:[%s6752 + $0x68] sm:$0x1]
        %v6794 = vld [vmem:[%s6752 + $0x74] sm:$0x1]
        %v6795 = vld [vmem:[%s6752 + $0x80] sm:$0x1]
        %v6796 = vld [vmem:[%s6752 + $0x8c] sm:$0x1]
        %v6797 = vld [vmem:[%s6752 + $0x98] sm:$0x1]
        %v6798 = vld [vmem:[%s6752 + $0xa4] sm:$0x1]
        %v6799 = vld [vmem:[%s6752 + $0xb0] sm:$0x1]
        %v6800 = vld [vmem:[%s6752 + $0xbc] sm:$0x1]
        %v6801 = vld [vmem:[%s6752] sm:$0xe]
        %v6802 = vld [vmem:[%s6752 + $0xc] sm:$0xe]
        %v6803 = vld [vmem:[%s6752 + $0x18] sm:$0xe]
        %v6804 = vld [vmem:[%s6752 + $0x24] sm:$0xe]
        %v6805 = vld [vmem:[%s6752 + $0x30] sm:$0xe]
        %v6806 = vld [vmem:[%s6752 + $0x3c] sm:$0xe]
        %v6807 = vld [vmem:[%s6752 + $0x48] sm:$0xe]
        %v6808 = vld [vmem:[%s6752 + $0x54] sm:$0xe]
        %v6809 = vld [vmem:[%s6752 + $0x60] sm:$0xe]
        %v6810 = vld [vmem:[%s6752 + $0x6c] sm:$0xe]
        %v6811 = vld [vmem:[%s6752 + $0x78] sm:$0xe]
        %v6812 = vld [vmem:[%s6752 + $0x84] sm:$0xe]
        %v6813 = vld [vmem:[%s6752 + $0x90] sm:$0xe]
        %v6814 = vld [vmem:[%s6752 + $0x9c] sm:$0xe]
        %v6815 = vld [vmem:[%s6752 + $0xa8] sm:$0xe]
        %v6816 = vld [vmem:[%s6752 + $0xb4] sm:$0xe]
        %v6849 = vunpack.c.l.b16 %v6753
        %v6850 = vunpack.c.l.b16 %v6754
        %v6851 = vunpack.c.l.b16 %v6755
        %v6852 = vunpack.c.l.b16 %v6756
        %v6853 = vunpack.c.l.b16 %v6757
        %v6854 = vunpack.c.l.b16 %v6758
        %v6855 = vunpack.c.l.b16 %v6759
        %v6856 = vunpack.c.l.b16 %v6760
        %v6857 = vunpack.c.l.b16 %v6761
        %v6858 = vunpack.c.l.b16 %v6762
        %v6859 = vunpack.c.l.b16 %v6763
        %v6860 = vunpack.c.l.b16 %v6764
        %v6861 = vunpack.c.l.b16 %v6765
        %v6862 = vunpack.c.l.b16 %v6766
        %v6863 = vunpack.c.l.b16 %v6767
        %v6864 = vunpack.c.l.b16 %v6768
        %v6865 = vunpack.c.l.b16 %v6769
        %v6866 = vunpack.c.l.b16 %v6770
        %v6867 = vunpack.c.l.b16 %v6771
        %v6868 = vunpack.c.l.b16 %v6772
        %v6869 = vunpack.c.l.b16 %v6773
        %v6870 = vunpack.c.l.b16 %v6774
        %v6871 = vunpack.c.l.b16 %v6775
        %v6872 = vunpack.c.l.b16 %v6776
        %v6873 = vunpack.c.l.b16 %v6777
        %v6874 = vunpack.c.l.b16 %v6778
        %v6875 = vunpack.c.l.b16 %v6779
        %v6876 = vunpack.c.l.b16 %v6780
        %v6877 = vunpack.c.l.b16 %v6781
        %v6878 = vunpack.c.l.b16 %v6782
        %v6879 = vunpack.c.l.b16 %v6783
        %v6880 = vunpack.c.l.b16 %v6784
        %v6881 = vpack.c.b16 %v6850, %v6849
        %v6882 = vpack.c.b16 %v6852, %v6851
        %v6883 = vpack.c.b16 %v6854, %v6853
        %v6884 = vpack.c.b16 %v6856, %v6855
        %v6885 = vpack.c.b16 %v6858, %v6857
        %v6886 = vpack.c.b16 %v6860, %v6859
        %v6887 = vpack.c.b16 %v6862, %v6861
        %v6888 = vpack.c.b16 %v6864, %v6863
        %v6889 = vpack.c.b16 %v6866, %v6865
        %v6890 = vpack.c.b16 %v6868, %v6867
        %v6891 = vpack.c.b16 %v6870, %v6869
        %v6892 = vpack.c.b16 %v6872, %v6871
        %v6893 = vpack.c.b16 %v6874, %v6873
        %v6894 = vpack.c.b16 %v6876, %v6875
        %v6895 = vpack.c.b16 %v6878, %v6877
        %v6896 = vpack.c.b16 %v6880, %v6879
        %v6929 = vunpack.c.l.b16 %v6785
        %v6930 = vunpack.c.l.b16 %v6786
        %v6931 = vunpack.c.l.b16 %v6787
        %v6932 = vunpack.c.l.b16 %v6788
        %v6933 = vunpack.c.l.b16 %v6789
        %v6934 = vunpack.c.l.b16 %v6790
        %v6935 = vunpack.c.l.b16 %v6791
        %v6936 = vunpack.c.l.b16 %v6792
        %v6937 = vunpack.c.l.b16 %v6793
        %v6938 = vunpack.c.l.b16 %v6794
        %v6939 = vunpack.c.l.b16 %v6795
        %v6940 = vunpack.c.l.b16 %v6796
        %v6941 = vunpack.c.l.b16 %v6797
        %v6942 = vunpack.c.l.b16 %v6798
        %v6943 = vunpack.c.l.b16 %v6799
        %v6944 = vunpack.c.l.b16 %v6800
        %v6945 = vpack.c.b16 %v6929, %v6929
        %v6946 = vpack.c.b16 %v6930, %v6930
        %v6947 = vpack.c.b16 %v6931, %v6931
        %v6948 = vpack.c.b16 %v6932, %v6932
        %v6949 = vpack.c.b16 %v6933, %v6933
        %v6950 = vpack.c.b16 %v6934, %v6934
        %v6951 = vpack.c.b16 %v6935, %v6935
        %v6952 = vpack.c.b16 %v6936, %v6936
        %v6953 = vpack.c.b16 %v6937, %v6937
        %v6954 = vpack.c.b16 %v6938, %v6938
        %v6955 = vpack.c.b16 %v6939, %v6939
        %v6956 = vpack.c.b16 %v6940, %v6940
        %v6957 = vpack.c.b16 %v6941, %v6941
        %v6958 = vpack.c.b16 %v6942, %v6942
        %v6959 = vpack.c.b16 %v6943, %v6943
        %v6960 = vpack.c.b16 %v6944, %v6944
        %v6962 = vshrl.u32 %v6881, 16
        %v6964 = vshll.u32 %v6881, 16
        %v6966 = vrot.slane %v6964, 1
        %v6967 = vor.u32 %v6962, %v6966
        %v6969 = vshll.u32 %v6945, 16
        %v6971 = vrot.slane %v6969, 1
        %v6972 = vsel %vm693, %v6967, %v6971
        %v6974 = vshrl.u32 %v6882, 16
        %v6976 = vshll.u32 %v6882, 16
        %v6978 = vrot.slane %v6976, 1
        %v6979 = vor.u32 %v6974, %v6978
        %v6981 = vshll.u32 %v6946, 16
        %v6983 = vrot.slane %v6981, 1
        %v6984 = vsel %vm693, %v6979, %v6983
        %v6986 = vshrl.u32 %v6883, 16
        %v6988 = vshll.u32 %v6883, 16
        %v6990 = vrot.slane %v6988, 1
        %v6991 = vor.u32 %v6986, %v6990
        %v6993 = vshll.u32 %v6947, 16
        %v6995 = vrot.slane %v6993, 1
        %v6996 = vsel %vm693, %v6991, %v6995
        %v6998 = vshrl.u32 %v6884, 16
        %v7000 = vshll.u32 %v6884, 16
        %v7002 = vrot.slane %v7000, 1
        %v7003 = vor.u32 %v6998, %v7002
        %v7005 = vshll.u32 %v6948, 16
        %v7007 = vrot.slane %v7005, 1
        %v7008 = vsel %vm693, %v7003, %v7007
        %v7010 = vshrl.u32 %v6885, 16
        %v7012 = vshll.u32 %v6885, 16
        %v7014 = vrot.slane %v7012, 1
        %v7015 = vor.u32 %v7010, %v7014
        %v7017 = vshll.u32 %v6949, 16
        %v7019 = vrot.slane %v7017, 1
        %v7020 = vsel %vm693, %v7015, %v7019
        %v7022 = vshrl.u32 %v6886, 16
        %v7024 = vshll.u32 %v6886, 16
        %v7026 = vrot.slane %v7024, 1
        %v7027 = vor.u32 %v7022, %v7026
        %v7029 = vshll.u32 %v6950, 16
        %v7031 = vrot.slane %v7029, 1
        %v7032 = vsel %vm693, %v7027, %v7031
        %v7034 = vshrl.u32 %v6887, 16
        %v7036 = vshll.u32 %v6887, 16
        %v7038 = vrot.slane %v7036, 1
        %v7039 = vor.u32 %v7034, %v7038
        %v7041 = vshll.u32 %v6951, 16
        %v7043 = vrot.slane %v7041, 1
        %v7044 = vsel %vm693, %v7039, %v7043
        %v7046 = vshrl.u32 %v6888, 16
        %v7048 = vshll.u32 %v6888, 16
        %v7050 = vrot.slane %v7048, 1
        %v7051 = vor.u32 %v7046, %v7050
        %v7053 = vshll.u32 %v6952, 16
        %v7055 = vrot.slane %v7053, 1
        %v7056 = vsel %vm693, %v7051, %v7055
        %v7058 = vshrl.u32 %v6889, 16
        %v7060 = vshll.u32 %v6889, 16
        %v7062 = vrot.slane %v7060, 1
        %v7063 = vor.u32 %v7058, %v7062
        %v7065 = vshll.u32 %v6953, 16
        %v7067 = vrot.slane %v7065, 1
        %v7068 = vsel %vm693, %v7063, %v7067
        %v7070 = vshrl.u32 %v6890, 16
        %v7072 = vshll.u32 %v6890, 16
        %v7074 = vrot.slane %v7072, 1
        %v7075 = vor.u32 %v7070, %v7074
        %v7077 = vshll.u32 %v6954, 16
        %v7079 = vrot.slane %v7077, 1
        %v7080 = vsel %vm693, %v7075, %v7079
        %v7082 = vshrl.u32 %v6891, 16
        %v7084 = vshll.u32 %v6891, 16
        %v7086 = vrot.slane %v7084, 1
        %v7087 = vor.u32 %v7082, %v7086
        %v7089 = vshll.u32 %v6955, 16
        %v7091 = vrot.slane %v7089, 1
        %v7092 = vsel %vm693, %v7087, %v7091
        %v7094 = vshrl.u32 %v6892, 16
        %v7096 = vshll.u32 %v6892, 16
        %v7098 = vrot.slane %v7096, 1
        %v7099 = vor.u32 %v7094, %v7098
        %v7101 = vshll.u32 %v6956, 16
        %v7103 = vrot.slane %v7101, 1
        %v7104 = vsel %vm693, %v7099, %v7103
        %v7106 = vshrl.u32 %v6893, 16
        %v7108 = vshll.u32 %v6893, 16
        %v7110 = vrot.slane %v7108, 1
        %v7111 = vor.u32 %v7106, %v7110
        %v7113 = vshll.u32 %v6957, 16
        %v7115 = vrot.slane %v7113, 1
        %v7116 = vsel %vm693, %v7111, %v7115
        %v7118 = vshrl.u32 %v6894, 16
        %v7120 = vshll.u32 %v6894, 16
        %v7122 = vrot.slane %v7120, 1
        %v7123 = vor.u32 %v7118, %v7122
        %v7125 = vshll.u32 %v6958, 16
        %v7127 = vrot.slane %v7125, 1
        %v7128 = vsel %vm693, %v7123, %v7127
        %v7130 = vshrl.u32 %v6895, 16
        %v7132 = vshll.u32 %v6895, 16
        %v7134 = vrot.slane %v7132, 1
        %v7135 = vor.u32 %v7130, %v7134
        %v7137 = vshll.u32 %v6959, 16
        %v7139 = vrot.slane %v7137, 1
        %v7140 = vsel %vm693, %v7135, %v7139
        %v7142 = vshrl.u32 %v6896, 16
        %v7144 = vshll.u32 %v6896, 16
        %v7146 = vrot.slane %v7144, 1
        %v7147 = vor.u32 %v7142, %v7146
        %v7149 = vshll.u32 %v6960, 16
        %v7151 = vrot.slane %v7149, 1
        %v7152 = vsel %vm693, %v7147, %v7151
        %v7185 = vunpack.c.l.b16 %v6801
        %v7186 = vunpack.c.l.b16 %v6802
        %v7187 = vunpack.c.l.b16 %v6803
        %v7188 = vunpack.c.l.b16 %v6804
        %v7189 = vunpack.c.l.b16 %v6805
        %v7190 = vunpack.c.l.b16 %v6806
        %v7191 = vunpack.c.l.b16 %v6807
        %v7192 = vunpack.c.l.b16 %v6808
        %v7193 = vunpack.c.l.b16 %v6809
        %v7194 = vunpack.c.l.b16 %v6810
        %v7195 = vunpack.c.l.b16 %v6811
        %v7196 = vunpack.c.l.b16 %v6812
        %v7197 = vunpack.c.l.b16 %v6813
        %v7198 = vunpack.c.l.b16 %v6814
        %v7199 = vunpack.c.l.b16 %v6815
        %v7200 = vunpack.c.l.b16 %v6816
        %v7201 = vpack.c.b16 %v6850, %v7185
        %v7202 = vpack.c.b16 %v6852, %v7186
        %v7203 = vpack.c.b16 %v6854, %v7187
        %v7204 = vpack.c.b16 %v6856, %v7188
        %v7205 = vpack.c.b16 %v6858, %v7189
        %v7206 = vpack.c.b16 %v6860, %v7190
        %v7207 = vpack.c.b16 %v6862, %v7191
        %v7208 = vpack.c.b16 %v6864, %v7192
        %v7209 = vpack.c.b16 %v6866, %v7193
        %v7210 = vpack.c.b16 %v6868, %v7194
        %v7211 = vpack.c.b16 %v6870, %v7195
        %v7212 = vpack.c.b16 %v6872, %v7196
        %v7213 = vpack.c.b16 %v6874, %v7197
        %v7214 = vpack.c.b16 %v6876, %v7198
        %v7215 = vpack.c.b16 %v6878, %v7199
        %v7216 = vpack.c.b16 %v6880, %v7200
        %v7217 = vrot.slane %v7201, 1
        %v7218 = vrot.slane %v6945, 1
        %v7219 = vsel %vm982, %v7217, %v7218
        %v7220 = vrot.slane %v7202, 1
        %v7221 = vrot.slane %v6946, 1
        %v7222 = vsel %vm982, %v7220, %v7221
        %v7223 = vrot.slane %v7203, 1
        %v7224 = vrot.slane %v6947, 1
        %v7225 = vsel %vm982, %v7223, %v7224
        %v7226 = vrot.slane %v7204, 1
        %v7227 = vrot.slane %v6948, 1
        %v7228 = vsel %vm982, %v7226, %v7227
        %v7229 = vrot.slane %v7205, 1
        %v7230 = vrot.slane %v6949, 1
        %v7231 = vsel %vm982, %v7229, %v7230
        %v7232 = vrot.slane %v7206, 1
        %v7233 = vrot.slane %v6950, 1
        %v7234 = vsel %vm982, %v7232, %v7233
        %v7235 = vrot.slane %v7207, 1
        %v7236 = vrot.slane %v6951, 1
        %v7237 = vsel %vm982, %v7235, %v7236
        %v7238 = vrot.slane %v7208, 1
        %v7239 = vrot.slane %v6952, 1
        %v7240 = vsel %vm982, %v7238, %v7239
        %v7241 = vrot.slane %v7209, 1
        %v7242 = vrot.slane %v6953, 1
        %v7243 = vsel %vm982, %v7241, %v7242
        %v7244 = vrot.slane %v7210, 1
        %v7245 = vrot.slane %v6954, 1
        %v7246 = vsel %vm982, %v7244, %v7245
        %v7247 = vrot.slane %v7211, 1
        %v7248 = vrot.slane %v6955, 1
        %v7249 = vsel %vm982, %v7247, %v7248
        %v7250 = vrot.slane %v7212, 1
        %v7251 = vrot.slane %v6956, 1
        %v7252 = vsel %vm982, %v7250, %v7251
        %v7253 = vrot.slane %v7213, 1
        %v7254 = vrot.slane %v6957, 1
        %v7255 = vsel %vm982, %v7253, %v7254
        %v7256 = vrot.slane %v7214, 1
        %v7257 = vrot.slane %v6958, 1
        %v7258 = vsel %vm982, %v7256, %v7257
        %v7259 = vrot.slane %v7215, 1
        %v7260 = vrot.slane %v6959, 1
        %v7261 = vsel %vm982, %v7259, %v7260
        %v7262 = vrot.slane %v7216, 1
        %v7263 = vrot.slane %v6960, 1
        %v7264 = vsel %vm982, %v7262, %v7263
        %s7281 = scalar_lea.vmem [#allocation8], 384
        %v7282 = vld [vmem:[%s7281] sm:$0xf]
        %v7283 = vld [vmem:[%s7281 + $0x4] sm:$0xf]
        %v7284 = vld [vmem:[%s7281 + $0x8] sm:$0xf]
        %v7285 = vld [vmem:[%s7281 + $0xc] sm:$0xf]
        %v7286 = vld [vmem:[%s7281 + $0x10] sm:$0xf]
        %v7287 = vld [vmem:[%s7281 + $0x14] sm:$0xf]
        %v7288 = vld [vmem:[%s7281 + $0x18] sm:$0xf]
        %v7289 = vld [vmem:[%s7281 + $0x1c] sm:$0xf]
        %v7290 = vld [vmem:[%s7281 + $0x20] sm:$0xf]
        %v7291 = vld [vmem:[%s7281 + $0x24] sm:$0xf]
        %v7292 = vld [vmem:[%s7281 + $0x28] sm:$0xf]
        %v7293 = vld [vmem:[%s7281 + $0x2c] sm:$0xf]
        %v7294 = vld [vmem:[%s7281 + $0x30] sm:$0xf]
        %v7295 = vld [vmem:[%s7281 + $0x34] sm:$0xf]
        %v7296 = vld [vmem:[%s7281 + $0x38] sm:$0xf]
        %v7297 = vld [vmem:[%s7281 + $0x3c] sm:$0xf]
        %v7298 = vld [vmem:[%s7281 + $0x40] sm:$0xf]
        %v7299 = vld [vmem:[%s7281 + $0x44] sm:$0xf]
        %v7300 = vld [vmem:[%s7281 + $0x48] sm:$0xf]
        %v7301 = vld [vmem:[%s7281 + $0x4c] sm:$0xf]
        %v7302 = vld [vmem:[%s7281 + $0x50] sm:$0xf]
        %v7303 = vld [vmem:[%s7281 + $0x54] sm:$0xf]
        %v7304 = vld [vmem:[%s7281 + $0x58] sm:$0xf]
        %v7305 = vld [vmem:[%s7281 + $0x5c] sm:$0xf]
        %v7306 = vld [vmem:[%s7281 + $0x60] sm:$0xf]
        %v7307 = vld [vmem:[%s7281 + $0x64] sm:$0xf]
        %v7308 = vld [vmem:[%s7281 + $0x68] sm:$0xf]
        %v7309 = vld [vmem:[%s7281 + $0x6c] sm:$0xf]
        %v7310 = vld [vmem:[%s7281 + $0x70] sm:$0xf]
        %v7311 = vld [vmem:[%s7281 + $0x74] sm:$0xf]
        %v7312 = vld [vmem:[%s7281 + $0x78] sm:$0xf]
        %v7313 = vld [vmem:[%s7281 + $0x7c] sm:$0xf]
        %v7314 = vld [vmem:[%s7281 + $0x80] sm:$0xf]
        %v7315 = vld [vmem:[%s7281 + $0x84] sm:$0xf]
        %v7316 = vld [vmem:[%s7281 + $0x88] sm:$0xf]
        %v7317 = vld [vmem:[%s7281 + $0x8c] sm:$0xf]
        %v7318 = vld [vmem:[%s7281 + $0x90] sm:$0xf]
        %v7319 = vld [vmem:[%s7281 + $0x94] sm:$0xf]
        %v7320 = vld [vmem:[%s7281 + $0x98] sm:$0xf]
        %v7321 = vld [vmem:[%s7281 + $0x9c] sm:$0xf]
        %v7322 = vld [vmem:[%s7281 + $0xa0] sm:$0xf]
        %v7323 = vld [vmem:[%s7281 + $0xa4] sm:$0xf]
        %v7324 = vld [vmem:[%s7281 + $0xa8] sm:$0xf]
        %v7325 = vld [vmem:[%s7281 + $0xac] sm:$0xf]
        %v7326 = vld [vmem:[%s7281 + $0xb0] sm:$0xf]
        %v7327 = vld [vmem:[%s7281 + $0xb4] sm:$0xf]
        %v7328 = vld [vmem:[%s7281 + $0xb8] sm:$0xf]
        %v7329 = vld [vmem:[%s7281 + $0xbc] sm:$0xf]
        %v7378 = vunpack.c.l.b16 %v7282
        %v7379 = vunpack.c.l.b16 %v7283
        %v7380 = vunpack.c.l.b16 %v7284
        %v7381 = vunpack.c.l.b16 %v7285
        %v7382 = vunpack.c.l.b16 %v7286
        %v7383 = vunpack.c.l.b16 %v7287
        %v7384 = vunpack.c.l.b16 %v7288
        %v7385 = vunpack.c.l.b16 %v7289
        %v7386 = vunpack.c.l.b16 %v7290
        %v7387 = vunpack.c.l.b16 %v7291
        %v7388 = vunpack.c.l.b16 %v7292
        %v7389 = vunpack.c.l.b16 %v7293
        %v7390 = vunpack.c.l.b16 %v7294
        %v7391 = vunpack.c.l.b16 %v7295
        %v7392 = vunpack.c.l.b16 %v7296
        %v7393 = vunpack.c.l.b16 %v7297
        %v7394 = vunpack.c.l.b16 %v7298
        %v7395 = vunpack.c.l.b16 %v7299
        %v7396 = vunpack.c.l.b16 %v7300
        %v7397 = vunpack.c.l.b16 %v7301
        %v7398 = vunpack.c.l.b16 %v7302
        %v7399 = vunpack.c.l.b16 %v7303
        %v7400 = vunpack.c.l.b16 %v7304
        %v7401 = vunpack.c.l.b16 %v7305
        %v7402 = vunpack.c.l.b16 %v7306
        %v7403 = vunpack.c.l.b16 %v7307
        %v7404 = vunpack.c.l.b16 %v7308
        %v7405 = vunpack.c.l.b16 %v7309
        %v7406 = vunpack.c.l.b16 %v7310
        %v7407 = vunpack.c.l.b16 %v7311
        %v7408 = vunpack.c.l.b16 %v7312
        %v7409 = vunpack.c.l.b16 %v7313
        %v7410 = vunpack.c.l.b16 %v7314
        %v7411 = vunpack.c.l.b16 %v7315
        %v7412 = vunpack.c.l.b16 %v7316
        %v7413 = vunpack.c.l.b16 %v7317
        %v7414 = vunpack.c.l.b16 %v7318
        %v7415 = vunpack.c.l.b16 %v7319
        %v7416 = vunpack.c.l.b16 %v7320
        %v7417 = vunpack.c.l.b16 %v7321
        %v7418 = vunpack.c.l.b16 %v7322
        %v7419 = vunpack.c.l.b16 %v7323
        %v7420 = vunpack.c.l.b16 %v7324
        %v7421 = vunpack.c.l.b16 %v7325
        %v7422 = vunpack.c.l.b16 %v7326
        %v7423 = vunpack.c.l.b16 %v7327
        %v7424 = vunpack.c.l.b16 %v7328
        %v7425 = vunpack.c.l.b16 %v7329
        %v7426 = vpack.c.b16 %v7379, %v7378
        %v7427 = vpack.c.b16 %v7381, %v7380
        %v7428 = vpack.c.b16 %v7383, %v7382
        %v7429 = vpack.c.b16 %v7385, %v7384
        %v7430 = vpack.c.b16 %v7387, %v7386
        %v7431 = vpack.c.b16 %v7389, %v7388
        %v7432 = vpack.c.b16 %v7391, %v7390
        %v7433 = vpack.c.b16 %v7393, %v7392
        %v7434 = vpack.c.b16 %v7395, %v7394
        %v7435 = vpack.c.b16 %v7397, %v7396
        %v7436 = vpack.c.b16 %v7399, %v7398
        %v7437 = vpack.c.b16 %v7401, %v7400
        %v7438 = vpack.c.b16 %v7403, %v7402
        %v7439 = vpack.c.b16 %v7405, %v7404
        %v7440 = vpack.c.b16 %v7407, %v7406
        %v7441 = vpack.c.b16 %v7409, %v7408
        %v7442 = vpack.c.b16 %v7411, %v7410
        %v7443 = vpack.c.b16 %v7413, %v7412
        %v7444 = vpack.c.b16 %v7415, %v7414
        %v7445 = vpack.c.b16 %v7417, %v7416
        %v7446 = vpack.c.b16 %v7419, %v7418
        %v7447 = vpack.c.b16 %v7421, %v7420
        %v7448 = vpack.c.b16 %v7423, %v7422
        %v7449 = vpack.c.b16 %v7425, %v7424
        %7474 = vmatprep.subr.bf16.mxu0 0
        %7475 = vmatpush1.bf16.msra.mxu0 %v7426
        %7476 = vmatprep.subr.bf16.mxu0 0
        %7477 = vmatpush1.bf16.msra.mxu0 %v7427
        %7478 = vmatprep.subr.bf16.mxu0 0
        %7479 = vmatpush1.bf16.msra.mxu0 %v7428
        %7480 = vmatprep.subr.bf16.mxu0 0
        %7481 = vmatpush1.bf16.msra.mxu0 %v7429
        %7482 = vmatprep.subr.bf16.mxu0 0
        %7483 = vmatpush1.bf16.msra.mxu0 %v7430
        %7484 = vmatprep.subr.bf16.mxu0 0
        %7485 = vmatpush1.bf16.msra.mxu0 %v7431
        %7486 = vmatprep.subr.bf16.mxu0 0
        %7487 = vmatpush1.bf16.msra.mxu0 %v7432
        %7488 = vmatprep.subr.bf16.mxu0 0
        %7489 = vmatpush1.bf16.msra.mxu0 %v7433
        %7490 = vmatprep.subr.bf16.mxu0 0
        %7491 = vmatpush1.bf16.msra.mxu0 %v7434
        %7492 = vmatprep.subr.bf16.mxu0 0
        %7493 = vmatpush1.bf16.msra.mxu0 %v7435
        %7494 = vmatprep.subr.bf16.mxu0 0
        %7495 = vmatpush1.bf16.msra.mxu0 %v7436
        %7496 = vmatprep.subr.bf16.mxu0 0
        %7497 = vmatpush1.bf16.msra.mxu0 %v7437
        %7498 = vmatprep.subr.bf16.mxu0 0
        %7499 = vmatpush1.bf16.msra.mxu0 %v7438
        %7500 = vmatprep.subr.bf16.mxu0 0
        %7501 = vmatpush1.bf16.msra.mxu0 %v7439
        %7502 = vmatprep.subr.bf16.mxu0 0
        %7503 = vmatpush1.bf16.msra.mxu0 %v7440
        %7504 = vmatprep.subr.bf16.mxu0 0
        %7505 = vmatpush1.bf16.msra.mxu0 %v7441
        %7506 = vmatprep.mubr.bf16.mxu0 %v6972
        %7507 = vmatmul.mubr.bf16.gmra.mrb[0].mxu0 %v6881
        %v7508 = vpop.f32.mrb[0].mxu0
        %v7509 = vadd.f32 0.0, %v7508
        %v7510 = vpop.f32.mrb[0].mxu0
        %v7511 = vpop.f32.mrb[0].mxu0
        %v7512 = vadd.f32 0.0, %v7511
        %v7513 = vpop.f32.mrb[0].mxu0
        %7514 = vmatprep.mubr.bf16.mxu0 %v6984
        %7515 = vmatmul.mubr.bf16.gmra.mrb[0].mxu0 %v6882
        %v7516 = vpop.f32.mrb[0].mxu0
        %v7517 = vadd.f32 0.0, %v7516
        %v7518 = vpop.f32.mrb[0].mxu0
        %v7519 = vpop.f32.mrb[0].mxu0
        %v7520 = vadd.f32 0.0, %v7519
        %v7521 = vpop.f32.mrb[0].mxu0
        %7522 = vmatprep.mubr.bf16.mxu0 %v6996
        %7523 = vmatmul.mubr.bf16.gmra.mrb[0].mxu0 %v6883
        %v7524 = vpop.f32.mrb[0].mxu0
        %v7525 = vadd.f32 0.0, %v7524
        %v7526 = vpop.f32.mrb[0].mxu0
        %v7527 = vpop.f32.mrb[0].mxu0
        %v7528 = vadd.f32 0.0, %v7527
        %v7529 = vpop.f32.mrb[0].mxu0
        %7530 = vmatprep.mubr.bf16.mxu0 %v7008
        %7531 = vmatmul.mubr.bf16.gmra.mrb[0].mxu0 %v6884
        %v7532 = vpop.f32.mrb[0].mxu0
        %v7533 = vadd.f32 0.0, %v7532
        %v7534 = vpop.f32.mrb[0].mxu0
        %v7535 = vpop.f32.mrb[0].mxu0
        %v7536 = vadd.f32 0.0, %v7535
        %v7537 = vpop.f32.mrb[0].mxu0
        %7538 = vmatprep.mubr.bf16.mxu0 %v7020
        %7539 = vmatmul.mubr.bf16.gmra.mrb[0].mxu0 %v6885
        %v7540 = vpop.f32.mrb[0].mxu0
        %v7541 = vadd.f32 0.0, %v7540
        %v7542 = vpop.f32.mrb[0].mxu0
        %v7543 = vpop.f32.mrb[0].mxu0
        %v7544 = vadd.f32 0.0, %v7543
        %v7545 = vpop.f32.mrb[0].mxu0
        %7546 = vmatprep.mubr.bf16.mxu0 %v7032
        %7547 = vmatmul.mubr.bf16.gmra.mrb[0].mxu0 %v6886
        %v7548 = vpop.f32.mrb[0].mxu0
        %v7549 = vadd.f32 0.0, %v7548
        %v7550 = vpop.f32.mrb[0].mxu0
        %v7551 = vpop.f32.mrb[0].mxu0
        %v7552 = vadd.f32 0.0, %v7551
        %v7553 = vpop.f32.mrb[0].mxu0
        %7554 = vmatprep.mubr.bf16.mxu0 %v7044
        %7555 = vmatmul.mubr.bf16.gmra.mrb[0].mxu0 %v6887
        %v7556 = vpop.f32.mrb[0].mxu0
        %v7557 = vadd.f32 0.0, %v7556
        %v7558 = vpop.f32.mrb[0].mxu0
        %v7559 = vpop.f32.mrb[0].mxu0
        %v7560 = vadd.f32 0.0, %v7559
        %v7561 = vpop.f32.mrb[0].mxu0
        %7562 = vmatprep.mubr.bf16.mxu0 %v7056
        %7563 = vmatmul.mubr.bf16.gmra.mrb[0].mxu0 %v6888
        %v7564 = vpop.f32.mrb[0].mxu0
        %v7565 = vadd.f32 0.0, %v7564
        %v7566 = vpop.f32.mrb[0].mxu0
        %v7567 = vpop.f32.mrb[0].mxu0
        %v7568 = vadd.f32 0.0, %v7567
        %v7569 = vpop.f32.mrb[0].mxu0
        %7570 = vmatprep.mubr.bf16.mxu0 %v7068
        %7571 = vmatmul.mubr.bf16.gmra.mrb[0].mxu0 %v6889
        %v7572 = vpop.f32.mrb[0].mxu0
        %v7573 = vadd.f32 0.0, %v7572
        %v7574 = vpop.f32.mrb[0].mxu0
        %v7575 = vpop.f32.mrb[0].mxu0
        %v7576 = vadd.f32 0.0, %v7575
        %v7577 = vpop.f32.mrb[0].mxu0
        %7578 = vmatprep.mubr.bf16.mxu0 %v7080
        %7579 = vmatmul.mubr.bf16.gmra.mrb[0].mxu0 %v6890
        %v7580 = vpop.f32.mrb[0].mxu0
        %v7581 = vadd.f32 0.0, %v7580
        %v7582 = vpop.f32.mrb[0].mxu0
        %v7583 = vpop.f32.mrb[0].mxu0
        %v7584 = vadd.f32 0.0, %v7583
        %v7585 = vpop.f32.mrb[0].mxu0
        %7586 = vmatprep.mubr.bf16.mxu0 %v7092
        %7587 = vmatmul.mubr.bf16.gmra.mrb[0].mxu0 %v6891
        %v7588 = vpop.f32.mrb[0].mxu0
        %v7589 = vadd.f32 0.0, %v7588
        %v7590 = vpop.f32.mrb[0].mxu0
        %v7591 = vpop.f32.mrb[0].mxu0
        %v7592 = vadd.f32 0.0, %v7591
        %v7593 = vpop.f32.mrb[0].mxu0
        %7594 = vmatprep.mubr.bf16.mxu0 %v7104
        %7595 = vmatmul.mubr.bf16.gmra.mrb[0].mxu0 %v6892
        %v7596 = vpop.f32.mrb[0].mxu0
        %v7597 = vadd.f32 0.0, %v7596
        %v7598 = vpop.f32.mrb[0].mxu0
        %v7599 = vpop.f32.mrb[0].mxu0
        %v7600 = vadd.f32 0.0, %v7599
        %v7601 = vpop.f32.mrb[0].mxu0
        %7602 = vmatprep.mubr.bf16.mxu0 %v7116
        %7603 = vmatmul.mubr.bf16.gmra.mrb[0].mxu0 %v6893
        %v7604 = vpop.f32.mrb[0].mxu0
        %v7605 = vadd.f32 0.0, %v7604
        %v7606 = vpop.f32.mrb[0].mxu0
        %v7607 = vpop.f32.mrb[0].mxu0
        %v7608 = vadd.f32 0.0, %v7607
        %v7609 = vpop.f32.mrb[0].mxu0
        %7610 = vmatprep.mubr.bf16.mxu0 %v7128
        %7611 = vmatmul.mubr.bf16.gmra.mrb[0].mxu0 %v6894
        %v7612 = vpop.f32.mrb[0].mxu0
        %v7613 = vadd.f32 0.0, %v7612
        %v7614 = vpop.f32.mrb[0].mxu0
        %v7615 = vpop.f32.mrb[0].mxu0
        %v7616 = vadd.f32 0.0, %v7615
        %v7617 = vpop.f32.mrb[0].mxu0
        %7618 = vmatprep.mubr.bf16.mxu0 %v7140
        %7619 = vmatmul.mubr.bf16.gmra.mrb[0].mxu0 %v6895
        %v7620 = vpop.f32.mrb[0].mxu0
        %v7621 = vadd.f32 0.0, %v7620
        %v7622 = vpop.f32.mrb[0].mxu0
        %v7623 = vpop.f32.mrb[0].mxu0
        %v7624 = vadd.f32 0.0, %v7623
        %v7625 = vpop.f32.mrb[0].mxu0
        %7626 = vmatprep.mubr.bf16.mxu0 %v7152
        %7627 = vmatmul.mubr.bf16.gmra.mrb[0].mxu0 %v6896
        %v7628 = vpop.f32.mrb[0].mxu0
        %v7629 = vadd.f32 0.0, %v7628
        %v7630 = vpop.f32.mrb[0].mxu0
        %v7631 = vpop.f32.mrb[0].mxu0
        %v7632 = vadd.f32 0.0, %v7631
        %v7633 = vpop.f32.mrb[0].mxu0
        %7634 = vdwg.mxu0
        %7635 = vmatprep.subr.bf16.mxu0 0
        %7636 = vmatpush1.bf16.msra.mxu0 %v7442
        %7637 = vmatprep.subr.bf16.mxu0 0
        %7638 = vmatpush1.bf16.msra.mxu0 %v7443
        %7639 = vmatprep.subr.bf16.mxu0 0
        %7640 = vmatpush1.bf16.msra.mxu0 %v7444
        %7641 = vmatprep.subr.bf16.mxu0 0
        %7642 = vmatpush1.bf16.msra.mxu0 %v7445
        %7643 = vmatprep.subr.bf16.mxu0 0
        %7644 = vmatpush1.bf16.msra.mxu0 %v7446
        %7645 = vmatprep.subr.bf16.mxu0 0
        %7646 = vmatpush1.bf16.msra.mxu0 %v7447
        %7647 = vmatprep.subr.bf16.mxu0 0
        %7648 = vmatpush1.bf16.msra.mxu0 %v7448
        %7649 = vmatprep.subr.bf16.mxu0 0
        %7650 = vmatpush1.bf16.msra.mxu0 %v7449
        %7651 = vmatprep.subr.bf16.mxu0 0
        %7652 = vmatpush1.bf16.msra.mxu0 0
        %7653 = vmatprep.subr.bf16.mxu0 0
        %7654 = vmatpush1.bf16.msra.mxu0 0
        %7655 = vmatprep.subr.bf16.mxu0 0
        %7656 = vmatpush1.bf16.msra.mxu0 0
        %7657 = vmatprep.subr.bf16.mxu0 0
        %7658 = vmatpush1.bf16.msra.mxu0 0
        %7659 = vmatprep.subr.bf16.mxu0 0
        %7660 = vmatpush1.bf16.msra.mxu0 0
        %7661 = vmatprep.subr.bf16.mxu0 0
        %7662 = vmatpush1.bf16.msra.mxu0 0
        %7663 = vmatprep.subr.bf16.mxu0 0
        %7664 = vmatpush1.bf16.msra.mxu0 0
        %7665 = vmatprep.subr.bf16.mxu0 0
        %7666 = vmatpush1.bf16.msra.mxu0 0
        %7667 = vmatprep.mubr.bf16.mxu0 0
        %7668 = vmatmul.mubr.bf16.gmra.mrb[0].mxu0 %v7219
        %v7669 = vpop.f32.mrb[0].mxu0
        %v7670 = vadd.f32 %v7509, %v7669
        %v7671 = vpop.f32.mrb[0].mxu0
        %v7672 = vpop.f32.mrb[0].mxu0
        %v7673 = vadd.f32 %v7512, %v7672
        %v7674 = vpop.f32.mrb[0].mxu0
        %7675 = vmatprep.mubr.bf16.mxu0 0
        %7676 = vmatmul.mubr.bf16.gmra.mrb[0].mxu0 %v7222
        %v7677 = vpop.f32.mrb[0].mxu0
        %v7678 = vadd.f32 %v7517, %v7677
        %v7679 = vpop.f32.mrb[0].mxu0
        %v7680 = vpop.f32.mrb[0].mxu0
        %v7681 = vadd.f32 %v7520, %v7680
        %v7682 = vpop.f32.mrb[0].mxu0
        %7683 = vmatprep.mubr.bf16.mxu0 0
        %7684 = vmatmul.mubr.bf16.gmra.mrb[0].mxu0 %v7225
        %v7685 = vpop.f32.mrb[0].mxu0
        %v7686 = vadd.f32 %v7525, %v7685
        %v7687 = vpop.f32.mrb[0].mxu0
        %v7688 = vpop.f32.mrb[0].mxu0
        %v7689 = vadd.f32 %v7528, %v7688
        %v7690 = vpop.f32.mrb[0].mxu0
        %7691 = vmatprep.mubr.bf16.mxu0 0
        %7692 = vmatmul.mubr.bf16.gmra.mrb[0].mxu0 %v7228
        %v7693 = vpop.f32.mrb[0].mxu0
        %v7694 = vadd.f32 %v7533, %v7693
        %v7695 = vpop.f32.mrb[0].mxu0
        %v7696 = vpop.f32.mrb[0].mxu0
        %v7697 = vadd.f32 %v7536, %v7696
        %v7698 = vpop.f32.mrb[0].mxu0
        %7699 = vmatprep.mubr.bf16.mxu0 0
        %7700 = vmatmul.mubr.bf16.gmra.mrb[0].mxu0 %v7231
        %v7701 = vpop.f32.mrb[0].mxu0
        %v7702 = vadd.f32 %v7541, %v7701
        %v7703 = vpop.f32.mrb[0].mxu0
        %v7704 = vpop.f32.mrb[0].mxu0
        %v7705 = vadd.f32 %v7544, %v7704
        %v7706 = vpop.f32.mrb[0].mxu0
        %7707 = vmatprep.mubr.bf16.mxu0 0
        %7708 = vmatmul.mubr.bf16.gmra.mrb[0].mxu0 %v7234
        %v7709 = vpop.f32.mrb[0].mxu0
        %v7710 = vadd.f32 %v7549, %v7709
        %v7711 = vpop.f32.mrb[0].mxu0
        %v7712 = vpop.f32.mrb[0].mxu0
        %v7713 = vadd.f32 %v7552, %v7712
        %v7714 = vpop.f32.mrb[0].mxu0
        %7715 = vmatprep.mubr.bf16.mxu0 0
        %7716 = vmatmul.mubr.bf16.gmra.mrb[0].mxu0 %v7237
        %v7717 = vpop.f32.mrb[0].mxu0
        %v7718 = vadd.f32 %v7557, %v7717
        %v7719 = vpop.f32.mrb[0].mxu0
        %v7720 = vpop.f32.mrb[0].mxu0
        %v7721 = vadd.f32 %v7560, %v7720
        %v7722 = vpop.f32.mrb[0].mxu0
        %7723 = vmatprep.mubr.bf16.mxu0 0
        %7724 = vmatmul.mubr.bf16.gmra.mrb[0].mxu0 %v7240
        %v7725 = vpop.f32.mrb[0].mxu0
        %v7726 = vadd.f32 %v7565, %v7725
        %v7727 = vpop.f32.mrb[0].mxu0
        %v7728 = vpop.f32.mrb[0].mxu0
        %v7729 = vadd.f32 %v7568, %v7728
        %v7730 = vpop.f32.mrb[0].mxu0
        %7731 = vmatprep.mubr.bf16.mxu0 0
        %7732 = vmatmul.mubr.bf16.gmra.mrb[0].mxu0 %v7243
        %v7733 = vpop.f32.mrb[0].mxu0
        %v7734 = vadd.f32 %v7573, %v7733
        %v7735 = vpop.f32.mrb[0].mxu0
        %v7736 = vpop.f32.mrb[0].mxu0
        %v7737 = vadd.f32 %v7576, %v7736
        %v7738 = vpop.f32.mrb[0].mxu0
        %7739 = vmatprep.mubr.bf16.mxu0 0
        %7740 = vmatmul.mubr.bf16.gmra.mrb[0].mxu0 %v7246
        %v7741 = vpop.f32.mrb[0].mxu0
        %v7742 = vadd.f32 %v7581, %v7741
        %v7743 = vpop.f32.mrb[0].mxu0
        %v7744 = vpop.f32.mrb[0].mxu0
        %v7745 = vadd.f32 %v7584, %v7744
        %v7746 = vpop.f32.mrb[0].mxu0
        %7747 = vmatprep.mubr.bf16.mxu0 0
        %7748 = vmatmul.mubr.bf16.gmra.mrb[0].mxu0 %v7249
        %v7749 = vpop.f32.mrb[0].mxu0
        %v7750 = vadd.f32 %v7589, %v7749
        %v7751 = vpop.f32.mrb[0].mxu0
        %v7752 = vpop.f32.mrb[0].mxu0
        %v7753 = vadd.f32 %v7592, %v7752
        %v7754 = vpop.f32.mrb[0].mxu0
        %7755 = vmatprep.mubr.bf16.mxu0 0
        %7756 = vmatmul.mubr.bf16.gmra.mrb[0].mxu0 %v7252
        %v7757 = vpop.f32.mrb[0].mxu0
        %v7758 = vadd.f32 %v7597, %v7757
        %v7759 = vpop.f32.mrb[0].mxu0
        %v7760 = vpop.f32.mrb[0].mxu0
        %v7761 = vadd.f32 %v7600, %v7760
        %v7762 = vpop.f32.mrb[0].mxu0
        %7763 = vmatprep.mubr.bf16.mxu0 0
        %7764 = vmatmul.mubr.bf16.gmra.mrb[0].mxu0 %v7255
        %v7765 = vpop.f32.mrb[0].mxu0
        %v7766 = vadd.f32 %v7605, %v7765
        %v7767 = vpop.f32.mrb[0].mxu0
        %v7768 = vpop.f32.mrb[0].mxu0
        %v7769 = vadd.f32 %v7608, %v7768
        %v7770 = vpop.f32.mrb[0].mxu0
        %7771 = vmatprep.mubr.bf16.mxu0 0
        %7772 = vmatmul.mubr.bf16.gmra.mrb[0].mxu0 %v7258
        %v7773 = vpop.f32.mrb[0].mxu0
        %v7774 = vadd.f32 %v7613, %v7773
        %v7775 = vpop.f32.mrb[0].mxu0
        %v7776 = vpop.f32.mrb[0].mxu0
        %v7777 = vadd.f32 %v7616, %v7776
        %v7778 = vpop.f32.mrb[0].mxu0
        %7779 = vmatprep.mubr.bf16.mxu0 0
        %7780 = vmatmul.mubr.bf16.gmra.mrb[0].mxu0 %v7261
        %v7781 = vpop.f32.mrb[0].mxu0
        %v7782 = vadd.f32 %v7621, %v7781
        %v7783 = vpop.f32.mrb[0].mxu0
        %v7784 = vpop.f32.mrb[0].mxu0
        %v7785 = vadd.f32 %v7624, %v7784
        %v7786 = vpop.f32.mrb[0].mxu0
        %7787 = vmatprep.mubr.bf16.mxu0 0
        %7788 = vmatmul.mubr.bf16.gmra.mrb[0].mxu0 %v7264
        %v7789 = vpop.f32.mrb[0].mxu0
        %v7790 = vadd.f32 %v7629, %v7789
        %v7791 = vpop.f32.mrb[0].mxu0
        %v7792 = vpop.f32.mrb[0].mxu0
        %v7793 = vadd.f32 %v7632, %v7792
        %v7794 = vpop.f32.mrb[0].mxu0
        %7795 = vdwg.mxu0
        %v7796 = vadd.f32 %v6626, %v7670
        %v7797 = vadd.f32 %v6629, %v7673
        %v7798 = vadd.f32 %v6634, %v7678
        %v7799 = vadd.f32 %v6637, %v7681
        %v7800 = vadd.f32 %v6642, %v7686
        %v7801 = vadd.f32 %v6645, %v7689
        %v7802 = vadd.f32 %v6650, %v7694
        %v7803 = vadd.f32 %v6653, %v7697
        %v7804 = vadd.f32 %v6658, %v7702
        %v7805 = vadd.f32 %v6661, %v7705
        %v7806 = vadd.f32 %v6666, %v7710
        %v7807 = vadd.f32 %v6669, %v7713
        %v7808 = vadd.f32 %v6674, %v7718
        %v7809 = vadd.f32 %v6677, %v7721
        %v7810 = vadd.f32 %v6682, %v7726
        %v7811 = vadd.f32 %v6685, %v7729
        %v7812 = vadd.f32 %v6690, %v7734
        %v7813 = vadd.f32 %v6693, %v7737
        %v7814 = vadd.f32 %v6698, %v7742
        %v7815 = vadd.f32 %v6701, %v7745
        %v7816 = vadd.f32 %v6706, %v7750
        %v7817 = vadd.f32 %v6709, %v7753
        %v7818 = vadd.f32 %v6714, %v7758
        %v7819 = vadd.f32 %v6717, %v7761
        %v7820 = vadd.f32 %v6722, %v7766
        %v7821 = vadd.f32 %v6725, %v7769
        %v7822 = vadd.f32 %v6730, %v7774
        %v7823 = vadd.f32 %v6733, %v7777
        %v7824 = vadd.f32 %v6738, %v7782
        %v7825 = vadd.f32 %v6741, %v7785
        %v7826 = vadd.f32 %v6746, %v7790
        %v7827 = vadd.f32 %v6749, %v7793
        %v7828 = vld [vmem:[%s5] sm:$0x1]
        %v7830 = vlaneseq
        %v7831 = vshrl.u32 %v7830, 7
        %v7832 = vsub.s32 0, %v7831
        %v7833 = vrot.slane %v7828, %v7832
        %v7835 = vmul.f32 %v7796, %v7833
        %v7836 = vmul.f32 %v7797, %v7833
        %v7837 = vmul.f32 %v7798, %v7833
        %v7838 = vmul.f32 %v7799, %v7833
        %v7839 = vmul.f32 %v7800, %v7833
        %v7840 = vmul.f32 %v7801, %v7833
        %v7841 = vmul.f32 %v7802, %v7833
        %v7842 = vmul.f32 %v7803, %v7833
        %v7843 = vmul.f32 %v7804, %v7833
        %v7844 = vmul.f32 %v7805, %v7833
        %v7845 = vmul.f32 %v7806, %v7833
        %v7846 = vmul.f32 %v7807, %v7833
        %v7847 = vmul.f32 %v7808, %v7833
        %v7848 = vmul.f32 %v7809, %v7833
        %v7849 = vmul.f32 %v7810, %v7833
        %v7850 = vmul.f32 %v7811, %v7833
        %v7851 = vmul.f32 %v7812, %v7833
        %v7852 = vmul.f32 %v7813, %v7833
        %v7853 = vmul.f32 %v7814, %v7833
        %v7854 = vmul.f32 %v7815, %v7833
        %v7855 = vmul.f32 %v7816, %v7833
        %v7856 = vmul.f32 %v7817, %v7833
        %v7857 = vmul.f32 %v7818, %v7833
        %v7858 = vmul.f32 %v7819, %v7833
        %v7859 = vmul.f32 %v7820, %v7833
        %v7860 = vmul.f32 %v7821, %v7833
        %v7861 = vmul.f32 %v7822, %v7833
        %v7862 = vmul.f32 %v7823, %v7833
        %v7863 = vmul.f32 %v7824, %v7833
        %v7864 = vmul.f32 %v7825, %v7833
        %v7865 = vmul.f32 %v7826, %v7833
        %v7866 = vmul.f32 %v7827, %v7833
        %v7867 = vld [vmem:[%s6] sm:$0x1]
        %v7869 = vlaneseq
        %v7870 = vshrl.u32 %v7869, 7
        %v7871 = vsub.s32 0, %v7870
        %v7872 = vrot.slane %v7867, %v7871
        %v7874 = vadd.f32 %v7835, %v7872
        %v7875 = vadd.f32 %v7836, %v7872
        %v7876 = vadd.f32 %v7837, %v7872
        %v7877 = vadd.f32 %v7838, %v7872
        %v7878 = vadd.f32 %v7839, %v7872
        %v7879 = vadd.f32 %v7840, %v7872
        %v7880 = vadd.f32 %v7841, %v7872
        %v7881 = vadd.f32 %v7842, %v7872
        %v7882 = vadd.f32 %v7843, %v7872
        %v7883 = vadd.f32 %v7844, %v7872
        %v7884 = vadd.f32 %v7845, %v7872
        %v7885 = vadd.f32 %v7846, %v7872
        %v7886 = vadd.f32 %v7847, %v7872
        %v7887 = vadd.f32 %v7848, %v7872
        %v7888 = vadd.f32 %v7849, %v7872
        %v7889 = vadd.f32 %v7850, %v7872
        %v7890 = vadd.f32 %v7851, %v7872
        %v7891 = vadd.f32 %v7852, %v7872
        %v7892 = vadd.f32 %v7853, %v7872
        %v7893 = vadd.f32 %v7854, %v7872
        %v7894 = vadd.f32 %v7855, %v7872
        %v7895 = vadd.f32 %v7856, %v7872
        %v7896 = vadd.f32 %v7857, %v7872
        %v7897 = vadd.f32 %v7858, %v7872
        %v7898 = vadd.f32 %v7859, %v7872
        %v7899 = vadd.f32 %v7860, %v7872
        %v7900 = vadd.f32 %v7861, %v7872
        %v7901 = vadd.f32 %v7862, %v7872
        %v7902 = vadd.f32 %v7863, %v7872
        %v7903 = vadd.f32 %v7864, %v7872
        %v7904 = vadd.f32 %v7865, %v7872
        %v7905 = vadd.f32 %v7866, %v7872
        %v7906 = vld [vmem:[%s2749] sm:$0xf]
        %v7907 = vld [vmem:[%s2749 + $0x4] sm:$0xf]
        %v7908 = vld [vmem:[%s2749 + $0x8] sm:$0x1]
        %v7909 = vld [vmem:[%s2749 + $0xc] sm:$0xf]
        %v7910 = vld [vmem:[%s2749 + $0x10] sm:$0xf]
        %v7911 = vld [vmem:[%s2749 + $0x14] sm:$0x1]
        %v7912 = vld [vmem:[%s2749 + $0x18] sm:$0xf]
        %v7913 = vld [vmem:[%s2749 + $0x1c] sm:$0xf]
        %v7914 = vld [vmem:[%s2749 + $0x20] sm:$0x1]
        %v7915 = vld [vmem:[%s2749 + $0x24] sm:$0xf]
        %v7916 = vld [vmem:[%s2749 + $0x28] sm:$0xf]
        %v7917 = vld [vmem:[%s2749 + $0x2c] sm:$0x1]
        %v7918 = vld [vmem:[%s2749 + $0x30] sm:$0xf]
        %v7919 = vld [vmem:[%s2749 + $0x34] sm:$0xf]
        %v7920 = vld [vmem:[%s2749 + $0x38] sm:$0x1]
        %v7921 = vld [vmem:[%s2749 + $0x3c] sm:$0xf]
        %v7922 = vld [vmem:[%s2749 + $0x40] sm:$0xf]
        %v7923 = vld [vmem:[%s2749 + $0x44] sm:$0x1]
        %v7924 = vld [vmem:[%s2749 + $0x48] sm:$0xf]
        %v7925 = vld [vmem:[%s2749 + $0x4c] sm:$0xf]
        %v7926 = vld [vmem:[%s2749 + $0x50] sm:$0x1]
        %v7927 = vld [vmem:[%s2749 + $0x54] sm:$0xf]
        %v7928 = vld [vmem:[%s2749 + $0x58] sm:$0xf]
        %v7929 = vld [vmem:[%s2749 + $0x5c] sm:$0x1]
        %v7930 = vld [vmem:[%s2749 + $0x60] sm:$0xf]
        %v7931 = vld [vmem:[%s2749 + $0x64] sm:$0xf]
        %v7932 = vld [vmem:[%s2749 + $0x68] sm:$0x1]
        %v7933 = vld [vmem:[%s2749 + $0x6c] sm:$0xf]
        %v7934 = vld [vmem:[%s2749 + $0x70] sm:$0xf]
        %v7935 = vld [vmem:[%s2749 + $0x74] sm:$0x1]
        %v7936 = vld [vmem:[%s2749 + $0x78] sm:$0xf]
        %v7937 = vld [vmem:[%s2749 + $0x7c] sm:$0xf]
        %v7938 = vld [vmem:[%s2749 + $0x80] sm:$0x1]
        %v7939 = vld [vmem:[%s2749 + $0x84] sm:$0xf]
        %v7940 = vld [vmem:[%s2749 + $0x88] sm:$0xf]
        %v7941 = vld [vmem:[%s2749 + $0x8c] sm:$0x1]
        %v7942 = vld [vmem:[%s2749 + $0x90] sm:$0xf]
        %v7943 = vld [vmem:[%s2749 + $0x94] sm:$0xf]
        %v7944 = vld [vmem:[%s2749 + $0x98] sm:$0x1]
        %v7945 = vld [vmem:[%s2749 + $0x9c] sm:$0xf]
        %v7946 = vld [vmem:[%s2749 + $0xa0] sm:$0xf]
        %v7947 = vld [vmem:[%s2749 + $0xa4] sm:$0x1]
        %v7948 = vld [vmem:[%s2749 + $0xa8] sm:$0xf]
        %v7949 = vld [vmem:[%s2749 + $0xac] sm:$0xf]
        %v7950 = vld [vmem:[%s2749 + $0xb0] sm:$0x1]
        %v7951 = vld [vmem:[%s2749 + $0xb4] sm:$0xf]
        %v7952 = vld [vmem:[%s2749 + $0xb8] sm:$0xf]
        %v7953 = vld [vmem:[%s2749 + $0xbc] sm:$0x1]
        %v7954 = vunpack.c.l.bf16 %v7906
        %v7955 = vunpack.c.l.bf16 %v7907
        %v7956 = vunpack.c.l.bf16 %v7908
        %v7957 = vunpack.c.l.bf16 %v7909
        %v7958 = vunpack.c.l.bf16 %v7910
        %v7959 = vunpack.c.l.bf16 %v7911
        %v7960 = vunpack.c.l.bf16 %v7912
        %v7961 = vunpack.c.l.bf16 %v7913
        %v7962 = vunpack.c.l.bf16 %v7914
        %v7963 = vunpack.c.l.bf16 %v7915
        %v7964 = vunpack.c.l.bf16 %v7916
        %v7965 = vunpack.c.l.bf16 %v7917
        %v7966 = vunpack.c.l.bf16 %v7918
        %v7967 = vunpack.c.l.bf16 %v7919
        %v7968 = vunpack.c.l.bf16 %v7920
        %v7969 = vunpack.c.l.bf16 %v7921
        %v7970 = vunpack.c.l.bf16 %v7922
        %v7971 = vunpack.c.l.bf16 %v7923
        %v7972 = vunpack.c.l.bf16 %v7924
        %v7973 = vunpack.c.l.bf16 %v7925
        %v7974 = vunpack.c.l.bf16 %v7926
        %v7975 = vunpack.c.l.bf16 %v7927
        %v7976 = vunpack.c.l.bf16 %v7928
        %v7977 = vunpack.c.l.bf16 %v7929
        %v7978 = vunpack.c.l.bf16 %v7930
        %v7979 = vunpack.c.l.bf16 %v7931
        %v7980 = vunpack.c.l.bf16 %v7932
        %v7981 = vunpack.c.l.bf16 %v7933
        %v7982 = vunpack.c.l.bf16 %v7934
        %v7983 = vunpack.c.l.bf16 %v7935
        %v7984 = vunpack.c.l.bf16 %v7936
        %v7985 = vunpack.c.l.bf16 %v7937
        %v7986 = vunpack.c.l.bf16 %v7938
        %v7987 = vunpack.c.l.bf16 %v7939
        %v7988 = vunpack.c.l.bf16 %v7940
        %v7989 = vunpack.c.l.bf16 %v7941
        %v7990 = vunpack.c.l.bf16 %v7942
        %v7991 = vunpack.c.l.bf16 %v7943
        %v7992 = vunpack.c.l.bf16 %v7944
        %v7993 = vunpack.c.l.bf16 %v7945
        %v7994 = vunpack.c.l.bf16 %v7946
        %v7995 = vunpack.c.l.bf16 %v7947
        %v7996 = vunpack.c.l.bf16 %v7948
        %v7997 = vunpack.c.l.bf16 %v7949
        %v7998 = vunpack.c.l.bf16 %v7950
        %v7999 = vunpack.c.l.bf16 %v7951
        %v8000 = vunpack.c.l.bf16 %v7952
        %v8001 = vunpack.c.l.bf16 %v7953
        %vm8050 = vcmask 1046528
        %v8051 = vrot.slane %v7954, 1
        %v8052 = vrot.slane %v7955, 1
        %v8053 = vsel %vm8050, %v8051, %v8052
        %v8054 = vrot.slane %v7956, 1
        %v8055 = vsel %vm8050, %v8052, %v8054
        %v8056 = vrot.slane %v7957, 1
        %v8057 = vrot.slane %v7958, 1
        %v8058 = vsel %vm8050, %v8056, %v8057
        %v8059 = vrot.slane %v7959, 1
        %v8060 = vsel %vm8050, %v8057, %v8059
        %v8061 = vrot.slane %v7960, 1
        %v8062 = vrot.slane %v7961, 1
        %v8063 = vsel %vm8050, %v8061, %v8062
        %v8064 = vrot.slane %v7962, 1
        %v8065 = vsel %vm8050, %v8062, %v8064
        %v8066 = vrot.slane %v7963, 1
        %v8067 = vrot.slane %v7964, 1
        %v8068 = vsel %vm8050, %v8066, %v8067
        %v8069 = vrot.slane %v7965, 1
        %v8070 = vsel %vm8050, %v8067, %v8069
        %v8071 = vrot.slane %v7966, 1
        %v8072 = vrot.slane %v7967, 1
        %v8073 = vsel %vm8050, %v8071, %v8072
        %v8074 = vrot.slane %v7968, 1
        %v8075 = vsel %vm8050, %v8072, %v8074
        %v8076 = vrot.slane %v7969, 1
        %v8077 = vrot.slane %v7970, 1
        %v8078 = vsel %vm8050, %v8076, %v8077
        %v8079 = vrot.slane %v7971, 1
        %v8080 = vsel %vm8050, %v8077, %v8079
        %v8081 = vrot.slane %v7972, 1
        %v8082 = vrot.slane %v7973, 1
        %v8083 = vsel %vm8050, %v8081, %v8082
        %v8084 = vrot.slane %v7974, 1
        %v8085 = vsel %vm8050, %v8082, %v8084
        %v8086 = vrot.slane %v7975, 1
        %v8087 = vrot.slane %v7976, 1
        %v8088 = vsel %vm8050, %v8086, %v8087
        %v8089 = vrot.slane %v7977, 1
        %v8090 = vsel %vm8050, %v8087, %v8089
        %v8091 = vrot.slane %v7978, 1
        %v8092 = vrot.slane %v7979, 1
        %v8093 = vsel %vm8050, %v8091, %v8092
        %v8094 = vrot.slane %v7980, 1
        %v8095 = vsel %vm8050, %v8092, %v8094
        %v8096 = vrot.slane %v7981, 1
        %v8097 = vrot.slane %v7982, 1
        %v8098 = vsel %vm8050, %v8096, %v8097
        %v8099 = vrot.slane %v7983, 1
        %v8100 = vsel %vm8050, %v8097, %v8099
        %v8101 = vrot.slane %v7984, 1
        %v8102 = vrot.slane %v7985, 1
        %v8103 = vsel %vm8050, %v8101, %v8102
        %v8104 = vrot.slane %v7986, 1
        %v8105 = vsel %vm8050, %v8102, %v8104
        %v8106 = vrot.slane %v7987, 1
        %v8107 = vrot.slane %v7988, 1
        %v8108 = vsel %vm8050, %v8106, %v8107
        %v8109 = vrot.slane %v7989, 1
        %v8110 = vsel %vm8050, %v8107, %v8109
        %v8111 = vrot.slane %v7990, 1
        %v8112 = vrot.slane %v7991, 1
        %v8113 = vsel %vm8050, %v8111, %v8112
        %v8114 = vrot.slane %v7992, 1
        %v8115 = vsel %vm8050, %v8112, %v8114
        %v8116 = vrot.slane %v7993, 1
        %v8117 = vrot.slane %v7994, 1
        %v8118 = vsel %vm8050, %v8116, %v8117
        %v8119 = vrot.slane %v7995, 1
        %v8120 = vsel %vm8050, %v8117, %v8119
        %v8121 = vrot.slane %v7996, 1
        %v8122 = vrot.slane %v7997, 1
        %v8123 = vsel %vm8050, %v8121, %v8122
        %v8124 = vrot.slane %v7998, 1
        %v8125 = vsel %vm8050, %v8122, %v8124
        %v8126 = vrot.slane %v7999, 1
        %v8127 = vrot.slane %v8000, 1
        %v8128 = vsel %vm8050, %v8126, %v8127
        %v8129 = vrot.slane %v8001, 1
        %v8130 = vsel %vm8050, %v8127, %v8129
        %v8163 = vadd.f32 %v7874, %v8053
        %v8164 = vadd.f32 %v7875, %v8055
        %v8165 = vadd.f32 %v7876, %v8058
        %v8166 = vadd.f32 %v7877, %v8060
        %v8167 = vadd.f32 %v7878, %v8063
        %v8168 = vadd.f32 %v7879, %v8065
        %v8169 = vadd.f32 %v7880, %v8068
        %v8170 = vadd.f32 %v7881, %v8070
        %v8171 = vadd.f32 %v7882, %v8073
        %v8172 = vadd.f32 %v7883, %v8075
        %v8173 = vadd.f32 %v7884, %v8078
        %v8174 = vadd.f32 %v7885, %v8080
        %v8175 = vadd.f32 %v7886, %v8083
        %v8176 = vadd.f32 %v7887, %v8085
        %v8177 = vadd.f32 %v7888, %v8088
        %v8178 = vadd.f32 %v7889, %v8090
        %v8179 = vadd.f32 %v7890, %v8093
        %v8180 = vadd.f32 %v7891, %v8095
        %v8181 = vadd.f32 %v7892, %v8098
        %v8182 = vadd.f32 %v7893, %v8100
        %v8183 = vadd.f32 %v7894, %v8103
        %v8184 = vadd.f32 %v7895, %v8105
        %v8185 = vadd.f32 %v7896, %v8108
        %v8186 = vadd.f32 %v7897, %v8110
        %v8187 = vadd.f32 %v7898, %v8113
        %v8188 = vadd.f32 %v7899, %v8115
        %v8189 = vadd.f32 %v7900, %v8118
        %v8190 = vadd.f32 %v7901, %v8120
        %v8191 = vadd.f32 %v7902, %v8123
        %v8192 = vadd.f32 %v7903, %v8125
        %v8193 = vadd.f32 %v7904, %v8128
        %v8194 = vadd.f32 %v7905, %v8130
        %v8195 = vmax.f32 %v8163, 0.0
        %v8196 = vmax.f32 %v8164, 0.0
        %v8197 = vmax.f32 %v8165, 0.0
        %v8198 = vmax.f32 %v8166, 0.0
        %v8199 = vmax.f32 %v8167, 0.0
        %v8200 = vmax.f32 %v8168, 0.0
        %v8201 = vmax.f32 %v8169, 0.0
        %v8202 = vmax.f32 %v8170, 0.0
        %v8203 = vmax.f32 %v8171, 0.0
        %v8204 = vmax.f32 %v8172, 0.0
        %v8205 = vmax.f32 %v8173, 0.0
        %v8206 = vmax.f32 %v8174, 0.0
        %v8207 = vmax.f32 %v8175, 0.0
        %v8208 = vmax.f32 %v8176, 0.0
        %v8209 = vmax.f32 %v8177, 0.0
        %v8210 = vmax.f32 %v8178, 0.0
        %v8211 = vmax.f32 %v8179, 0.0
        %v8212 = vmax.f32 %v8180, 0.0
        %v8213 = vmax.f32 %v8181, 0.0
        %v8214 = vmax.f32 %v8182, 0.0
        %v8215 = vmax.f32 %v8183, 0.0
        %v8216 = vmax.f32 %v8184, 0.0
        %v8217 = vmax.f32 %v8185, 0.0
        %v8218 = vmax.f32 %v8186, 0.0
        %v8219 = vmax.f32 %v8187, 0.0
        %v8220 = vmax.f32 %v8188, 0.0
        %v8221 = vmax.f32 %v8189, 0.0
        %v8222 = vmax.f32 %v8190, 0.0
        %v8223 = vmax.f32 %v8191, 0.0
        %v8224 = vmax.f32 %v8192, 0.0
        %v8225 = vmax.f32 %v8193, 0.0
        %v8226 = vmax.f32 %v8194, 0.0
        %v8227 = vpack.c.bf16 %v8196, %v8195
        %v8228 = vpack.c.bf16 %v8198, %v8197
        %v8229 = vpack.c.bf16 %v8200, %v8199
        %v8230 = vpack.c.bf16 %v8202, %v8201
        %v8231 = vpack.c.bf16 %v8204, %v8203
        %v8232 = vpack.c.bf16 %v8206, %v8205
        %v8233 = vpack.c.bf16 %v8208, %v8207
        %v8234 = vpack.c.bf16 %v8210, %v8209
        %v8235 = vpack.c.bf16 %v8212, %v8211
        %v8236 = vpack.c.bf16 %v8214, %v8213
        %v8237 = vpack.c.bf16 %v8216, %v8215
        %v8238 = vpack.c.bf16 %v8218, %v8217
        %v8239 = vpack.c.bf16 %v8220, %v8219
        %v8240 = vpack.c.bf16 %v8222, %v8221
        %v8241 = vpack.c.bf16 %v8224, %v8223
        %v8242 = vpack.c.bf16 %v8226, %v8225
        %v8259 = vunpack.c.l.b16 %v8227
        %v8260 = vunpack.c.h.b16 %v8227
        %v8261 = vunpack.c.l.b16 %v8228
        %v8262 = vunpack.c.h.b16 %v8228
        %v8263 = vunpack.c.l.b16 %v8229
        %v8264 = vunpack.c.h.b16 %v8229
        %v8265 = vunpack.c.l.b16 %v8230
        %v8266 = vunpack.c.h.b16 %v8230
        %v8267 = vunpack.c.l.b16 %v8231
        %v8268 = vunpack.c.h.b16 %v8231
        %v8269 = vunpack.c.l.b16 %v8232
        %v8270 = vunpack.c.h.b16 %v8232
        %v8271 = vunpack.c.l.b16 %v8233
        %v8272 = vunpack.c.h.b16 %v8233
        %v8273 = vunpack.c.l.b16 %v8234
        %v8274 = vunpack.c.h.b16 %v8234
        %v8275 = vunpack.c.l.b16 %v8235
        %v8276 = vunpack.c.h.b16 %v8235
        %v8277 = vunpack.c.l.b16 %v8236
        %v8278 = vunpack.c.h.b16 %v8236
        %v8279 = vunpack.c.l.b16 %v8237
        %v8280 = vunpack.c.h.b16 %v8237
        %v8281 = vunpack.c.l.b16 %v8238
        %v8282 = vunpack.c.h.b16 %v8238
        %v8283 = vunpack.c.l.b16 %v8239
        %v8284 = vunpack.c.h.b16 %v8239
        %v8285 = vunpack.c.l.b16 %v8240
        %v8286 = vunpack.c.h.b16 %v8240
        %v8287 = vunpack.c.l.b16 %v8241
        %v8288 = vunpack.c.h.b16 %v8241
        %v8289 = vunpack.c.l.b16 %v8242
        %v8290 = vunpack.c.h.b16 %v8242
        %v8291 = vpack.c.b16 %v8259, %v8259
        %v8292 = vpack.c.b16 %v8260, %v8260
        %v8293 = vpack.c.b16 %v8261, %v8261
        %v8294 = vpack.c.b16 %v8262, %v8262
        %v8295 = vpack.c.b16 %v8263, %v8263
        %v8296 = vpack.c.b16 %v8264, %v8264
        %v8297 = vpack.c.b16 %v8265, %v8265
        %v8298 = vpack.c.b16 %v8266, %v8266
        %v8299 = vpack.c.b16 %v8267, %v8267
        %v8300 = vpack.c.b16 %v8268, %v8268
        %v8301 = vpack.c.b16 %v8269, %v8269
        %v8302 = vpack.c.b16 %v8270, %v8270
        %v8303 = vpack.c.b16 %v8271, %v8271
        %v8304 = vpack.c.b16 %v8272, %v8272
        %v8305 = vpack.c.b16 %v8273, %v8273
        %v8306 = vpack.c.b16 %v8274, %v8274
        %v8307 = vpack.c.b16 %v8275, %v8275
        %v8308 = vpack.c.b16 %v8276, %v8276
        %v8309 = vpack.c.b16 %v8277, %v8277
        %v8310 = vpack.c.b16 %v8278, %v8278
        %v8311 = vpack.c.b16 %v8279, %v8279
        %v8312 = vpack.c.b16 %v8280, %v8280
        %v8313 = vpack.c.b16 %v8281, %v8281
        %v8314 = vpack.c.b16 %v8282, %v8282
        %v8315 = vpack.c.b16 %v8283, %v8283
        %v8316 = vpack.c.b16 %v8284, %v8284
        %v8317 = vpack.c.b16 %v8285, %v8285
        %v8318 = vpack.c.b16 %v8286, %v8286
        %v8319 = vpack.c.b16 %v8287, %v8287
        %v8320 = vpack.c.b16 %v8288, %v8288
        %v8321 = vpack.c.b16 %v8289, %v8289
        %v8322 = vpack.c.b16 %v8290, %v8290
        %8355 = vst [vmem:[%s339] sm:$0xf] %v8291
        %8356 = vst [vmem:[%s339 + $0x4] sm:$0xf] %v8292
        %8357 = vst [vmem:[%s339 + $0x8] sm:$0xf] %v8293
        %8358 = vst [vmem:[%s339 + $0xc] sm:$0xf] %v8294
        %8359 = vst [vmem:[%s339 + $0x10] sm:$0xf] %v8295
        %8360 = vst [vmem:[%s339 + $0x14] sm:$0xf] %v8296
        %8361 = vst [vmem:[%s339 + $0x18] sm:$0xf] %v8297
        %8362 = vst [vmem:[%s339 + $0x1c] sm:$0xf] %v8298
        %8363 = vst [vmem:[%s339 + $0x20] sm:$0xf] %v8299
        %8364 = vst [vmem:[%s339 + $0x24] sm:$0xf] %v8300
        %8365 = vst [vmem:[%s339 + $0x28] sm:$0xf] %v8301
        %8366 = vst [vmem:[%s339 + $0x2c] sm:$0xf] %v8302
        %8367 = vst [vmem:[%s339 + $0x30] sm:$0xf] %v8303
        %8368 = vst [vmem:[%s339 + $0x34] sm:$0xf] %v8304
        %8369 = vst [vmem:[%s339 + $0x38] sm:$0xf] %v8305
        %8370 = vst [vmem:[%s339 + $0x3c] sm:$0xf] %v8306
        %8371 = vst [vmem:[%s339 + $0x40] sm:$0xf] %v8307
        %8372 = vst [vmem:[%s339 + $0x44] sm:$0xf] %v8308
        %8373 = vst [vmem:[%s339 + $0x48] sm:$0xf] %v8309
        %8374 = vst [vmem:[%s339 + $0x4c] sm:$0xf] %v8310
        %8375 = vst [vmem:[%s339 + $0x50] sm:$0xf] %v8311
        %8376 = vst [vmem:[%s339 + $0x54] sm:$0xf] %v8312
        %8377 = vst [vmem:[%s339 + $0x58] sm:$0xf] %v8313
        %8378 = vst [vmem:[%s339 + $0x5c] sm:$0xf] %v8314
        %8379 = vst [vmem:[%s339 + $0x60] sm:$0xf] %v8315
        %8380 = vst [vmem:[%s339 + $0x64] sm:$0xf] %v8316
        %8381 = vst [vmem:[%s339 + $0x68] sm:$0xf] %v8317
        %8382 = vst [vmem:[%s339 + $0x6c] sm:$0xf] %v8318
        %8383 = vst [vmem:[%s339 + $0x70] sm:$0xf] %v8319
        %8384 = vst [vmem:[%s339 + $0x74] sm:$0xf] %v8320
        %8385 = vst [vmem:[%s339 + $0x78] sm:$0xf] %v8321
        %8386 = vst [vmem:[%s339 + $0x7c] sm:$0xf] %v8322
        %s8387 = sand.u32 %s199, 1
        %s8388 = scalar_lea.sflag [#allocation5], %s8387
        %s8389 = sand.u32 %s199, 1
        %s8390 = smul.addr %s8389, 128
        %s8391 = scalar_lea.vmem [#allocation9], %s8390
        // Predicated region
        $region65: #{tpu_custom_call.1} parent=47 // pred_check
          %p8392 = pneg %p209
        $region66: #{tpu_custom_call.1} parent=47 // pred_check_branch
          %8394 = sbr.rel (%p8392) target = $region68
        $region67: #{tpu_custom_call.1} parent=47 // pred_region
          %s8395 = smul.u32 16, %s30
          %s8397 = ssub.s32 2048, 2048
          %8398 = vsyncadd %s8388, %s8397
          %s8399 = smul.addr %s8395, 2
          %s8400 = smul.addr %s29, 32
          %s8401 = sadd.s32 %s8399, %s8400
          %s8402 = smul.addr %s8401, 64
          %s8403 = scalar_lea.hbm %s7, %s8402
          %s8404 = sshll.u32 %s8391, 4
          %s8405 = int_to_ptr.vmem [resolvable:$true] %s8404
          %8410 = dma.vmem_to_hbm [thread:$0]  %s8405, 2048, %s8403, %s8388, 64, 64, 4
        $region68: #{tpu_custom_call.1} parent=47 // pred_fallthru
          _
      $region48: #{tpu_custom_call.1} parent=5 // pred_fallthru
        _
      %p8411 = scmp.le.s32.totalorder 2, %s20
      // Predicated region
      $region69: #{tpu_custom_call.1} parent=5 // pred_check
        %p8412 = pneg %p8411
      $region70: #{tpu_custom_call.1} parent=5 // pred_check_branch
        %8414 = sbr.rel (%p8412) target = $region72
      $region71: #{tpu_custom_call.1} parent=5 // pred_region
        %s8415 = ssub.s32 %s20, 2
        // Predicated region
        $region73: #{tpu_custom_call.1} parent=71 // pred_check
          %p8416 = pneg %p215
        $region74: #{tpu_custom_call.1} parent=71 // pred_check_branch
          %8418 = sbr.rel (%p8416) target = $region76
        $region75: #{tpu_custom_call.1} parent=71 // pred_region
          %s8419 = sand.u32 %s200, 1
          %s8420 = scalar_lea.sflag [#allocation5], %s8419
          %s8421 = sand.u32 %s200, 1
          %s8422 = smul.addr %s8421, 128
          %s8423 = scalar_lea.vmem [#allocation9], %s8422
          %8424 = dma.done %s8420, 2048
        $region76: #{tpu_custom_call.1} parent=71 // pred_fallthru
          _
      $region72: #{tpu_custom_call.1} parent=5 // pred_fallthru
        _
    $region6: #{tpu_custom_call.1} parent=1 // loop_footer
      %s24 = sadd.s32 1, %s20
    $region7: #{tpu_custom_call.1} parent=1 // loop_footer_branch
      %19 = sbr.rel target = $region3
    $region8: #{tpu_custom_call.1} parent=1 // loop_exit
      _
    %8425 = vsyncpa [#allocation4], 1
    %s8426 = scalar_lea.sflag [#allocation4], 1
    %8427 = vsyncpa %s8426, 1
    %8428 = vsyncpa [#allocation7], 1
    %8429 = vsyncpa [#allocation5], 1
    %s8430 = scalar_lea.sflag [#allocation5], 1
    %8431 = vsyncpa %s8430, 1

</llo_original>
